<compile_context>
chip_gen: v7x
topology: tpu7x:2x2x1
jax: 0.10.0
libtpu: 0.0.40
codegen_flags: <defaults>
</compile_context>

<pallas_src>
import functools
import math

import jax
import jax.numpy as jnp
import numpy as np
from jax.experimental import pallas as pl
from jax.experimental.pallas import tpu as pltpu

D_MODEL = 32
N_HEAD = 4
DH = D_MODEL // N_HEAD
N_LAYERS = 2
DIM_FF = 2048            # nn.TransformerEncoderLayer default dim_feedforward
LN_EPS = 1e-5

# smallvec row layout (per layer), + one trailing row for pointer V
ROWS_PER_LAYER = 9
(R_BQ, R_BK, R_BV, R_BO, R_B2, R_G1, R_BE1, R_G2, R_BE2) = range(ROWS_PER_LAYER)


# ------------------------------------------------------------------ math ---

def _mm(x2d, w):
    """x2d: [N, Din] @ w: [Dout, Din] (PyTorch weight layout) -> [N, Dout]."""
    return jax.lax.dot_general(x2d, w, (((1,), (1,)), ((), ())),
                               preferred_element_type=jnp.float32)


def _mm_nt(x2d, w_t):
    """x2d: [N, K] @ w_t: [K, Dout] -> [N, Dout]."""
    return jax.lax.dot_general(x2d, w_t, (((1,), (0,)), ((), ())),
                               preferred_element_type=jnp.float32)


def _row(sv, r):
    """Row r of the packed small-vector table as a (1, D) array."""
    return sv[r:r + 1, :]


def _layer_norm(x, gamma, beta):
    mu = jnp.mean(x, axis=-1, keepdims=True)
    xc = x - mu
    var = jnp.mean(xc * xc, axis=-1, keepdims=True)
    return xc * jax.lax.rsqrt(var + LN_EPS) * gamma + beta


def _softmax_lastdim(s, approx_recip):
    s = s - jnp.max(s, axis=-1, keepdims=True)
    ex = jnp.exp(s)
    denom = jnp.sum(ex, axis=-1, keepdims=True)
    if approx_recip:
        return ex * pl.reciprocal(denom, approx=True)   # EUP, in-kernel only
    return ex / denom


def _encoder_layer(x2d, b, s, wqkvo, w1_bf16, b1_row, w2_bf16, sv, row0,
                   approx_recip):
    """Post-norm nn.TransformerEncoderLayer (relu, dropout=identity) on [N, D]."""
    n = b * s
    scale = 1.0 / math.sqrt(DH)

    # ---- multi-head self-attention (per-head weight row-slices, no concat) ----
    attn = None
    for h in range(N_HEAD):
        lo = h * DH
        wq_h = wqkvo[0 * D_MODEL + lo: 0 * D_MODEL + lo + DH]   # [DH, D]
        wk_h = wqkvo[1 * D_MODEL + lo: 1 * D_MODEL + lo + DH]
        wv_h = wqkvo[2 * D_MODEL + lo: 2 * D_MODEL + lo + DH]
        wo_h = wqkvo[3 * D_MODEL + lo: 3 * D_MODEL + lo + DH]   # rows of out_w^T
        bq_h = sv[row0 + R_BQ: row0 + R_BQ + 1, lo:lo + DH]     # (1, DH)
        bk_h = sv[row0 + R_BK: row0 + R_BK + 1, lo:lo + DH]
        bv_h = sv[row0 + R_BV: row0 + R_BV + 1, lo:lo + DH]

        qh = (_mm(x2d, wq_h) + bq_h) * scale                    # [N, DH]
        kh = _mm(x2d, wk_h) + bk_h
        vh = _mm(x2d, wv_h) + bv_h

        q3 = qh.reshape(b, s, DH)
        k3 = kh.reshape(b, s, DH)
        v3 = vh.reshape(b, s, DH)
        sc = jnp.einsum('bqd,bkd->bqk', q3, k3,
                        preferred_element_type=jnp.float32)      # [B, S, S]
        p = _softmax_lastdim(sc, approx_recip)
        oh = jnp.einsum('bqk,bkd->bqd', p, v3,
                        preferred_element_type=jnp.float32)      # [B, S, DH]

        contrib = _mm_nt(oh.reshape(n, DH), wo_h)                # [N, D]
        attn = contrib if attn is None else attn + contrib

    attn = attn + _row(sv, row0 + R_BO)                          # out_proj bias
    x2d = _layer_norm(x2d + attn, _row(sv, row0 + R_G1), _row(sv, row0 + R_BE1))

    # ---- feed-forward: bf16 operands, f32 accumulation --------------------
    h1 = jnp.maximum(_mm(x2d.astype(jnp.bfloat16), w1_bf16) + b1_row, 0.0)
    h2 = _mm(h1.astype(jnp.bfloat16), w2_bf16) + _row(sv, row0 + R_B2)
    x2d = _layer_norm(x2d + h2, _row(sv, row0 + R_G2), _row(sv, row0 + R_BE2))
    return x2d


def _forward_math(x, mask, qkvo_w, ffn_w1, ffn_w2, ffn_b1, smallvec, ptr_w,
                  *, approx_recip):
    b, s, d = x.shape
    n = b * s
    x2d = x.reshape(n, d)                                        # flatten once

    for l in range(N_LAYERS):
        x2d = _encoder_layer(x2d, b, s, qkvo_w[l], ffn_w1[l],
                             ffn_b1[l:l + 1], ffn_w2[l], smallvec,
                             l * ROWS_PER_LAYER, approx_recip)

    # pointer Attention (use_tanh=False path)
    x3 = x2d.reshape(b, s, d)
    query = jnp.mean(x3, axis=1)                                 # [B, D]
    qp = _mm(query, ptr_w[0:D_MODEL])                            # project_query
    e = _mm(x2d, ptr_w[D_MODEL:2 * D_MODEL]).reshape(b, s, d)    # project_ref (Conv1d k=1)
    v = _row(smallvec, N_LAYERS * ROWS_PER_LAYER)                # pointer V, (1, D)
    u = jnp.sum(v * jnp.tanh(qp[:, None, :] + e), axis=-1)       # [B, S]
    return jnp.where(mask != 0, -jnp.inf, u)                     # logits[job==-1]=-inf


# ---------------------------------------------------------------- kernel ---

def _pointer_kernel(x_ref, mask_ref, qkvo_ref, w1_ref, w2_ref, b1_ref,
                    sv_ref, ptrw_ref, out_ref):
    out_ref[...] = _forward_math(
        x_ref[...], mask_ref[...], qkvo_ref[...], w1_ref[...], w2_ref[...],
        b1_ref[...], sv_ref[...], ptrw_ref[...], approx_recip=True)


def pointer_network_forward(x, mask_i32, packed):
    b, s, _ = x.shape
    flat_in = [x, mask_i32] + list(packed)
    vmem = pl.BlockSpec(memory_space=pltpu.MemorySpace.VMEM)
    return pl.pallas_call(
        _pointer_kernel,
        out_shape=jax.ShapeDtypeStruct((b, s), jnp.float32),
        in_specs=[vmem] * len(flat_in),
        out_specs=vmem,
        compiler_params=pltpu.CompilerParams(vmem_limit_bytes=16 << 20),
    )(*flat_in)


# ---------------------------------------------------------------- params ---

def init_params(key):
    """PyTorch-layout parameters of the original module (all f32)."""
    def u(k, shape, scale):
        return jax.random.uniform(k, shape, jnp.float32, -scale, scale)

    keys = iter(jax.random.split(key, 64))
    s_d = 1.0 / math.sqrt(D_MODEL)
    s_f = 1.0 / math.sqrt(DIM_FF)
    layers = []
    for _ in range(N_LAYERS):
        layers.append(dict(
            in_w=u(next(keys), (3 * D_MODEL, D_MODEL), s_d),   # in_proj_weight
            in_b=u(next(keys), (3 * D_MODEL,), s_d),           # in_proj_bias
            out_w=u(next(keys), (D_MODEL, D_MODEL), s_d),      # out_proj.weight
            out_b=u(next(keys), (D_MODEL,), s_d),              # out_proj.bias
            w1=u(next(keys), (DIM_FF, D_MODEL), s_d),          # linear1.weight
            b1=u(next(keys), (DIM_FF,), s_d),                  # linear1.bias
            w2=u(next(keys), (D_MODEL, DIM_FF), s_f),          # linear2.weight
            b2=u(next(keys), (D_MODEL,), s_f),                 # linear2.bias
            g1=jnp.ones((D_MODEL,), jnp.float32),
            be1=jnp.zeros((D_MODEL,), jnp.float32),
            g2=jnp.ones((D_MODEL,), jnp.float32),
            be2=jnp.zeros((D_MODEL,), jnp.float32),
        ))
    ptr = dict(
        wq=u(next(keys), (D_MODEL, D_MODEL), s_d),             # project_query.weight
        wref=u(next(keys), (D_MODEL, D_MODEL), s_d),           # project_ref.weight (k=1)
        v=jax.random.uniform(next(keys), (D_MODEL,), jnp.float32) - 0.5,   # V
    )
    return layers, ptr


def pack_params(layers, ptr):
    """Pack the many tiny PyTorch params into 6 DMA-friendly kernel inputs.

    qkvo_w   [L,128,32] f32 : rows 0:96 = in_proj_weight (Wq|Wk|Wv), rows
                              96:128 = out_proj.weight^T (per-head = row slices)
    ffn_w1   [L,2048,32] bf16, ffn_w2 [L,32,2048] bf16, ffn_b1 [L,2048] f32
    smallvec [L*9+1, 32] f32 : per layer bq,bk,bv,bo,b2,g1,be1,g2,be2; last row V
    ptr_w    [64,32] f32     : project_query.weight ; project_ref.weight
    """
    qkvo, w1s, w2s, b1s, rows = [], [], [], [], []
    for p in layers:
        qkvo.append(jnp.concatenate([p['in_w'], p['out_w'].T], axis=0))
        w1s.append(p['w1'].astype(jnp.bfloat16))
        w2s.append(p['w2'].astype(jnp.bfloat16))
        b1s.append(p['b1'])
        rows += [p['in_b'][0:D_MODEL], p['in_b'][D_MODEL:2 * D_MODEL],
                 p['in_b'][2 * D_MODEL:], p['out_b'], p['b2'],
                 p['g1'], p['be1'], p['g2'], p['be2']]
    rows.append(ptr['v'])
    return (jnp.stack(qkvo),
            jnp.stack(w1s),
            jnp.stack(w2s),
            jnp.stack(b1s),
            jnp.stack(rows),
            jnp.concatenate([ptr['wq'], ptr['wref']], axis=0))


# ------------------------------------------------------------------ main ---

if __name__ == "__main__":
    key = jax.random.PRNGKey(0)
    k_obs, k_par = jax.random.split(key)

    N_TOTAL, SEQ = 4, 8
    obs = jax.random.normal(k_obs, (N_TOTAL, SEQ, D_MODEL), jnp.float32)
    job_types = np.array(
        [[0, 1, -1, 2, 0, -1, 1, 0],
         [1, -1, 0, 0, 2, 1, -1, 0],
         [0, 0, 0, -1, 1, 2, 0, 1],
         [2, 0, 1, 0, -1, 0, 0, -1]], dtype=np.int32)
    skip_mask = np.array([False, True, False, True])

    # TODO(synk): obs[~skip_mask] is a dynamic-shape boolean batch select with no
    # static-shape Pallas equivalent; it is done host-side before the kernel.
    keep = np.nonzero(~skip_mask)[0]
    obs_sel = jnp.asarray(np.asarray(obs)[keep])                    # [B', S, D]
    mask_i32 = jnp.asarray((job_types[keep] == -1).astype(np.int32))

    layers, ptr = init_params(k_par)
    packed = pack_params(layers, ptr)

    out = jax.block_until_ready(pointer_network_forward(obs_sel, mask_i32, packed))

    # Pure-JAX reference using the same packed (bf16 FFN) params; the only
    # intended deltas vs. the kernel are the approx reciprocal in softmax and
    # XLA-vs-Mosaic matmul rounding, hence the 1e-2 sanity tolerance.
    ref_fn = jax.jit(functools.partial(_forward_math, approx_recip=False))
    ref = jax.block_until_ready(ref_fn(obs_sel, mask_i32, *packed))

    out_np, ref_np = np.asarray(out), np.asarray(ref)
    finite = np.isfinite(ref_np)
    assert np.array_equal(np.isfinite(out_np), finite)
    np.testing.assert_allclose(np.where(finite, out_np, 0.0),
                               np.where(finite, ref_np, 0.0),
                               rtol=1e-2, atol=1e-2)
    print("KERNEL_OK")
</pallas_src>

<mosaic_0001>
module attributes {stable_mosaic.version = 11 : i64} {
  func.func @_pointer_kernel(%arg0: memref<2x8x32xf32, #tpu.memory_space<vmem>>, %arg1: memref<2x8xi32, #tpu.memory_space<vmem>>, %arg2: memref<2x128x32xf32, #tpu.memory_space<vmem>>, %arg3: memref<2x2048x32xbf16, #tpu.memory_space<vmem>>, %arg4: memref<2x32x2048xbf16, #tpu.memory_space<vmem>>, %arg5: memref<2x2048xf32, #tpu.memory_space<vmem>>, %arg6: memref<19x32xf32, #tpu.memory_space<vmem>>, %arg7: memref<64x32xf32, #tpu.memory_space<vmem>>, %arg8: memref<2x8xf32, #tpu.memory_space<vmem>>) attributes {dimension_semantics = [], scalar_prefetch = 0 : i64, scratch_operands = 0 : i64, tpu.core_type = #tpu.core_type<tc>} {
    %c0 = arith.constant 0 : index
    %c0_0 = arith.constant 0 : index
    %c0_1 = arith.constant 0 : index
    %0 = vector.load %arg0[%c0, %c0_0, %c0_1] : memref<2x8x32xf32, #tpu.memory_space<vmem>>, vector<2x8x32xf32>
    %c0_2 = arith.constant 0 : index
    %c0_3 = arith.constant 0 : index
    %1 = vector.load %arg1[%c0_2, %c0_3] : memref<2x8xi32, #tpu.memory_space<vmem>>, vector<2x8xi32>
    %c0_4 = arith.constant 0 : index
    %c0_5 = arith.constant 0 : index
    %c0_6 = arith.constant 0 : index
    %2 = vector.load %arg2[%c0_4, %c0_5, %c0_6] : memref<2x128x32xf32, #tpu.memory_space<vmem>>, vector<2x128x32xf32>
    %c0_7 = arith.constant 0 : index
    %c0_8 = arith.constant 0 : index
    %c0_9 = arith.constant 0 : index
    %3 = vector.load %arg3[%c0_7, %c0_8, %c0_9] : memref<2x2048x32xbf16, #tpu.memory_space<vmem>>, vector<2x2048x32xbf16>
    %c0_10 = arith.constant 0 : index
    %c0_11 = arith.constant 0 : index
    %c0_12 = arith.constant 0 : index
    %4 = vector.load %arg4[%c0_10, %c0_11, %c0_12] : memref<2x32x2048xbf16, #tpu.memory_space<vmem>>, vector<2x32x2048xbf16>
    %c0_13 = arith.constant 0 : index
    %c0_14 = arith.constant 0 : index
    %5 = vector.load %arg5[%c0_13, %c0_14] : memref<2x2048xf32, #tpu.memory_space<vmem>>, vector<2x2048xf32>
    %c0_15 = arith.constant 0 : index
    %c0_16 = arith.constant 0 : index
    %6 = vector.load %arg6[%c0_15, %c0_16] : memref<19x32xf32, #tpu.memory_space<vmem>>, vector<19x32xf32>
    %c0_17 = arith.constant 0 : index
    %c0_18 = arith.constant 0 : index
    %7 = vector.load %arg7[%c0_17, %c0_18] : memref<64x32xf32, #tpu.memory_space<vmem>>, vector<64x32xf32>
    %8 = vector.shape_cast %0 : vector<2x8x32xf32> to vector<16x32xf32>
    %9 = vector.extract_strided_slice %2 {offsets = [0, 0, 0], sizes = [1, 128, 32], strides = [1, 1, 1]} : vector<2x128x32xf32> to vector<1x128x32xf32>
    %10 = vector.shape_cast %9 : vector<1x128x32xf32> to vector<128x32xf32>
    %11 = vector.extract_strided_slice %3 {offsets = [0, 0, 0], sizes = [1, 2048, 32], strides = [1, 1, 1]} : vector<2x2048x32xbf16> to vector<1x2048x32xbf16>
    %12 = vector.shape_cast %11 : vector<1x2048x32xbf16> to vector<2048x32xbf16>
    %13 = vector.extract_strided_slice %5 {offsets = [0, 0], sizes = [1, 2048], strides = [1, 1]} : vector<2x2048xf32> to vector<1x2048xf32>
    %14 = vector.extract_strided_slice %4 {offsets = [0, 0, 0], sizes = [1, 32, 2048], strides = [1, 1, 1]} : vector<2x32x2048xbf16> to vector<1x32x2048xbf16>
    %15 = vector.shape_cast %14 : vector<1x32x2048xbf16> to vector<32x2048xbf16>
    %16 = vector.extract_strided_slice %10 {offsets = [0, 0], sizes = [8, 32], strides = [1, 1]} : vector<128x32xf32> to vector<8x32xf32>
    %17 = vector.extract_strided_slice %10 {offsets = [32, 0], sizes = [8, 32], strides = [1, 1]} : vector<128x32xf32> to vector<8x32xf32>
    %18 = vector.extract_strided_slice %10 {offsets = [64, 0], sizes = [8, 32], strides = [1, 1]} : vector<128x32xf32> to vector<8x32xf32>
    %19 = vector.extract_strided_slice %10 {offsets = [96, 0], sizes = [8, 32], strides = [1, 1]} : vector<128x32xf32> to vector<8x32xf32>
    %20 = vector.extract_strided_slice %6 {offsets = [0, 0], sizes = [1, 8], strides = [1, 1]} : vector<19x32xf32> to vector<1x8xf32>
    %21 = vector.extract_strided_slice %6 {offsets = [1, 0], sizes = [1, 8], strides = [1, 1]} : vector<19x32xf32> to vector<1x8xf32>
    %22 = vector.extract_strided_slice %6 {offsets = [2, 0], sizes = [1, 8], strides = [1, 1]} : vector<19x32xf32> to vector<1x8xf32>
    %cst = arith.constant dense<0.000000e+00> : vector<16x8xf32>
    %23 = tpu.matmul %8, %16, %cst {dimension_numbers = #tpu.dot_dimension_numbers<[1], [1], [0], [0], [0, 0, 1, 0], [], []>} : vector<16x32xf32>, vector<8x32xf32>, vector<16x8xf32> -> vector<16x8xf32>
    %24 = vector.broadcast %20 : vector<1x8xf32> to vector<16x8xf32>
    %25 = arith.addf %23, %24 : vector<16x8xf32>
    %cst_19 = arith.constant 0.353553385 : f32
    %26 = vector.broadcast %cst_19 : f32 to vector<16x8xf32>
    %27 = arith.mulf %25, %26 : vector<16x8xf32>
    %cst_20 = arith.constant dense<0.000000e+00> : vector<16x8xf32>
    %28 = tpu.matmul %8, %17, %cst_20 {dimension_numbers = #tpu.dot_dimension_numbers<[1], [1], [0], [0], [0, 0, 1, 0], [], []>} : vector<16x32xf32>, vector<8x32xf32>, vector<16x8xf32> -> vector<16x8xf32>
    %29 = vector.broadcast %21 : vector<1x8xf32> to vector<16x8xf32>
    %30 = arith.addf %28, %29 : vector<16x8xf32>
    %cst_21 = arith.constant dense<0.000000e+00> : vector<16x8xf32>
    %31 = tpu.matmul %8, %18, %cst_21 {dimension_numbers = #tpu.dot_dimension_numbers<[1], [1], [0], [0], [0, 0, 1, 0], [], []>} : vector<16x32xf32>, vector<8x32xf32>, vector<16x8xf32> -> vector<16x8xf32>
    %32 = vector.broadcast %22 : vector<1x8xf32> to vector<16x8xf32>
    %33 = arith.addf %31, %32 : vector<16x8xf32>
    %34 = vector.shape_cast %27 : vector<16x8xf32> to vector<2x8x8xf32>
    %35 = vector.shape_cast %30 : vector<16x8xf32> to vector<2x8x8xf32>
    %36 = vector.shape_cast %33 : vector<16x8xf32> to vector<2x8x8xf32>
    "tpu.trace_start"() <{level = 10 : i32, message = "bqd,bkd->bqk"}> : () -> ()
    %cst_22 = arith.constant dense<0.000000e+00> : vector<2x8x8xf32>
    %37 = tpu.matmul %34, %35, %cst_22 {dimension_numbers = #tpu.dot_dimension_numbers<[2], [2], [1], [1], [0, 0, 0, 1, 1, 1], [0], [0]>} : vector<2x8x8xf32>, vector<2x8x8xf32>, vector<2x8x8xf32> -> vector<2x8x8xf32>
    "tpu.trace_stop"() : () -> ()
    %cst_23 = arith.constant dense<0xFF800000> : vector<2x8xf32>
    %38 = vector.multi_reduction <maximumf>, %37, %cst_23 [2] : vector<2x8x8xf32> to vector<2x8xf32>
    %39 = vector.shape_cast %38 : vector<2x8xf32> to vector<2x8x1xf32>
    %40 = vector.broadcast %39 : vector<2x8x1xf32> to vector<2x8x8xf32>
    %41 = arith.subf %37, %40 : vector<2x8x8xf32>
    %42 = math.exp %41 : vector<2x8x8xf32>
    %cst_24 = arith.constant dense<0.000000e+00> : vector<2x8xf32>
    %43 = vector.multi_reduction <add>, %42, %cst_24 [2] : vector<2x8x8xf32> to vector<2x8xf32>
    %44 = vector.shape_cast %43 : vector<2x8xf32> to vector<2x8x1xf32>
    %45 = tpu.reciprocal %44 {approx = true} : vector<2x8x1xf32> -> vector<2x8x1xf32>
    %46 = vector.broadcast %45 : vector<2x8x1xf32> to vector<2x8x8xf32>
    %47 = arith.mulf %42, %46 : vector<2x8x8xf32>
    "tpu.trace_start"() <{level = 10 : i32, message = "bqk,bkd->bqd"}> : () -> ()
    %cst_25 = arith.constant dense<0.000000e+00> : vector<2x8x8xf32>
    %48 = tpu.matmul %47, %36, %cst_25 {dimension_numbers = #tpu.dot_dimension_numbers<[2], [1], [1], [2], [0, 0, 0, 1, 1, 2], [0], [0]>} : vector<2x8x8xf32>, vector<2x8x8xf32>, vector<2x8x8xf32> -> vector<2x8x8xf32>
    "tpu.trace_stop"() : () -> ()
    %49 = vector.shape_cast %48 : vector<2x8x8xf32> to vector<16x8xf32>
    %cst_26 = arith.constant dense<0.000000e+00> : vector<16x32xf32>
    %50 = tpu.matmul %49, %19, %cst_26 {dimension_numbers = #tpu.dot_dimension_numbers<[1], [0], [0], [1], [0, 0, 1, 1], [], []>} : vector<16x8xf32>, vector<8x32xf32>, vector<16x32xf32> -> vector<16x32xf32>
    %51 = vector.extract_strided_slice %10 {offsets = [8, 0], sizes = [8, 32], strides = [1, 1]} : vector<128x32xf32> to vector<8x32xf32>
    %52 = vector.extract_strided_slice %10 {offsets = [40, 0], sizes = [8, 32], strides = [1, 1]} : vector<128x32xf32> to vector<8x32xf32>
    %53 = vector.extract_strided_slice %10 {offsets = [72, 0], sizes = [8, 32], strides = [1, 1]} : vector<128x32xf32> to vector<8x32xf32>
    %54 = vector.extract_strided_slice %10 {offsets = [104, 0], sizes = [8, 32], strides = [1, 1]} : vector<128x32xf32> to vector<8x32xf32>
    %55 = vector.extract_strided_slice %6 {offsets = [0, 8], sizes = [1, 8], strides = [1, 1]} : vector<19x32xf32> to vector<1x8xf32>
    %56 = vector.extract_strided_slice %6 {offsets = [1, 8], sizes = [1, 8], strides = [1, 1]} : vector<19x32xf32> to vector<1x8xf32>
    %57 = vector.extract_strided_slice %6 {offsets = [2, 8], sizes = [1, 8], strides = [1, 1]} : vector<19x32xf32> to vector<1x8xf32>
    %cst_27 = arith.constant dense<0.000000e+00> : vector<16x8xf32>
    %58 = tpu.matmul %8, %51, %cst_27 {dimension_numbers = #tpu.dot_dimension_numbers<[1], [1], [0], [0], [0, 0, 1, 0], [], []>} : vector<16x32xf32>, vector<8x32xf32>, vector<16x8xf32> -> vector<16x8xf32>
    %59 = vector.broadcast %55 : vector<1x8xf32> to vector<16x8xf32>
    %60 = arith.addf %58, %59 : vector<16x8xf32>
    %cst_28 = arith.constant 0.353553385 : f32
    %61 = vector.broadcast %cst_28 : f32 to vector<16x8xf32>
    %62 = arith.mulf %60, %61 : vector<16x8xf32>
    %cst_29 = arith.constant dense<0.000000e+00> : vector<16x8xf32>
    %63 = tpu.matmul %8, %52, %cst_29 {dimension_numbers = #tpu.dot_dimension_numbers<[1], [1], [0], [0], [0, 0, 1, 0], [], []>} : vector<16x32xf32>, vector<8x32xf32>, vector<16x8xf32> -> vector<16x8xf32>
    %64 = vector.broadcast %56 : vector<1x8xf32> to vector<16x8xf32>
    %65 = arith.addf %63, %64 : vector<16x8xf32>
    %cst_30 = arith.constant dense<0.000000e+00> : vector<16x8xf32>
    %66 = tpu.matmul %8, %53, %cst_30 {dimension_numbers = #tpu.dot_dimension_numbers<[1], [1], [0], [0], [0, 0, 1, 0], [], []>} : vector<16x32xf32>, vector<8x32xf32>, vector<16x8xf32> -> vector<16x8xf32>
    %67 = vector.broadcast %57 : vector<1x8xf32> to vector<16x8xf32>
    %68 = arith.addf %66, %67 : vector<16x8xf32>
    %69 = vector.shape_cast %62 : vector<16x8xf32> to vector<2x8x8xf32>
    %70 = vector.shape_cast %65 : vector<16x8xf32> to vector<2x8x8xf32>
    %71 = vector.shape_cast %68 : vector<16x8xf32> to vector<2x8x8xf32>
    "tpu.trace_start"() <{level = 10 : i32, message = "bqd,bkd->bqk"}> : () -> ()
    %cst_31 = arith.constant dense<0.000000e+00> : vector<2x8x8xf32>
    %72 = tpu.matmul %69, %70, %cst_31 {dimension_numbers = #tpu.dot_dimension_numbers<[2], [2], [1], [1], [0, 0, 0, 1, 1, 1], [0], [0]>} : vector<2x8x8xf32>, vector<2x8x8xf32>, vector<2x8x8xf32> -> vector<2x8x8xf32>
    "tpu.trace_stop"() : () -> ()
    %cst_32 = arith.constant dense<0xFF800000> : vector<2x8xf32>
    %73 = vector.multi_reduction <maximumf>, %72, %cst_32 [2] : vector<2x8x8xf32> to vector<2x8xf32>
    %74 = vector.shape_cast %73 : vector<2x8xf32> to vector<2x8x1xf32>
    %75 = vector.broadcast %74 : vector<2x8x1xf32> to vector<2x8x8xf32>
    %76 = arith.subf %72, %75 : vector<2x8x8xf32>
    %77 = math.exp %76 : vector<2x8x8xf32>
    %cst_33 = arith.constant dense<0.000000e+00> : vector<2x8xf32>
    %78 = vector.multi_reduction <add>, %77, %cst_33 [2] : vector<2x8x8xf32> to vector<2x8xf32>
    %79 = vector.shape_cast %78 : vector<2x8xf32> to vector<2x8x1xf32>
    %80 = tpu.reciprocal %79 {approx = true} : vector<2x8x1xf32> -> vector<2x8x1xf32>
    %81 = vector.broadcast %80 : vector<2x8x1xf32> to vector<2x8x8xf32>
    %82 = arith.mulf %77, %81 : vector<2x8x8xf32>
    "tpu.trace_start"() <{level = 10 : i32, message = "bqk,bkd->bqd"}> : () -> ()
    %cst_34 = arith.constant dense<0.000000e+00> : vector<2x8x8xf32>
    %83 = tpu.matmul %82, %71, %cst_34 {dimension_numbers = #tpu.dot_dimension_numbers<[2], [1], [1], [2], [0, 0, 0, 1, 1, 2], [0], [0]>} : vector<2x8x8xf32>, vector<2x8x8xf32>, vector<2x8x8xf32> -> vector<2x8x8xf32>
    "tpu.trace_stop"() : () -> ()
    %84 = vector.shape_cast %83 : vector<2x8x8xf32> to vector<16x8xf32>
    %cst_35 = arith.constant dense<0.000000e+00> : vector<16x32xf32>
    %85 = tpu.matmul %84, %54, %cst_35 {dimension_numbers = #tpu.dot_dimension_numbers<[1], [0], [0], [1], [0, 0, 1, 1], [], []>} : vector<16x8xf32>, vector<8x32xf32>, vector<16x32xf32> -> vector<16x32xf32>
    %86 = arith.addf %50, %85 : vector<16x32xf32>
    %87 = vector.extract_strided_slice %10 {offsets = [16, 0], sizes = [8, 32], strides = [1, 1]} : vector<128x32xf32> to vector<8x32xf32>
    %88 = vector.extract_strided_slice %10 {offsets = [48, 0], sizes = [8, 32], strides = [1, 1]} : vector<128x32xf32> to vector<8x32xf32>
    %89 = vector.extract_strided_slice %10 {offsets = [80, 0], sizes = [8, 32], strides = [1, 1]} : vector<128x32xf32> to vector<8x32xf32>
    %90 = vector.extract_strided_slice %10 {offsets = [112, 0], sizes = [8, 32], strides = [1, 1]} : vector<128x32xf32> to vector<8x32xf32>
    %91 = vector.extract_strided_slice %6 {offsets = [0, 16], sizes = [1, 8], strides = [1, 1]} : vector<19x32xf32> to vector<1x8xf32>
    %92 = vector.extract_strided_slice %6 {offsets = [1, 16], sizes = [1, 8], strides = [1, 1]} : vector<19x32xf32> to vector<1x8xf32>
    %93 = vector.extract_strided_slice %6 {offsets = [2, 16], sizes = [1, 8], strides = [1, 1]} : vector<19x32xf32> to vector<1x8xf32>
    %cst_36 = arith.constant dense<0.000000e+00> : vector<16x8xf32>
    %94 = tpu.matmul %8, %87, %cst_36 {dimension_numbers = #tpu.dot_dimension_numbers<[1], [1], [0], [0], [0, 0, 1, 0], [], []>} : vector<16x32xf32>, vector<8x32xf32>, vector<16x8xf32> -> vector<16x8xf32>
    %95 = vector.broadcast %91 : vector<1x8xf32> to vector<16x8xf32>
    %96 = arith.addf %94, %95 : vector<16x8xf32>
    %cst_37 = arith.constant 0.353553385 : f32
    %97 = vector.broadcast %cst_37 : f32 to vector<16x8xf32>
    %98 = arith.mulf %96, %97 : vector<16x8xf32>
    %cst_38 = arith.constant dense<0.000000e+00> : vector<16x8xf32>
    %99 = tpu.matmul %8, %88, %cst_38 {dimension_numbers = #tpu.dot_dimension_numbers<[1], [1], [0], [0], [0, 0, 1, 0], [], []>} : vector<16x32xf32>, vector<8x32xf32>, vector<16x8xf32> -> vector<16x8xf32>
    %100 = vector.broadcast %92 : vector<1x8xf32> to vector<16x8xf32>
    %101 = arith.addf %99, %100 : vector<16x8xf32>
    %cst_39 = arith.constant dense<0.000000e+00> : vector<16x8xf32>
    %102 = tpu.matmul %8, %89, %cst_39 {dimension_numbers = #tpu.dot_dimension_numbers<[1], [1], [0], [0], [0, 0, 1, 0], [], []>} : vector<16x32xf32>, vector<8x32xf32>, vector<16x8xf32> -> vector<16x8xf32>
    %103 = vector.broadcast %93 : vector<1x8xf32> to vector<16x8xf32>
    %104 = arith.addf %102, %103 : vector<16x8xf32>
    %105 = vector.shape_cast %98 : vector<16x8xf32> to vector<2x8x8xf32>
    %106 = vector.shape_cast %101 : vector<16x8xf32> to vector<2x8x8xf32>
    %107 = vector.shape_cast %104 : vector<16x8xf32> to vector<2x8x8xf32>
    "tpu.trace_start"() <{level = 10 : i32, message = "bqd,bkd->bqk"}> : () -> ()
    %cst_40 = arith.constant dense<0.000000e+00> : vector<2x8x8xf32>
    %108 = tpu.matmul %105, %106, %cst_40 {dimension_numbers = #tpu.dot_dimension_numbers<[2], [2], [1], [1], [0, 0, 0, 1, 1, 1], [0], [0]>} : vector<2x8x8xf32>, vector<2x8x8xf32>, vector<2x8x8xf32> -> vector<2x8x8xf32>
    "tpu.trace_stop"() : () -> ()
    %cst_41 = arith.constant dense<0xFF800000> : vector<2x8xf32>
    %109 = vector.multi_reduction <maximumf>, %108, %cst_41 [2] : vector<2x8x8xf32> to vector<2x8xf32>
    %110 = vector.shape_cast %109 : vector<2x8xf32> to vector<2x8x1xf32>
    %111 = vector.broadcast %110 : vector<2x8x1xf32> to vector<2x8x8xf32>
    %112 = arith.subf %108, %111 : vector<2x8x8xf32>
    %113 = math.exp %112 : vector<2x8x8xf32>
    %cst_42 = arith.constant dense<0.000000e+00> : vector<2x8xf32>
    %114 = vector.multi_reduction <add>, %113, %cst_42 [2] : vector<2x8x8xf32> to vector<2x8xf32>
    %115 = vector.shape_cast %114 : vector<2x8xf32> to vector<2x8x1xf32>
    %116 = tpu.reciprocal %115 {approx = true} : vector<2x8x1xf32> -> vector<2x8x1xf32>
    %117 = vector.broadcast %116 : vector<2x8x1xf32> to vector<2x8x8xf32>
    %118 = arith.mulf %113, %117 : vector<2x8x8xf32>
    "tpu.trace_start"() <{level = 10 : i32, message = "bqk,bkd->bqd"}> : () -> ()
    %cst_43 = arith.constant dense<0.000000e+00> : vector<2x8x8xf32>
    %119 = tpu.matmul %118, %107, %cst_43 {dimension_numbers = #tpu.dot_dimension_numbers<[2], [1], [1], [2], [0, 0, 0, 1, 1, 2], [0], [0]>} : vector<2x8x8xf32>, vector<2x8x8xf32>, vector<2x8x8xf32> -> vector<2x8x8xf32>
    "tpu.trace_stop"() : () -> ()
    %120 = vector.shape_cast %119 : vector<2x8x8xf32> to vector<16x8xf32>
    %cst_44 = arith.constant dense<0.000000e+00> : vector<16x32xf32>
    %121 = tpu.matmul %120, %90, %cst_44 {dimension_numbers = #tpu.dot_dimension_numbers<[1], [0], [0], [1], [0, 0, 1, 1], [], []>} : vector<16x8xf32>, vector<8x32xf32>, vector<16x32xf32> -> vector<16x32xf32>
    %122 = arith.addf %86, %121 : vector<16x32xf32>
    %123 = vector.extract_strided_slice %10 {offsets = [24, 0], sizes = [8, 32], strides = [1, 1]} : vector<128x32xf32> to vector<8x32xf32>
    %124 = vector.extract_strided_slice %10 {offsets = [56, 0], sizes = [8, 32], strides = [1, 1]} : vector<128x32xf32> to vector<8x32xf32>
    %125 = vector.extract_strided_slice %10 {offsets = [88, 0], sizes = [8, 32], strides = [1, 1]} : vector<128x32xf32> to vector<8x32xf32>
    %126 = vector.extract_strided_slice %10 {offsets = [120, 0], sizes = [8, 32], strides = [1, 1]} : vector<128x32xf32> to vector<8x32xf32>
    %127 = vector.extract_strided_slice %6 {offsets = [0, 24], sizes = [1, 8], strides = [1, 1]} : vector<19x32xf32> to vector<1x8xf32>
    %128 = vector.extract_strided_slice %6 {offsets = [1, 24], sizes = [1, 8], strides = [1, 1]} : vector<19x32xf32> to vector<1x8xf32>
    %129 = vector.extract_strided_slice %6 {offsets = [2, 24], sizes = [1, 8], strides = [1, 1]} : vector<19x32xf32> to vector<1x8xf32>
    %cst_45 = arith.constant dense<0.000000e+00> : vector<16x8xf32>
    %130 = tpu.matmul %8, %123, %cst_45 {dimension_numbers = #tpu.dot_dimension_numbers<[1], [1], [0], [0], [0, 0, 1, 0], [], []>} : vector<16x32xf32>, vector<8x32xf32>, vector<16x8xf32> -> vector<16x8xf32>
    %131 = vector.broadcast %127 : vector<1x8xf32> to vector<16x8xf32>
    %132 = arith.addf %130, %131 : vector<16x8xf32>
    %cst_46 = arith.constant 0.353553385 : f32
    %133 = vector.broadcast %cst_46 : f32 to vector<16x8xf32>
    %134 = arith.mulf %132, %133 : vector<16x8xf32>
    %cst_47 = arith.constant dense<0.000000e+00> : vector<16x8xf32>
    %135 = tpu.matmul %8, %124, %cst_47 {dimension_numbers = #tpu.dot_dimension_numbers<[1], [1], [0], [0], [0, 0, 1, 0], [], []>} : vector<16x32xf32>, vector<8x32xf32>, vector<16x8xf32> -> vector<16x8xf32>
    %136 = vector.broadcast %128 : vector<1x8xf32> to vector<16x8xf32>
    %137 = arith.addf %135, %136 : vector<16x8xf32>
    %cst_48 = arith.constant dense<0.000000e+00> : vector<16x8xf32>
    %138 = tpu.matmul %8, %125, %cst_48 {dimension_numbers = #tpu.dot_dimension_numbers<[1], [1], [0], [0], [0, 0, 1, 0], [], []>} : vector<16x32xf32>, vector<8x32xf32>, vector<16x8xf32> -> vector<16x8xf32>
    %139 = vector.broadcast %129 : vector<1x8xf32> to vector<16x8xf32>
    %140 = arith.addf %138, %139 : vector<16x8xf32>
    %141 = vector.shape_cast %134 : vector<16x8xf32> to vector<2x8x8xf32>
    %142 = vector.shape_cast %137 : vector<16x8xf32> to vector<2x8x8xf32>
    %143 = vector.shape_cast %140 : vector<16x8xf32> to vector<2x8x8xf32>
    "tpu.trace_start"() <{level = 10 : i32, message = "bqd,bkd->bqk"}> : () -> ()
    %cst_49 = arith.constant dense<0.000000e+00> : vector<2x8x8xf32>
    %144 = tpu.matmul %141, %142, %cst_49 {dimension_numbers = #tpu.dot_dimension_numbers<[2], [2], [1], [1], [0, 0, 0, 1, 1, 1], [0], [0]>} : vector<2x8x8xf32>, vector<2x8x8xf32>, vector<2x8x8xf32> -> vector<2x8x8xf32>
    "tpu.trace_stop"() : () -> ()
    %cst_50 = arith.constant dense<0xFF800000> : vector<2x8xf32>
    %145 = vector.multi_reduction <maximumf>, %144, %cst_50 [2] : vector<2x8x8xf32> to vector<2x8xf32>
    %146 = vector.shape_cast %145 : vector<2x8xf32> to vector<2x8x1xf32>
    %147 = vector.broadcast %146 : vector<2x8x1xf32> to vector<2x8x8xf32>
    %148 = arith.subf %144, %147 : vector<2x8x8xf32>
    %149 = math.exp %148 : vector<2x8x8xf32>
    %cst_51 = arith.constant dense<0.000000e+00> : vector<2x8xf32>
    %150 = vector.multi_reduction <add>, %149, %cst_51 [2] : vector<2x8x8xf32> to vector<2x8xf32>
    %151 = vector.shape_cast %150 : vector<2x8xf32> to vector<2x8x1xf32>
    %152 = tpu.reciprocal %151 {approx = true} : vector<2x8x1xf32> -> vector<2x8x1xf32>
    %153 = vector.broadcast %152 : vector<2x8x1xf32> to vector<2x8x8xf32>
    %154 = arith.mulf %149, %153 : vector<2x8x8xf32>
    "tpu.trace_start"() <{level = 10 : i32, message = "bqk,bkd->bqd"}> : () -> ()
    %cst_52 = arith.constant dense<0.000000e+00> : vector<2x8x8xf32>
    %155 = tpu.matmul %154, %143, %cst_52 {dimension_numbers = #tpu.dot_dimension_numbers<[2], [1], [1], [2], [0, 0, 0, 1, 1, 2], [0], [0]>} : vector<2x8x8xf32>, vector<2x8x8xf32>, vector<2x8x8xf32> -> vector<2x8x8xf32>
    "tpu.trace_stop"() : () -> ()
    %156 = vector.shape_cast %155 : vector<2x8x8xf32> to vector<16x8xf32>
    %cst_53 = arith.constant dense<0.000000e+00> : vector<16x32xf32>
    %157 = tpu.matmul %156, %126, %cst_53 {dimension_numbers = #tpu.dot_dimension_numbers<[1], [0], [0], [1], [0, 0, 1, 1], [], []>} : vector<16x8xf32>, vector<8x32xf32>, vector<16x32xf32> -> vector<16x32xf32>
    %158 = arith.addf %122, %157 : vector<16x32xf32>
    %159 = vector.extract_strided_slice %6 {offsets = [3, 0], sizes = [1, 32], strides = [1, 1]} : vector<19x32xf32> to vector<1x32xf32>
    %160 = vector.broadcast %159 : vector<1x32xf32> to vector<16x32xf32>
    %161 = arith.addf %158, %160 : vector<16x32xf32>
    %162 = arith.addf %8, %161 : vector<16x32xf32>
    %163 = vector.extract_strided_slice %6 {offsets = [5, 0], sizes = [1, 32], strides = [1, 1]} : vector<19x32xf32> to vector<1x32xf32>
    %164 = vector.extract_strided_slice %6 {offsets = [6, 0], sizes = [1, 32], strides = [1, 1]} : vector<19x32xf32> to vector<1x32xf32>
    %cst_54 = arith.constant dense<0.000000e+00> : vector<16xf32>
    %165 = vector.multi_reduction <add>, %162, %cst_54 [1] : vector<16x32xf32> to vector<16xf32>
    %166 = vector.shape_cast %165 : vector<16xf32> to vector<16x1xf32>
    %cst_55 = arith.constant 3.200000e+01 : f32
    %167 = vector.broadcast %cst_55 : f32 to vector<16x1xf32>
    %168 = arith.divf %166, %167 : vector<16x1xf32>
    %169 = vector.broadcast %168 : vector<16x1xf32> to vector<16x32xf32>
    %170 = arith.subf %162, %169 : vector<16x32xf32>
    %171 = arith.mulf %170, %170 : vector<16x32xf32>
    %cst_56 = arith.constant dense<0.000000e+00> : vector<16xf32>
    %172 = vector.multi_reduction <add>, %171, %cst_56 [1] : vector<16x32xf32> to vector<16xf32>
    %173 = vector.shape_cast %172 : vector<16xf32> to vector<16x1xf32>
    %cst_57 = arith.constant 3.200000e+01 : f32
    %174 = vector.broadcast %cst_57 : f32 to vector<16x1xf32>
    %175 = arith.divf %173, %174 : vector<16x1xf32>
    %cst_58 = arith.constant 9.99999974E-6 : f32
    %176 = vector.broadcast %cst_58 : f32 to vector<16x1xf32>
    %177 = arith.addf %175, %176 : vector<16x1xf32>
    %178 = math.rsqrt %177 : vector<16x1xf32>
    %179 = vector.broadcast %178 : vector<16x1xf32> to vector<16x32xf32>
    %180 = arith.mulf %170, %179 : vector<16x32xf32>
    %181 = vector.broadcast %163 : vector<1x32xf32> to vector<16x32xf32>
    %182 = arith.mulf %180, %181 : vector<16x32xf32>
    %183 = vector.broadcast %164 : vector<1x32xf32> to vector<16x32xf32>
    %184 = arith.addf %182, %183 : vector<16x32xf32>
    %185 = arith.truncf %184 : vector<16x32xf32> to vector<16x32xbf16>
    %cst_59 = arith.constant dense<0.000000e+00> : vector<16x2048xf32>
    %186 = tpu.matmul %185, %12, %cst_59 {dimension_numbers = #tpu.dot_dimension_numbers<[1], [1], [0], [0], [0, 0, 1, 0], [], []>} : vector<16x32xbf16>, vector<2048x32xbf16>, vector<16x2048xf32> -> vector<16x2048xf32>
    %187 = vector.broadcast %13 : vector<1x2048xf32> to vector<16x2048xf32>
    %188 = arith.addf %186, %187 : vector<16x2048xf32>
    %cst_60 = arith.constant 0.000000e+00 : f32
    %189 = vector.broadcast %cst_60 : f32 to vector<16x2048xf32>
    %190 = arith.maximumf %188, %189 : vector<16x2048xf32>
    %191 = arith.truncf %190 : vector<16x2048xf32> to vector<16x2048xbf16>
    %cst_61 = arith.constant dense<0.000000e+00> : vector<16x32xf32>
    %192 = tpu.matmul %191, %15, %cst_61 {dimension_numbers = #tpu.dot_dimension_numbers<[1], [1], [0], [0], [0, 0, 1, 0], [], []>} : vector<16x2048xbf16>, vector<32x2048xbf16>, vector<16x32xf32> -> vector<16x32xf32>
    %193 = vector.extract_strided_slice %6 {offsets = [4, 0], sizes = [1, 32], strides = [1, 1]} : vector<19x32xf32> to vector<1x32xf32>
    %194 = vector.broadcast %193 : vector<1x32xf32> to vector<16x32xf32>
    %195 = arith.addf %192, %194 : vector<16x32xf32>
    %196 = arith.addf %184, %195 : vector<16x32xf32>
    %197 = vector.extract_strided_slice %6 {offsets = [7, 0], sizes = [1, 32], strides = [1, 1]} : vector<19x32xf32> to vector<1x32xf32>
    %198 = vector.extract_strided_slice %6 {offsets = [8, 0], sizes = [1, 32], strides = [1, 1]} : vector<19x32xf32> to vector<1x32xf32>
    %cst_62 = arith.constant dense<0.000000e+00> : vector<16xf32>
    %199 = vector.multi_reduction <add>, %196, %cst_62 [1] : vector<16x32xf32> to vector<16xf32>
    %200 = vector.shape_cast %199 : vector<16xf32> to vector<16x1xf32>
    %cst_63 = arith.constant 3.200000e+01 : f32
    %201 = vector.broadcast %cst_63 : f32 to vector<16x1xf32>
    %202 = arith.divf %200, %201 : vector<16x1xf32>
    %203 = vector.broadcast %202 : vector<16x1xf32> to vector<16x32xf32>
    %204 = arith.subf %196, %203 : vector<16x32xf32>
    %205 = arith.mulf %204, %204 : vector<16x32xf32>
    %cst_64 = arith.constant dense<0.000000e+00> : vector<16xf32>
    %206 = vector.multi_reduction <add>, %205, %cst_64 [1] : vector<16x32xf32> to vector<16xf32>
    %207 = vector.shape_cast %206 : vector<16xf32> to vector<16x1xf32>
    %cst_65 = arith.constant 3.200000e+01 : f32
    %208 = vector.broadcast %cst_65 : f32 to vector<16x1xf32>
    %209 = arith.divf %207, %208 : vector<16x1xf32>
    %cst_66 = arith.constant 9.99999974E-6 : f32
    %210 = vector.broadcast %cst_66 : f32 to vector<16x1xf32>
    %211 = arith.addf %209, %210 : vector<16x1xf32>
    %212 = math.rsqrt %211 : vector<16x1xf32>
    %213 = vector.broadcast %212 : vector<16x1xf32> to vector<16x32xf32>
    %214 = arith.mulf %204, %213 : vector<16x32xf32>
    %215 = vector.broadcast %197 : vector<1x32xf32> to vector<16x32xf32>
    %216 = arith.mulf %214, %215 : vector<16x32xf32>
    %217 = vector.broadcast %198 : vector<1x32xf32> to vector<16x32xf32>
    %218 = arith.addf %216, %217 : vector<16x32xf32>
    %219 = vector.extract_strided_slice %2 {offsets = [1, 0, 0], sizes = [1, 128, 32], strides = [1, 1, 1]} : vector<2x128x32xf32> to vector<1x128x32xf32>
    %220 = vector.shape_cast %219 : vector<1x128x32xf32> to vector<128x32xf32>
    %221 = vector.extract_strided_slice %3 {offsets = [1, 0, 0], sizes = [1, 2048, 32], strides = [1, 1, 1]} : vector<2x2048x32xbf16> to vector<1x2048x32xbf16>
    %222 = vector.shape_cast %221 : vector<1x2048x32xbf16> to vector<2048x32xbf16>
    %223 = vector.extract_strided_slice %5 {offsets = [1, 0], sizes = [1, 2048], strides = [1, 1]} : vector<2x2048xf32> to vector<1x2048xf32>
    %224 = vector.extract_strided_slice %4 {offsets = [1, 0, 0], sizes = [1, 32, 2048], strides = [1, 1, 1]} : vector<2x32x2048xbf16> to vector<1x32x2048xbf16>
    %225 = vector.shape_cast %224 : vector<1x32x2048xbf16> to vector<32x2048xbf16>
    %226 = vector.extract_strided_slice %220 {offsets = [0, 0], sizes = [8, 32], strides = [1, 1]} : vector<128x32xf32> to vector<8x32xf32>
    %227 = vector.extract_strided_slice %220 {offsets = [32, 0], sizes = [8, 32], strides = [1, 1]} : vector<128x32xf32> to vector<8x32xf32>
    %228 = vector.extract_strided_slice %220 {offsets = [64, 0], sizes = [8, 32], strides = [1, 1]} : vector<128x32xf32> to vector<8x32xf32>
    %229 = vector.extract_strided_slice %220 {offsets = [96, 0], sizes = [8, 32], strides = [1, 1]} : vector<128x32xf32> to vector<8x32xf32>
    %230 = vector.extract_strided_slice %6 {offsets = [9, 0], sizes = [1, 8], strides = [1, 1]} : vector<19x32xf32> to vector<1x8xf32>
    %231 = vector.extract_strided_slice %6 {offsets = [10, 0], sizes = [1, 8], strides = [1, 1]} : vector<19x32xf32> to vector<1x8xf32>
    %232 = vector.extract_strided_slice %6 {offsets = [11, 0], sizes = [1, 8], strides = [1, 1]} : vector<19x32xf32> to vector<1x8xf32>
    %cst_67 = arith.constant dense<0.000000e+00> : vector<16x8xf32>
    %233 = tpu.matmul %218, %226, %cst_67 {dimension_numbers = #tpu.dot_dimension_numbers<[1], [1], [0], [0], [0, 0, 1, 0], [], []>} : vector<16x32xf32>, vector<8x32xf32>, vector<16x8xf32> -> vector<16x8xf32>
    %234 = vector.broadcast %230 : vector<1x8xf32> to vector<16x8xf32>
    %235 = arith.addf %233, %234 : vector<16x8xf32>
    %cst_68 = arith.constant 0.353553385 : f32
    %236 = vector.broadcast %cst_68 : f32 to vector<16x8xf32>
    %237 = arith.mulf %235, %236 : vector<16x8xf32>
    %cst_69 = arith.constant dense<0.000000e+00> : vector<16x8xf32>
    %238 = tpu.matmul %218, %227, %cst_69 {dimension_numbers = #tpu.dot_dimension_numbers<[1], [1], [0], [0], [0, 0, 1, 0], [], []>} : vector<16x32xf32>, vector<8x32xf32>, vector<16x8xf32> -> vector<16x8xf32>
    %239 = vector.broadcast %231 : vector<1x8xf32> to vector<16x8xf32>
    %240 = arith.addf %238, %239 : vector<16x8xf32>
    %cst_70 = arith.constant dense<0.000000e+00> : vector<16x8xf32>
    %241 = tpu.matmul %218, %228, %cst_70 {dimension_numbers = #tpu.dot_dimension_numbers<[1], [1], [0], [0], [0, 0, 1, 0], [], []>} : vector<16x32xf32>, vector<8x32xf32>, vector<16x8xf32> -> vector<16x8xf32>
    %242 = vector.broadcast %232 : vector<1x8xf32> to vector<16x8xf32>
    %243 = arith.addf %241, %242 : vector<16x8xf32>
    %244 = vector.shape_cast %237 : vector<16x8xf32> to vector<2x8x8xf32>
    %245 = vector.shape_cast %240 : vector<16x8xf32> to vector<2x8x8xf32>
    %246 = vector.shape_cast %243 : vector<16x8xf32> to vector<2x8x8xf32>
    "tpu.trace_start"() <{level = 10 : i32, message = "bqd,bkd->bqk"}> : () -> ()
    %cst_71 = arith.constant dense<0.000000e+00> : vector<2x8x8xf32>
    %247 = tpu.matmul %244, %245, %cst_71 {dimension_numbers = #tpu.dot_dimension_numbers<[2], [2], [1], [1], [0, 0, 0, 1, 1, 1], [0], [0]>} : vector<2x8x8xf32>, vector<2x8x8xf32>, vector<2x8x8xf32> -> vector<2x8x8xf32>
    "tpu.trace_stop"() : () -> ()
    %cst_72 = arith.constant dense<0xFF800000> : vector<2x8xf32>
    %248 = vector.multi_reduction <maximumf>, %247, %cst_72 [2] : vector<2x8x8xf32> to vector<2x8xf32>
    %249 = vector.shape_cast %248 : vector<2x8xf32> to vector<2x8x1xf32>
    %250 = vector.broadcast %249 : vector<2x8x1xf32> to vector<2x8x8xf32>
    %251 = arith.subf %247, %250 : vector<2x8x8xf32>
    %252 = math.exp %251 : vector<2x8x8xf32>
    %cst_73 = arith.constant dense<0.000000e+00> : vector<2x8xf32>
    %253 = vector.multi_reduction <add>, %252, %cst_73 [2] : vector<2x8x8xf32> to vector<2x8xf32>
    %254 = vector.shape_cast %253 : vector<2x8xf32> to vector<2x8x1xf32>
    %255 = tpu.reciprocal %254 {approx = true} : vector<2x8x1xf32> -> vector<2x8x1xf32>
    %256 = vector.broadcast %255 : vector<2x8x1xf32> to vector<2x8x8xf32>
    %257 = arith.mulf %252, %256 : vector<2x8x8xf32>
    "tpu.trace_start"() <{level = 10 : i32, message = "bqk,bkd->bqd"}> : () -> ()
    %cst_74 = arith.constant dense<0.000000e+00> : vector<2x8x8xf32>
    %258 = tpu.matmul %257, %246, %cst_74 {dimension_numbers = #tpu.dot_dimension_numbers<[2], [1], [1], [2], [0, 0, 0, 1, 1, 2], [0], [0]>} : vector<2x8x8xf32>, vector<2x8x8xf32>, vector<2x8x8xf32> -> vector<2x8x8xf32>
    "tpu.trace_stop"() : () -> ()
    %259 = vector.shape_cast %258 : vector<2x8x8xf32> to vector<16x8xf32>
    %cst_75 = arith.constant dense<0.000000e+00> : vector<16x32xf32>
    %260 = tpu.matmul %259, %229, %cst_75 {dimension_numbers = #tpu.dot_dimension_numbers<[1], [0], [0], [1], [0, 0, 1, 1], [], []>} : vector<16x8xf32>, vector<8x32xf32>, vector<16x32xf32> -> vector<16x32xf32>
    %261 = vector.extract_strided_slice %220 {offsets = [8, 0], sizes = [8, 32], strides = [1, 1]} : vector<128x32xf32> to vector<8x32xf32>
    %262 = vector.extract_strided_slice %220 {offsets = [40, 0], sizes = [8, 32], strides = [1, 1]} : vector<128x32xf32> to vector<8x32xf32>
    %263 = vector.extract_strided_slice %220 {offsets = [72, 0], sizes = [8, 32], strides = [1, 1]} : vector<128x32xf32> to vector<8x32xf32>
    %264 = vector.extract_strided_slice %220 {offsets = [104, 0], sizes = [8, 32], strides = [1, 1]} : vector<128x32xf32> to vector<8x32xf32>
    %265 = vector.extract_strided_slice %6 {offsets = [9, 8], sizes = [1, 8], strides = [1, 1]} : vector<19x32xf32> to vector<1x8xf32>
    %266 = vector.extract_strided_slice %6 {offsets = [10, 8], sizes = [1, 8], strides = [1, 1]} : vector<19x32xf32> to vector<1x8xf32>
    %267 = vector.extract_strided_slice %6 {offsets = [11, 8], sizes = [1, 8], strides = [1, 1]} : vector<19x32xf32> to vector<1x8xf32>
    %cst_76 = arith.constant dense<0.000000e+00> : vector<16x8xf32>
    %268 = tpu.matmul %218, %261, %cst_76 {dimension_numbers = #tpu.dot_dimension_numbers<[1], [1], [0], [0], [0, 0, 1, 0], [], []>} : vector<16x32xf32>, vector<8x32xf32>, vector<16x8xf32> -> vector<16x8xf32>
    %269 = vector.broadcast %265 : vector<1x8xf32> to vector<16x8xf32>
    %270 = arith.addf %268, %269 : vector<16x8xf32>
    %cst_77 = arith.constant 0.353553385 : f32
    %271 = vector.broadcast %cst_77 : f32 to vector<16x8xf32>
    %272 = arith.mulf %270, %271 : vector<16x8xf32>
    %cst_78 = arith.constant dense<0.000000e+00> : vector<16x8xf32>
    %273 = tpu.matmul %218, %262, %cst_78 {dimension_numbers = #tpu.dot_dimension_numbers<[1], [1], [0], [0], [0, 0, 1, 0], [], []>} : vector<16x32xf32>, vector<8x32xf32>, vector<16x8xf32> -> vector<16x8xf32>
    %274 = vector.broadcast %266 : vector<1x8xf32> to vector<16x8xf32>
    %275 = arith.addf %273, %274 : vector<16x8xf32>
    %cst_79 = arith.constant dense<0.000000e+00> : vector<16x8xf32>
    %276 = tpu.matmul %218, %263, %cst_79 {dimension_numbers = #tpu.dot_dimension_numbers<[1], [1], [0], [0], [0, 0, 1, 0], [], []>} : vector<16x32xf32>, vector<8x32xf32>, vector<16x8xf32> -> vector<16x8xf32>
    %277 = vector.broadcast %267 : vector<1x8xf32> to vector<16x8xf32>
    %278 = arith.addf %276, %277 : vector<16x8xf32>
    %279 = vector.shape_cast %272 : vector<16x8xf32> to vector<2x8x8xf32>
    %280 = vector.shape_cast %275 : vector<16x8xf32> to vector<2x8x8xf32>
    %281 = vector.shape_cast %278 : vector<16x8xf32> to vector<2x8x8xf32>
    "tpu.trace_start"() <{level = 10 : i32, message = "bqd,bkd->bqk"}> : () -> ()
    %cst_80 = arith.constant dense<0.000000e+00> : vector<2x8x8xf32>
    %282 = tpu.matmul %279, %280, %cst_80 {dimension_numbers = #tpu.dot_dimension_numbers<[2], [2], [1], [1], [0, 0, 0, 1, 1, 1], [0], [0]>} : vector<2x8x8xf32>, vector<2x8x8xf32>, vector<2x8x8xf32> -> vector<2x8x8xf32>
    "tpu.trace_stop"() : () -> ()
    %cst_81 = arith.constant dense<0xFF800000> : vector<2x8xf32>
    %283 = vector.multi_reduction <maximumf>, %282, %cst_81 [2] : vector<2x8x8xf32> to vector<2x8xf32>
    %284 = vector.shape_cast %283 : vector<2x8xf32> to vector<2x8x1xf32>
    %285 = vector.broadcast %284 : vector<2x8x1xf32> to vector<2x8x8xf32>
    %286 = arith.subf %282, %285 : vector<2x8x8xf32>
    %287 = math.exp %286 : vector<2x8x8xf32>
    %cst_82 = arith.constant dense<0.000000e+00> : vector<2x8xf32>
    %288 = vector.multi_reduction <add>, %287, %cst_82 [2] : vector<2x8x8xf32> to vector<2x8xf32>
    %289 = vector.shape_cast %288 : vector<2x8xf32> to vector<2x8x1xf32>
    %290 = tpu.reciprocal %289 {approx = true} : vector<2x8x1xf32> -> vector<2x8x1xf32>
    %291 = vector.broadcast %290 : vector<2x8x1xf32> to vector<2x8x8xf32>
    %292 = arith.mulf %287, %291 : vector<2x8x8xf32>
    "tpu.trace_start"() <{level = 10 : i32, message = "bqk,bkd->bqd"}> : () -> ()
    %cst_83 = arith.constant dense<0.000000e+00> : vector<2x8x8xf32>
    %293 = tpu.matmul %292, %281, %cst_83 {dimension_numbers = #tpu.dot_dimension_numbers<[2], [1], [1], [2], [0, 0, 0, 1, 1, 2], [0], [0]>} : vector<2x8x8xf32>, vector<2x8x8xf32>, vector<2x8x8xf32> -> vector<2x8x8xf32>
    "tpu.trace_stop"() : () -> ()
    %294 = vector.shape_cast %293 : vector<2x8x8xf32> to vector<16x8xf32>
    %cst_84 = arith.constant dense<0.000000e+00> : vector<16x32xf32>
    %295 = tpu.matmul %294, %264, %cst_84 {dimension_numbers = #tpu.dot_dimension_numbers<[1], [0], [0], [1], [0, 0, 1, 1], [], []>} : vector<16x8xf32>, vector<8x32xf32>, vector<16x32xf32> -> vector<16x32xf32>
    %296 = arith.addf %260, %295 : vector<16x32xf32>
    %297 = vector.extract_strided_slice %220 {offsets = [16, 0], sizes = [8, 32], strides = [1, 1]} : vector<128x32xf32> to vector<8x32xf32>
    %298 = vector.extract_strided_slice %220 {offsets = [48, 0], sizes = [8, 32], strides = [1, 1]} : vector<128x32xf32> to vector<8x32xf32>
    %299 = vector.extract_strided_slice %220 {offsets = [80, 0], sizes = [8, 32], strides = [1, 1]} : vector<128x32xf32> to vector<8x32xf32>
    %300 = vector.extract_strided_slice %220 {offsets = [112, 0], sizes = [8, 32], strides = [1, 1]} : vector<128x32xf32> to vector<8x32xf32>
    %301 = vector.extract_strided_slice %6 {offsets = [9, 16], sizes = [1, 8], strides = [1, 1]} : vector<19x32xf32> to vector<1x8xf32>
    %302 = vector.extract_strided_slice %6 {offsets = [10, 16], sizes = [1, 8], strides = [1, 1]} : vector<19x32xf32> to vector<1x8xf32>
    %303 = vector.extract_strided_slice %6 {offsets = [11, 16], sizes = [1, 8], strides = [1, 1]} : vector<19x32xf32> to vector<1x8xf32>
    %cst_85 = arith.constant dense<0.000000e+00> : vector<16x8xf32>
    %304 = tpu.matmul %218, %297, %cst_85 {dimension_numbers = #tpu.dot_dimension_numbers<[1], [1], [0], [0], [0, 0, 1, 0], [], []>} : vector<16x32xf32>, vector<8x32xf32>, vector<16x8xf32> -> vector<16x8xf32>
    %305 = vector.broadcast %301 : vector<1x8xf32> to vector<16x8xf32>
    %306 = arith.addf %304, %305 : vector<16x8xf32>
    %cst_86 = arith.constant 0.353553385 : f32
    %307 = vector.broadcast %cst_86 : f32 to vector<16x8xf32>
    %308 = arith.mulf %306, %307 : vector<16x8xf32>
    %cst_87 = arith.constant dense<0.000000e+00> : vector<16x8xf32>
    %309 = tpu.matmul %218, %298, %cst_87 {dimension_numbers = #tpu.dot_dimension_numbers<[1], [1], [0], [0], [0, 0, 1, 0], [], []>} : vector<16x32xf32>, vector<8x32xf32>, vector<16x8xf32> -> vector<16x8xf32>
    %310 = vector.broadcast %302 : vector<1x8xf32> to vector<16x8xf32>
    %311 = arith.addf %309, %310 : vector<16x8xf32>
    %cst_88 = arith.constant dense<0.000000e+00> : vector<16x8xf32>
    %312 = tpu.matmul %218, %299, %cst_88 {dimension_numbers = #tpu.dot_dimension_numbers<[1], [1], [0], [0], [0, 0, 1, 0], [], []>} : vector<16x32xf32>, vector<8x32xf32>, vector<16x8xf32> -> vector<16x8xf32>
    %313 = vector.broadcast %303 : vector<1x8xf32> to vector<16x8xf32>
    %314 = arith.addf %312, %313 : vector<16x8xf32>
    %315 = vector.shape_cast %308 : vector<16x8xf32> to vector<2x8x8xf32>
    %316 = vector.shape_cast %311 : vector<16x8xf32> to vector<2x8x8xf32>
    %317 = vector.shape_cast %314 : vector<16x8xf32> to vector<2x8x8xf32>
    "tpu.trace_start"() <{level = 10 : i32, message = "bqd,bkd->bqk"}> : () -> ()
    %cst_89 = arith.constant dense<0.000000e+00> : vector<2x8x8xf32>
    %318 = tpu.matmul %315, %316, %cst_89 {dimension_numbers = #tpu.dot_dimension_numbers<[2], [2], [1], [1], [0, 0, 0, 1, 1, 1], [0], [0]>} : vector<2x8x8xf32>, vector<2x8x8xf32>, vector<2x8x8xf32> -> vector<2x8x8xf32>
    "tpu.trace_stop"() : () -> ()
    %cst_90 = arith.constant dense<0xFF800000> : vector<2x8xf32>
    %319 = vector.multi_reduction <maximumf>, %318, %cst_90 [2] : vector<2x8x8xf32> to vector<2x8xf32>
    %320 = vector.shape_cast %319 : vector<2x8xf32> to vector<2x8x1xf32>
    %321 = vector.broadcast %320 : vector<2x8x1xf32> to vector<2x8x8xf32>
    %322 = arith.subf %318, %321 : vector<2x8x8xf32>
    %323 = math.exp %322 : vector<2x8x8xf32>
    %cst_91 = arith.constant dense<0.000000e+00> : vector<2x8xf32>
    %324 = vector.multi_reduction <add>, %323, %cst_91 [2] : vector<2x8x8xf32> to vector<2x8xf32>
    %325 = vector.shape_cast %324 : vector<2x8xf32> to vector<2x8x1xf32>
    %326 = tpu.reciprocal %325 {approx = true} : vector<2x8x1xf32> -> vector<2x8x1xf32>
    %327 = vector.broadcast %326 : vector<2x8x1xf32> to vector<2x8x8xf32>
    %328 = arith.mulf %323, %327 : vector<2x8x8xf32>
    "tpu.trace_start"() <{level = 10 : i32, message = "bqk,bkd->bqd"}> : () -> ()
    %cst_92 = arith.constant dense<0.000000e+00> : vector<2x8x8xf32>
    %329 = tpu.matmul %328, %317, %cst_92 {dimension_numbers = #tpu.dot_dimension_numbers<[2], [1], [1], [2], [0, 0, 0, 1, 1, 2], [0], [0]>} : vector<2x8x8xf32>, vector<2x8x8xf32>, vector<2x8x8xf32> -> vector<2x8x8xf32>
    "tpu.trace_stop"() : () -> ()
    %330 = vector.shape_cast %329 : vector<2x8x8xf32> to vector<16x8xf32>
    %cst_93 = arith.constant dense<0.000000e+00> : vector<16x32xf32>
    %331 = tpu.matmul %330, %300, %cst_93 {dimension_numbers = #tpu.dot_dimension_numbers<[1], [0], [0], [1], [0, 0, 1, 1], [], []>} : vector<16x8xf32>, vector<8x32xf32>, vector<16x32xf32> -> vector<16x32xf32>
    %332 = arith.addf %296, %331 : vector<16x32xf32>
    %333 = vector.extract_strided_slice %220 {offsets = [24, 0], sizes = [8, 32], strides = [1, 1]} : vector<128x32xf32> to vector<8x32xf32>
    %334 = vector.extract_strided_slice %220 {offsets = [56, 0], sizes = [8, 32], strides = [1, 1]} : vector<128x32xf32> to vector<8x32xf32>
    %335 = vector.extract_strided_slice %220 {offsets = [88, 0], sizes = [8, 32], strides = [1, 1]} : vector<128x32xf32> to vector<8x32xf32>
    %336 = vector.extract_strided_slice %220 {offsets = [120, 0], sizes = [8, 32], strides = [1, 1]} : vector<128x32xf32> to vector<8x32xf32>
    %337 = vector.extract_strided_slice %6 {offsets = [9, 24], sizes = [1, 8], strides = [1, 1]} : vector<19x32xf32> to vector<1x8xf32>
    %338 = vector.extract_strided_slice %6 {offsets = [10, 24], sizes = [1, 8], strides = [1, 1]} : vector<19x32xf32> to vector<1x8xf32>
    %339 = vector.extract_strided_slice %6 {offsets = [11, 24], sizes = [1, 8], strides = [1, 1]} : vector<19x32xf32> to vector<1x8xf32>
    %cst_94 = arith.constant dense<0.000000e+00> : vector<16x8xf32>
    %340 = tpu.matmul %218, %333, %cst_94 {dimension_numbers = #tpu.dot_dimension_numbers<[1], [1], [0], [0], [0, 0, 1, 0], [], []>} : vector<16x32xf32>, vector<8x32xf32>, vector<16x8xf32> -> vector<16x8xf32>
    %341 = vector.broadcast %337 : vector<1x8xf32> to vector<16x8xf32>
    %342 = arith.addf %340, %341 : vector<16x8xf32>
    %cst_95 = arith.constant 0.353553385 : f32
    %343 = vector.broadcast %cst_95 : f32 to vector<16x8xf32>
    %344 = arith.mulf %342, %343 : vector<16x8xf32>
    %cst_96 = arith.constant dense<0.000000e+00> : vector<16x8xf32>
    %345 = tpu.matmul %218, %334, %cst_96 {dimension_numbers = #tpu.dot_dimension_numbers<[1], [1], [0], [0], [0, 0, 1, 0], [], []>} : vector<16x32xf32>, vector<8x32xf32>, vector<16x8xf32> -> vector<16x8xf32>
    %346 = vector.broadcast %338 : vector<1x8xf32> to vector<16x8xf32>
    %347 = arith.addf %345, %346 : vector<16x8xf32>
    %cst_97 = arith.constant dense<0.000000e+00> : vector<16x8xf32>
    %348 = tpu.matmul %218, %335, %cst_97 {dimension_numbers = #tpu.dot_dimension_numbers<[1], [1], [0], [0], [0, 0, 1, 0], [], []>} : vector<16x32xf32>, vector<8x32xf32>, vector<16x8xf32> -> vector<16x8xf32>
    %349 = vector.broadcast %339 : vector<1x8xf32> to vector<16x8xf32>
    %350 = arith.addf %348, %349 : vector<16x8xf32>
    %351 = vector.shape_cast %344 : vector<16x8xf32> to vector<2x8x8xf32>
    %352 = vector.shape_cast %347 : vector<16x8xf32> to vector<2x8x8xf32>
    %353 = vector.shape_cast %350 : vector<16x8xf32> to vector<2x8x8xf32>
    "tpu.trace_start"() <{level = 10 : i32, message = "bqd,bkd->bqk"}> : () -> ()
    %cst_98 = arith.constant dense<0.000000e+00> : vector<2x8x8xf32>
    %354 = tpu.matmul %351, %352, %cst_98 {dimension_numbers = #tpu.dot_dimension_numbers<[2], [2], [1], [1], [0, 0, 0, 1, 1, 1], [0], [0]>} : vector<2x8x8xf32>, vector<2x8x8xf32>, vector<2x8x8xf32> -> vector<2x8x8xf32>
    "tpu.trace_stop"() : () -> ()
    %cst_99 = arith.constant dense<0xFF800000> : vector<2x8xf32>
    %355 = vector.multi_reduction <maximumf>, %354, %cst_99 [2] : vector<2x8x8xf32> to vector<2x8xf32>
    %356 = vector.shape_cast %355 : vector<2x8xf32> to vector<2x8x1xf32>
    %357 = vector.broadcast %356 : vector<2x8x1xf32> to vector<2x8x8xf32>
    %358 = arith.subf %354, %357 : vector<2x8x8xf32>
    %359 = math.exp %358 : vector<2x8x8xf32>
    %cst_100 = arith.constant dense<0.000000e+00> : vector<2x8xf32>
    %360 = vector.multi_reduction <add>, %359, %cst_100 [2] : vector<2x8x8xf32> to vector<2x8xf32>
    %361 = vector.shape_cast %360 : vector<2x8xf32> to vector<2x8x1xf32>
    %362 = tpu.reciprocal %361 {approx = true} : vector<2x8x1xf32> -> vector<2x8x1xf32>
    %363 = vector.broadcast %362 : vector<2x8x1xf32> to vector<2x8x8xf32>
    %364 = arith.mulf %359, %363 : vector<2x8x8xf32>
    "tpu.trace_start"() <{level = 10 : i32, message = "bqk,bkd->bqd"}> : () -> ()
    %cst_101 = arith.constant dense<0.000000e+00> : vector<2x8x8xf32>
    %365 = tpu.matmul %364, %353, %cst_101 {dimension_numbers = #tpu.dot_dimension_numbers<[2], [1], [1], [2], [0, 0, 0, 1, 1, 2], [0], [0]>} : vector<2x8x8xf32>, vector<2x8x8xf32>, vector<2x8x8xf32> -> vector<2x8x8xf32>
    "tpu.trace_stop"() : () -> ()
    %366 = vector.shape_cast %365 : vector<2x8x8xf32> to vector<16x8xf32>
    %cst_102 = arith.constant dense<0.000000e+00> : vector<16x32xf32>
    %367 = tpu.matmul %366, %336, %cst_102 {dimension_numbers = #tpu.dot_dimension_numbers<[1], [0], [0], [1], [0, 0, 1, 1], [], []>} : vector<16x8xf32>, vector<8x32xf32>, vector<16x32xf32> -> vector<16x32xf32>
    %368 = arith.addf %332, %367 : vector<16x32xf32>
    %369 = vector.extract_strided_slice %6 {offsets = [12, 0], sizes = [1, 32], strides = [1, 1]} : vector<19x32xf32> to vector<1x32xf32>
    %370 = vector.broadcast %369 : vector<1x32xf32> to vector<16x32xf32>
    %371 = arith.addf %368, %370 : vector<16x32xf32>
    %372 = arith.addf %218, %371 : vector<16x32xf32>
    %373 = vector.extract_strided_slice %6 {offsets = [14, 0], sizes = [1, 32], strides = [1, 1]} : vector<19x32xf32> to vector<1x32xf32>
    %374 = vector.extract_strided_slice %6 {offsets = [15, 0], sizes = [1, 32], strides = [1, 1]} : vector<19x32xf32> to vector<1x32xf32>
    %cst_103 = arith.constant dense<0.000000e+00> : vector<16xf32>
    %375 = vector.multi_reduction <add>, %372, %cst_103 [1] : vector<16x32xf32> to vector<16xf32>
    %376 = vector.shape_cast %375 : vector<16xf32> to vector<16x1xf32>
    %cst_104 = arith.constant 3.200000e+01 : f32
    %377 = vector.broadcast %cst_104 : f32 to vector<16x1xf32>
    %378 = arith.divf %376, %377 : vector<16x1xf32>
    %379 = vector.broadcast %378 : vector<16x1xf32> to vector<16x32xf32>
    %380 = arith.subf %372, %379 : vector<16x32xf32>
    %381 = arith.mulf %380, %380 : vector<16x32xf32>
    %cst_105 = arith.constant dense<0.000000e+00> : vector<16xf32>
    %382 = vector.multi_reduction <add>, %381, %cst_105 [1] : vector<16x32xf32> to vector<16xf32>
    %383 = vector.shape_cast %382 : vector<16xf32> to vector<16x1xf32>
    %cst_106 = arith.constant 3.200000e+01 : f32
    %384 = vector.broadcast %cst_106 : f32 to vector<16x1xf32>
    %385 = arith.divf %383, %384 : vector<16x1xf32>
    %cst_107 = arith.constant 9.99999974E-6 : f32
    %386 = vector.broadcast %cst_107 : f32 to vector<16x1xf32>
    %387 = arith.addf %385, %386 : vector<16x1xf32>
    %388 = math.rsqrt %387 : vector<16x1xf32>
    %389 = vector.broadcast %388 : vector<16x1xf32> to vector<16x32xf32>
    %390 = arith.mulf %380, %389 : vector<16x32xf32>
    %391 = vector.broadcast %373 : vector<1x32xf32> to vector<16x32xf32>
    %392 = arith.mulf %390, %391 : vector<16x32xf32>
    %393 = vector.broadcast %374 : vector<1x32xf32> to vector<16x32xf32>
    %394 = arith.addf %392, %393 : vector<16x32xf32>
    %395 = arith.truncf %394 : vector<16x32xf32> to vector<16x32xbf16>
    %cst_108 = arith.constant dense<0.000000e+00> : vector<16x2048xf32>
    %396 = tpu.matmul %395, %222, %cst_108 {dimension_numbers = #tpu.dot_dimension_numbers<[1], [1], [0], [0], [0, 0, 1, 0], [], []>} : vector<16x32xbf16>, vector<2048x32xbf16>, vector<16x2048xf32> -> vector<16x2048xf32>
    %397 = vector.broadcast %223 : vector<1x2048xf32> to vector<16x2048xf32>
    %398 = arith.addf %396, %397 : vector<16x2048xf32>
    %cst_109 = arith.constant 0.000000e+00 : f32
    %399 = vector.broadcast %cst_109 : f32 to vector<16x2048xf32>
    %400 = arith.maximumf %398, %399 : vector<16x2048xf32>
    %401 = arith.truncf %400 : vector<16x2048xf32> to vector<16x2048xbf16>
    %cst_110 = arith.constant dense<0.000000e+00> : vector<16x32xf32>
    %402 = tpu.matmul %401, %225, %cst_110 {dimension_numbers = #tpu.dot_dimension_numbers<[1], [1], [0], [0], [0, 0, 1, 0], [], []>} : vector<16x2048xbf16>, vector<32x2048xbf16>, vector<16x32xf32> -> vector<16x32xf32>
    %403 = vector.extract_strided_slice %6 {offsets = [13, 0], sizes = [1, 32], strides = [1, 1]} : vector<19x32xf32> to vector<1x32xf32>
    %404 = vector.broadcast %403 : vector<1x32xf32> to vector<16x32xf32>
    %405 = arith.addf %402, %404 : vector<16x32xf32>
    %406 = arith.addf %394, %405 : vector<16x32xf32>
    %407 = vector.extract_strided_slice %6 {offsets = [16, 0], sizes = [1, 32], strides = [1, 1]} : vector<19x32xf32> to vector<1x32xf32>
    %408 = vector.extract_strided_slice %6 {offsets = [17, 0], sizes = [1, 32], strides = [1, 1]} : vector<19x32xf32> to vector<1x32xf32>
    %cst_111 = arith.constant dense<0.000000e+00> : vector<16xf32>
    %409 = vector.multi_reduction <add>, %406, %cst_111 [1] : vector<16x32xf32> to vector<16xf32>
    %410 = vector.shape_cast %409 : vector<16xf32> to vector<16x1xf32>
    %cst_112 = arith.constant 3.200000e+01 : f32
    %411 = vector.broadcast %cst_112 : f32 to vector<16x1xf32>
    %412 = arith.divf %410, %411 : vector<16x1xf32>
    %413 = vector.broadcast %412 : vector<16x1xf32> to vector<16x32xf32>
    %414 = arith.subf %406, %413 : vector<16x32xf32>
    %415 = arith.mulf %414, %414 : vector<16x32xf32>
    %cst_113 = arith.constant dense<0.000000e+00> : vector<16xf32>
    %416 = vector.multi_reduction <add>, %415, %cst_113 [1] : vector<16x32xf32> to vector<16xf32>
    %417 = vector.shape_cast %416 : vector<16xf32> to vector<16x1xf32>
    %cst_114 = arith.constant 3.200000e+01 : f32
    %418 = vector.broadcast %cst_114 : f32 to vector<16x1xf32>
    %419 = arith.divf %417, %418 : vector<16x1xf32>
    %cst_115 = arith.constant 9.99999974E-6 : f32
    %420 = vector.broadcast %cst_115 : f32 to vector<16x1xf32>
    %421 = arith.addf %419, %420 : vector<16x1xf32>
    %422 = math.rsqrt %421 : vector<16x1xf32>
    %423 = vector.broadcast %422 : vector<16x1xf32> to vector<16x32xf32>
    %424 = arith.mulf %414, %423 : vector<16x32xf32>
    %425 = vector.broadcast %407 : vector<1x32xf32> to vector<16x32xf32>
    %426 = arith.mulf %424, %425 : vector<16x32xf32>
    %427 = vector.broadcast %408 : vector<1x32xf32> to vector<16x32xf32>
    %428 = arith.addf %426, %427 : vector<16x32xf32>
    %429 = vector.shape_cast %428 : vector<16x32xf32> to vector<2x8x32xf32>
    %cst_116 = arith.constant dense<0.000000e+00> : vector<2x32xf32>
    %430 = vector.multi_reduction <add>, %429, %cst_116 [1] : vector<2x8x32xf32> to vector<2x32xf32>
    %cst_117 = arith.constant 8.000000e+00 : f32
    %431 = vector.broadcast %cst_117 : f32 to vector<2x32xf32>
    %432 = arith.divf %430, %431 : vector<2x32xf32>
    %433 = vector.extract_strided_slice %7 {offsets = [0, 0], sizes = [32, 32], strides = [1, 1]} : vector<64x32xf32> to vector<32x32xf32>
    %cst_118 = arith.constant dense<0.000000e+00> : vector<2x32xf32>
    %434 = tpu.matmul %432, %433, %cst_118 {dimension_numbers = #tpu.dot_dimension_numbers<[1], [1], [0], [0], [0, 0, 1, 0], [], []>} : vector<2x32xf32>, vector<32x32xf32>, vector<2x32xf32> -> vector<2x32xf32>
    %435 = vector.extract_strided_slice %7 {offsets = [32, 0], sizes = [32, 32], strides = [1, 1]} : vector<64x32xf32> to vector<32x32xf32>
    %cst_119 = arith.constant dense<0.000000e+00> : vector<16x32xf32>
    %436 = tpu.matmul %428, %435, %cst_119 {dimension_numbers = #tpu.dot_dimension_numbers<[1], [1], [0], [0], [0, 0, 1, 0], [], []>} : vector<16x32xf32>, vector<32x32xf32>, vector<16x32xf32> -> vector<16x32xf32>
    %437 = vector.shape_cast %436 : vector<16x32xf32> to vector<2x8x32xf32>
    %438 = vector.extract_strided_slice %6 {offsets = [18, 0], sizes = [1, 32], strides = [1, 1]} : vector<19x32xf32> to vector<1x32xf32>
    %439 = vector.shape_cast %434 : vector<2x32xf32> to vector<2x1x32xf32>
    %440 = vector.broadcast %439 : vector<2x1x32xf32> to vector<2x8x32xf32>
    %441 = arith.addf %440, %437 : vector<2x8x32xf32>
    %442 = math.tanh %441 : vector<2x8x32xf32>
    %443 = vector.shape_cast %438 : vector<1x32xf32> to vector<1x1x32xf32>
    %444 = vector.broadcast %443 : vector<1x1x32xf32> to vector<2x8x32xf32>
    %445 = arith.mulf %444, %442 : vector<2x8x32xf32>
    %cst_120 = arith.constant dense<0.000000e+00> : vector<2x8xf32>
    %446 = vector.multi_reduction <add>, %445, %cst_120 [2] : vector<2x8x32xf32> to vector<2x8xf32>
    %c0_i32 = arith.constant 0 : i32
    %447 = vector.broadcast %c0_i32 : i32 to vector<2x8xi32>
    %448 = arith.cmpi ne, %1, %447 : vector<2x8xi32>
    %cst_121 = arith.constant 0xFF800000 : f32
    %449 = vector.broadcast %cst_121 : f32 to vector<2x8xf32>
    %450 = arith.select %448, %449, %446 : vector<2x8xi1>, vector<2x8xf32>
    %c0_122 = arith.constant 0 : index
    %c0_123 = arith.constant 0 : index
    %451 = vector.load %arg8[%c0_122, %c0_123] : memref<2x8xf32, #tpu.memory_space<vmem>>, vector<2x8xf32>
    tpu.vector_store %arg8[%c0_122, %c0_123], %450 {strides = array<i32>} : memref<2x8xf32, #tpu.memory_space<vmem>>, vector<2x8xf32>,
    return
  }
}

</mosaic_0001>

<llo_original>
// kernel: tpu_custom_call.1
$region0: #{tpu_custom_call.1}
  #allocation0 [shape = 'u32[]', space=smem, size = 0x4, offset = 0x4, fixed_abs, tag = 'smem constant byte address 0x4 - core index']
  #allocation1 [shape = 'u32[144,128]{1,0:T(1,128)}', space=vmem, size = 0x12000, scoped, tag = 'internal scratch']
  %s0 = inlined_call_operand.vmem [shape: f32[2,8,32], index: 0, kind: input, shape index: {}]
  %s1 = inlined_call_operand.vmem [shape: s32[2,8], index: 1, kind: input, shape index: {}]
  %s2 = inlined_call_operand.vmem [shape: f32[2,128,32], index: 2, kind: input, shape index: {}]
  %s3 = inlined_call_operand.vmem [shape: bf16[2,2048,32], index: 3, kind: input, shape index: {}]
  %s4 = inlined_call_operand.vmem [shape: bf16[2,32,2048], index: 4, kind: input, shape index: {}]
  %s5 = inlined_call_operand.vmem [shape: f32[2,2048], index: 5, kind: input, shape index: {}]
  %s6 = inlined_call_operand.vmem [shape: f32[19,32], index: 6, kind: input, shape index: {}]
  %s7 = inlined_call_operand.vmem [shape: f32[64,32], index: 7, kind: input, shape index: {}]
  %s8 = inlined_call_operand.hbm [shape: f32[2,8], index: 8, kind: output, shape index: {}]
  %s9 = sld [smem:[#allocation0]]
  $region42: #{tpu_custom_call.1} parent=0
    _
  %s11 = ssub.s32 1, %s9
  %s12 = scalar_select 0, %s11, %s9
  $region1: #{tpu_custom_call.1} parent=0
    #allocation2 [shape = 'u8[1024]{0}', space=vmem, size = 0x400, scoped, tag = 'output window, operand 0, single buffered']
    #allocation3 [shape = 's32[1]{0}', space=sflag, size = 0x4, scoped, tag = 'scoped memory for tpu_custom_call.1']
    %13 = vsyncpa [#allocation3], 0
    // Predicated region
    $region2: #{tpu_custom_call.1} parent=1 // pred_check
      _
    $region3: #{tpu_custom_call.1} parent=1 // pred_check_branch
      %15 = sbr.rel (0) target = $region5
    $region4: #{tpu_custom_call.1} parent=1 // pred_region
      _
    $region5: #{tpu_custom_call.1} parent=1 // pred_fallthru
      _
    // Predicated region
    $region6: #{tpu_custom_call.1} parent=1 // pred_check
      _
    $region7: #{tpu_custom_call.1} parent=1 // pred_check_branch
      %17 = sbr.rel (0) target = $region9
    $region8: #{tpu_custom_call.1} parent=1 // pred_region
      _
    $region9: #{tpu_custom_call.1} parent=1 // pred_fallthru
      _
    // Predicated region
    $region10: #{tpu_custom_call.1} parent=1 // pred_check
      _
    $region11: #{tpu_custom_call.1} parent=1 // pred_check_branch
      %19 = sbr.rel (0) target = $region13
    $region12: #{tpu_custom_call.1} parent=1 // pred_region
      _
    $region13: #{tpu_custom_call.1} parent=1 // pred_fallthru
      _
    // Predicated region
    $region14: #{tpu_custom_call.1} parent=1 // pred_check
      _
    $region15: #{tpu_custom_call.1} parent=1 // pred_check_branch
      %21 = sbr.rel (0) target = $region17
    $region16: #{tpu_custom_call.1} parent=1 // pred_region
      _
    $region17: #{tpu_custom_call.1} parent=1 // pred_fallthru
      _
    // Predicated region
    $region18: #{tpu_custom_call.1} parent=1 // pred_check
      _
    $region19: #{tpu_custom_call.1} parent=1 // pred_check_branch
      %23 = sbr.rel (0) target = $region21
    $region20: #{tpu_custom_call.1} parent=1 // pred_region
      _
    $region21: #{tpu_custom_call.1} parent=1 // pred_fallthru
      _
    // Predicated region
    $region22: #{tpu_custom_call.1} parent=1 // pred_check
      _
    $region23: #{tpu_custom_call.1} parent=1 // pred_check_branch
      %25 = sbr.rel (0) target = $region25
    $region24: #{tpu_custom_call.1} parent=1 // pred_region
      _
    $region25: #{tpu_custom_call.1} parent=1 // pred_fallthru
      _
    // Predicated region
    $region26: #{tpu_custom_call.1} parent=1 // pred_check
      _
    $region27: #{tpu_custom_call.1} parent=1 // pred_check_branch
      %27 = sbr.rel (0) target = $region29
    $region28: #{tpu_custom_call.1} parent=1 // pred_region
      _
    $region29: #{tpu_custom_call.1} parent=1 // pred_fallthru
      _
    // Predicated region
    $region30: #{tpu_custom_call.1} parent=1 // pred_check
      _
    $region31: #{tpu_custom_call.1} parent=1 // pred_check_branch
      %29 = sbr.rel (0) target = $region33
    $region32: #{tpu_custom_call.1} parent=1 // pred_region
      _
    $region33: #{tpu_custom_call.1} parent=1 // pred_fallthru
      _
    %v31 = vld [vmem:[%s0] sm:$0xff]
    %v32 = vld [vmem:[%s0 + $0x8] sm:$0xff]
    %v33 = vld [vmem:[%s1] sm:$0x3]
    %v34 = vld [vmem:[%s2] sm:$0xff]
    %v35 = vld [vmem:[%s2 + $0x8] sm:$0xff]
    %v36 = vld [vmem:[%s2 + $0x10] sm:$0xff]
    %v37 = vld [vmem:[%s2 + $0x18] sm:$0xff]
    %v38 = vld [vmem:[%s2 + $0x20] sm:$0xff]
    %v39 = vld [vmem:[%s2 + $0x28] sm:$0xff]
    %v40 = vld [vmem:[%s2 + $0x30] sm:$0xff]
    %v41 = vld [vmem:[%s2 + $0x38] sm:$0xff]
    %v42 = vld [vmem:[%s2 + $0x40] sm:$0xff]
    %v43 = vld [vmem:[%s2 + $0x48] sm:$0xff]
    %v44 = vld [vmem:[%s2 + $0x50] sm:$0xff]
    %v45 = vld [vmem:[%s2 + $0x58] sm:$0xff]
    %v46 = vld [vmem:[%s2 + $0x60] sm:$0xff]
    %v47 = vld [vmem:[%s2 + $0x68] sm:$0xff]
    %v48 = vld [vmem:[%s2 + $0x70] sm:$0xff]
    %v49 = vld [vmem:[%s2 + $0x78] sm:$0xff]
    %v50 = vld [vmem:[%s2 + $0x80] sm:$0xff]
    %v51 = vld [vmem:[%s2 + $0x88] sm:$0xff]
    %v52 = vld [vmem:[%s2 + $0x90] sm:$0xff]
    %v53 = vld [vmem:[%s2 + $0x98] sm:$0xff]
    %v54 = vld [vmem:[%s2 + $0xa0] sm:$0xff]
    %v55 = vld [vmem:[%s2 + $0xa8] sm:$0xff]
    %v56 = vld [vmem:[%s2 + $0xb0] sm:$0xff]
    %v57 = vld [vmem:[%s2 + $0xb8] sm:$0xff]
    %v58 = vld [vmem:[%s2 + $0xc0] sm:$0xff]
    %v59 = vld [vmem:[%s2 + $0xc8] sm:$0xff]
    %v60 = vld [vmem:[%s2 + $0xd0] sm:$0xff]
    %v61 = vld [vmem:[%s2 + $0xd8] sm:$0xff]
    %v62 = vld [vmem:[%s2 + $0xe0] sm:$0xff]
    %v63 = vld [vmem:[%s2 + $0xe8] sm:$0xff]
    %v64 = vld [vmem:[%s2 + $0xf0] sm:$0xff]
    %v65 = vld [vmem:[%s2 + $0xf8] sm:$0xff]
    %v66 = vld [vmem:[%s3] sm:$0xf]
    %v67 = vld [vmem:[%s3 + $0x4] sm:$0xf]
    %v68 = vld [vmem:[%s3 + $0x8] sm:$0xf]
    %v69 = vld [vmem:[%s3 + $0xc] sm:$0xf]
    %v70 = vld [vmem:[%s3 + $0x10] sm:$0xf]
    %v71 = vld [vmem:[%s3 + $0x14] sm:$0xf]
    %v72 = vld [vmem:[%s3 + $0x18] sm:$0xf]
    %v73 = vld [vmem:[%s3 + $0x1c] sm:$0xf]
    %v74 = vld [vmem:[%s3 + $0x20] sm:$0xf]
    %v75 = vld [vmem:[%s3 + $0x24] sm:$0xf]
    %v76 = vld [vmem:[%s3 + $0x28] sm:$0xf]
    %v77 = vld [vmem:[%s3 + $0x2c] sm:$0xf]
    %v78 = vld [vmem:[%s3 + $0x30] sm:$0xf]
    %v79 = vld [vmem:[%s3 + $0x34] sm:$0xf]
    %v80 = vld [vmem:[%s3 + $0x38] sm:$0xf]
    %v81 = vld [vmem:[%s3 + $0x3c] sm:$0xf]
    %v82 = vld [vmem:[%s3 + $0x40] sm:$0xf]
    %v83 = vld [vmem:[%s3 + $0x44] sm:$0xf]
    %v84 = vld [vmem:[%s3 + $0x48] sm:$0xf]
    %v85 = vld [vmem:[%s3 + $0x4c] sm:$0xf]
    %v86 = vld [vmem:[%s3 + $0x50] sm:$0xf]
    %v87 = vld [vmem:[%s3 + $0x54] sm:$0xf]
    %v88 = vld [vmem:[%s3 + $0x58] sm:$0xf]
    %v89 = vld [vmem:[%s3 + $0x5c] sm:$0xf]
    %v90 = vld [vmem:[%s3 + $0x60] sm:$0xf]
    %v91 = vld [vmem:[%s3 + $0x64] sm:$0xf]
    %v92 = vld [vmem:[%s3 + $0x68] sm:$0xf]
    %v93 = vld [vmem:[%s3 + $0x6c] sm:$0xf]
    %v94 = vld [vmem:[%s3 + $0x70] sm:$0xf]
    %v95 = vld [vmem:[%s3 + $0x74] sm:$0xf]
    %v96 = vld [vmem:[%s3 + $0x78] sm:$0xf]
    %v97 = vld [vmem:[%s3 + $0x7c] sm:$0xf]
    %v98 = vld [vmem:[%s3 + $0x80] sm:$0xf]
    %v99 = vld [vmem:[%s3 + $0x84] sm:$0xf]
    %v100 = vld [vmem:[%s3 + $0x88] sm:$0xf]
    %v101 = vld [vmem:[%s3 + $0x8c] sm:$0xf]
    %v102 = vld [vmem:[%s3 + $0x90] sm:$0xf]
    %v103 = vld [vmem:[%s3 + $0x94] sm:$0xf]
    %v104 = vld [vmem:[%s3 + $0x98] sm:$0xf]
    %v105 = vld [vmem:[%s3 + $0x9c] sm:$0xf]
    %v106 = vld [vmem:[%s3 + $0xa0] sm:$0xf]
    %v107 = vld [vmem:[%s3 + $0xa4] sm:$0xf]
    %v108 = vld [vmem:[%s3 + $0xa8] sm:$0xf]
    %v109 = vld [vmem:[%s3 + $0xac] sm:$0xf]
    %v110 = vld [vmem:[%s3 + $0xb0] sm:$0xf]
    %v111 = vld [vmem:[%s3 + $0xb4] sm:$0xf]
    %v112 = vld [vmem:[%s3 + $0xb8] sm:$0xf]
    %v113 = vld [vmem:[%s3 + $0xbc] sm:$0xf]
    %v114 = vld [vmem:[%s3 + $0xc0] sm:$0xf]
    %v115 = vld [vmem:[%s3 + $0xc4] sm:$0xf]
    %v116 = vld [vmem:[%s3 + $0xc8] sm:$0xf]
    %v117 = vld [vmem:[%s3 + $0xcc] sm:$0xf]
    %v118 = vld [vmem:[%s3 + $0xd0] sm:$0xf]
    %v119 = vld [vmem:[%s3 + $0xd4] sm:$0xf]
    %v120 = vld [vmem:[%s3 + $0xd8] sm:$0xf]
    %v121 = vld [vmem:[%s3 + $0xdc] sm:$0xf]
    %v122 = vld [vmem:[%s3 + $0xe0] sm:$0xf]
    %v123 = vld [vmem:[%s3 + $0xe4] sm:$0xf]
    %v124 = vld [vmem:[%s3 + $0xe8] sm:$0xf]
    %v125 = vld [vmem:[%s3 + $0xec] sm:$0xf]
    %v126 = vld [vmem:[%s3 + $0xf0] sm:$0xf]
    %v127 = vld [vmem:[%s3 + $0xf4] sm:$0xf]
    %v128 = vld [vmem:[%s3 + $0xf8] sm:$0xf]
    %v129 = vld [vmem:[%s3 + $0xfc] sm:$0xf]
    %v130 = vld [vmem:[%s3 + $0x100] sm:$0xf]
    %v131 = vld [vmem:[%s3 + $0x104] sm:$0xf]
    %v132 = vld [vmem:[%s3 + $0x108] sm:$0xf]
    %v133 = vld [vmem:[%s3 + $0x10c] sm:$0xf]
    %v134 = vld [vmem:[%s3 + $0x110] sm:$0xf]
    %v135 = vld [vmem:[%s3 + $0x114] sm:$0xf]
    %v136 = vld [vmem:[%s3 + $0x118] sm:$0xf]
    %v137 = vld [vmem:[%s3 + $0x11c] sm:$0xf]
    %v138 = vld [vmem:[%s3 + $0x120] sm:$0xf]
    %v139 = vld [vmem:[%s3 + $0x124] sm:$0xf]
    %v140 = vld [vmem:[%s3 + $0x128] sm:$0xf]
    %v141 = vld [vmem:[%s3 + $0x12c] sm:$0xf]
    %v142 = vld [vmem:[%s3 + $0x130] sm:$0xf]
    %v143 = vld [vmem:[%s3 + $0x134] sm:$0xf]
    %v144 = vld [vmem:[%s3 + $0x138] sm:$0xf]
    %v145 = vld [vmem:[%s3 + $0x13c] sm:$0xf]
    %v146 = vld [vmem:[%s3 + $0x140] sm:$0xf]
    %v147 = vld [vmem:[%s3 + $0x144] sm:$0xf]
    %v148 = vld [vmem:[%s3 + $0x148] sm:$0xf]
    %v149 = vld [vmem:[%s3 + $0x14c] sm:$0xf]
    %v150 = vld [vmem:[%s3 + $0x150] sm:$0xf]
    %v151 = vld [vmem:[%s3 + $0x154] sm:$0xf]
    %v152 = vld [vmem:[%s3 + $0x158] sm:$0xf]
    %v153 = vld [vmem:[%s3 + $0x15c] sm:$0xf]
    %v154 = vld [vmem:[%s3 + $0x160] sm:$0xf]
    %v155 = vld [vmem:[%s3 + $0x164] sm:$0xf]
    %v156 = vld [vmem:[%s3 + $0x168] sm:$0xf]
    %v157 = vld [vmem:[%s3 + $0x16c] sm:$0xf]
    %v158 = vld [vmem:[%s3 + $0x170] sm:$0xf]
    %v159 = vld [vmem:[%s3 + $0x174] sm:$0xf]
    %v160 = vld [vmem:[%s3 + $0x178] sm:$0xf]
    %v161 = vld [vmem:[%s3 + $0x17c] sm:$0xf]
    %v162 = vld [vmem:[%s3 + $0x180] sm:$0xf]
    %v163 = vld [vmem:[%s3 + $0x184] sm:$0xf]
    %v164 = vld [vmem:[%s3 + $0x188] sm:$0xf]
    %v165 = vld [vmem:[%s3 + $0x18c] sm:$0xf]
    %v166 = vld [vmem:[%s3 + $0x190] sm:$0xf]
    %v167 = vld [vmem:[%s3 + $0x194] sm:$0xf]
    %v168 = vld [vmem:[%s3 + $0x198] sm:$0xf]
    %v169 = vld [vmem:[%s3 + $0x19c] sm:$0xf]
    %v170 = vld [vmem:[%s3 + $0x1a0] sm:$0xf]
    %v171 = vld [vmem:[%s3 + $0x1a4] sm:$0xf]
    %v172 = vld [vmem:[%s3 + $0x1a8] sm:$0xf]
    %v173 = vld [vmem:[%s3 + $0x1ac] sm:$0xf]
    %v174 = vld [vmem:[%s3 + $0x1b0] sm:$0xf]
    %v175 = vld [vmem:[%s3 + $0x1b4] sm:$0xf]
    %v176 = vld [vmem:[%s3 + $0x1b8] sm:$0xf]
    %v177 = vld [vmem:[%s3 + $0x1bc] sm:$0xf]
    %v178 = vld [vmem:[%s3 + $0x1c0] sm:$0xf]
    %v179 = vld [vmem:[%s3 + $0x1c4] sm:$0xf]
    %v180 = vld [vmem:[%s3 + $0x1c8] sm:$0xf]
    %v181 = vld [vmem:[%s3 + $0x1cc] sm:$0xf]
    %v182 = vld [vmem:[%s3 + $0x1d0] sm:$0xf]
    %v183 = vld [vmem:[%s3 + $0x1d4] sm:$0xf]
    %v184 = vld [vmem:[%s3 + $0x1d8] sm:$0xf]
    %v185 = vld [vmem:[%s3 + $0x1dc] sm:$0xf]
    %v186 = vld [vmem:[%s3 + $0x1e0] sm:$0xf]
    %v187 = vld [vmem:[%s3 + $0x1e4] sm:$0xf]
    %v188 = vld [vmem:[%s3 + $0x1e8] sm:$0xf]
    %v189 = vld [vmem:[%s3 + $0x1ec] sm:$0xf]
    %v190 = vld [vmem:[%s3 + $0x1f0] sm:$0xf]
    %v191 = vld [vmem:[%s3 + $0x1f4] sm:$0xf]
    %v192 = vld [vmem:[%s3 + $0x1f8] sm:$0xf]
    %v193 = vld [vmem:[%s3 + $0x1fc] sm:$0xf]
    %v194 = vld [vmem:[%s3 + $0x200] sm:$0xf]
    %v195 = vld [vmem:[%s3 + $0x204] sm:$0xf]
    %v196 = vld [vmem:[%s3 + $0x208] sm:$0xf]
    %v197 = vld [vmem:[%s3 + $0x20c] sm:$0xf]
    %v198 = vld [vmem:[%s3 + $0x210] sm:$0xf]
    %v199 = vld [vmem:[%s3 + $0x214] sm:$0xf]
    %v200 = vld [vmem:[%s3 + $0x218] sm:$0xf]
    %v201 = vld [vmem:[%s3 + $0x21c] sm:$0xf]
    %v202 = vld [vmem:[%s3 + $0x220] sm:$0xf]
    %v203 = vld [vmem:[%s3 + $0x224] sm:$0xf]
    %v204 = vld [vmem:[%s3 + $0x228] sm:$0xf]
    %v205 = vld [vmem:[%s3 + $0x22c] sm:$0xf]
    %v206 = vld [vmem:[%s3 + $0x230] sm:$0xf]
    %v207 = vld [vmem:[%s3 + $0x234] sm:$0xf]
    %v208 = vld [vmem:[%s3 + $0x238] sm:$0xf]
    %v209 = vld [vmem:[%s3 + $0x23c] sm:$0xf]
    %v210 = vld [vmem:[%s3 + $0x240] sm:$0xf]
    %v211 = vld [vmem:[%s3 + $0x244] sm:$0xf]
    %v212 = vld [vmem:[%s3 + $0x248] sm:$0xf]
    %v213 = vld [vmem:[%s3 + $0x24c] sm:$0xf]
    %v214 = vld [vmem:[%s3 + $0x250] sm:$0xf]
    %v215 = vld [vmem:[%s3 + $0x254] sm:$0xf]
    %v216 = vld [vmem:[%s3 + $0x258] sm:$0xf]
    %v217 = vld [vmem:[%s3 + $0x25c] sm:$0xf]
    %v218 = vld [vmem:[%s3 + $0x260] sm:$0xf]
    %v219 = vld [vmem:[%s3 + $0x264] sm:$0xf]
    %v220 = vld [vmem:[%s3 + $0x268] sm:$0xf]
    %v221 = vld [vmem:[%s3 + $0x26c] sm:$0xf]
    %v222 = vld [vmem:[%s3 + $0x270] sm:$0xf]
    %v223 = vld [vmem:[%s3 + $0x274] sm:$0xf]
    %v224 = vld [vmem:[%s3 + $0x278] sm:$0xf]
    %v225 = vld [vmem:[%s3 + $0x27c] sm:$0xf]
    %v226 = vld [vmem:[%s3 + $0x280] sm:$0xf]
    %v227 = vld [vmem:[%s3 + $0x284] sm:$0xf]
    %v228 = vld [vmem:[%s3 + $0x288] sm:$0xf]
    %v229 = vld [vmem:[%s3 + $0x28c] sm:$0xf]
    %v230 = vld [vmem:[%s3 + $0x290] sm:$0xf]
    %v231 = vld [vmem:[%s3 + $0x294] sm:$0xf]
    %v232 = vld [vmem:[%s3 + $0x298] sm:$0xf]
    %v233 = vld [vmem:[%s3 + $0x29c] sm:$0xf]
    %v234 = vld [vmem:[%s3 + $0x2a0] sm:$0xf]
    %v235 = vld [vmem:[%s3 + $0x2a4] sm:$0xf]
    %v236 = vld [vmem:[%s3 + $0x2a8] sm:$0xf]
    %v237 = vld [vmem:[%s3 + $0x2ac] sm:$0xf]
    %v238 = vld [vmem:[%s3 + $0x2b0] sm:$0xf]
    %v239 = vld [vmem:[%s3 + $0x2b4] sm:$0xf]
    %v240 = vld [vmem:[%s3 + $0x2b8] sm:$0xf]
    %v241 = vld [vmem:[%s3 + $0x2bc] sm:$0xf]
    %v242 = vld [vmem:[%s3 + $0x2c0] sm:$0xf]
    %v243 = vld [vmem:[%s3 + $0x2c4] sm:$0xf]
    %v244 = vld [vmem:[%s3 + $0x2c8] sm:$0xf]
    %v245 = vld [vmem:[%s3 + $0x2cc] sm:$0xf]
    %v246 = vld [vmem:[%s3 + $0x2d0] sm:$0xf]
    %v247 = vld [vmem:[%s3 + $0x2d4] sm:$0xf]
    %v248 = vld [vmem:[%s3 + $0x2d8] sm:$0xf]
    %v249 = vld [vmem:[%s3 + $0x2dc] sm:$0xf]
    %v250 = vld [vmem:[%s3 + $0x2e0] sm:$0xf]
    %v251 = vld [vmem:[%s3 + $0x2e4] sm:$0xf]
    %v252 = vld [vmem:[%s3 + $0x2e8] sm:$0xf]
    %v253 = vld [vmem:[%s3 + $0x2ec] sm:$0xf]
    %v254 = vld [vmem:[%s3 + $0x2f0] sm:$0xf]
    %v255 = vld [vmem:[%s3 + $0x2f4] sm:$0xf]
    %v256 = vld [vmem:[%s3 + $0x2f8] sm:$0xf]
    %v257 = vld [vmem:[%s3 + $0x2fc] sm:$0xf]
    %v258 = vld [vmem:[%s3 + $0x300] sm:$0xf]
    %v259 = vld [vmem:[%s3 + $0x304] sm:$0xf]
    %v260 = vld [vmem:[%s3 + $0x308] sm:$0xf]
    %v261 = vld [vmem:[%s3 + $0x30c] sm:$0xf]
    %v262 = vld [vmem:[%s3 + $0x310] sm:$0xf]
    %v263 = vld [vmem:[%s3 + $0x314] sm:$0xf]
    %v264 = vld [vmem:[%s3 + $0x318] sm:$0xf]
    %v265 = vld [vmem:[%s3 + $0x31c] sm:$0xf]
    %v266 = vld [vmem:[%s3 + $0x320] sm:$0xf]
    %v267 = vld [vmem:[%s3 + $0x324] sm:$0xf]
    %v268 = vld [vmem:[%s3 + $0x328] sm:$0xf]
    %v269 = vld [vmem:[%s3 + $0x32c] sm:$0xf]
    %v270 = vld [vmem:[%s3 + $0x330] sm:$0xf]
    %v271 = vld [vmem:[%s3 + $0x334] sm:$0xf]
    %v272 = vld [vmem:[%s3 + $0x338] sm:$0xf]
    %v273 = vld [vmem:[%s3 + $0x33c] sm:$0xf]
    %v274 = vld [vmem:[%s3 + $0x340] sm:$0xf]
    %v275 = vld [vmem:[%s3 + $0x344] sm:$0xf]
    %v276 = vld [vmem:[%s3 + $0x348] sm:$0xf]
    %v277 = vld [vmem:[%s3 + $0x34c] sm:$0xf]
    %v278 = vld [vmem:[%s3 + $0x350] sm:$0xf]
    %v279 = vld [vmem:[%s3 + $0x354] sm:$0xf]
    %v280 = vld [vmem:[%s3 + $0x358] sm:$0xf]
    %v281 = vld [vmem:[%s3 + $0x35c] sm:$0xf]
    %v282 = vld [vmem:[%s3 + $0x360] sm:$0xf]
    %v283 = vld [vmem:[%s3 + $0x364] sm:$0xf]
    %v284 = vld [vmem:[%s3 + $0x368] sm:$0xf]
    %v285 = vld [vmem:[%s3 + $0x36c] sm:$0xf]
    %v286 = vld [vmem:[%s3 + $0x370] sm:$0xf]
    %v287 = vld [vmem:[%s3 + $0x374] sm:$0xf]
    %v288 = vld [vmem:[%s3 + $0x378] sm:$0xf]
    %v289 = vld [vmem:[%s3 + $0x37c] sm:$0xf]
    %v290 = vld [vmem:[%s3 + $0x380] sm:$0xf]
    %v291 = vld [vmem:[%s3 + $0x384] sm:$0xf]
    %v292 = vld [vmem:[%s3 + $0x388] sm:$0xf]
    %v293 = vld [vmem:[%s3 + $0x38c] sm:$0xf]
    %v294 = vld [vmem:[%s3 + $0x390] sm:$0xf]
    %v295 = vld [vmem:[%s3 + $0x394] sm:$0xf]
    %v296 = vld [vmem:[%s3 + $0x398] sm:$0xf]
    %v297 = vld [vmem:[%s3 + $0x39c] sm:$0xf]
    %v298 = vld [vmem:[%s3 + $0x3a0] sm:$0xf]
    %v299 = vld [vmem:[%s3 + $0x3a4] sm:$0xf]
    %v300 = vld [vmem:[%s3 + $0x3a8] sm:$0xf]
    %v301 = vld [vmem:[%s3 + $0x3ac] sm:$0xf]
    %v302 = vld [vmem:[%s3 + $0x3b0] sm:$0xf]
    %v303 = vld [vmem:[%s3 + $0x3b4] sm:$0xf]
    %v304 = vld [vmem:[%s3 + $0x3b8] sm:$0xf]
    %v305 = vld [vmem:[%s3 + $0x3bc] sm:$0xf]
    %v306 = vld [vmem:[%s3 + $0x3c0] sm:$0xf]
    %v307 = vld [vmem:[%s3 + $0x3c4] sm:$0xf]
    %v308 = vld [vmem:[%s3 + $0x3c8] sm:$0xf]
    %v309 = vld [vmem:[%s3 + $0x3cc] sm:$0xf]
    %v310 = vld [vmem:[%s3 + $0x3d0] sm:$0xf]
    %v311 = vld [vmem:[%s3 + $0x3d4] sm:$0xf]
    %v312 = vld [vmem:[%s3 + $0x3d8] sm:$0xf]
    %v313 = vld [vmem:[%s3 + $0x3dc] sm:$0xf]
    %v314 = vld [vmem:[%s3 + $0x3e0] sm:$0xf]
    %v315 = vld [vmem:[%s3 + $0x3e4] sm:$0xf]
    %v316 = vld [vmem:[%s3 + $0x3e8] sm:$0xf]
    %v317 = vld [vmem:[%s3 + $0x3ec] sm:$0xf]
    %v318 = vld [vmem:[%s3 + $0x3f0] sm:$0xf]
    %v319 = vld [vmem:[%s3 + $0x3f4] sm:$0xf]
    %v320 = vld [vmem:[%s3 + $0x3f8] sm:$0xf]
    %v321 = vld [vmem:[%s3 + $0x3fc] sm:$0xf]
    %v322 = vld [vmem:[%s3 + $0x400] sm:$0xf]
    %v323 = vld [vmem:[%s3 + $0x404] sm:$0xf]
    %v324 = vld [vmem:[%s3 + $0x408] sm:$0xf]
    %v325 = vld [vmem:[%s3 + $0x40c] sm:$0xf]
    %v326 = vld [vmem:[%s3 + $0x410] sm:$0xf]
    %v327 = vld [vmem:[%s3 + $0x414] sm:$0xf]
    %v328 = vld [vmem:[%s3 + $0x418] sm:$0xf]
    %v329 = vld [vmem:[%s3 + $0x41c] sm:$0xf]
    %v330 = vld [vmem:[%s3 + $0x420] sm:$0xf]
    %v331 = vld [vmem:[%s3 + $0x424] sm:$0xf]
    %v332 = vld [vmem:[%s3 + $0x428] sm:$0xf]
    %v333 = vld [vmem:[%s3 + $0x42c] sm:$0xf]
    %v334 = vld [vmem:[%s3 + $0x430] sm:$0xf]
    %v335 = vld [vmem:[%s3 + $0x434] sm:$0xf]
    %v336 = vld [vmem:[%s3 + $0x438] sm:$0xf]
    %v337 = vld [vmem:[%s3 + $0x43c] sm:$0xf]
    %v338 = vld [vmem:[%s3 + $0x440] sm:$0xf]
    %v339 = vld [vmem:[%s3 + $0x444] sm:$0xf]
    %v340 = vld [vmem:[%s3 + $0x448] sm:$0xf]
    %v341 = vld [vmem:[%s3 + $0x44c] sm:$0xf]
    %v342 = vld [vmem:[%s3 + $0x450] sm:$0xf]
    %v343 = vld [vmem:[%s3 + $0x454] sm:$0xf]
    %v344 = vld [vmem:[%s3 + $0x458] sm:$0xf]
    %v345 = vld [vmem:[%s3 + $0x45c] sm:$0xf]
    %v346 = vld [vmem:[%s3 + $0x460] sm:$0xf]
    %v347 = vld [vmem:[%s3 + $0x464] sm:$0xf]
    %v348 = vld [vmem:[%s3 + $0x468] sm:$0xf]
    %v349 = vld [vmem:[%s3 + $0x46c] sm:$0xf]
    %v350 = vld [vmem:[%s3 + $0x470] sm:$0xf]
    %v351 = vld [vmem:[%s3 + $0x474] sm:$0xf]
    %v352 = vld [vmem:[%s3 + $0x478] sm:$0xf]
    %v353 = vld [vmem:[%s3 + $0x47c] sm:$0xf]
    %v354 = vld [vmem:[%s3 + $0x480] sm:$0xf]
    %v355 = vld [vmem:[%s3 + $0x484] sm:$0xf]
    %v356 = vld [vmem:[%s3 + $0x488] sm:$0xf]
    %v357 = vld [vmem:[%s3 + $0x48c] sm:$0xf]
    %v358 = vld [vmem:[%s3 + $0x490] sm:$0xf]
    %v359 = vld [vmem:[%s3 + $0x494] sm:$0xf]
    %v360 = vld [vmem:[%s3 + $0x498] sm:$0xf]
    %v361 = vld [vmem:[%s3 + $0x49c] sm:$0xf]
    %v362 = vld [vmem:[%s3 + $0x4a0] sm:$0xf]
    %v363 = vld [vmem:[%s3 + $0x4a4] sm:$0xf]
    %v364 = vld [vmem:[%s3 + $0x4a8] sm:$0xf]
    %v365 = vld [vmem:[%s3 + $0x4ac] sm:$0xf]
    %v366 = vld [vmem:[%s3 + $0x4b0] sm:$0xf]
    %v367 = vld [vmem:[%s3 + $0x4b4] sm:$0xf]
    %v368 = vld [vmem:[%s3 + $0x4b8] sm:$0xf]
    %v369 = vld [vmem:[%s3 + $0x4bc] sm:$0xf]
    %v370 = vld [vmem:[%s3 + $0x4c0] sm:$0xf]
    %v371 = vld [vmem:[%s3 + $0x4c4] sm:$0xf]
    %v372 = vld [vmem:[%s3 + $0x4c8] sm:$0xf]
    %v373 = vld [vmem:[%s3 + $0x4cc] sm:$0xf]
    %v374 = vld [vmem:[%s3 + $0x4d0] sm:$0xf]
    %v375 = vld [vmem:[%s3 + $0x4d4] sm:$0xf]
    %v376 = vld [vmem:[%s3 + $0x4d8] sm:$0xf]
    %v377 = vld [vmem:[%s3 + $0x4dc] sm:$0xf]
    %v378 = vld [vmem:[%s3 + $0x4e0] sm:$0xf]
    %v379 = vld [vmem:[%s3 + $0x4e4] sm:$0xf]
    %v380 = vld [vmem:[%s3 + $0x4e8] sm:$0xf]
    %v381 = vld [vmem:[%s3 + $0x4ec] sm:$0xf]
    %v382 = vld [vmem:[%s3 + $0x4f0] sm:$0xf]
    %v383 = vld [vmem:[%s3 + $0x4f4] sm:$0xf]
    %v384 = vld [vmem:[%s3 + $0x4f8] sm:$0xf]
    %v385 = vld [vmem:[%s3 + $0x4fc] sm:$0xf]
    %v386 = vld [vmem:[%s3 + $0x500] sm:$0xf]
    %v387 = vld [vmem:[%s3 + $0x504] sm:$0xf]
    %v388 = vld [vmem:[%s3 + $0x508] sm:$0xf]
    %v389 = vld [vmem:[%s3 + $0x50c] sm:$0xf]
    %v390 = vld [vmem:[%s3 + $0x510] sm:$0xf]
    %v391 = vld [vmem:[%s3 + $0x514] sm:$0xf]
    %v392 = vld [vmem:[%s3 + $0x518] sm:$0xf]
    %v393 = vld [vmem:[%s3 + $0x51c] sm:$0xf]
    %v394 = vld [vmem:[%s3 + $0x520] sm:$0xf]
    %v395 = vld [vmem:[%s3 + $0x524] sm:$0xf]
    %v396 = vld [vmem:[%s3 + $0x528] sm:$0xf]
    %v397 = vld [vmem:[%s3 + $0x52c] sm:$0xf]
    %v398 = vld [vmem:[%s3 + $0x530] sm:$0xf]
    %v399 = vld [vmem:[%s3 + $0x534] sm:$0xf]
    %v400 = vld [vmem:[%s3 + $0x538] sm:$0xf]
    %v401 = vld [vmem:[%s3 + $0x53c] sm:$0xf]
    %v402 = vld [vmem:[%s3 + $0x540] sm:$0xf]
    %v403 = vld [vmem:[%s3 + $0x544] sm:$0xf]
    %v404 = vld [vmem:[%s3 + $0x548] sm:$0xf]
    %v405 = vld [vmem:[%s3 + $0x54c] sm:$0xf]
    %v406 = vld [vmem:[%s3 + $0x550] sm:$0xf]
    %v407 = vld [vmem:[%s3 + $0x554] sm:$0xf]
    %v408 = vld [vmem:[%s3 + $0x558] sm:$0xf]
    %v409 = vld [vmem:[%s3 + $0x55c] sm:$0xf]
    %v410 = vld [vmem:[%s3 + $0x560] sm:$0xf]
    %v411 = vld [vmem:[%s3 + $0x564] sm:$0xf]
    %v412 = vld [vmem:[%s3 + $0x568] sm:$0xf]
    %v413 = vld [vmem:[%s3 + $0x56c] sm:$0xf]
    %v414 = vld [vmem:[%s3 + $0x570] sm:$0xf]
    %v415 = vld [vmem:[%s3 + $0x574] sm:$0xf]
    %v416 = vld [vmem:[%s3 + $0x578] sm:$0xf]
    %v417 = vld [vmem:[%s3 + $0x57c] sm:$0xf]
    %v418 = vld [vmem:[%s3 + $0x580] sm:$0xf]
    %v419 = vld [vmem:[%s3 + $0x584] sm:$0xf]
    %v420 = vld [vmem:[%s3 + $0x588] sm:$0xf]
    %v421 = vld [vmem:[%s3 + $0x58c] sm:$0xf]
    %v422 = vld [vmem:[%s3 + $0x590] sm:$0xf]
    %v423 = vld [vmem:[%s3 + $0x594] sm:$0xf]
    %v424 = vld [vmem:[%s3 + $0x598] sm:$0xf]
    %v425 = vld [vmem:[%s3 + $0x59c] sm:$0xf]
    %v426 = vld [vmem:[%s3 + $0x5a0] sm:$0xf]
    %v427 = vld [vmem:[%s3 + $0x5a4] sm:$0xf]
    %v428 = vld [vmem:[%s3 + $0x5a8] sm:$0xf]
    %v429 = vld [vmem:[%s3 + $0x5ac] sm:$0xf]
    %v430 = vld [vmem:[%s3 + $0x5b0] sm:$0xf]
    %v431 = vld [vmem:[%s3 + $0x5b4] sm:$0xf]
    %v432 = vld [vmem:[%s3 + $0x5b8] sm:$0xf]
    %v433 = vld [vmem:[%s3 + $0x5bc] sm:$0xf]
    %v434 = vld [vmem:[%s3 + $0x5c0] sm:$0xf]
    %v435 = vld [vmem:[%s3 + $0x5c4] sm:$0xf]
    %v436 = vld [vmem:[%s3 + $0x5c8] sm:$0xf]
    %v437 = vld [vmem:[%s3 + $0x5cc] sm:$0xf]
    %v438 = vld [vmem:[%s3 + $0x5d0] sm:$0xf]
    %v439 = vld [vmem:[%s3 + $0x5d4] sm:$0xf]
    %v440 = vld [vmem:[%s3 + $0x5d8] sm:$0xf]
    %v441 = vld [vmem:[%s3 + $0x5dc] sm:$0xf]
    %v442 = vld [vmem:[%s3 + $0x5e0] sm:$0xf]
    %v443 = vld [vmem:[%s3 + $0x5e4] sm:$0xf]
    %v444 = vld [vmem:[%s3 + $0x5e8] sm:$0xf]
    %v445 = vld [vmem:[%s3 + $0x5ec] sm:$0xf]
    %v446 = vld [vmem:[%s3 + $0x5f0] sm:$0xf]
    %v447 = vld [vmem:[%s3 + $0x5f4] sm:$0xf]
    %v448 = vld [vmem:[%s3 + $0x5f8] sm:$0xf]
    %v449 = vld [vmem:[%s3 + $0x5fc] sm:$0xf]
    %v450 = vld [vmem:[%s3 + $0x600] sm:$0xf]
    %v451 = vld [vmem:[%s3 + $0x604] sm:$0xf]
    %v452 = vld [vmem:[%s3 + $0x608] sm:$0xf]
    %v453 = vld [vmem:[%s3 + $0x60c] sm:$0xf]
    %v454 = vld [vmem:[%s3 + $0x610] sm:$0xf]
    %v455 = vld [vmem:[%s3 + $0x614] sm:$0xf]
    %v456 = vld [vmem:[%s3 + $0x618] sm:$0xf]
    %v457 = vld [vmem:[%s3 + $0x61c] sm:$0xf]
    %v458 = vld [vmem:[%s3 + $0x620] sm:$0xf]
    %v459 = vld [vmem:[%s3 + $0x624] sm:$0xf]
    %v460 = vld [vmem:[%s3 + $0x628] sm:$0xf]
    %v461 = vld [vmem:[%s3 + $0x62c] sm:$0xf]
    %v462 = vld [vmem:[%s3 + $0x630] sm:$0xf]
    %v463 = vld [vmem:[%s3 + $0x634] sm:$0xf]
    %v464 = vld [vmem:[%s3 + $0x638] sm:$0xf]
    %v465 = vld [vmem:[%s3 + $0x63c] sm:$0xf]
    %v466 = vld [vmem:[%s3 + $0x640] sm:$0xf]
    %v467 = vld [vmem:[%s3 + $0x644] sm:$0xf]
    %v468 = vld [vmem:[%s3 + $0x648] sm:$0xf]
    %v469 = vld [vmem:[%s3 + $0x64c] sm:$0xf]
    %v470 = vld [vmem:[%s3 + $0x650] sm:$0xf]
    %v471 = vld [vmem:[%s3 + $0x654] sm:$0xf]
    %v472 = vld [vmem:[%s3 + $0x658] sm:$0xf]
    %v473 = vld [vmem:[%s3 + $0x65c] sm:$0xf]
    %v474 = vld [vmem:[%s3 + $0x660] sm:$0xf]
    %v475 = vld [vmem:[%s3 + $0x664] sm:$0xf]
    %v476 = vld [vmem:[%s3 + $0x668] sm:$0xf]
    %v477 = vld [vmem:[%s3 + $0x66c] sm:$0xf]
    %v478 = vld [vmem:[%s3 + $0x670] sm:$0xf]
    %v479 = vld [vmem:[%s3 + $0x674] sm:$0xf]
    %v480 = vld [vmem:[%s3 + $0x678] sm:$0xf]
    %v481 = vld [vmem:[%s3 + $0x67c] sm:$0xf]
    %v482 = vld [vmem:[%s3 + $0x680] sm:$0xf]
    %v483 = vld [vmem:[%s3 + $0x684] sm:$0xf]
    %v484 = vld [vmem:[%s3 + $0x688] sm:$0xf]
    %v485 = vld [vmem:[%s3 + $0x68c] sm:$0xf]
    %v486 = vld [vmem:[%s3 + $0x690] sm:$0xf]
    %v487 = vld [vmem:[%s3 + $0x694] sm:$0xf]
    %v488 = vld [vmem:[%s3 + $0x698] sm:$0xf]
    %v489 = vld [vmem:[%s3 + $0x69c] sm:$0xf]
    %v490 = vld [vmem:[%s3 + $0x6a0] sm:$0xf]
    %v491 = vld [vmem:[%s3 + $0x6a4] sm:$0xf]
    %v492 = vld [vmem:[%s3 + $0x6a8] sm:$0xf]
    %v493 = vld [vmem:[%s3 + $0x6ac] sm:$0xf]
    %v494 = vld [vmem:[%s3 + $0x6b0] sm:$0xf]
    %v495 = vld [vmem:[%s3 + $0x6b4] sm:$0xf]
    %v496 = vld [vmem:[%s3 + $0x6b8] sm:$0xf]
    %v497 = vld [vmem:[%s3 + $0x6bc] sm:$0xf]
    %v498 = vld [vmem:[%s3 + $0x6c0] sm:$0xf]
    %v499 = vld [vmem:[%s3 + $0x6c4] sm:$0xf]
    %v500 = vld [vmem:[%s3 + $0x6c8] sm:$0xf]
    %v501 = vld [vmem:[%s3 + $0x6cc] sm:$0xf]
    %v502 = vld [vmem:[%s3 + $0x6d0] sm:$0xf]
    %v503 = vld [vmem:[%s3 + $0x6d4] sm:$0xf]
    %v504 = vld [vmem:[%s3 + $0x6d8] sm:$0xf]
    %v505 = vld [vmem:[%s3 + $0x6dc] sm:$0xf]
    %v506 = vld [vmem:[%s3 + $0x6e0] sm:$0xf]
    %v507 = vld [vmem:[%s3 + $0x6e4] sm:$0xf]
    %v508 = vld [vmem:[%s3 + $0x6e8] sm:$0xf]
    %v509 = vld [vmem:[%s3 + $0x6ec] sm:$0xf]
    %v510 = vld [vmem:[%s3 + $0x6f0] sm:$0xf]
    %v511 = vld [vmem:[%s3 + $0x6f4] sm:$0xf]
    %v512 = vld [vmem:[%s3 + $0x6f8] sm:$0xf]
    %v513 = vld [vmem:[%s3 + $0x6fc] sm:$0xf]
    %v514 = vld [vmem:[%s3 + $0x700] sm:$0xf]
    %v515 = vld [vmem:[%s3 + $0x704] sm:$0xf]
    %v516 = vld [vmem:[%s3 + $0x708] sm:$0xf]
    %v517 = vld [vmem:[%s3 + $0x70c] sm:$0xf]
    %v518 = vld [vmem:[%s3 + $0x710] sm:$0xf]
    %v519 = vld [vmem:[%s3 + $0x714] sm:$0xf]
    %v520 = vld [vmem:[%s3 + $0x718] sm:$0xf]
    %v521 = vld [vmem:[%s3 + $0x71c] sm:$0xf]
    %v522 = vld [vmem:[%s3 + $0x720] sm:$0xf]
    %v523 = vld [vmem:[%s3 + $0x724] sm:$0xf]
    %v524 = vld [vmem:[%s3 + $0x728] sm:$0xf]
    %v525 = vld [vmem:[%s3 + $0x72c] sm:$0xf]
    %v526 = vld [vmem:[%s3 + $0x730] sm:$0xf]
    %v527 = vld [vmem:[%s3 + $0x734] sm:$0xf]
    %v528 = vld [vmem:[%s3 + $0x738] sm:$0xf]
    %v529 = vld [vmem:[%s3 + $0x73c] sm:$0xf]
    %v530 = vld [vmem:[%s3 + $0x740] sm:$0xf]
    %v531 = vld [vmem:[%s3 + $0x744] sm:$0xf]
    %v532 = vld [vmem:[%s3 + $0x748] sm:$0xf]
    %v533 = vld [vmem:[%s3 + $0x74c] sm:$0xf]
    %v534 = vld [vmem:[%s3 + $0x750] sm:$0xf]
    %v535 = vld [vmem:[%s3 + $0x754] sm:$0xf]
    %v536 = vld [vmem:[%s3 + $0x758] sm:$0xf]
    %v537 = vld [vmem:[%s3 + $0x75c] sm:$0xf]
    %v538 = vld [vmem:[%s3 + $0x760] sm:$0xf]
    %v539 = vld [vmem:[%s3 + $0x764] sm:$0xf]
    %v540 = vld [vmem:[%s3 + $0x768] sm:$0xf]
    %v541 = vld [vmem:[%s3 + $0x76c] sm:$0xf]
    %v542 = vld [vmem:[%s3 + $0x770] sm:$0xf]
    %v543 = vld [vmem:[%s3 + $0x774] sm:$0xf]
    %v544 = vld [vmem:[%s3 + $0x778] sm:$0xf]
    %v545 = vld [vmem:[%s3 + $0x77c] sm:$0xf]
    %v546 = vld [vmem:[%s3 + $0x780] sm:$0xf]
    %v547 = vld [vmem:[%s3 + $0x784] sm:$0xf]
    %v548 = vld [vmem:[%s3 + $0x788] sm:$0xf]
    %v549 = vld [vmem:[%s3 + $0x78c] sm:$0xf]
    %v550 = vld [vmem:[%s3 + $0x790] sm:$0xf]
    %v551 = vld [vmem:[%s3 + $0x794] sm:$0xf]
    %v552 = vld [vmem:[%s3 + $0x798] sm:$0xf]
    %v553 = vld [vmem:[%s3 + $0x79c] sm:$0xf]
    %v554 = vld [vmem:[%s3 + $0x7a0] sm:$0xf]
    %v555 = vld [vmem:[%s3 + $0x7a4] sm:$0xf]
    %v556 = vld [vmem:[%s3 + $0x7a8] sm:$0xf]
    %v557 = vld [vmem:[%s3 + $0x7ac] sm:$0xf]
    %v558 = vld [vmem:[%s3 + $0x7b0] sm:$0xf]
    %v559 = vld [vmem:[%s3 + $0x7b4] sm:$0xf]
    %v560 = vld [vmem:[%s3 + $0x7b8] sm:$0xf]
    %v561 = vld [vmem:[%s3 + $0x7bc] sm:$0xf]
    %v562 = vld [vmem:[%s3 + $0x7c0] sm:$0xf]
    %v563 = vld [vmem:[%s3 + $0x7c4] sm:$0xf]
    %v564 = vld [vmem:[%s3 + $0x7c8] sm:$0xf]
    %v565 = vld [vmem:[%s3 + $0x7cc] sm:$0xf]
    %v566 = vld [vmem:[%s3 + $0x7d0] sm:$0xf]
    %v567 = vld [vmem:[%s3 + $0x7d4] sm:$0xf]
    %v568 = vld [vmem:[%s3 + $0x7d8] sm:$0xf]
    %v569 = vld [vmem:[%s3 + $0x7dc] sm:$0xf]
    %v570 = vld [vmem:[%s3 + $0x7e0] sm:$0xf]
    %v571 = vld [vmem:[%s3 + $0x7e4] sm:$0xf]
    %v572 = vld [vmem:[%s3 + $0x7e8] sm:$0xf]
    %v573 = vld [vmem:[%s3 + $0x7ec] sm:$0xf]
    %v574 = vld [vmem:[%s3 + $0x7f0] sm:$0xf]
    %v575 = vld [vmem:[%s3 + $0x7f4] sm:$0xf]
    %v576 = vld [vmem:[%s3 + $0x7f8] sm:$0xf]
    %v577 = vld [vmem:[%s3 + $0x7fc] sm:$0xf]
    %v578 = vld [vmem:[%s4] sm:$0xff]
    %v579 = vld [vmem:[%s4 + $0x8] sm:$0xff]
    %v580 = vld [vmem:[%s4 + $0x10] sm:$0xff]
    %v581 = vld [vmem:[%s4 + $0x18] sm:$0xff]
    %v582 = vld [vmem:[%s4 + $0x20] sm:$0xff]
    %v583 = vld [vmem:[%s4 + $0x28] sm:$0xff]
    %v584 = vld [vmem:[%s4 + $0x30] sm:$0xff]
    %v585 = vld [vmem:[%s4 + $0x38] sm:$0xff]
    %v586 = vld [vmem:[%s4 + $0x40] sm:$0xff]
    %v587 = vld [vmem:[%s4 + $0x48] sm:$0xff]
    %v588 = vld [vmem:[%s4 + $0x50] sm:$0xff]
    %v589 = vld [vmem:[%s4 + $0x58] sm:$0xff]
    %v590 = vld [vmem:[%s4 + $0x60] sm:$0xff]
    %v591 = vld [vmem:[%s4 + $0x68] sm:$0xff]
    %v592 = vld [vmem:[%s4 + $0x70] sm:$0xff]
    %v593 = vld [vmem:[%s4 + $0x78] sm:$0xff]
    %v594 = vld [vmem:[%s4 + $0x80] sm:$0xff]
    %v595 = vld [vmem:[%s4 + $0x88] sm:$0xff]
    %v596 = vld [vmem:[%s4 + $0x90] sm:$0xff]
    %v597 = vld [vmem:[%s4 + $0x98] sm:$0xff]
    %v598 = vld [vmem:[%s4 + $0xa0] sm:$0xff]
    %v599 = vld [vmem:[%s4 + $0xa8] sm:$0xff]
    %v600 = vld [vmem:[%s4 + $0xb0] sm:$0xff]
    %v601 = vld [vmem:[%s4 + $0xb8] sm:$0xff]
    %v602 = vld [vmem:[%s4 + $0xc0] sm:$0xff]
    %v603 = vld [vmem:[%s4 + $0xc8] sm:$0xff]
    %v604 = vld [vmem:[%s4 + $0xd0] sm:$0xff]
    %v605 = vld [vmem:[%s4 + $0xd8] sm:$0xff]
    %v606 = vld [vmem:[%s4 + $0xe0] sm:$0xff]
    %v607 = vld [vmem:[%s4 + $0xe8] sm:$0xff]
    %v608 = vld [vmem:[%s4 + $0xf0] sm:$0xff]
    %v609 = vld [vmem:[%s4 + $0xf8] sm:$0xff]
    %v610 = vld [vmem:[%s4 + $0x100] sm:$0xff]
    %v611 = vld [vmem:[%s4 + $0x108] sm:$0xff]
    %v612 = vld [vmem:[%s4 + $0x110] sm:$0xff]
    %v613 = vld [vmem:[%s4 + $0x118] sm:$0xff]
    %v614 = vld [vmem:[%s4 + $0x120] sm:$0xff]
    %v615 = vld [vmem:[%s4 + $0x128] sm:$0xff]
    %v616 = vld [vmem:[%s4 + $0x130] sm:$0xff]
    %v617 = vld [vmem:[%s4 + $0x138] sm:$0xff]
    %v618 = vld [vmem:[%s4 + $0x140] sm:$0xff]
    %v619 = vld [vmem:[%s4 + $0x148] sm:$0xff]
    %v620 = vld [vmem:[%s4 + $0x150] sm:$0xff]
    %v621 = vld [vmem:[%s4 + $0x158] sm:$0xff]
    %v622 = vld [vmem:[%s4 + $0x160] sm:$0xff]
    %v623 = vld [vmem:[%s4 + $0x168] sm:$0xff]
    %v624 = vld [vmem:[%s4 + $0x170] sm:$0xff]
    %v625 = vld [vmem:[%s4 + $0x178] sm:$0xff]
    %v626 = vld [vmem:[%s4 + $0x180] sm:$0xff]
    %v627 = vld [vmem:[%s4 + $0x188] sm:$0xff]
    %v628 = vld [vmem:[%s4 + $0x190] sm:$0xff]
    %v629 = vld [vmem:[%s4 + $0x198] sm:$0xff]
    %v630 = vld [vmem:[%s4 + $0x1a0] sm:$0xff]
    %v631 = vld [vmem:[%s4 + $0x1a8] sm:$0xff]
    %v632 = vld [vmem:[%s4 + $0x1b0] sm:$0xff]
    %v633 = vld [vmem:[%s4 + $0x1b8] sm:$0xff]
    %v634 = vld [vmem:[%s4 + $0x1c0] sm:$0xff]
    %v635 = vld [vmem:[%s4 + $0x1c8] sm:$0xff]
    %v636 = vld [vmem:[%s4 + $0x1d0] sm:$0xff]
    %v637 = vld [vmem:[%s4 + $0x1d8] sm:$0xff]
    %v638 = vld [vmem:[%s4 + $0x1e0] sm:$0xff]
    %v639 = vld [vmem:[%s4 + $0x1e8] sm:$0xff]
    %v640 = vld [vmem:[%s4 + $0x1f0] sm:$0xff]
    %v641 = vld [vmem:[%s4 + $0x1f8] sm:$0xff]
    %v642 = vld [vmem:[%s5] sm:$0xff]
    %v643 = vld [vmem:[%s5 + $0x8] sm:$0xff]
    %v644 = vld [vmem:[%s5 + $0x10] sm:$0xff]
    %v645 = vld [vmem:[%s5 + $0x18] sm:$0xff]
    %v646 = vld [vmem:[%s6] sm:$0xff]
    %v647 = vld [vmem:[%s6 + $0x8] sm:$0xff]
    %v648 = vld [vmem:[%s6 + $0x10] sm:$0x7]
    %v649 = vld [vmem:[%s7] sm:$0xff]
    %v650 = vld [vmem:[%s7 + $0x8] sm:$0xff]
    %v651 = vld [vmem:[%s7 + $0x10] sm:$0xff]
    %v652 = vld [vmem:[%s7 + $0x18] sm:$0xff]
    %v653 = vld [vmem:[%s7 + $0x20] sm:$0xff]
    %v654 = vld [vmem:[%s7 + $0x28] sm:$0xff]
    %v655 = vld [vmem:[%s7 + $0x30] sm:$0xff]
    %v656 = vld [vmem:[%s7 + $0x38] sm:$0xff]
    %v657 = vlaneseq
    %v658 = vshrl.u32 %v657, 7
    %v659 = vsub.s32 0, %v658
    %v660 = vrot.slane %v646, %v659
    %vm661 = vcmask 261120
    %v663 = vsel %vm661, %v31, 0
    %v666 = vsel %vm661, %v32, 0
    %v669 = vsel %vm661, %v34, 0
    %671 = vmatprep.subr.mxu0 0.0
    %672 = vmatpush1.xpose.msra.mxu0 %v669
    %673 = vmatprep.subr.mxu0 0.0
    %674 = vmatpush1.xpose.msra.mxu0 0.0
    %675 = vmatprep.subr.mxu0 0.0
    %676 = vmatpush1.xpose.msra.mxu0 0.0
    %677 = vmatprep.subr.mxu0 0.0
    %678 = vmatpush1.xpose.msra.mxu0 0.0
    %679 = vmatprep.subr.mxu0 0.0
    %680 = vmatpush1.xpose.msra.mxu0 0.0
    %681 = vmatprep.subr.mxu0 0.0
    %682 = vmatpush1.xpose.msra.mxu0 0.0
    %683 = vmatprep.subr.mxu0 0.0
    %684 = vmatpush1.xpose.msra.mxu0 0.0
    %685 = vmatprep.subr.mxu0 0.0
    %686 = vmatpush1.xpose.msra.mxu0 0.0
    %687 = vmatprep.subr.mxu0 0.0
    %688 = vmatpush1.xpose.msra.mxu0 0.0
    %689 = vmatprep.subr.mxu0 0.0
    %690 = vmatpush1.xpose.msra.mxu0 0.0
    %691 = vmatprep.subr.mxu0 0.0
    %692 = vmatpush1.xpose.msra.mxu0 0.0
    %693 = vmatprep.subr.mxu0 0.0
    %694 = vmatpush1.xpose.msra.mxu0 0.0
    %695 = vmatprep.subr.mxu0 0.0
    %696 = vmatpush1.xpose.msra.mxu0 0.0
    %697 = vmatprep.subr.mxu0 0.0
    %698 = vmatpush1.xpose.msra.mxu0 0.0
    %699 = vmatprep.subr.mxu0 0.0
    %700 = vmatpush1.xpose.msra.mxu0 0.0
    %701 = vmatprep.subr.mxu0 0.0
    %702 = vmatpush1.xpose.msra.mxu0 0.0
    %703 = vmatprep.subr.mxu0 0.0
    %704 = vmatpush1.xpose.msra.mxu0 0.0
    %705 = vmatprep.subr.mxu0 0.0
    %706 = vmatpush1.xpose.msra.mxu0 0.0
    %707 = vmatprep.subr.mxu0 0.0
    %708 = vmatpush1.xpose.msra.mxu0 0.0
    %709 = vmatprep.subr.mxu0 0.0
    %710 = vmatpush1.xpose.msra.mxu0 0.0
    %711 = vmatprep.subr.mxu0 0.0
    %712 = vmatpush1.xpose.msra.mxu0 0.0
    %713 = vmatprep.subr.mxu0 0.0
    %714 = vmatpush1.xpose.msra.mxu0 0.0
    %715 = vmatprep.subr.mxu0 0.0
    %716 = vmatpush1.xpose.msra.mxu0 0.0
    %717 = vmatprep.subr.mxu0 0.0
    %718 = vmatpush1.xpose.msra.mxu0 0.0
    %719 = vmatprep.subr.mxu0 0.0
    %720 = vmatpush1.xpose.msra.mxu0 0.0
    %721 = vmatprep.subr.mxu0 0.0
    %722 = vmatpush1.xpose.msra.mxu0 0.0
    %723 = vmatprep.subr.mxu0 0.0
    %724 = vmatpush1.xpose.msra.mxu0 0.0
    %725 = vmatprep.subr.mxu0 0.0
    %726 = vmatpush1.xpose.msra.mxu0 0.0
    %727 = vmatprep.subr.mxu0 0.0
    %728 = vmatpush1.xpose.msra.mxu0 0.0
    %729 = vmatprep.subr.mxu0 0.0
    %730 = vmatpush1.xpose.msra.mxu0 0.0
    %731 = vmatprep.subr.mxu0 0.0
    %732 = vmatpush1.xpose.msra.mxu0 0.0
    %733 = vmatprep.subr.mxu0 0.0
    %734 = vmatpush1.xpose.msra.mxu0 0.0
    %735 = vmatprep.mubr.f32.mxu0 0.0
    %736 = vmatmul.mubr.f32.gmra.mrb[0].mxu0 %v663
    %v737 = vpop.f32.mrb[0].mxu0
    %v738 = vadd.f32 %v660, %v737
    %v739 = vpop.f32.mrb[0].mxu0
    %740 = vmatprep.mubr.f32.mxu0 0.0
    %741 = vmatmul.mubr.f32.gmra.mrb[0].mxu0 %v666
    %v742 = vpop.f32.mrb[0].mxu0
    %v743 = vadd.f32 %v660, %v742
    %v744 = vpop.f32.mrb[0].mxu0
    %745 = vdwg.mxu0
    %v746 = vmul.f32 %v738, 0.35355338
    %v747 = vmul.f32 %v743, 0.35355338
    %v748 = vlaneseq
    %v749 = vshrl.u32 %v748, 7
    %v750 = vsub.s32 1, %v749
    %v751 = vrot.slane %v646, %v750
    %v753 = vsel %vm661, %v38, 0
    %755 = vmatprep.subr.mxu0 0.0
    %756 = vmatpush1.xpose.msra.mxu0 %v753
    %757 = vmatprep.subr.mxu0 0.0
    %758 = vmatpush1.xpose.msra.mxu0 0.0
    %759 = vmatprep.subr.mxu0 0.0
    %760 = vmatpush1.xpose.msra.mxu0 0.0
    %761 = vmatprep.subr.mxu0 0.0
    %762 = vmatpush1.xpose.msra.mxu0 0.0
    %763 = vmatprep.subr.mxu0 0.0
    %764 = vmatpush1.xpose.msra.mxu0 0.0
    %765 = vmatprep.subr.mxu0 0.0
    %766 = vmatpush1.xpose.msra.mxu0 0.0
    %767 = vmatprep.subr.mxu0 0.0
    %768 = vmatpush1.xpose.msra.mxu0 0.0
    %769 = vmatprep.subr.mxu0 0.0
    %770 = vmatpush1.xpose.msra.mxu0 0.0
    %771 = vmatprep.subr.mxu0 0.0
    %772 = vmatpush1.xpose.msra.mxu0 0.0
    %773 = vmatprep.subr.mxu0 0.0
    %774 = vmatpush1.xpose.msra.mxu0 0.0
    %775 = vmatprep.subr.mxu0 0.0
    %776 = vmatpush1.xpose.msra.mxu0 0.0
    %777 = vmatprep.subr.mxu0 0.0
    %778 = vmatpush1.xpose.msra.mxu0 0.0
    %779 = vmatprep.subr.mxu0 0.0
    %780 = vmatpush1.xpose.msra.mxu0 0.0
    %781 = vmatprep.subr.mxu0 0.0
    %782 = vmatpush1.xpose.msra.mxu0 0.0
    %783 = vmatprep.subr.mxu0 0.0
    %784 = vmatpush1.xpose.msra.mxu0 0.0
    %785 = vmatprep.subr.mxu0 0.0
    %786 = vmatpush1.xpose.msra.mxu0 0.0
    %787 = vmatprep.subr.mxu0 0.0
    %788 = vmatpush1.xpose.msra.mxu0 0.0
    %789 = vmatprep.subr.mxu0 0.0
    %790 = vmatpush1.xpose.msra.mxu0 0.0
    %791 = vmatprep.subr.mxu0 0.0
    %792 = vmatpush1.xpose.msra.mxu0 0.0
    %793 = vmatprep.subr.mxu0 0.0
    %794 = vmatpush1.xpose.msra.mxu0 0.0
    %795 = vmatprep.subr.mxu0 0.0
    %796 = vmatpush1.xpose.msra.mxu0 0.0
    %797 = vmatprep.subr.mxu0 0.0
    %798 = vmatpush1.xpose.msra.mxu0 0.0
    %799 = vmatprep.subr.mxu0 0.0
    %800 = vmatpush1.xpose.msra.mxu0 0.0
    %801 = vmatprep.subr.mxu0 0.0
    %802 = vmatpush1.xpose.msra.mxu0 0.0
    %803 = vmatprep.subr.mxu0 0.0
    %804 = vmatpush1.xpose.msra.mxu0 0.0
    %805 = vmatprep.subr.mxu0 0.0
    %806 = vmatpush1.xpose.msra.mxu0 0.0
    %807 = vmatprep.subr.mxu0 0.0
    %808 = vmatpush1.xpose.msra.mxu0 0.0
    %809 = vmatprep.subr.mxu0 0.0
    %810 = vmatpush1.xpose.msra.mxu0 0.0
    %811 = vmatprep.subr.mxu0 0.0
    %812 = vmatpush1.xpose.msra.mxu0 0.0
    %813 = vmatprep.subr.mxu0 0.0
    %814 = vmatpush1.xpose.msra.mxu0 0.0
    %815 = vmatprep.subr.mxu0 0.0
    %816 = vmatpush1.xpose.msra.mxu0 0.0
    %817 = vmatprep.subr.mxu0 0.0
    %818 = vmatpush1.xpose.msra.mxu0 0.0
    %819 = vmatprep.mubr.f32.mxu0 0.0
    %820 = vmatmul.mubr.f32.gmra.mrb[0].mxu0 %v663
    %v821 = vpop.f32.mrb[0].mxu0
    %v822 = vadd.f32 %v751, %v821
    %v823 = vpop.f32.mrb[0].mxu0
    %824 = vmatprep.mubr.f32.mxu0 0.0
    %825 = vmatmul.mubr.f32.gmra.mrb[0].mxu0 %v666
    %v826 = vpop.f32.mrb[0].mxu0
    %v827 = vadd.f32 %v751, %v826
    %v828 = vpop.f32.mrb[0].mxu0
    %829 = vdwg.mxu0
    %v830 = vlaneseq
    %v831 = vshrl.u32 %v830, 7
    %v832 = vsub.s32 2, %v831
    %v833 = vrot.slane %v646, %v832
    %v835 = vsel %vm661, %v42, 0
    %837 = vmatprep.subr.mxu0 0.0
    %838 = vmatpush1.xpose.msra.mxu0 %v835
    %839 = vmatprep.subr.mxu0 0.0
    %840 = vmatpush1.xpose.msra.mxu0 0.0
    %841 = vmatprep.subr.mxu0 0.0
    %842 = vmatpush1.xpose.msra.mxu0 0.0
    %843 = vmatprep.subr.mxu0 0.0
    %844 = vmatpush1.xpose.msra.mxu0 0.0
    %845 = vmatprep.subr.mxu0 0.0
    %846 = vmatpush1.xpose.msra.mxu0 0.0
    %847 = vmatprep.subr.mxu0 0.0
    %848 = vmatpush1.xpose.msra.mxu0 0.0
    %849 = vmatprep.subr.mxu0 0.0
    %850 = vmatpush1.xpose.msra.mxu0 0.0
    %851 = vmatprep.subr.mxu0 0.0
    %852 = vmatpush1.xpose.msra.mxu0 0.0
    %853 = vmatprep.subr.mxu0 0.0
    %854 = vmatpush1.xpose.msra.mxu0 0.0
    %855 = vmatprep.subr.mxu0 0.0
    %856 = vmatpush1.xpose.msra.mxu0 0.0
    %857 = vmatprep.subr.mxu0 0.0
    %858 = vmatpush1.xpose.msra.mxu0 0.0
    %859 = vmatprep.subr.mxu0 0.0
    %860 = vmatpush1.xpose.msra.mxu0 0.0
    %861 = vmatprep.subr.mxu0 0.0
    %862 = vmatpush1.xpose.msra.mxu0 0.0
    %863 = vmatprep.subr.mxu0 0.0
    %864 = vmatpush1.xpose.msra.mxu0 0.0
    %865 = vmatprep.subr.mxu0 0.0
    %866 = vmatpush1.xpose.msra.mxu0 0.0
    %867 = vmatprep.subr.mxu0 0.0
    %868 = vmatpush1.xpose.msra.mxu0 0.0
    %869 = vmatprep.subr.mxu0 0.0
    %870 = vmatpush1.xpose.msra.mxu0 0.0
    %871 = vmatprep.subr.mxu0 0.0
    %872 = vmatpush1.xpose.msra.mxu0 0.0
    %873 = vmatprep.subr.mxu0 0.0
    %874 = vmatpush1.xpose.msra.mxu0 0.0
    %875 = vmatprep.subr.mxu0 0.0
    %876 = vmatpush1.xpose.msra.mxu0 0.0
    %877 = vmatprep.subr.mxu0 0.0
    %878 = vmatpush1.xpose.msra.mxu0 0.0
    %879 = vmatprep.subr.mxu0 0.0
    %880 = vmatpush1.xpose.msra.mxu0 0.0
    %881 = vmatprep.subr.mxu0 0.0
    %882 = vmatpush1.xpose.msra.mxu0 0.0
    %883 = vmatprep.subr.mxu0 0.0
    %884 = vmatpush1.xpose.msra.mxu0 0.0
    %885 = vmatprep.subr.mxu0 0.0
    %886 = vmatpush1.xpose.msra.mxu0 0.0
    %887 = vmatprep.subr.mxu0 0.0
    %888 = vmatpush1.xpose.msra.mxu0 0.0
    %889 = vmatprep.subr.mxu0 0.0
    %890 = vmatpush1.xpose.msra.mxu0 0.0
    %891 = vmatprep.subr.mxu0 0.0
    %892 = vmatpush1.xpose.msra.mxu0 0.0
    %893 = vmatprep.subr.mxu0 0.0
    %894 = vmatpush1.xpose.msra.mxu0 0.0
    %895 = vmatprep.subr.mxu0 0.0
    %896 = vmatpush1.xpose.msra.mxu0 0.0
    %897 = vmatprep.subr.mxu0 0.0
    %898 = vmatpush1.xpose.msra.mxu0 0.0
    %899 = vmatprep.subr.mxu0 0.0
    %900 = vmatpush1.xpose.msra.mxu0 0.0
    %901 = vmatprep.mubr.f32.mxu0 0.0
    %902 = vmatmul.mubr.f32.gmra.mrb[0].mxu0 %v663
    %v903 = vpop.f32.mrb[0].mxu0
    %v904 = vadd.f32 %v833, %v903
    %v905 = vpop.f32.mrb[0].mxu0
    %906 = vmatprep.mubr.f32.mxu0 0.0
    %907 = vmatmul.mubr.f32.gmra.mrb[0].mxu0 %v666
    %v908 = vpop.f32.mrb[0].mxu0
    %v909 = vadd.f32 %v833, %v908
    %v910 = vpop.f32.mrb[0].mxu0
    %911 = vdwg.mxu0
    %vm912 = vcmask 64512
    %v914 = vsel %vm912, %v746, 0
    %v917 = vsel %vm912, %v822, 0
    %919 = vmatprep.subr.mxu0 0.0
    %920 = vmatpush1.xpose.msra.mxu0 %v917
    %921 = vmatprep.subr.mxu0 0.0
    %922 = vmatpush1.xpose.msra.mxu0 0.0
    %923 = vmatprep.subr.mxu0 0.0
    %924 = vmatpush1.xpose.msra.mxu0 0.0
    %925 = vmatprep.subr.mxu0 0.0
    %926 = vmatpush1.xpose.msra.mxu0 0.0
    %927 = vmatprep.subr.mxu0 0.0
    %928 = vmatpush1.xpose.msra.mxu0 0.0
    %929 = vmatprep.subr.mxu0 0.0
    %930 = vmatpush1.xpose.msra.mxu0 0.0
    %931 = vmatprep.subr.mxu0 0.0
    %932 = vmatpush1.xpose.msra.mxu0 0.0
    %933 = vmatprep.subr.mxu0 0.0
    %934 = vmatpush1.xpose.msra.mxu0 0.0
    %935 = vmatprep.subr.mxu0 0.0
    %936 = vmatpush1.xpose.msra.mxu0 0.0
    %937 = vmatprep.subr.mxu0 0.0
    %938 = vmatpush1.xpose.msra.mxu0 0.0
    %939 = vmatprep.subr.mxu0 0.0
    %940 = vmatpush1.xpose.msra.mxu0 0.0
    %941 = vmatprep.subr.mxu0 0.0
    %942 = vmatpush1.xpose.msra.mxu0 0.0
    %943 = vmatprep.subr.mxu0 0.0
    %944 = vmatpush1.xpose.msra.mxu0 0.0
    %945 = vmatprep.subr.mxu0 0.0
    %946 = vmatpush1.xpose.msra.mxu0 0.0
    %947 = vmatprep.subr.mxu0 0.0
    %948 = vmatpush1.xpose.msra.mxu0 0.0
    %949 = vmatprep.subr.mxu0 0.0
    %950 = vmatpush1.xpose.msra.mxu0 0.0
    %951 = vmatprep.subr.mxu0 0.0
    %952 = vmatpush1.xpose.msra.mxu0 0.0
    %953 = vmatprep.subr.mxu0 0.0
    %954 = vmatpush1.xpose.msra.mxu0 0.0
    %955 = vmatprep.subr.mxu0 0.0
    %956 = vmatpush1.xpose.msra.mxu0 0.0
    %957 = vmatprep.subr.mxu0 0.0
    %958 = vmatpush1.xpose.msra.mxu0 0.0
    %959 = vmatprep.subr.mxu0 0.0
    %960 = vmatpush1.xpose.msra.mxu0 0.0
    %961 = vmatprep.subr.mxu0 0.0
    %962 = vmatpush1.xpose.msra.mxu0 0.0
    %963 = vmatprep.subr.mxu0 0.0
    %964 = vmatpush1.xpose.msra.mxu0 0.0
    %965 = vmatprep.subr.mxu0 0.0
    %966 = vmatpush1.xpose.msra.mxu0 0.0
    %967 = vmatprep.subr.mxu0 0.0
    %968 = vmatpush1.xpose.msra.mxu0 0.0
    %969 = vmatprep.subr.mxu0 0.0
    %970 = vmatpush1.xpose.msra.mxu0 0.0
    %971 = vmatprep.subr.mxu0 0.0
    %972 = vmatpush1.xpose.msra.mxu0 0.0
    %973 = vmatprep.subr.mxu0 0.0
    %974 = vmatpush1.xpose.msra.mxu0 0.0
    %975 = vmatprep.subr.mxu0 0.0
    %976 = vmatpush1.xpose.msra.mxu0 0.0
    %977 = vmatprep.subr.mxu0 0.0
    %978 = vmatpush1.xpose.msra.mxu0 0.0
    %979 = vmatprep.subr.mxu0 0.0
    %980 = vmatpush1.xpose.msra.mxu0 0.0
    %981 = vmatprep.subr.mxu0 0.0
    %982 = vmatpush1.xpose.msra.mxu0 0.0
    %983 = vmatprep.mubr.f32.mxu0 0.0
    %984 = vmatmul.mubr.f32.gmra.mrb[0].mxu0 %v914
    %v985 = vpop.f32.mrb[0].mxu0
    %v986 = vadd.f32 0.0, %v985
    %v987 = vpop.f32.mrb[0].mxu0
    %988 = vdwg.mxu0
    %v990 = vsel %vm912, %v747, 0
    %v993 = vsel %vm912, %v827, 0
    %995 = vmatprep.subr.mxu0 0.0
    %996 = vmatpush1.xpose.msra.mxu0 %v993
    %997 = vmatprep.subr.mxu0 0.0
    %998 = vmatpush1.xpose.msra.mxu0 0.0
    %999 = vmatprep.subr.mxu0 0.0
    %1000 = vmatpush1.xpose.msra.mxu0 0.0
    %1001 = vmatprep.subr.mxu0 0.0
    %1002 = vmatpush1.xpose.msra.mxu0 0.0
    %1003 = vmatprep.subr.mxu0 0.0
    %1004 = vmatpush1.xpose.msra.mxu0 0.0
    %1005 = vmatprep.subr.mxu0 0.0
    %1006 = vmatpush1.xpose.msra.mxu0 0.0
    %1007 = vmatprep.subr.mxu0 0.0
    %1008 = vmatpush1.xpose.msra.mxu0 0.0
    %1009 = vmatprep.subr.mxu0 0.0
    %1010 = vmatpush1.xpose.msra.mxu0 0.0
    %1011 = vmatprep.subr.mxu0 0.0
    %1012 = vmatpush1.xpose.msra.mxu0 0.0
    %1013 = vmatprep.subr.mxu0 0.0
    %1014 = vmatpush1.xpose.msra.mxu0 0.0
    %1015 = vmatprep.subr.mxu0 0.0
    %1016 = vmatpush1.xpose.msra.mxu0 0.0
    %1017 = vmatprep.subr.mxu0 0.0
    %1018 = vmatpush1.xpose.msra.mxu0 0.0
    %1019 = vmatprep.subr.mxu0 0.0
    %1020 = vmatpush1.xpose.msra.mxu0 0.0
    %1021 = vmatprep.subr.mxu0 0.0
    %1022 = vmatpush1.xpose.msra.mxu0 0.0
    %1023 = vmatprep.subr.mxu0 0.0
    %1024 = vmatpush1.xpose.msra.mxu0 0.0
    %1025 = vmatprep.subr.mxu0 0.0
    %1026 = vmatpush1.xpose.msra.mxu0 0.0
    %1027 = vmatprep.subr.mxu0 0.0
    %1028 = vmatpush1.xpose.msra.mxu0 0.0
    %1029 = vmatprep.subr.mxu0 0.0
    %1030 = vmatpush1.xpose.msra.mxu0 0.0
    %1031 = vmatprep.subr.mxu0 0.0
    %1032 = vmatpush1.xpose.msra.mxu0 0.0
    %1033 = vmatprep.subr.mxu0 0.0
    %1034 = vmatpush1.xpose.msra.mxu0 0.0
    %1035 = vmatprep.subr.mxu0 0.0
    %1036 = vmatpush1.xpose.msra.mxu0 0.0
    %1037 = vmatprep.subr.mxu0 0.0
    %1038 = vmatpush1.xpose.msra.mxu0 0.0
    %1039 = vmatprep.subr.mxu0 0.0
    %1040 = vmatpush1.xpose.msra.mxu0 0.0
    %1041 = vmatprep.subr.mxu0 0.0
    %1042 = vmatpush1.xpose.msra.mxu0 0.0
    %1043 = vmatprep.subr.mxu0 0.0
    %1044 = vmatpush1.xpose.msra.mxu0 0.0
    %1045 = vmatprep.subr.mxu0 0.0
    %1046 = vmatpush1.xpose.msra.mxu0 0.0
    %1047 = vmatprep.subr.mxu0 0.0
    %1048 = vmatpush1.xpose.msra.mxu0 0.0
    %1049 = vmatprep.subr.mxu0 0.0
    %1050 = vmatpush1.xpose.msra.mxu0 0.0
    %1051 = vmatprep.subr.mxu0 0.0
    %1052 = vmatpush1.xpose.msra.mxu0 0.0
    %1053 = vmatprep.subr.mxu0 0.0
    %1054 = vmatpush1.xpose.msra.mxu0 0.0
    %1055 = vmatprep.subr.mxu0 0.0
    %1056 = vmatpush1.xpose.msra.mxu0 0.0
    %1057 = vmatprep.subr.mxu0 0.0
    %1058 = vmatpush1.xpose.msra.mxu0 0.0
    %1059 = vmatprep.mubr.f32.mxu0 0.0
    %1060 = vmatmul.mubr.f32.gmra.mrb[0].mxu0 %v990
    %v1061 = vpop.f32.mrb[0].mxu0
    %v1062 = vadd.f32 0.0, %v1061
    %v1063 = vpop.f32.mrb[0].mxu0
    %1064 = vdwg.mxu0
    %v1065 = vsel %vm912, %v986, -inf
    %1066 = vmax.xlane.f32.xlu0 %v1065
    %v1067 = vpop.xlane.xlu0 %1066
    %v1068 = vsel %vm912, %v1062, -inf
    %1069 = vmax.xlane.f32.xlu0 %v1068
    %v1070 = vpop.xlane.xlu0 %1069
    %v1071 = vsub.f32 %v986, %v1067
    %v1072 = vsub.f32 %v1062, %v1070
    %v1073 = vmul.f32 %v1071, 1.442695
    %v1074 = vpow.pop %v1073
    %v1075 = vmul.f32 %v1072, 1.442695
    %v1076 = vpow.pop %v1075
    %v1077 = vsel %vm912, %v1074, 0.0
    %1078 = vadd.xlane.f32.xlu0 %v1077
    %v1079 = vpop.xlane.xlu0 %1078
    %v1080 = vsel %vm912, %v1076, 0.0
    %1081 = vadd.xlane.f32.xlu0 %v1080
    %v1082 = vpop.xlane.xlu0 %1081
    %v1083 = vrcp.pop %v1079
    %v1084 = vrcp.pop %v1082
    %v1085 = vmul.f32 %v1074, %v1083
    %v1086 = vmul.f32 %v1076, %v1084
    %v1088 = vsel %vm912, %v1085, 0
    %1090 = vmatprep.subr.mxu0 0.0
    %1091 = vmatpush1.msra.mxu0 %v904
    %1092 = vmatprep.subr.mxu0 0.0
    %1093 = vmatpush1.msra.mxu0 0.0
    %1094 = vmatprep.subr.mxu0 0.0
    %1095 = vmatpush1.msra.mxu0 0.0
    %1096 = vmatprep.subr.mxu0 0.0
    %1097 = vmatpush1.msra.mxu0 0.0
    %1098 = vmatprep.subr.mxu0 0.0
    %1099 = vmatpush1.msra.mxu0 0.0
    %1100 = vmatprep.subr.mxu0 0.0
    %1101 = vmatpush1.msra.mxu0 0.0
    %1102 = vmatprep.subr.mxu0 0.0
    %1103 = vmatpush1.msra.mxu0 0.0
    %1104 = vmatprep.subr.mxu0 0.0
    %1105 = vmatpush1.msra.mxu0 0.0
    %1106 = vmatprep.subr.mxu0 0.0
    %1107 = vmatpush1.msra.mxu0 0.0
    %1108 = vmatprep.subr.mxu0 0.0
    %1109 = vmatpush1.msra.mxu0 0.0
    %1110 = vmatprep.subr.mxu0 0.0
    %1111 = vmatpush1.msra.mxu0 0.0
    %1112 = vmatprep.subr.mxu0 0.0
    %1113 = vmatpush1.msra.mxu0 0.0
    %1114 = vmatprep.subr.mxu0 0.0
    %1115 = vmatpush1.msra.mxu0 0.0
    %1116 = vmatprep.subr.mxu0 0.0
    %1117 = vmatpush1.msra.mxu0 0.0
    %1118 = vmatprep.subr.mxu0 0.0
    %1119 = vmatpush1.msra.mxu0 0.0
    %1120 = vmatprep.subr.mxu0 0.0
    %1121 = vmatpush1.msra.mxu0 0.0
    %1122 = vmatprep.subr.mxu0 0.0
    %1123 = vmatpush1.msra.mxu0 0.0
    %1124 = vmatprep.subr.mxu0 0.0
    %1125 = vmatpush1.msra.mxu0 0.0
    %1126 = vmatprep.subr.mxu0 0.0
    %1127 = vmatpush1.msra.mxu0 0.0
    %1128 = vmatprep.subr.mxu0 0.0
    %1129 = vmatpush1.msra.mxu0 0.0
    %1130 = vmatprep.subr.mxu0 0.0
    %1131 = vmatpush1.msra.mxu0 0.0
    %1132 = vmatprep.subr.mxu0 0.0
    %1133 = vmatpush1.msra.mxu0 0.0
    %1134 = vmatprep.subr.mxu0 0.0
    %1135 = vmatpush1.msra.mxu0 0.0
    %1136 = vmatprep.subr.mxu0 0.0
    %1137 = vmatpush1.msra.mxu0 0.0
    %1138 = vmatprep.subr.mxu0 0.0
    %1139 = vmatpush1.msra.mxu0 0.0
    %1140 = vmatprep.subr.mxu0 0.0
    %1141 = vmatpush1.msra.mxu0 0.0
    %1142 = vmatprep.subr.mxu0 0.0
    %1143 = vmatpush1.msra.mxu0 0.0
    %1144 = vmatprep.subr.mxu0 0.0
    %1145 = vmatpush1.msra.mxu0 0.0
    %1146 = vmatprep.subr.mxu0 0.0
    %1147 = vmatpush1.msra.mxu0 0.0
    %1148 = vmatprep.subr.mxu0 0.0
    %1149 = vmatpush1.msra.mxu0 0.0
    %1150 = vmatprep.subr.mxu0 0.0
    %1151 = vmatpush1.msra.mxu0 0.0
    %1152 = vmatprep.subr.mxu0 0.0
    %1153 = vmatpush1.msra.mxu0 0.0
    %1154 = vmatprep.mubr.f32.mxu0 0.0
    %1155 = vmatmul.mubr.f32.gmra.mrb[0].mxu0 %v1088
    %v1156 = vpop.f32.mrb[0].mxu0
    %v1157 = vadd.f32 0.0, %v1156
    %v1158 = vpop.f32.mrb[0].mxu0
    %1159 = vdwg.mxu0
    %v1161 = vsel %vm912, %v1086, 0
    %1163 = vmatprep.subr.mxu0 0.0
    %1164 = vmatpush1.msra.mxu0 %v909
    %1165 = vmatprep.subr.mxu0 0.0
    %1166 = vmatpush1.msra.mxu0 0.0
    %1167 = vmatprep.subr.mxu0 0.0
    %1168 = vmatpush1.msra.mxu0 0.0
    %1169 = vmatprep.subr.mxu0 0.0
    %1170 = vmatpush1.msra.mxu0 0.0
    %1171 = vmatprep.subr.mxu0 0.0
    %1172 = vmatpush1.msra.mxu0 0.0
    %1173 = vmatprep.subr.mxu0 0.0
    %1174 = vmatpush1.msra.mxu0 0.0
    %1175 = vmatprep.subr.mxu0 0.0
    %1176 = vmatpush1.msra.mxu0 0.0
    %1177 = vmatprep.subr.mxu0 0.0
    %1178 = vmatpush1.msra.mxu0 0.0
    %1179 = vmatprep.subr.mxu0 0.0
    %1180 = vmatpush1.msra.mxu0 0.0
    %1181 = vmatprep.subr.mxu0 0.0
    %1182 = vmatpush1.msra.mxu0 0.0
    %1183 = vmatprep.subr.mxu0 0.0
    %1184 = vmatpush1.msra.mxu0 0.0
    %1185 = vmatprep.subr.mxu0 0.0
    %1186 = vmatpush1.msra.mxu0 0.0
    %1187 = vmatprep.subr.mxu0 0.0
    %1188 = vmatpush1.msra.mxu0 0.0
    %1189 = vmatprep.subr.mxu0 0.0
    %1190 = vmatpush1.msra.mxu0 0.0
    %1191 = vmatprep.subr.mxu0 0.0
    %1192 = vmatpush1.msra.mxu0 0.0
    %1193 = vmatprep.subr.mxu0 0.0
    %1194 = vmatpush1.msra.mxu0 0.0
    %1195 = vmatprep.subr.mxu0 0.0
    %1196 = vmatpush1.msra.mxu0 0.0
    %1197 = vmatprep.subr.mxu0 0.0
    %1198 = vmatpush1.msra.mxu0 0.0
    %1199 = vmatprep.subr.mxu0 0.0
    %1200 = vmatpush1.msra.mxu0 0.0
    %1201 = vmatprep.subr.mxu0 0.0
    %1202 = vmatpush1.msra.mxu0 0.0
    %1203 = vmatprep.subr.mxu0 0.0
    %1204 = vmatpush1.msra.mxu0 0.0
    %1205 = vmatprep.subr.mxu0 0.0
    %1206 = vmatpush1.msra.mxu0 0.0
    %1207 = vmatprep.subr.mxu0 0.0
    %1208 = vmatpush1.msra.mxu0 0.0
    %1209 = vmatprep.subr.mxu0 0.0
    %1210 = vmatpush1.msra.mxu0 0.0
    %1211 = vmatprep.subr.mxu0 0.0
    %1212 = vmatpush1.msra.mxu0 0.0
    %1213 = vmatprep.subr.mxu0 0.0
    %1214 = vmatpush1.msra.mxu0 0.0
    %1215 = vmatprep.subr.mxu0 0.0
    %1216 = vmatpush1.msra.mxu0 0.0
    %1217 = vmatprep.subr.mxu0 0.0
    %1218 = vmatpush1.msra.mxu0 0.0
    %1219 = vmatprep.subr.mxu0 0.0
    %1220 = vmatpush1.msra.mxu0 0.0
    %1221 = vmatprep.subr.mxu0 0.0
    %1222 = vmatpush1.msra.mxu0 0.0
    %1223 = vmatprep.subr.mxu0 0.0
    %1224 = vmatpush1.msra.mxu0 0.0
    %1225 = vmatprep.subr.mxu0 0.0
    %1226 = vmatpush1.msra.mxu0 0.0
    %1227 = vmatprep.mubr.f32.mxu0 0.0
    %1228 = vmatmul.mubr.f32.gmra.mrb[0].mxu0 %v1161
    %v1229 = vpop.f32.mrb[0].mxu0
    %v1230 = vadd.f32 0.0, %v1229
    %v1231 = vpop.f32.mrb[0].mxu0
    %1232 = vdwg.mxu0
    %1234 = vrot.lane.b32.xlu0 %v660, 120
    %v1235 = vpop.permute.xlu0 %1234
    %v1238 = vsel %vm661, %v35, 0
    %1240 = vmatprep.subr.mxu0 0.0
    %1241 = vmatpush1.xpose.msra.mxu0 %v1238
    %1242 = vmatprep.subr.mxu0 0.0
    %1243 = vmatpush1.xpose.msra.mxu0 0.0
    %1244 = vmatprep.subr.mxu0 0.0
    %1245 = vmatpush1.xpose.msra.mxu0 0.0
    %1246 = vmatprep.subr.mxu0 0.0
    %1247 = vmatpush1.xpose.msra.mxu0 0.0
    %1248 = vmatprep.subr.mxu0 0.0
    %1249 = vmatpush1.xpose.msra.mxu0 0.0
    %1250 = vmatprep.subr.mxu0 0.0
    %1251 = vmatpush1.xpose.msra.mxu0 0.0
    %1252 = vmatprep.subr.mxu0 0.0
    %1253 = vmatpush1.xpose.msra.mxu0 0.0
    %1254 = vmatprep.subr.mxu0 0.0
    %1255 = vmatpush1.xpose.msra.mxu0 0.0
    %1256 = vmatprep.subr.mxu0 0.0
    %1257 = vmatpush1.xpose.msra.mxu0 0.0
    %1258 = vmatprep.subr.mxu0 0.0
    %1259 = vmatpush1.xpose.msra.mxu0 0.0
    %1260 = vmatprep.subr.mxu0 0.0
    %1261 = vmatpush1.xpose.msra.mxu0 0.0
    %1262 = vmatprep.subr.mxu0 0.0
    %1263 = vmatpush1.xpose.msra.mxu0 0.0
    %1264 = vmatprep.subr.mxu0 0.0
    %1265 = vmatpush1.xpose.msra.mxu0 0.0
    %1266 = vmatprep.subr.mxu0 0.0
    %1267 = vmatpush1.xpose.msra.mxu0 0.0
    %1268 = vmatprep.subr.mxu0 0.0
    %1269 = vmatpush1.xpose.msra.mxu0 0.0
    %1270 = vmatprep.subr.mxu0 0.0
    %1271 = vmatpush1.xpose.msra.mxu0 0.0
    %1272 = vmatprep.subr.mxu0 0.0
    %1273 = vmatpush1.xpose.msra.mxu0 0.0
    %1274 = vmatprep.subr.mxu0 0.0
    %1275 = vmatpush1.xpose.msra.mxu0 0.0
    %1276 = vmatprep.subr.mxu0 0.0
    %1277 = vmatpush1.xpose.msra.mxu0 0.0
    %1278 = vmatprep.subr.mxu0 0.0
    %1279 = vmatpush1.xpose.msra.mxu0 0.0
    %1280 = vmatprep.subr.mxu0 0.0
    %1281 = vmatpush1.xpose.msra.mxu0 0.0
    %1282 = vmatprep.subr.mxu0 0.0
    %1283 = vmatpush1.xpose.msra.mxu0 0.0
    %1284 = vmatprep.subr.mxu0 0.0
    %1285 = vmatpush1.xpose.msra.mxu0 0.0
    %1286 = vmatprep.subr.mxu0 0.0
    %1287 = vmatpush1.xpose.msra.mxu0 0.0
    %1288 = vmatprep.subr.mxu0 0.0
    %1289 = vmatpush1.xpose.msra.mxu0 0.0
    %1290 = vmatprep.subr.mxu0 0.0
    %1291 = vmatpush1.xpose.msra.mxu0 0.0
    %1292 = vmatprep.subr.mxu0 0.0
    %1293 = vmatpush1.xpose.msra.mxu0 0.0
    %1294 = vmatprep.subr.mxu0 0.0
    %1295 = vmatpush1.xpose.msra.mxu0 0.0
    %1296 = vmatprep.subr.mxu0 0.0
    %1297 = vmatpush1.xpose.msra.mxu0 0.0
    %1298 = vmatprep.subr.mxu0 0.0
    %1299 = vmatpush1.xpose.msra.mxu0 0.0
    %1300 = vmatprep.subr.mxu0 0.0
    %1301 = vmatpush1.xpose.msra.mxu0 0.0
    %1302 = vmatprep.subr.mxu0 0.0
    %1303 = vmatpush1.xpose.msra.mxu0 0.0
    %1304 = vmatprep.mubr.f32.mxu0 0.0
    %1305 = vmatmul.mubr.f32.gmra.mrb[0].mxu0 %v663
    %v1306 = vpop.f32.mrb[0].mxu0
    %v1307 = vadd.f32 %v1235, %v1306
    %v1308 = vpop.f32.mrb[0].mxu0
    %1309 = vmatprep.mubr.f32.mxu0 0.0
    %1310 = vmatmul.mubr.f32.gmra.mrb[0].mxu0 %v666
    %v1311 = vpop.f32.mrb[0].mxu0
    %v1312 = vadd.f32 %v1235, %v1311
    %v1313 = vpop.f32.mrb[0].mxu0
    %1314 = vdwg.mxu0
    %v1315 = vmul.f32 %v1307, 0.35355338
    %v1316 = vmul.f32 %v1312, 0.35355338
    %1318 = vrot.lane.b32.xlu0 %v751, 120
    %v1319 = vpop.permute.xlu0 %1318
    %v1322 = vsel %vm661, %v39, 0
    %1324 = vmatprep.subr.mxu0 0.0
    %1325 = vmatpush1.xpose.msra.mxu0 %v1322
    %1326 = vmatprep.subr.mxu0 0.0
    %1327 = vmatpush1.xpose.msra.mxu0 0.0
    %1328 = vmatprep.subr.mxu0 0.0
    %1329 = vmatpush1.xpose.msra.mxu0 0.0
    %1330 = vmatprep.subr.mxu0 0.0
    %1331 = vmatpush1.xpose.msra.mxu0 0.0
    %1332 = vmatprep.subr.mxu0 0.0
    %1333 = vmatpush1.xpose.msra.mxu0 0.0
    %1334 = vmatprep.subr.mxu0 0.0
    %1335 = vmatpush1.xpose.msra.mxu0 0.0
    %1336 = vmatprep.subr.mxu0 0.0
    %1337 = vmatpush1.xpose.msra.mxu0 0.0
    %1338 = vmatprep.subr.mxu0 0.0
    %1339 = vmatpush1.xpose.msra.mxu0 0.0
    %1340 = vmatprep.subr.mxu0 0.0
    %1341 = vmatpush1.xpose.msra.mxu0 0.0
    %1342 = vmatprep.subr.mxu0 0.0
    %1343 = vmatpush1.xpose.msra.mxu0 0.0
    %1344 = vmatprep.subr.mxu0 0.0
    %1345 = vmatpush1.xpose.msra.mxu0 0.0
    %1346 = vmatprep.subr.mxu0 0.0
    %1347 = vmatpush1.xpose.msra.mxu0 0.0
    %1348 = vmatprep.subr.mxu0 0.0
    %1349 = vmatpush1.xpose.msra.mxu0 0.0
    %1350 = vmatprep.subr.mxu0 0.0
    %1351 = vmatpush1.xpose.msra.mxu0 0.0
    %1352 = vmatprep.subr.mxu0 0.0
    %1353 = vmatpush1.xpose.msra.mxu0 0.0
    %1354 = vmatprep.subr.mxu0 0.0
    %1355 = vmatpush1.xpose.msra.mxu0 0.0
    %1356 = vmatprep.subr.mxu0 0.0
    %1357 = vmatpush1.xpose.msra.mxu0 0.0
    %1358 = vmatprep.subr.mxu0 0.0
    %1359 = vmatpush1.xpose.msra.mxu0 0.0
    %1360 = vmatprep.subr.mxu0 0.0
    %1361 = vmatpush1.xpose.msra.mxu0 0.0
    %1362 = vmatprep.subr.mxu0 0.0
    %1363 = vmatpush1.xpose.msra.mxu0 0.0
    %1364 = vmatprep.subr.mxu0 0.0
    %1365 = vmatpush1.xpose.msra.mxu0 0.0
    %1366 = vmatprep.subr.mxu0 0.0
    %1367 = vmatpush1.xpose.msra.mxu0 0.0
    %1368 = vmatprep.subr.mxu0 0.0
    %1369 = vmatpush1.xpose.msra.mxu0 0.0
    %1370 = vmatprep.subr.mxu0 0.0
    %1371 = vmatpush1.xpose.msra.mxu0 0.0
    %1372 = vmatprep.subr.mxu0 0.0
    %1373 = vmatpush1.xpose.msra.mxu0 0.0
    %1374 = vmatprep.subr.mxu0 0.0
    %1375 = vmatpush1.xpose.msra.mxu0 0.0
    %1376 = vmatprep.subr.mxu0 0.0
    %1377 = vmatpush1.xpose.msra.mxu0 0.0
    %1378 = vmatprep.subr.mxu0 0.0
    %1379 = vmatpush1.xpose.msra.mxu0 0.0
    %1380 = vmatprep.subr.mxu0 0.0
    %1381 = vmatpush1.xpose.msra.mxu0 0.0
    %1382 = vmatprep.subr.mxu0 0.0
    %1383 = vmatpush1.xpose.msra.mxu0 0.0
    %1384 = vmatprep.subr.mxu0 0.0
    %1385 = vmatpush1.xpose.msra.mxu0 0.0
    %1386 = vmatprep.subr.mxu0 0.0
    %1387 = vmatpush1.xpose.msra.mxu0 0.0
    %1388 = vmatprep.mubr.f32.mxu0 0.0
    %1389 = vmatmul.mubr.f32.gmra.mrb[0].mxu0 %v663
    %v1390 = vpop.f32.mrb[0].mxu0
    %v1391 = vadd.f32 %v1319, %v1390
    %v1392 = vpop.f32.mrb[0].mxu0
    %1393 = vmatprep.mubr.f32.mxu0 0.0
    %1394 = vmatmul.mubr.f32.gmra.mrb[0].mxu0 %v666
    %v1395 = vpop.f32.mrb[0].mxu0
    %v1396 = vadd.f32 %v1319, %v1395
    %v1397 = vpop.f32.mrb[0].mxu0
    %1398 = vdwg.mxu0
    %1400 = vrot.lane.b32.xlu0 %v833, 120
    %v1401 = vpop.permute.xlu0 %1400
    %v1404 = vsel %vm661, %v43, 0
    %1406 = vmatprep.subr.mxu0 0.0
    %1407 = vmatpush1.xpose.msra.mxu0 %v1404
    %1408 = vmatprep.subr.mxu0 0.0
    %1409 = vmatpush1.xpose.msra.mxu0 0.0
    %1410 = vmatprep.subr.mxu0 0.0
    %1411 = vmatpush1.xpose.msra.mxu0 0.0
    %1412 = vmatprep.subr.mxu0 0.0
    %1413 = vmatpush1.xpose.msra.mxu0 0.0
    %1414 = vmatprep.subr.mxu0 0.0
    %1415 = vmatpush1.xpose.msra.mxu0 0.0
    %1416 = vmatprep.subr.mxu0 0.0
    %1417 = vmatpush1.xpose.msra.mxu0 0.0
    %1418 = vmatprep.subr.mxu0 0.0
    %1419 = vmatpush1.xpose.msra.mxu0 0.0
    %1420 = vmatprep.subr.mxu0 0.0
    %1421 = vmatpush1.xpose.msra.mxu0 0.0
    %1422 = vmatprep.subr.mxu0 0.0
    %1423 = vmatpush1.xpose.msra.mxu0 0.0
    %1424 = vmatprep.subr.mxu0 0.0
    %1425 = vmatpush1.xpose.msra.mxu0 0.0
    %1426 = vmatprep.subr.mxu0 0.0
    %1427 = vmatpush1.xpose.msra.mxu0 0.0
    %1428 = vmatprep.subr.mxu0 0.0
    %1429 = vmatpush1.xpose.msra.mxu0 0.0
    %1430 = vmatprep.subr.mxu0 0.0
    %1431 = vmatpush1.xpose.msra.mxu0 0.0
    %1432 = vmatprep.subr.mxu0 0.0
    %1433 = vmatpush1.xpose.msra.mxu0 0.0
    %1434 = vmatprep.subr.mxu0 0.0
    %1435 = vmatpush1.xpose.msra.mxu0 0.0
    %1436 = vmatprep.subr.mxu0 0.0
    %1437 = vmatpush1.xpose.msra.mxu0 0.0
    %1438 = vmatprep.subr.mxu0 0.0
    %1439 = vmatpush1.xpose.msra.mxu0 0.0
    %1440 = vmatprep.subr.mxu0 0.0
    %1441 = vmatpush1.xpose.msra.mxu0 0.0
    %1442 = vmatprep.subr.mxu0 0.0
    %1443 = vmatpush1.xpose.msra.mxu0 0.0
    %1444 = vmatprep.subr.mxu0 0.0
    %1445 = vmatpush1.xpose.msra.mxu0 0.0
    %1446 = vmatprep.subr.mxu0 0.0
    %1447 = vmatpush1.xpose.msra.mxu0 0.0
    %1448 = vmatprep.subr.mxu0 0.0
    %1449 = vmatpush1.xpose.msra.mxu0 0.0
    %1450 = vmatprep.subr.mxu0 0.0
    %1451 = vmatpush1.xpose.msra.mxu0 0.0
    %1452 = vmatprep.subr.mxu0 0.0
    %1453 = vmatpush1.xpose.msra.mxu0 0.0
    %1454 = vmatprep.subr.mxu0 0.0
    %1455 = vmatpush1.xpose.msra.mxu0 0.0
    %1456 = vmatprep.subr.mxu0 0.0
    %1457 = vmatpush1.xpose.msra.mxu0 0.0
    %1458 = vmatprep.subr.mxu0 0.0
    %1459 = vmatpush1.xpose.msra.mxu0 0.0
    %1460 = vmatprep.subr.mxu0 0.0
    %1461 = vmatpush1.xpose.msra.mxu0 0.0
    %1462 = vmatprep.subr.mxu0 0.0
    %1463 = vmatpush1.xpose.msra.mxu0 0.0
    %1464 = vmatprep.subr.mxu0 0.0
    %1465 = vmatpush1.xpose.msra.mxu0 0.0
    %1466 = vmatprep.subr.mxu0 0.0
    %1467 = vmatpush1.xpose.msra.mxu0 0.0
    %1468 = vmatprep.subr.mxu0 0.0
    %1469 = vmatpush1.xpose.msra.mxu0 0.0
    %1470 = vmatprep.mubr.f32.mxu0 0.0
    %1471 = vmatmul.mubr.f32.gmra.mrb[0].mxu0 %v663
    %v1472 = vpop.f32.mrb[0].mxu0
    %v1473 = vadd.f32 %v1401, %v1472
    %v1474 = vpop.f32.mrb[0].mxu0
    %1475 = vmatprep.mubr.f32.mxu0 0.0
    %1476 = vmatmul.mubr.f32.gmra.mrb[0].mxu0 %v666
    %v1477 = vpop.f32.mrb[0].mxu0
    %v1478 = vadd.f32 %v1401, %v1477
    %v1479 = vpop.f32.mrb[0].mxu0
    %1480 = vdwg.mxu0
    %v1482 = vsel %vm912, %v1315, 0
    %v1485 = vsel %vm912, %v1391, 0
    %1487 = vmatprep.subr.mxu0 0.0
    %1488 = vmatpush1.xpose.msra.mxu0 %v1485
    %1489 = vmatprep.subr.mxu0 0.0
    %1490 = vmatpush1.xpose.msra.mxu0 0.0
    %1491 = vmatprep.subr.mxu0 0.0
    %1492 = vmatpush1.xpose.msra.mxu0 0.0
    %1493 = vmatprep.subr.mxu0 0.0
    %1494 = vmatpush1.xpose.msra.mxu0 0.0
    %1495 = vmatprep.subr.mxu0 0.0
    %1496 = vmatpush1.xpose.msra.mxu0 0.0
    %1497 = vmatprep.subr.mxu0 0.0
    %1498 = vmatpush1.xpose.msra.mxu0 0.0
    %1499 = vmatprep.subr.mxu0 0.0
    %1500 = vmatpush1.xpose.msra.mxu0 0.0
    %1501 = vmatprep.subr.mxu0 0.0
    %1502 = vmatpush1.xpose.msra.mxu0 0.0
    %1503 = vmatprep.subr.mxu0 0.0
    %1504 = vmatpush1.xpose.msra.mxu0 0.0
    %1505 = vmatprep.subr.mxu0 0.0
    %1506 = vmatpush1.xpose.msra.mxu0 0.0
    %1507 = vmatprep.subr.mxu0 0.0
    %1508 = vmatpush1.xpose.msra.mxu0 0.0
    %1509 = vmatprep.subr.mxu0 0.0
    %1510 = vmatpush1.xpose.msra.mxu0 0.0
    %1511 = vmatprep.subr.mxu0 0.0
    %1512 = vmatpush1.xpose.msra.mxu0 0.0
    %1513 = vmatprep.subr.mxu0 0.0
    %1514 = vmatpush1.xpose.msra.mxu0 0.0
    %1515 = vmatprep.subr.mxu0 0.0
    %1516 = vmatpush1.xpose.msra.mxu0 0.0
    %1517 = vmatprep.subr.mxu0 0.0
    %1518 = vmatpush1.xpose.msra.mxu0 0.0
    %1519 = vmatprep.subr.mxu0 0.0
    %1520 = vmatpush1.xpose.msra.mxu0 0.0
    %1521 = vmatprep.subr.mxu0 0.0
    %1522 = vmatpush1.xpose.msra.mxu0 0.0
    %1523 = vmatprep.subr.mxu0 0.0
    %1524 = vmatpush1.xpose.msra.mxu0 0.0
    %1525 = vmatprep.subr.mxu0 0.0
    %1526 = vmatpush1.xpose.msra.mxu0 0.0
    %1527 = vmatprep.subr.mxu0 0.0
    %1528 = vmatpush1.xpose.msra.mxu0 0.0
    %1529 = vmatprep.subr.mxu0 0.0
    %1530 = vmatpush1.xpose.msra.mxu0 0.0
    %1531 = vmatprep.subr.mxu0 0.0
    %1532 = vmatpush1.xpose.msra.mxu0 0.0
    %1533 = vmatprep.subr.mxu0 0.0
    %1534 = vmatpush1.xpose.msra.mxu0 0.0
    %1535 = vmatprep.subr.mxu0 0.0
    %1536 = vmatpush1.xpose.msra.mxu0 0.0
    %1537 = vmatprep.subr.mxu0 0.0
    %1538 = vmatpush1.xpose.msra.mxu0 0.0
    %1539 = vmatprep.subr.mxu0 0.0
    %1540 = vmatpush1.xpose.msra.mxu0 0.0
    %1541 = vmatprep.subr.mxu0 0.0
    %1542 = vmatpush1.xpose.msra.mxu0 0.0
    %1543 = vmatprep.subr.mxu0 0.0
    %1544 = vmatpush1.xpose.msra.mxu0 0.0
    %1545 = vmatprep.subr.mxu0 0.0
    %1546 = vmatpush1.xpose.msra.mxu0 0.0
    %1547 = vmatprep.subr.mxu0 0.0
    %1548 = vmatpush1.xpose.msra.mxu0 0.0
    %1549 = vmatprep.subr.mxu0 0.0
    %1550 = vmatpush1.xpose.msra.mxu0 0.0
    %1551 = vmatprep.mubr.f32.mxu0 0.0
    %1552 = vmatmul.mubr.f32.gmra.mrb[0].mxu0 %v1482
    %v1553 = vpop.f32.mrb[0].mxu0
    %v1554 = vadd.f32 0.0, %v1553
    %v1555 = vpop.f32.mrb[0].mxu0
    %1556 = vdwg.mxu0
    %v1558 = vsel %vm912, %v1316, 0
    %v1561 = vsel %vm912, %v1396, 0
    %1563 = vmatprep.subr.mxu0 0.0
    %1564 = vmatpush1.xpose.msra.mxu0 %v1561
    %1565 = vmatprep.subr.mxu0 0.0
    %1566 = vmatpush1.xpose.msra.mxu0 0.0
    %1567 = vmatprep.subr.mxu0 0.0
    %1568 = vmatpush1.xpose.msra.mxu0 0.0
    %1569 = vmatprep.subr.mxu0 0.0
    %1570 = vmatpush1.xpose.msra.mxu0 0.0
    %1571 = vmatprep.subr.mxu0 0.0
    %1572 = vmatpush1.xpose.msra.mxu0 0.0
    %1573 = vmatprep.subr.mxu0 0.0
    %1574 = vmatpush1.xpose.msra.mxu0 0.0
    %1575 = vmatprep.subr.mxu0 0.0
    %1576 = vmatpush1.xpose.msra.mxu0 0.0
    %1577 = vmatprep.subr.mxu0 0.0
    %1578 = vmatpush1.xpose.msra.mxu0 0.0
    %1579 = vmatprep.subr.mxu0 0.0
    %1580 = vmatpush1.xpose.msra.mxu0 0.0
    %1581 = vmatprep.subr.mxu0 0.0
    %1582 = vmatpush1.xpose.msra.mxu0 0.0
    %1583 = vmatprep.subr.mxu0 0.0
    %1584 = vmatpush1.xpose.msra.mxu0 0.0
    %1585 = vmatprep.subr.mxu0 0.0
    %1586 = vmatpush1.xpose.msra.mxu0 0.0
    %1587 = vmatprep.subr.mxu0 0.0
    %1588 = vmatpush1.xpose.msra.mxu0 0.0
    %1589 = vmatprep.subr.mxu0 0.0
    %1590 = vmatpush1.xpose.msra.mxu0 0.0
    %1591 = vmatprep.subr.mxu0 0.0
    %1592 = vmatpush1.xpose.msra.mxu0 0.0
    %1593 = vmatprep.subr.mxu0 0.0
    %1594 = vmatpush1.xpose.msra.mxu0 0.0
    %1595 = vmatprep.subr.mxu0 0.0
    %1596 = vmatpush1.xpose.msra.mxu0 0.0
    %1597 = vmatprep.subr.mxu0 0.0
    %1598 = vmatpush1.xpose.msra.mxu0 0.0
    %1599 = vmatprep.subr.mxu0 0.0
    %1600 = vmatpush1.xpose.msra.mxu0 0.0
    %1601 = vmatprep.subr.mxu0 0.0
    %1602 = vmatpush1.xpose.msra.mxu0 0.0
    %1603 = vmatprep.subr.mxu0 0.0
    %1604 = vmatpush1.xpose.msra.mxu0 0.0
    %1605 = vmatprep.subr.mxu0 0.0
    %1606 = vmatpush1.xpose.msra.mxu0 0.0
    %1607 = vmatprep.subr.mxu0 0.0
    %1608 = vmatpush1.xpose.msra.mxu0 0.0
    %1609 = vmatprep.subr.mxu0 0.0
    %1610 = vmatpush1.xpose.msra.mxu0 0.0
    %1611 = vmatprep.subr.mxu0 0.0
    %1612 = vmatpush1.xpose.msra.mxu0 0.0
    %1613 = vmatprep.subr.mxu0 0.0
    %1614 = vmatpush1.xpose.msra.mxu0 0.0
    %1615 = vmatprep.subr.mxu0 0.0
    %1616 = vmatpush1.xpose.msra.mxu0 0.0
    %1617 = vmatprep.subr.mxu0 0.0
    %1618 = vmatpush1.xpose.msra.mxu0 0.0
    %1619 = vmatprep.subr.mxu0 0.0
    %1620 = vmatpush1.xpose.msra.mxu0 0.0
    %1621 = vmatprep.subr.mxu0 0.0
    %1622 = vmatpush1.xpose.msra.mxu0 0.0
    %1623 = vmatprep.subr.mxu0 0.0
    %1624 = vmatpush1.xpose.msra.mxu0 0.0
    %1625 = vmatprep.subr.mxu0 0.0
    %1626 = vmatpush1.xpose.msra.mxu0 0.0
    %1627 = vmatprep.mubr.f32.mxu0 0.0
    %1628 = vmatmul.mubr.f32.gmra.mrb[0].mxu0 %v1558
    %v1629 = vpop.f32.mrb[0].mxu0
    %v1630 = vadd.f32 0.0, %v1629
    %v1631 = vpop.f32.mrb[0].mxu0
    %1632 = vdwg.mxu0
    %v1633 = vsel %vm912, %v1554, -inf
    %1634 = vmax.xlane.f32.xlu0 %v1633
    %v1635 = vpop.xlane.xlu0 %1634
    %v1636 = vsel %vm912, %v1630, -inf
    %1637 = vmax.xlane.f32.xlu0 %v1636
    %v1638 = vpop.xlane.xlu0 %1637
    %v1639 = vsub.f32 %v1554, %v1635
    %v1640 = vsub.f32 %v1630, %v1638
    %v1641 = vmul.f32 %v1639, 1.442695
    %v1642 = vpow.pop %v1641
    %v1643 = vmul.f32 %v1640, 1.442695
    %v1644 = vpow.pop %v1643
    %v1645 = vsel %vm912, %v1642, 0.0
    %1646 = vadd.xlane.f32.xlu0 %v1645
    %v1647 = vpop.xlane.xlu0 %1646
    %v1648 = vsel %vm912, %v1644, 0.0
    %1649 = vadd.xlane.f32.xlu0 %v1648
    %v1650 = vpop.xlane.xlu0 %1649
    %v1651 = vrcp.pop %v1647
    %v1652 = vrcp.pop %v1650
    %v1653 = vmul.f32 %v1642, %v1651
    %v1654 = vmul.f32 %v1644, %v1652
    %v1656 = vsel %vm912, %v1653, 0
    %1658 = vmatprep.subr.mxu0 0.0
    %1659 = vmatpush1.msra.mxu0 %v1473
    %1660 = vmatprep.subr.mxu0 0.0
    %1661 = vmatpush1.msra.mxu0 0.0
    %1662 = vmatprep.subr.mxu0 0.0
    %1663 = vmatpush1.msra.mxu0 0.0
    %1664 = vmatprep.subr.mxu0 0.0
    %1665 = vmatpush1.msra.mxu0 0.0
    %1666 = vmatprep.subr.mxu0 0.0
    %1667 = vmatpush1.msra.mxu0 0.0
    %1668 = vmatprep.subr.mxu0 0.0
    %1669 = vmatpush1.msra.mxu0 0.0
    %1670 = vmatprep.subr.mxu0 0.0
    %1671 = vmatpush1.msra.mxu0 0.0
    %1672 = vmatprep.subr.mxu0 0.0
    %1673 = vmatpush1.msra.mxu0 0.0
    %1674 = vmatprep.subr.mxu0 0.0
    %1675 = vmatpush1.msra.mxu0 0.0
    %1676 = vmatprep.subr.mxu0 0.0
    %1677 = vmatpush1.msra.mxu0 0.0
    %1678 = vmatprep.subr.mxu0 0.0
    %1679 = vmatpush1.msra.mxu0 0.0
    %1680 = vmatprep.subr.mxu0 0.0
    %1681 = vmatpush1.msra.mxu0 0.0
    %1682 = vmatprep.subr.mxu0 0.0
    %1683 = vmatpush1.msra.mxu0 0.0
    %1684 = vmatprep.subr.mxu0 0.0
    %1685 = vmatpush1.msra.mxu0 0.0
    %1686 = vmatprep.subr.mxu0 0.0
    %1687 = vmatpush1.msra.mxu0 0.0
    %1688 = vmatprep.subr.mxu0 0.0
    %1689 = vmatpush1.msra.mxu0 0.0
    %1690 = vmatprep.subr.mxu0 0.0
    %1691 = vmatpush1.msra.mxu0 0.0
    %1692 = vmatprep.subr.mxu0 0.0
    %1693 = vmatpush1.msra.mxu0 0.0
    %1694 = vmatprep.subr.mxu0 0.0
    %1695 = vmatpush1.msra.mxu0 0.0
    %1696 = vmatprep.subr.mxu0 0.0
    %1697 = vmatpush1.msra.mxu0 0.0
    %1698 = vmatprep.subr.mxu0 0.0
    %1699 = vmatpush1.msra.mxu0 0.0
    %1700 = vmatprep.subr.mxu0 0.0
    %1701 = vmatpush1.msra.mxu0 0.0
    %1702 = vmatprep.subr.mxu0 0.0
    %1703 = vmatpush1.msra.mxu0 0.0
    %1704 = vmatprep.subr.mxu0 0.0
    %1705 = vmatpush1.msra.mxu0 0.0
    %1706 = vmatprep.subr.mxu0 0.0
    %1707 = vmatpush1.msra.mxu0 0.0
    %1708 = vmatprep.subr.mxu0 0.0
    %1709 = vmatpush1.msra.mxu0 0.0
    %1710 = vmatprep.subr.mxu0 0.0
    %1711 = vmatpush1.msra.mxu0 0.0
    %1712 = vmatprep.subr.mxu0 0.0
    %1713 = vmatpush1.msra.mxu0 0.0
    %1714 = vmatprep.subr.mxu0 0.0
    %1715 = vmatpush1.msra.mxu0 0.0
    %1716 = vmatprep.subr.mxu0 0.0
    %1717 = vmatpush1.msra.mxu0 0.0
    %1718 = vmatprep.subr.mxu0 0.0
    %1719 = vmatpush1.msra.mxu0 0.0
    %1720 = vmatprep.subr.mxu0 0.0
    %1721 = vmatpush1.msra.mxu0 0.0
    %1722 = vmatprep.mubr.f32.mxu0 0.0
    %1723 = vmatmul.mubr.f32.gmra.mrb[0].mxu0 %v1656
    %v1724 = vpop.f32.mrb[0].mxu0
    %v1725 = vadd.f32 0.0, %v1724
    %v1726 = vpop.f32.mrb[0].mxu0
    %1727 = vdwg.mxu0
    %v1729 = vsel %vm912, %v1654, 0
    %1731 = vmatprep.subr.mxu0 0.0
    %1732 = vmatpush1.msra.mxu0 %v1478
    %1733 = vmatprep.subr.mxu0 0.0
    %1734 = vmatpush1.msra.mxu0 0.0
    %1735 = vmatprep.subr.mxu0 0.0
    %1736 = vmatpush1.msra.mxu0 0.0
    %1737 = vmatprep.subr.mxu0 0.0
    %1738 = vmatpush1.msra.mxu0 0.0
    %1739 = vmatprep.subr.mxu0 0.0
    %1740 = vmatpush1.msra.mxu0 0.0
    %1741 = vmatprep.subr.mxu0 0.0
    %1742 = vmatpush1.msra.mxu0 0.0
    %1743 = vmatprep.subr.mxu0 0.0
    %1744 = vmatpush1.msra.mxu0 0.0
    %1745 = vmatprep.subr.mxu0 0.0
    %1746 = vmatpush1.msra.mxu0 0.0
    %1747 = vmatprep.subr.mxu0 0.0
    %1748 = vmatpush1.msra.mxu0 0.0
    %1749 = vmatprep.subr.mxu0 0.0
    %1750 = vmatpush1.msra.mxu0 0.0
    %1751 = vmatprep.subr.mxu0 0.0
    %1752 = vmatpush1.msra.mxu0 0.0
    %1753 = vmatprep.subr.mxu0 0.0
    %1754 = vmatpush1.msra.mxu0 0.0
    %1755 = vmatprep.subr.mxu0 0.0
    %1756 = vmatpush1.msra.mxu0 0.0
    %1757 = vmatprep.subr.mxu0 0.0
    %1758 = vmatpush1.msra.mxu0 0.0
    %1759 = vmatprep.subr.mxu0 0.0
    %1760 = vmatpush1.msra.mxu0 0.0
    %1761 = vmatprep.subr.mxu0 0.0
    %1762 = vmatpush1.msra.mxu0 0.0
    %1763 = vmatprep.subr.mxu0 0.0
    %1764 = vmatpush1.msra.mxu0 0.0
    %1765 = vmatprep.subr.mxu0 0.0
    %1766 = vmatpush1.msra.mxu0 0.0
    %1767 = vmatprep.subr.mxu0 0.0
    %1768 = vmatpush1.msra.mxu0 0.0
    %1769 = vmatprep.subr.mxu0 0.0
    %1770 = vmatpush1.msra.mxu0 0.0
    %1771 = vmatprep.subr.mxu0 0.0
    %1772 = vmatpush1.msra.mxu0 0.0
    %1773 = vmatprep.subr.mxu0 0.0
    %1774 = vmatpush1.msra.mxu0 0.0
    %1775 = vmatprep.subr.mxu0 0.0
    %1776 = vmatpush1.msra.mxu0 0.0
    %1777 = vmatprep.subr.mxu0 0.0
    %1778 = vmatpush1.msra.mxu0 0.0
    %1779 = vmatprep.subr.mxu0 0.0
    %1780 = vmatpush1.msra.mxu0 0.0
    %1781 = vmatprep.subr.mxu0 0.0
    %1782 = vmatpush1.msra.mxu0 0.0
    %1783 = vmatprep.subr.mxu0 0.0
    %1784 = vmatpush1.msra.mxu0 0.0
    %1785 = vmatprep.subr.mxu0 0.0
    %1786 = vmatpush1.msra.mxu0 0.0
    %1787 = vmatprep.subr.mxu0 0.0
    %1788 = vmatpush1.msra.mxu0 0.0
    %1789 = vmatprep.subr.mxu0 0.0
    %1790 = vmatpush1.msra.mxu0 0.0
    %1791 = vmatprep.subr.mxu0 0.0
    %1792 = vmatpush1.msra.mxu0 0.0
    %1793 = vmatprep.subr.mxu0 0.0
    %1794 = vmatpush1.msra.mxu0 0.0
    %1795 = vmatprep.mubr.f32.mxu0 0.0
    %1796 = vmatmul.mubr.f32.gmra.mrb[0].mxu0 %v1729
    %v1797 = vpop.f32.mrb[0].mxu0
    %v1798 = vadd.f32 0.0, %v1797
    %v1799 = vpop.f32.mrb[0].mxu0
    %1800 = vdwg.mxu0
    %v1802 = vsel %vm912, %v1725, 0
    %v1805 = vsel %vm912, %v1798, 0
    %1807 = vmatprep.subr.mxu0 0.0
    %1808 = vmatpush1.msra.mxu0 %v47
    %1809 = vmatprep.subr.mxu0 0.0
    %1810 = vmatpush1.msra.mxu0 0.0
    %1811 = vmatprep.subr.mxu0 0.0
    %1812 = vmatpush1.msra.mxu0 0.0
    %1813 = vmatprep.subr.mxu0 0.0
    %1814 = vmatpush1.msra.mxu0 0.0
    %1815 = vmatprep.subr.mxu0 0.0
    %1816 = vmatpush1.msra.mxu0 0.0
    %1817 = vmatprep.subr.mxu0 0.0
    %1818 = vmatpush1.msra.mxu0 0.0
    %1819 = vmatprep.subr.mxu0 0.0
    %1820 = vmatpush1.msra.mxu0 0.0
    %1821 = vmatprep.subr.mxu0 0.0
    %1822 = vmatpush1.msra.mxu0 0.0
    %1823 = vmatprep.subr.mxu0 0.0
    %1824 = vmatpush1.msra.mxu0 0.0
    %1825 = vmatprep.subr.mxu0 0.0
    %1826 = vmatpush1.msra.mxu0 0.0
    %1827 = vmatprep.subr.mxu0 0.0
    %1828 = vmatpush1.msra.mxu0 0.0
    %1829 = vmatprep.subr.mxu0 0.0
    %1830 = vmatpush1.msra.mxu0 0.0
    %1831 = vmatprep.subr.mxu0 0.0
    %1832 = vmatpush1.msra.mxu0 0.0
    %1833 = vmatprep.subr.mxu0 0.0
    %1834 = vmatpush1.msra.mxu0 0.0
    %1835 = vmatprep.subr.mxu0 0.0
    %1836 = vmatpush1.msra.mxu0 0.0
    %1837 = vmatprep.subr.mxu0 0.0
    %1838 = vmatpush1.msra.mxu0 0.0
    %1839 = vmatprep.subr.mxu0 0.0
    %1840 = vmatpush1.msra.mxu0 0.0
    %1841 = vmatprep.subr.mxu0 0.0
    %1842 = vmatpush1.msra.mxu0 0.0
    %1843 = vmatprep.subr.mxu0 0.0
    %1844 = vmatpush1.msra.mxu0 0.0
    %1845 = vmatprep.subr.mxu0 0.0
    %1846 = vmatpush1.msra.mxu0 0.0
    %1847 = vmatprep.subr.mxu0 0.0
    %1848 = vmatpush1.msra.mxu0 0.0
    %1849 = vmatprep.subr.mxu0 0.0
    %1850 = vmatpush1.msra.mxu0 0.0
    %1851 = vmatprep.subr.mxu0 0.0
    %1852 = vmatpush1.msra.mxu0 0.0
    %1853 = vmatprep.subr.mxu0 0.0
    %1854 = vmatpush1.msra.mxu0 0.0
    %1855 = vmatprep.subr.mxu0 0.0
    %1856 = vmatpush1.msra.mxu0 0.0
    %1857 = vmatprep.subr.mxu0 0.0
    %1858 = vmatpush1.msra.mxu0 0.0
    %1859 = vmatprep.subr.mxu0 0.0
    %1860 = vmatpush1.msra.mxu0 0.0
    %1861 = vmatprep.subr.mxu0 0.0
    %1862 = vmatpush1.msra.mxu0 0.0
    %1863 = vmatprep.subr.mxu0 0.0
    %1864 = vmatpush1.msra.mxu0 0.0
    %1865 = vmatprep.subr.mxu0 0.0
    %1866 = vmatpush1.msra.mxu0 0.0
    %1867 = vmatprep.subr.mxu0 0.0
    %1868 = vmatpush1.msra.mxu0 0.0
    %1869 = vmatprep.subr.mxu0 0.0
    %1870 = vmatpush1.msra.mxu0 0.0
    %1871 = vmatprep.mubr.f32.mxu0 0.0
    %1872 = vmatmul.mubr.f32.gmra.mrb[0].mxu0 %v1802
    %v1873 = vpop.f32.mrb[0].mxu0
    %v1874 = vadd.f32 0.0, %v1873
    %v1875 = vpop.f32.mrb[0].mxu0
    %1876 = vmatprep.mubr.f32.mxu0 0.0
    %1877 = vmatmul.mubr.f32.gmra.mrb[0].mxu0 %v1805
    %v1878 = vpop.f32.mrb[0].mxu0
    %v1879 = vadd.f32 0.0, %v1878
    %v1880 = vpop.f32.mrb[0].mxu0
    %1881 = vdwg.mxu0
    %v1883 = vsel %vm912, %v1157, 0
    %v1886 = vsel %vm912, %v1230, 0
    %1888 = vmatprep.subr.mxu0 0.0
    %1889 = vmatpush1.msra.mxu0 %v46
    %1890 = vmatprep.subr.mxu0 0.0
    %1891 = vmatpush1.msra.mxu0 0.0
    %1892 = vmatprep.subr.mxu0 0.0
    %1893 = vmatpush1.msra.mxu0 0.0
    %1894 = vmatprep.subr.mxu0 0.0
    %1895 = vmatpush1.msra.mxu0 0.0
    %1896 = vmatprep.subr.mxu0 0.0
    %1897 = vmatpush1.msra.mxu0 0.0
    %1898 = vmatprep.subr.mxu0 0.0
    %1899 = vmatpush1.msra.mxu0 0.0
    %1900 = vmatprep.subr.mxu0 0.0
    %1901 = vmatpush1.msra.mxu0 0.0
    %1902 = vmatprep.subr.mxu0 0.0
    %1903 = vmatpush1.msra.mxu0 0.0
    %1904 = vmatprep.subr.mxu0 0.0
    %1905 = vmatpush1.msra.mxu0 0.0
    %1906 = vmatprep.subr.mxu0 0.0
    %1907 = vmatpush1.msra.mxu0 0.0
    %1908 = vmatprep.subr.mxu0 0.0
    %1909 = vmatpush1.msra.mxu0 0.0
    %1910 = vmatprep.subr.mxu0 0.0
    %1911 = vmatpush1.msra.mxu0 0.0
    %1912 = vmatprep.subr.mxu0 0.0
    %1913 = vmatpush1.msra.mxu0 0.0
    %1914 = vmatprep.subr.mxu0 0.0
    %1915 = vmatpush1.msra.mxu0 0.0
    %1916 = vmatprep.subr.mxu0 0.0
    %1917 = vmatpush1.msra.mxu0 0.0
    %1918 = vmatprep.subr.mxu0 0.0
    %1919 = vmatpush1.msra.mxu0 0.0
    %1920 = vmatprep.subr.mxu0 0.0
    %1921 = vmatpush1.msra.mxu0 0.0
    %1922 = vmatprep.subr.mxu0 0.0
    %1923 = vmatpush1.msra.mxu0 0.0
    %1924 = vmatprep.subr.mxu0 0.0
    %1925 = vmatpush1.msra.mxu0 0.0
    %1926 = vmatprep.subr.mxu0 0.0
    %1927 = vmatpush1.msra.mxu0 0.0
    %1928 = vmatprep.subr.mxu0 0.0
    %1929 = vmatpush1.msra.mxu0 0.0
    %1930 = vmatprep.subr.mxu0 0.0
    %1931 = vmatpush1.msra.mxu0 0.0
    %1932 = vmatprep.subr.mxu0 0.0
    %1933 = vmatpush1.msra.mxu0 0.0
    %1934 = vmatprep.subr.mxu0 0.0
    %1935 = vmatpush1.msra.mxu0 0.0
    %1936 = vmatprep.subr.mxu0 0.0
    %1937 = vmatpush1.msra.mxu0 0.0
    %1938 = vmatprep.subr.mxu0 0.0
    %1939 = vmatpush1.msra.mxu0 0.0
    %1940 = vmatprep.subr.mxu0 0.0
    %1941 = vmatpush1.msra.mxu0 0.0
    %1942 = vmatprep.subr.mxu0 0.0
    %1943 = vmatpush1.msra.mxu0 0.0
    %1944 = vmatprep.subr.mxu0 0.0
    %1945 = vmatpush1.msra.mxu0 0.0
    %1946 = vmatprep.subr.mxu0 0.0
    %1947 = vmatpush1.msra.mxu0 0.0
    %1948 = vmatprep.subr.mxu0 0.0
    %1949 = vmatpush1.msra.mxu0 0.0
    %1950 = vmatprep.subr.mxu0 0.0
    %1951 = vmatpush1.msra.mxu0 0.0
    %1952 = vmatprep.mubr.f32.mxu0 0.0
    %1953 = vmatmul.mubr.f32.gmra.mrb[0].mxu0 %v1883
    %v1954 = vpop.f32.mrb[0].mxu0
    %v1955 = vadd.f32 %v1874, %v1954
    %v1956 = vpop.f32.mrb[0].mxu0
    %1957 = vmatprep.mubr.f32.mxu0 0.0
    %1958 = vmatmul.mubr.f32.gmra.mrb[0].mxu0 %v1886
    %v1959 = vpop.f32.mrb[0].mxu0
    %v1960 = vadd.f32 %v1879, %v1959
    %v1961 = vpop.f32.mrb[0].mxu0
    %1962 = vdwg.mxu0
    %1963 = vrot.lane.b32.xlu0 %v660, 112
    %v1964 = vpop.permute.xlu0 %1963
    %v1967 = vsel %vm661, %v36, 0
    %1969 = vmatprep.subr.mxu0 0.0
    %1970 = vmatpush1.xpose.msra.mxu0 %v1967
    %1971 = vmatprep.subr.mxu0 0.0
    %1972 = vmatpush1.xpose.msra.mxu0 0.0
    %1973 = vmatprep.subr.mxu0 0.0
    %1974 = vmatpush1.xpose.msra.mxu0 0.0
    %1975 = vmatprep.subr.mxu0 0.0
    %1976 = vmatpush1.xpose.msra.mxu0 0.0
    %1977 = vmatprep.subr.mxu0 0.0
    %1978 = vmatpush1.xpose.msra.mxu0 0.0
    %1979 = vmatprep.subr.mxu0 0.0
    %1980 = vmatpush1.xpose.msra.mxu0 0.0
    %1981 = vmatprep.subr.mxu0 0.0
    %1982 = vmatpush1.xpose.msra.mxu0 0.0
    %1983 = vmatprep.subr.mxu0 0.0
    %1984 = vmatpush1.xpose.msra.mxu0 0.0
    %1985 = vmatprep.subr.mxu0 0.0
    %1986 = vmatpush1.xpose.msra.mxu0 0.0
    %1987 = vmatprep.subr.mxu0 0.0
    %1988 = vmatpush1.xpose.msra.mxu0 0.0
    %1989 = vmatprep.subr.mxu0 0.0
    %1990 = vmatpush1.xpose.msra.mxu0 0.0
    %1991 = vmatprep.subr.mxu0 0.0
    %1992 = vmatpush1.xpose.msra.mxu0 0.0
    %1993 = vmatprep.subr.mxu0 0.0
    %1994 = vmatpush1.xpose.msra.mxu0 0.0
    %1995 = vmatprep.subr.mxu0 0.0
    %1996 = vmatpush1.xpose.msra.mxu0 0.0
    %1997 = vmatprep.subr.mxu0 0.0
    %1998 = vmatpush1.xpose.msra.mxu0 0.0
    %1999 = vmatprep.subr.mxu0 0.0
    %2000 = vmatpush1.xpose.msra.mxu0 0.0
    %2001 = vmatprep.subr.mxu0 0.0
    %2002 = vmatpush1.xpose.msra.mxu0 0.0
    %2003 = vmatprep.subr.mxu0 0.0
    %2004 = vmatpush1.xpose.msra.mxu0 0.0
    %2005 = vmatprep.subr.mxu0 0.0
    %2006 = vmatpush1.xpose.msra.mxu0 0.0
    %2007 = vmatprep.subr.mxu0 0.0
    %2008 = vmatpush1.xpose.msra.mxu0 0.0
    %2009 = vmatprep.subr.mxu0 0.0
    %2010 = vmatpush1.xpose.msra.mxu0 0.0
    %2011 = vmatprep.subr.mxu0 0.0
    %2012 = vmatpush1.xpose.msra.mxu0 0.0
    %2013 = vmatprep.subr.mxu0 0.0
    %2014 = vmatpush1.xpose.msra.mxu0 0.0
    %2015 = vmatprep.subr.mxu0 0.0
    %2016 = vmatpush1.xpose.msra.mxu0 0.0
    %2017 = vmatprep.subr.mxu0 0.0
    %2018 = vmatpush1.xpose.msra.mxu0 0.0
    %2019 = vmatprep.subr.mxu0 0.0
    %2020 = vmatpush1.xpose.msra.mxu0 0.0
    %2021 = vmatprep.subr.mxu0 0.0
    %2022 = vmatpush1.xpose.msra.mxu0 0.0
    %2023 = vmatprep.subr.mxu0 0.0
    %2024 = vmatpush1.xpose.msra.mxu0 0.0
    %2025 = vmatprep.subr.mxu0 0.0
    %2026 = vmatpush1.xpose.msra.mxu0 0.0
    %2027 = vmatprep.subr.mxu0 0.0
    %2028 = vmatpush1.xpose.msra.mxu0 0.0
    %2029 = vmatprep.subr.mxu0 0.0
    %2030 = vmatpush1.xpose.msra.mxu0 0.0
    %2031 = vmatprep.subr.mxu0 0.0
    %2032 = vmatpush1.xpose.msra.mxu0 0.0
    %2033 = vmatprep.mubr.f32.mxu0 0.0
    %2034 = vmatmul.mubr.f32.gmra.mrb[0].mxu0 %v663
    %v2035 = vpop.f32.mrb[0].mxu0
    %v2036 = vadd.f32 %v1964, %v2035
    %v2037 = vpop.f32.mrb[0].mxu0
    %2038 = vmatprep.mubr.f32.mxu0 0.0
    %2039 = vmatmul.mubr.f32.gmra.mrb[0].mxu0 %v666
    %v2040 = vpop.f32.mrb[0].mxu0
    %v2041 = vadd.f32 %v1964, %v2040
    %v2042 = vpop.f32.mrb[0].mxu0
    %2043 = vdwg.mxu0
    %v2044 = vmul.f32 %v2036, 0.35355338
    %v2045 = vmul.f32 %v2041, 0.35355338
    %2046 = vrot.lane.b32.xlu0 %v751, 112
    %v2047 = vpop.permute.xlu0 %2046
    %v2050 = vsel %vm661, %v40, 0
    %2052 = vmatprep.subr.mxu0 0.0
    %2053 = vmatpush1.xpose.msra.mxu0 %v2050
    %2054 = vmatprep.subr.mxu0 0.0
    %2055 = vmatpush1.xpose.msra.mxu0 0.0
    %2056 = vmatprep.subr.mxu0 0.0
    %2057 = vmatpush1.xpose.msra.mxu0 0.0
    %2058 = vmatprep.subr.mxu0 0.0
    %2059 = vmatpush1.xpose.msra.mxu0 0.0
    %2060 = vmatprep.subr.mxu0 0.0
    %2061 = vmatpush1.xpose.msra.mxu0 0.0
    %2062 = vmatprep.subr.mxu0 0.0
    %2063 = vmatpush1.xpose.msra.mxu0 0.0
    %2064 = vmatprep.subr.mxu0 0.0
    %2065 = vmatpush1.xpose.msra.mxu0 0.0
    %2066 = vmatprep.subr.mxu0 0.0
    %2067 = vmatpush1.xpose.msra.mxu0 0.0
    %2068 = vmatprep.subr.mxu0 0.0
    %2069 = vmatpush1.xpose.msra.mxu0 0.0
    %2070 = vmatprep.subr.mxu0 0.0
    %2071 = vmatpush1.xpose.msra.mxu0 0.0
    %2072 = vmatprep.subr.mxu0 0.0
    %2073 = vmatpush1.xpose.msra.mxu0 0.0
    %2074 = vmatprep.subr.mxu0 0.0
    %2075 = vmatpush1.xpose.msra.mxu0 0.0
    %2076 = vmatprep.subr.mxu0 0.0
    %2077 = vmatpush1.xpose.msra.mxu0 0.0
    %2078 = vmatprep.subr.mxu0 0.0
    %2079 = vmatpush1.xpose.msra.mxu0 0.0
    %2080 = vmatprep.subr.mxu0 0.0
    %2081 = vmatpush1.xpose.msra.mxu0 0.0
    %2082 = vmatprep.subr.mxu0 0.0
    %2083 = vmatpush1.xpose.msra.mxu0 0.0
    %2084 = vmatprep.subr.mxu0 0.0
    %2085 = vmatpush1.xpose.msra.mxu0 0.0
    %2086 = vmatprep.subr.mxu0 0.0
    %2087 = vmatpush1.xpose.msra.mxu0 0.0
    %2088 = vmatprep.subr.mxu0 0.0
    %2089 = vmatpush1.xpose.msra.mxu0 0.0
    %2090 = vmatprep.subr.mxu0 0.0
    %2091 = vmatpush1.xpose.msra.mxu0 0.0
    %2092 = vmatprep.subr.mxu0 0.0
    %2093 = vmatpush1.xpose.msra.mxu0 0.0
    %2094 = vmatprep.subr.mxu0 0.0
    %2095 = vmatpush1.xpose.msra.mxu0 0.0
    %2096 = vmatprep.subr.mxu0 0.0
    %2097 = vmatpush1.xpose.msra.mxu0 0.0
    %2098 = vmatprep.subr.mxu0 0.0
    %2099 = vmatpush1.xpose.msra.mxu0 0.0
    %2100 = vmatprep.subr.mxu0 0.0
    %2101 = vmatpush1.xpose.msra.mxu0 0.0
    %2102 = vmatprep.subr.mxu0 0.0
    %2103 = vmatpush1.xpose.msra.mxu0 0.0
    %2104 = vmatprep.subr.mxu0 0.0
    %2105 = vmatpush1.xpose.msra.mxu0 0.0
    %2106 = vmatprep.subr.mxu0 0.0
    %2107 = vmatpush1.xpose.msra.mxu0 0.0
    %2108 = vmatprep.subr.mxu0 0.0
    %2109 = vmatpush1.xpose.msra.mxu0 0.0
    %2110 = vmatprep.subr.mxu0 0.0
    %2111 = vmatpush1.xpose.msra.mxu0 0.0
    %2112 = vmatprep.subr.mxu0 0.0
    %2113 = vmatpush1.xpose.msra.mxu0 0.0
    %2114 = vmatprep.subr.mxu0 0.0
    %2115 = vmatpush1.xpose.msra.mxu0 0.0
    %2116 = vmatprep.mubr.f32.mxu0 0.0
    %2117 = vmatmul.mubr.f32.gmra.mrb[0].mxu0 %v663
    %v2118 = vpop.f32.mrb[0].mxu0
    %v2119 = vadd.f32 %v2047, %v2118
    %v2120 = vpop.f32.mrb[0].mxu0
    %2121 = vmatprep.mubr.f32.mxu0 0.0
    %2122 = vmatmul.mubr.f32.gmra.mrb[0].mxu0 %v666
    %v2123 = vpop.f32.mrb[0].mxu0
    %v2124 = vadd.f32 %v2047, %v2123
    %v2125 = vpop.f32.mrb[0].mxu0
    %2126 = vdwg.mxu0
    %2127 = vrot.lane.b32.xlu0 %v833, 112
    %v2128 = vpop.permute.xlu0 %2127
    %v2131 = vsel %vm661, %v44, 0
    %2133 = vmatprep.subr.mxu0 0.0
    %2134 = vmatpush1.xpose.msra.mxu0 %v2131
    %2135 = vmatprep.subr.mxu0 0.0
    %2136 = vmatpush1.xpose.msra.mxu0 0.0
    %2137 = vmatprep.subr.mxu0 0.0
    %2138 = vmatpush1.xpose.msra.mxu0 0.0
    %2139 = vmatprep.subr.mxu0 0.0
    %2140 = vmatpush1.xpose.msra.mxu0 0.0
    %2141 = vmatprep.subr.mxu0 0.0
    %2142 = vmatpush1.xpose.msra.mxu0 0.0
    %2143 = vmatprep.subr.mxu0 0.0
    %2144 = vmatpush1.xpose.msra.mxu0 0.0
    %2145 = vmatprep.subr.mxu0 0.0
    %2146 = vmatpush1.xpose.msra.mxu0 0.0
    %2147 = vmatprep.subr.mxu0 0.0
    %2148 = vmatpush1.xpose.msra.mxu0 0.0
    %2149 = vmatprep.subr.mxu0 0.0
    %2150 = vmatpush1.xpose.msra.mxu0 0.0
    %2151 = vmatprep.subr.mxu0 0.0
    %2152 = vmatpush1.xpose.msra.mxu0 0.0
    %2153 = vmatprep.subr.mxu0 0.0
    %2154 = vmatpush1.xpose.msra.mxu0 0.0
    %2155 = vmatprep.subr.mxu0 0.0
    %2156 = vmatpush1.xpose.msra.mxu0 0.0
    %2157 = vmatprep.subr.mxu0 0.0
    %2158 = vmatpush1.xpose.msra.mxu0 0.0
    %2159 = vmatprep.subr.mxu0 0.0
    %2160 = vmatpush1.xpose.msra.mxu0 0.0
    %2161 = vmatprep.subr.mxu0 0.0
    %2162 = vmatpush1.xpose.msra.mxu0 0.0
    %2163 = vmatprep.subr.mxu0 0.0
    %2164 = vmatpush1.xpose.msra.mxu0 0.0
    %2165 = vmatprep.subr.mxu0 0.0
    %2166 = vmatpush1.xpose.msra.mxu0 0.0
    %2167 = vmatprep.subr.mxu0 0.0
    %2168 = vmatpush1.xpose.msra.mxu0 0.0
    %2169 = vmatprep.subr.mxu0 0.0
    %2170 = vmatpush1.xpose.msra.mxu0 0.0
    %2171 = vmatprep.subr.mxu0 0.0
    %2172 = vmatpush1.xpose.msra.mxu0 0.0
    %2173 = vmatprep.subr.mxu0 0.0
    %2174 = vmatpush1.xpose.msra.mxu0 0.0
    %2175 = vmatprep.subr.mxu0 0.0
    %2176 = vmatpush1.xpose.msra.mxu0 0.0
    %2177 = vmatprep.subr.mxu0 0.0
    %2178 = vmatpush1.xpose.msra.mxu0 0.0
    %2179 = vmatprep.subr.mxu0 0.0
    %2180 = vmatpush1.xpose.msra.mxu0 0.0
    %2181 = vmatprep.subr.mxu0 0.0
    %2182 = vmatpush1.xpose.msra.mxu0 0.0
    %2183 = vmatprep.subr.mxu0 0.0
    %2184 = vmatpush1.xpose.msra.mxu0 0.0
    %2185 = vmatprep.subr.mxu0 0.0
    %2186 = vmatpush1.xpose.msra.mxu0 0.0
    %2187 = vmatprep.subr.mxu0 0.0
    %2188 = vmatpush1.xpose.msra.mxu0 0.0
    %2189 = vmatprep.subr.mxu0 0.0
    %2190 = vmatpush1.xpose.msra.mxu0 0.0
    %2191 = vmatprep.subr.mxu0 0.0
    %2192 = vmatpush1.xpose.msra.mxu0 0.0
    %2193 = vmatprep.subr.mxu0 0.0
    %2194 = vmatpush1.xpose.msra.mxu0 0.0
    %2195 = vmatprep.subr.mxu0 0.0
    %2196 = vmatpush1.xpose.msra.mxu0 0.0
    %2197 = vmatprep.mubr.f32.mxu0 0.0
    %2198 = vmatmul.mubr.f32.gmra.mrb[0].mxu0 %v663
    %v2199 = vpop.f32.mrb[0].mxu0
    %v2200 = vadd.f32 %v2128, %v2199
    %v2201 = vpop.f32.mrb[0].mxu0
    %2202 = vmatprep.mubr.f32.mxu0 0.0
    %2203 = vmatmul.mubr.f32.gmra.mrb[0].mxu0 %v666
    %v2204 = vpop.f32.mrb[0].mxu0
    %v2205 = vadd.f32 %v2128, %v2204
    %v2206 = vpop.f32.mrb[0].mxu0
    %2207 = vdwg.mxu0
    %v2209 = vsel %vm912, %v2044, 0
    %v2212 = vsel %vm912, %v2119, 0
    %2214 = vmatprep.subr.mxu0 0.0
    %2215 = vmatpush1.xpose.msra.mxu0 %v2212
    %2216 = vmatprep.subr.mxu0 0.0
    %2217 = vmatpush1.xpose.msra.mxu0 0.0
    %2218 = vmatprep.subr.mxu0 0.0
    %2219 = vmatpush1.xpose.msra.mxu0 0.0
    %2220 = vmatprep.subr.mxu0 0.0
    %2221 = vmatpush1.xpose.msra.mxu0 0.0
    %2222 = vmatprep.subr.mxu0 0.0
    %2223 = vmatpush1.xpose.msra.mxu0 0.0
    %2224 = vmatprep.subr.mxu0 0.0
    %2225 = vmatpush1.xpose.msra.mxu0 0.0
    %2226 = vmatprep.subr.mxu0 0.0
    %2227 = vmatpush1.xpose.msra.mxu0 0.0
    %2228 = vmatprep.subr.mxu0 0.0
    %2229 = vmatpush1.xpose.msra.mxu0 0.0
    %2230 = vmatprep.subr.mxu0 0.0
    %2231 = vmatpush1.xpose.msra.mxu0 0.0
    %2232 = vmatprep.subr.mxu0 0.0
    %2233 = vmatpush1.xpose.msra.mxu0 0.0
    %2234 = vmatprep.subr.mxu0 0.0
    %2235 = vmatpush1.xpose.msra.mxu0 0.0
    %2236 = vmatprep.subr.mxu0 0.0
    %2237 = vmatpush1.xpose.msra.mxu0 0.0
    %2238 = vmatprep.subr.mxu0 0.0
    %2239 = vmatpush1.xpose.msra.mxu0 0.0
    %2240 = vmatprep.subr.mxu0 0.0
    %2241 = vmatpush1.xpose.msra.mxu0 0.0
    %2242 = vmatprep.subr.mxu0 0.0
    %2243 = vmatpush1.xpose.msra.mxu0 0.0
    %2244 = vmatprep.subr.mxu0 0.0
    %2245 = vmatpush1.xpose.msra.mxu0 0.0
    %2246 = vmatprep.subr.mxu0 0.0
    %2247 = vmatpush1.xpose.msra.mxu0 0.0
    %2248 = vmatprep.subr.mxu0 0.0
    %2249 = vmatpush1.xpose.msra.mxu0 0.0
    %2250 = vmatprep.subr.mxu0 0.0
    %2251 = vmatpush1.xpose.msra.mxu0 0.0
    %2252 = vmatprep.subr.mxu0 0.0
    %2253 = vmatpush1.xpose.msra.mxu0 0.0
    %2254 = vmatprep.subr.mxu0 0.0
    %2255 = vmatpush1.xpose.msra.mxu0 0.0
    %2256 = vmatprep.subr.mxu0 0.0
    %2257 = vmatpush1.xpose.msra.mxu0 0.0
    %2258 = vmatprep.subr.mxu0 0.0
    %2259 = vmatpush1.xpose.msra.mxu0 0.0
    %2260 = vmatprep.subr.mxu0 0.0
    %2261 = vmatpush1.xpose.msra.mxu0 0.0
    %2262 = vmatprep.subr.mxu0 0.0
    %2263 = vmatpush1.xpose.msra.mxu0 0.0
    %2264 = vmatprep.subr.mxu0 0.0
    %2265 = vmatpush1.xpose.msra.mxu0 0.0
    %2266 = vmatprep.subr.mxu0 0.0
    %2267 = vmatpush1.xpose.msra.mxu0 0.0
    %2268 = vmatprep.subr.mxu0 0.0
    %2269 = vmatpush1.xpose.msra.mxu0 0.0
    %2270 = vmatprep.subr.mxu0 0.0
    %2271 = vmatpush1.xpose.msra.mxu0 0.0
    %2272 = vmatprep.subr.mxu0 0.0
    %2273 = vmatpush1.xpose.msra.mxu0 0.0
    %2274 = vmatprep.subr.mxu0 0.0
    %2275 = vmatpush1.xpose.msra.mxu0 0.0
    %2276 = vmatprep.subr.mxu0 0.0
    %2277 = vmatpush1.xpose.msra.mxu0 0.0
    %2278 = vmatprep.mubr.f32.mxu0 0.0
    %2279 = vmatmul.mubr.f32.gmra.mrb[0].mxu0 %v2209
    %v2280 = vpop.f32.mrb[0].mxu0
    %v2281 = vadd.f32 0.0, %v2280
    %v2282 = vpop.f32.mrb[0].mxu0
    %2283 = vdwg.mxu0
    %v2285 = vsel %vm912, %v2045, 0
    %v2288 = vsel %vm912, %v2124, 0
    %2290 = vmatprep.subr.mxu0 0.0
    %2291 = vmatpush1.xpose.msra.mxu0 %v2288
    %2292 = vmatprep.subr.mxu0 0.0
    %2293 = vmatpush1.xpose.msra.mxu0 0.0
    %2294 = vmatprep.subr.mxu0 0.0
    %2295 = vmatpush1.xpose.msra.mxu0 0.0
    %2296 = vmatprep.subr.mxu0 0.0
    %2297 = vmatpush1.xpose.msra.mxu0 0.0
    %2298 = vmatprep.subr.mxu0 0.0
    %2299 = vmatpush1.xpose.msra.mxu0 0.0
    %2300 = vmatprep.subr.mxu0 0.0
    %2301 = vmatpush1.xpose.msra.mxu0 0.0
    %2302 = vmatprep.subr.mxu0 0.0
    %2303 = vmatpush1.xpose.msra.mxu0 0.0
    %2304 = vmatprep.subr.mxu0 0.0
    %2305 = vmatpush1.xpose.msra.mxu0 0.0
    %2306 = vmatprep.subr.mxu0 0.0
    %2307 = vmatpush1.xpose.msra.mxu0 0.0
    %2308 = vmatprep.subr.mxu0 0.0
    %2309 = vmatpush1.xpose.msra.mxu0 0.0
    %2310 = vmatprep.subr.mxu0 0.0
    %2311 = vmatpush1.xpose.msra.mxu0 0.0
    %2312 = vmatprep.subr.mxu0 0.0
    %2313 = vmatpush1.xpose.msra.mxu0 0.0
    %2314 = vmatprep.subr.mxu0 0.0
    %2315 = vmatpush1.xpose.msra.mxu0 0.0
    %2316 = vmatprep.subr.mxu0 0.0
    %2317 = vmatpush1.xpose.msra.mxu0 0.0
    %2318 = vmatprep.subr.mxu0 0.0
    %2319 = vmatpush1.xpose.msra.mxu0 0.0
    %2320 = vmatprep.subr.mxu0 0.0
    %2321 = vmatpush1.xpose.msra.mxu0 0.0
    %2322 = vmatprep.subr.mxu0 0.0
    %2323 = vmatpush1.xpose.msra.mxu0 0.0
    %2324 = vmatprep.subr.mxu0 0.0
    %2325 = vmatpush1.xpose.msra.mxu0 0.0
    %2326 = vmatprep.subr.mxu0 0.0
    %2327 = vmatpush1.xpose.msra.mxu0 0.0
    %2328 = vmatprep.subr.mxu0 0.0
    %2329 = vmatpush1.xpose.msra.mxu0 0.0
    %2330 = vmatprep.subr.mxu0 0.0
    %2331 = vmatpush1.xpose.msra.mxu0 0.0
    %2332 = vmatprep.subr.mxu0 0.0
    %2333 = vmatpush1.xpose.msra.mxu0 0.0
    %2334 = vmatprep.subr.mxu0 0.0
    %2335 = vmatpush1.xpose.msra.mxu0 0.0
    %2336 = vmatprep.subr.mxu0 0.0
    %2337 = vmatpush1.xpose.msra.mxu0 0.0
    %2338 = vmatprep.subr.mxu0 0.0
    %2339 = vmatpush1.xpose.msra.mxu0 0.0
    %2340 = vmatprep.subr.mxu0 0.0
    %2341 = vmatpush1.xpose.msra.mxu0 0.0
    %2342 = vmatprep.subr.mxu0 0.0
    %2343 = vmatpush1.xpose.msra.mxu0 0.0
    %2344 = vmatprep.subr.mxu0 0.0
    %2345 = vmatpush1.xpose.msra.mxu0 0.0
    %2346 = vmatprep.subr.mxu0 0.0
    %2347 = vmatpush1.xpose.msra.mxu0 0.0
    %2348 = vmatprep.subr.mxu0 0.0
    %2349 = vmatpush1.xpose.msra.mxu0 0.0
    %2350 = vmatprep.subr.mxu0 0.0
    %2351 = vmatpush1.xpose.msra.mxu0 0.0
    %2352 = vmatprep.subr.mxu0 0.0
    %2353 = vmatpush1.xpose.msra.mxu0 0.0
    %2354 = vmatprep.mubr.f32.mxu0 0.0
    %2355 = vmatmul.mubr.f32.gmra.mrb[0].mxu0 %v2285
    %v2356 = vpop.f32.mrb[0].mxu0
    %v2357 = vadd.f32 0.0, %v2356
    %v2358 = vpop.f32.mrb[0].mxu0
    %2359 = vdwg.mxu0
    %v2360 = vsel %vm912, %v2281, -inf
    %2361 = vmax.xlane.f32.xlu0 %v2360
    %v2362 = vpop.xlane.xlu0 %2361
    %v2363 = vsel %vm912, %v2357, -inf
    %2364 = vmax.xlane.f32.xlu0 %v2363
    %v2365 = vpop.xlane.xlu0 %2364
    %v2366 = vsub.f32 %v2281, %v2362
    %v2367 = vsub.f32 %v2357, %v2365
    %v2368 = vmul.f32 %v2366, 1.442695
    %v2369 = vpow.pop %v2368
    %v2370 = vmul.f32 %v2367, 1.442695
    %v2371 = vpow.pop %v2370
    %v2372 = vsel %vm912, %v2369, 0.0
    %2373 = vadd.xlane.f32.xlu0 %v2372
    %v2374 = vpop.xlane.xlu0 %2373
    %v2375 = vsel %vm912, %v2371, 0.0
    %2376 = vadd.xlane.f32.xlu0 %v2375
    %v2377 = vpop.xlane.xlu0 %2376
    %v2378 = vrcp.pop %v2374
    %v2379 = vrcp.pop %v2377
    %v2380 = vmul.f32 %v2369, %v2378
    %v2381 = vmul.f32 %v2371, %v2379
    %v2383 = vsel %vm912, %v2380, 0
    %2385 = vmatprep.subr.mxu0 0.0
    %2386 = vmatpush1.msra.mxu0 %v2200
    %2387 = vmatprep.subr.mxu0 0.0
    %2388 = vmatpush1.msra.mxu0 0.0
    %2389 = vmatprep.subr.mxu0 0.0
    %2390 = vmatpush1.msra.mxu0 0.0
    %2391 = vmatprep.subr.mxu0 0.0
    %2392 = vmatpush1.msra.mxu0 0.0
    %2393 = vmatprep.subr.mxu0 0.0
    %2394 = vmatpush1.msra.mxu0 0.0
    %2395 = vmatprep.subr.mxu0 0.0
    %2396 = vmatpush1.msra.mxu0 0.0
    %2397 = vmatprep.subr.mxu0 0.0
    %2398 = vmatpush1.msra.mxu0 0.0
    %2399 = vmatprep.subr.mxu0 0.0
    %2400 = vmatpush1.msra.mxu0 0.0
    %2401 = vmatprep.subr.mxu0 0.0
    %2402 = vmatpush1.msra.mxu0 0.0
    %2403 = vmatprep.subr.mxu0 0.0
    %2404 = vmatpush1.msra.mxu0 0.0
    %2405 = vmatprep.subr.mxu0 0.0
    %2406 = vmatpush1.msra.mxu0 0.0
    %2407 = vmatprep.subr.mxu0 0.0
    %2408 = vmatpush1.msra.mxu0 0.0
    %2409 = vmatprep.subr.mxu0 0.0
    %2410 = vmatpush1.msra.mxu0 0.0
    %2411 = vmatprep.subr.mxu0 0.0
    %2412 = vmatpush1.msra.mxu0 0.0
    %2413 = vmatprep.subr.mxu0 0.0
    %2414 = vmatpush1.msra.mxu0 0.0
    %2415 = vmatprep.subr.mxu0 0.0
    %2416 = vmatpush1.msra.mxu0 0.0
    %2417 = vmatprep.subr.mxu0 0.0
    %2418 = vmatpush1.msra.mxu0 0.0
    %2419 = vmatprep.subr.mxu0 0.0
    %2420 = vmatpush1.msra.mxu0 0.0
    %2421 = vmatprep.subr.mxu0 0.0
    %2422 = vmatpush1.msra.mxu0 0.0
    %2423 = vmatprep.subr.mxu0 0.0
    %2424 = vmatpush1.msra.mxu0 0.0
    %2425 = vmatprep.subr.mxu0 0.0
    %2426 = vmatpush1.msra.mxu0 0.0
    %2427 = vmatprep.subr.mxu0 0.0
    %2428 = vmatpush1.msra.mxu0 0.0
    %2429 = vmatprep.subr.mxu0 0.0
    %2430 = vmatpush1.msra.mxu0 0.0
    %2431 = vmatprep.subr.mxu0 0.0
    %2432 = vmatpush1.msra.mxu0 0.0
    %2433 = vmatprep.subr.mxu0 0.0
    %2434 = vmatpush1.msra.mxu0 0.0
    %2435 = vmatprep.subr.mxu0 0.0
    %2436 = vmatpush1.msra.mxu0 0.0
    %2437 = vmatprep.subr.mxu0 0.0
    %2438 = vmatpush1.msra.mxu0 0.0
    %2439 = vmatprep.subr.mxu0 0.0
    %2440 = vmatpush1.msra.mxu0 0.0
    %2441 = vmatprep.subr.mxu0 0.0
    %2442 = vmatpush1.msra.mxu0 0.0
    %2443 = vmatprep.subr.mxu0 0.0
    %2444 = vmatpush1.msra.mxu0 0.0
    %2445 = vmatprep.subr.mxu0 0.0
    %2446 = vmatpush1.msra.mxu0 0.0
    %2447 = vmatprep.subr.mxu0 0.0
    %2448 = vmatpush1.msra.mxu0 0.0
    %2449 = vmatprep.mubr.f32.mxu0 0.0
    %2450 = vmatmul.mubr.f32.gmra.mrb[0].mxu0 %v2383
    %v2451 = vpop.f32.mrb[0].mxu0
    %v2452 = vadd.f32 0.0, %v2451
    %v2453 = vpop.f32.mrb[0].mxu0
    %2454 = vdwg.mxu0
    %v2456 = vsel %vm912, %v2381, 0
    %2458 = vmatprep.subr.mxu0 0.0
    %2459 = vmatpush1.msra.mxu0 %v2205
    %2460 = vmatprep.subr.mxu0 0.0
    %2461 = vmatpush1.msra.mxu0 0.0
    %2462 = vmatprep.subr.mxu0 0.0
    %2463 = vmatpush1.msra.mxu0 0.0
    %2464 = vmatprep.subr.mxu0 0.0
    %2465 = vmatpush1.msra.mxu0 0.0
    %2466 = vmatprep.subr.mxu0 0.0
    %2467 = vmatpush1.msra.mxu0 0.0
    %2468 = vmatprep.subr.mxu0 0.0
    %2469 = vmatpush1.msra.mxu0 0.0
    %2470 = vmatprep.subr.mxu0 0.0
    %2471 = vmatpush1.msra.mxu0 0.0
    %2472 = vmatprep.subr.mxu0 0.0
    %2473 = vmatpush1.msra.mxu0 0.0
    %2474 = vmatprep.subr.mxu0 0.0
    %2475 = vmatpush1.msra.mxu0 0.0
    %2476 = vmatprep.subr.mxu0 0.0
    %2477 = vmatpush1.msra.mxu0 0.0
    %2478 = vmatprep.subr.mxu0 0.0
    %2479 = vmatpush1.msra.mxu0 0.0
    %2480 = vmatprep.subr.mxu0 0.0
    %2481 = vmatpush1.msra.mxu0 0.0
    %2482 = vmatprep.subr.mxu0 0.0
    %2483 = vmatpush1.msra.mxu0 0.0
    %2484 = vmatprep.subr.mxu0 0.0
    %2485 = vmatpush1.msra.mxu0 0.0
    %2486 = vmatprep.subr.mxu0 0.0
    %2487 = vmatpush1.msra.mxu0 0.0
    %2488 = vmatprep.subr.mxu0 0.0
    %2489 = vmatpush1.msra.mxu0 0.0
    %2490 = vmatprep.subr.mxu0 0.0
    %2491 = vmatpush1.msra.mxu0 0.0
    %2492 = vmatprep.subr.mxu0 0.0
    %2493 = vmatpush1.msra.mxu0 0.0
    %2494 = vmatprep.subr.mxu0 0.0
    %2495 = vmatpush1.msra.mxu0 0.0
    %2496 = vmatprep.subr.mxu0 0.0
    %2497 = vmatpush1.msra.mxu0 0.0
    %2498 = vmatprep.subr.mxu0 0.0
    %2499 = vmatpush1.msra.mxu0 0.0
    %2500 = vmatprep.subr.mxu0 0.0
    %2501 = vmatpush1.msra.mxu0 0.0
    %2502 = vmatprep.subr.mxu0 0.0
    %2503 = vmatpush1.msra.mxu0 0.0
    %2504 = vmatprep.subr.mxu0 0.0
    %2505 = vmatpush1.msra.mxu0 0.0
    %2506 = vmatprep.subr.mxu0 0.0
    %2507 = vmatpush1.msra.mxu0 0.0
    %2508 = vmatprep.subr.mxu0 0.0
    %2509 = vmatpush1.msra.mxu0 0.0
    %2510 = vmatprep.subr.mxu0 0.0
    %2511 = vmatpush1.msra.mxu0 0.0
    %2512 = vmatprep.subr.mxu0 0.0
    %2513 = vmatpush1.msra.mxu0 0.0
    %2514 = vmatprep.subr.mxu0 0.0
    %2515 = vmatpush1.msra.mxu0 0.0
    %2516 = vmatprep.subr.mxu0 0.0
    %2517 = vmatpush1.msra.mxu0 0.0
    %2518 = vmatprep.subr.mxu0 0.0
    %2519 = vmatpush1.msra.mxu0 0.0
    %2520 = vmatprep.subr.mxu0 0.0
    %2521 = vmatpush1.msra.mxu0 0.0
    %2522 = vmatprep.mubr.f32.mxu0 0.0
    %2523 = vmatmul.mubr.f32.gmra.mrb[0].mxu0 %v2456
    %v2524 = vpop.f32.mrb[0].mxu0
    %v2525 = vadd.f32 0.0, %v2524
    %v2526 = vpop.f32.mrb[0].mxu0
    %2527 = vdwg.mxu0
    %v2529 = vsel %vm912, %v2452, 0
    %v2532 = vsel %vm912, %v2525, 0
    %2534 = vmatprep.subr.mxu0 0.0
    %2535 = vmatpush1.msra.mxu0 %v48
    %2536 = vmatprep.subr.mxu0 0.0
    %2537 = vmatpush1.msra.mxu0 0.0
    %2538 = vmatprep.subr.mxu0 0.0
    %2539 = vmatpush1.msra.mxu0 0.0
    %2540 = vmatprep.subr.mxu0 0.0
    %2541 = vmatpush1.msra.mxu0 0.0
    %2542 = vmatprep.subr.mxu0 0.0
    %2543 = vmatpush1.msra.mxu0 0.0
    %2544 = vmatprep.subr.mxu0 0.0
    %2545 = vmatpush1.msra.mxu0 0.0
    %2546 = vmatprep.subr.mxu0 0.0
    %2547 = vmatpush1.msra.mxu0 0.0
    %2548 = vmatprep.subr.mxu0 0.0
    %2549 = vmatpush1.msra.mxu0 0.0
    %2550 = vmatprep.subr.mxu0 0.0
    %2551 = vmatpush1.msra.mxu0 0.0
    %2552 = vmatprep.subr.mxu0 0.0
    %2553 = vmatpush1.msra.mxu0 0.0
    %2554 = vmatprep.subr.mxu0 0.0
    %2555 = vmatpush1.msra.mxu0 0.0
    %2556 = vmatprep.subr.mxu0 0.0
    %2557 = vmatpush1.msra.mxu0 0.0
    %2558 = vmatprep.subr.mxu0 0.0
    %2559 = vmatpush1.msra.mxu0 0.0
    %2560 = vmatprep.subr.mxu0 0.0
    %2561 = vmatpush1.msra.mxu0 0.0
    %2562 = vmatprep.subr.mxu0 0.0
    %2563 = vmatpush1.msra.mxu0 0.0
    %2564 = vmatprep.subr.mxu0 0.0
    %2565 = vmatpush1.msra.mxu0 0.0
    %2566 = vmatprep.subr.mxu0 0.0
    %2567 = vmatpush1.msra.mxu0 0.0
    %2568 = vmatprep.subr.mxu0 0.0
    %2569 = vmatpush1.msra.mxu0 0.0
    %2570 = vmatprep.subr.mxu0 0.0
    %2571 = vmatpush1.msra.mxu0 0.0
    %2572 = vmatprep.subr.mxu0 0.0
    %2573 = vmatpush1.msra.mxu0 0.0
    %2574 = vmatprep.subr.mxu0 0.0
    %2575 = vmatpush1.msra.mxu0 0.0
    %2576 = vmatprep.subr.mxu0 0.0
    %2577 = vmatpush1.msra.mxu0 0.0
    %2578 = vmatprep.subr.mxu0 0.0
    %2579 = vmatpush1.msra.mxu0 0.0
    %2580 = vmatprep.subr.mxu0 0.0
    %2581 = vmatpush1.msra.mxu0 0.0
    %2582 = vmatprep.subr.mxu0 0.0
    %2583 = vmatpush1.msra.mxu0 0.0
    %2584 = vmatprep.subr.mxu0 0.0
    %2585 = vmatpush1.msra.mxu0 0.0
    %2586 = vmatprep.subr.mxu0 0.0
    %2587 = vmatpush1.msra.mxu0 0.0
    %2588 = vmatprep.subr.mxu0 0.0
    %2589 = vmatpush1.msra.mxu0 0.0
    %2590 = vmatprep.subr.mxu0 0.0
    %2591 = vmatpush1.msra.mxu0 0.0
    %2592 = vmatprep.subr.mxu0 0.0
    %2593 = vmatpush1.msra.mxu0 0.0
    %2594 = vmatprep.subr.mxu0 0.0
    %2595 = vmatpush1.msra.mxu0 0.0
    %2596 = vmatprep.subr.mxu0 0.0
    %2597 = vmatpush1.msra.mxu0 0.0
    %2598 = vmatprep.mubr.f32.mxu0 0.0
    %2599 = vmatmul.mubr.f32.gmra.mrb[0].mxu0 %v2529
    %v2600 = vpop.f32.mrb[0].mxu0
    %v2601 = vadd.f32 0.0, %v2600
    %v2602 = vpop.f32.mrb[0].mxu0
    %2603 = vmatprep.mubr.f32.mxu0 0.0
    %2604 = vmatmul.mubr.f32.gmra.mrb[0].mxu0 %v2532
    %v2605 = vpop.f32.mrb[0].mxu0
    %v2606 = vadd.f32 0.0, %v2605
    %v2607 = vpop.f32.mrb[0].mxu0
    %2608 = vdwg.mxu0
    %v2609 = vadd.f32 %v1955, %v2601
    %v2610 = vadd.f32 %v1960, %v2606
    %2611 = vrot.lane.b32.xlu0 %v660, 104
    %v2612 = vpop.permute.xlu0 %2611
    %v2615 = vsel %vm661, %v37, 0
    %2617 = vmatprep.subr.mxu0 0.0
    %2618 = vmatpush1.xpose.msra.mxu0 %v2615
    %2619 = vmatprep.subr.mxu0 0.0
    %2620 = vmatpush1.xpose.msra.mxu0 0.0
    %2621 = vmatprep.subr.mxu0 0.0
    %2622 = vmatpush1.xpose.msra.mxu0 0.0
    %2623 = vmatprep.subr.mxu0 0.0
    %2624 = vmatpush1.xpose.msra.mxu0 0.0
    %2625 = vmatprep.subr.mxu0 0.0
    %2626 = vmatpush1.xpose.msra.mxu0 0.0
    %2627 = vmatprep.subr.mxu0 0.0
    %2628 = vmatpush1.xpose.msra.mxu0 0.0
    %2629 = vmatprep.subr.mxu0 0.0
    %2630 = vmatpush1.xpose.msra.mxu0 0.0
    %2631 = vmatprep.subr.mxu0 0.0
    %2632 = vmatpush1.xpose.msra.mxu0 0.0
    %2633 = vmatprep.subr.mxu0 0.0
    %2634 = vmatpush1.xpose.msra.mxu0 0.0
    %2635 = vmatprep.subr.mxu0 0.0
    %2636 = vmatpush1.xpose.msra.mxu0 0.0
    %2637 = vmatprep.subr.mxu0 0.0
    %2638 = vmatpush1.xpose.msra.mxu0 0.0
    %2639 = vmatprep.subr.mxu0 0.0
    %2640 = vmatpush1.xpose.msra.mxu0 0.0
    %2641 = vmatprep.subr.mxu0 0.0
    %2642 = vmatpush1.xpose.msra.mxu0 0.0
    %2643 = vmatprep.subr.mxu0 0.0
    %2644 = vmatpush1.xpose.msra.mxu0 0.0
    %2645 = vmatprep.subr.mxu0 0.0
    %2646 = vmatpush1.xpose.msra.mxu0 0.0
    %2647 = vmatprep.subr.mxu0 0.0
    %2648 = vmatpush1.xpose.msra.mxu0 0.0
    %2649 = vmatprep.subr.mxu0 0.0
    %2650 = vmatpush1.xpose.msra.mxu0 0.0
    %2651 = vmatprep.subr.mxu0 0.0
    %2652 = vmatpush1.xpose.msra.mxu0 0.0
    %2653 = vmatprep.subr.mxu0 0.0
    %2654 = vmatpush1.xpose.msra.mxu0 0.0
    %2655 = vmatprep.subr.mxu0 0.0
    %2656 = vmatpush1.xpose.msra.mxu0 0.0
    %2657 = vmatprep.subr.mxu0 0.0
    %2658 = vmatpush1.xpose.msra.mxu0 0.0
    %2659 = vmatprep.subr.mxu0 0.0
    %2660 = vmatpush1.xpose.msra.mxu0 0.0
    %2661 = vmatprep.subr.mxu0 0.0
    %2662 = vmatpush1.xpose.msra.mxu0 0.0
    %2663 = vmatprep.subr.mxu0 0.0
    %2664 = vmatpush1.xpose.msra.mxu0 0.0
    %2665 = vmatprep.subr.mxu0 0.0
    %2666 = vmatpush1.xpose.msra.mxu0 0.0
    %2667 = vmatprep.subr.mxu0 0.0
    %2668 = vmatpush1.xpose.msra.mxu0 0.0
    %2669 = vmatprep.subr.mxu0 0.0
    %2670 = vmatpush1.xpose.msra.mxu0 0.0
    %2671 = vmatprep.subr.mxu0 0.0
    %2672 = vmatpush1.xpose.msra.mxu0 0.0
    %2673 = vmatprep.subr.mxu0 0.0
    %2674 = vmatpush1.xpose.msra.mxu0 0.0
    %2675 = vmatprep.subr.mxu0 0.0
    %2676 = vmatpush1.xpose.msra.mxu0 0.0
    %2677 = vmatprep.subr.mxu0 0.0
    %2678 = vmatpush1.xpose.msra.mxu0 0.0
    %2679 = vmatprep.subr.mxu0 0.0
    %2680 = vmatpush1.xpose.msra.mxu0 0.0
    %2681 = vmatprep.mubr.f32.mxu0 0.0
    %2682 = vmatmul.mubr.f32.gmra.mrb[0].mxu0 %v663
    %v2683 = vpop.f32.mrb[0].mxu0
    %v2684 = vadd.f32 %v2612, %v2683
    %v2685 = vpop.f32.mrb[0].mxu0
    %2686 = vmatprep.mubr.f32.mxu0 0.0
    %2687 = vmatmul.mubr.f32.gmra.mrb[0].mxu0 %v666
    %v2688 = vpop.f32.mrb[0].mxu0
    %v2689 = vadd.f32 %v2612, %v2688
    %v2690 = vpop.f32.mrb[0].mxu0
    %2691 = vdwg.mxu0
    %v2692 = vmul.f32 %v2684, 0.35355338
    %v2693 = vmul.f32 %v2689, 0.35355338
    %2694 = vrot.lane.b32.xlu0 %v751, 104
    %v2695 = vpop.permute.xlu0 %2694
    %v2698 = vsel %vm661, %v41, 0
    %2700 = vmatprep.subr.mxu0 0.0
    %2701 = vmatpush1.xpose.msra.mxu0 %v2698
    %2702 = vmatprep.subr.mxu0 0.0
    %2703 = vmatpush1.xpose.msra.mxu0 0.0
    %2704 = vmatprep.subr.mxu0 0.0
    %2705 = vmatpush1.xpose.msra.mxu0 0.0
    %2706 = vmatprep.subr.mxu0 0.0
    %2707 = vmatpush1.xpose.msra.mxu0 0.0
    %2708 = vmatprep.subr.mxu0 0.0
    %2709 = vmatpush1.xpose.msra.mxu0 0.0
    %2710 = vmatprep.subr.mxu0 0.0
    %2711 = vmatpush1.xpose.msra.mxu0 0.0
    %2712 = vmatprep.subr.mxu0 0.0
    %2713 = vmatpush1.xpose.msra.mxu0 0.0
    %2714 = vmatprep.subr.mxu0 0.0
    %2715 = vmatpush1.xpose.msra.mxu0 0.0
    %2716 = vmatprep.subr.mxu0 0.0
    %2717 = vmatpush1.xpose.msra.mxu0 0.0
    %2718 = vmatprep.subr.mxu0 0.0
    %2719 = vmatpush1.xpose.msra.mxu0 0.0
    %2720 = vmatprep.subr.mxu0 0.0
    %2721 = vmatpush1.xpose.msra.mxu0 0.0
    %2722 = vmatprep.subr.mxu0 0.0
    %2723 = vmatpush1.xpose.msra.mxu0 0.0
    %2724 = vmatprep.subr.mxu0 0.0
    %2725 = vmatpush1.xpose.msra.mxu0 0.0
    %2726 = vmatprep.subr.mxu0 0.0
    %2727 = vmatpush1.xpose.msra.mxu0 0.0
    %2728 = vmatprep.subr.mxu0 0.0
    %2729 = vmatpush1.xpose.msra.mxu0 0.0
    %2730 = vmatprep.subr.mxu0 0.0
    %2731 = vmatpush1.xpose.msra.mxu0 0.0
    %2732 = vmatprep.subr.mxu0 0.0
    %2733 = vmatpush1.xpose.msra.mxu0 0.0
    %2734 = vmatprep.subr.mxu0 0.0
    %2735 = vmatpush1.xpose.msra.mxu0 0.0
    %2736 = vmatprep.subr.mxu0 0.0
    %2737 = vmatpush1.xpose.msra.mxu0 0.0
    %2738 = vmatprep.subr.mxu0 0.0
    %2739 = vmatpush1.xpose.msra.mxu0 0.0
    %2740 = vmatprep.subr.mxu0 0.0
    %2741 = vmatpush1.xpose.msra.mxu0 0.0
    %2742 = vmatprep.subr.mxu0 0.0
    %2743 = vmatpush1.xpose.msra.mxu0 0.0
    %2744 = vmatprep.subr.mxu0 0.0
    %2745 = vmatpush1.xpose.msra.mxu0 0.0
    %2746 = vmatprep.subr.mxu0 0.0
    %2747 = vmatpush1.xpose.msra.mxu0 0.0
    %2748 = vmatprep.subr.mxu0 0.0
    %2749 = vmatpush1.xpose.msra.mxu0 0.0
    %2750 = vmatprep.subr.mxu0 0.0
    %2751 = vmatpush1.xpose.msra.mxu0 0.0
    %2752 = vmatprep.subr.mxu0 0.0
    %2753 = vmatpush1.xpose.msra.mxu0 0.0
    %2754 = vmatprep.subr.mxu0 0.0
    %2755 = vmatpush1.xpose.msra.mxu0 0.0
    %2756 = vmatprep.subr.mxu0 0.0
    %2757 = vmatpush1.xpose.msra.mxu0 0.0
    %2758 = vmatprep.subr.mxu0 0.0
    %2759 = vmatpush1.xpose.msra.mxu0 0.0
    %2760 = vmatprep.subr.mxu0 0.0
    %2761 = vmatpush1.xpose.msra.mxu0 0.0
    %2762 = vmatprep.subr.mxu0 0.0
    %2763 = vmatpush1.xpose.msra.mxu0 0.0
    %2764 = vmatprep.mubr.f32.mxu0 0.0
    %2765 = vmatmul.mubr.f32.gmra.mrb[0].mxu0 %v663
    %v2766 = vpop.f32.mrb[0].mxu0
    %v2767 = vadd.f32 %v2695, %v2766
    %v2768 = vpop.f32.mrb[0].mxu0
    %2769 = vmatprep.mubr.f32.mxu0 0.0
    %2770 = vmatmul.mubr.f32.gmra.mrb[0].mxu0 %v666
    %v2771 = vpop.f32.mrb[0].mxu0
    %v2772 = vadd.f32 %v2695, %v2771
    %v2773 = vpop.f32.mrb[0].mxu0
    %2774 = vdwg.mxu0
    %2775 = vrot.lane.b32.xlu0 %v833, 104
    %v2776 = vpop.permute.xlu0 %2775
    %v2779 = vsel %vm661, %v45, 0
    %2781 = vmatprep.subr.mxu0 0.0
    %2782 = vmatpush1.xpose.msra.mxu0 %v2779
    %2783 = vmatprep.subr.mxu0 0.0
    %2784 = vmatpush1.xpose.msra.mxu0 0.0
    %2785 = vmatprep.subr.mxu0 0.0
    %2786 = vmatpush1.xpose.msra.mxu0 0.0
    %2787 = vmatprep.subr.mxu0 0.0
    %2788 = vmatpush1.xpose.msra.mxu0 0.0
    %2789 = vmatprep.subr.mxu0 0.0
    %2790 = vmatpush1.xpose.msra.mxu0 0.0
    %2791 = vmatprep.subr.mxu0 0.0
    %2792 = vmatpush1.xpose.msra.mxu0 0.0
    %2793 = vmatprep.subr.mxu0 0.0
    %2794 = vmatpush1.xpose.msra.mxu0 0.0
    %2795 = vmatprep.subr.mxu0 0.0
    %2796 = vmatpush1.xpose.msra.mxu0 0.0
    %2797 = vmatprep.subr.mxu0 0.0
    %2798 = vmatpush1.xpose.msra.mxu0 0.0
    %2799 = vmatprep.subr.mxu0 0.0
    %2800 = vmatpush1.xpose.msra.mxu0 0.0
    %2801 = vmatprep.subr.mxu0 0.0
    %2802 = vmatpush1.xpose.msra.mxu0 0.0
    %2803 = vmatprep.subr.mxu0 0.0
    %2804 = vmatpush1.xpose.msra.mxu0 0.0
    %2805 = vmatprep.subr.mxu0 0.0
    %2806 = vmatpush1.xpose.msra.mxu0 0.0
    %2807 = vmatprep.subr.mxu0 0.0
    %2808 = vmatpush1.xpose.msra.mxu0 0.0
    %2809 = vmatprep.subr.mxu0 0.0
    %2810 = vmatpush1.xpose.msra.mxu0 0.0
    %2811 = vmatprep.subr.mxu0 0.0
    %2812 = vmatpush1.xpose.msra.mxu0 0.0
    %2813 = vmatprep.subr.mxu0 0.0
    %2814 = vmatpush1.xpose.msra.mxu0 0.0
    %2815 = vmatprep.subr.mxu0 0.0
    %2816 = vmatpush1.xpose.msra.mxu0 0.0
    %2817 = vmatprep.subr.mxu0 0.0
    %2818 = vmatpush1.xpose.msra.mxu0 0.0
    %2819 = vmatprep.subr.mxu0 0.0
    %2820 = vmatpush1.xpose.msra.mxu0 0.0
    %2821 = vmatprep.subr.mxu0 0.0
    %2822 = vmatpush1.xpose.msra.mxu0 0.0
    %2823 = vmatprep.subr.mxu0 0.0
    %2824 = vmatpush1.xpose.msra.mxu0 0.0
    %2825 = vmatprep.subr.mxu0 0.0
    %2826 = vmatpush1.xpose.msra.mxu0 0.0
    %2827 = vmatprep.subr.mxu0 0.0
    %2828 = vmatpush1.xpose.msra.mxu0 0.0
    %2829 = vmatprep.subr.mxu0 0.0
    %2830 = vmatpush1.xpose.msra.mxu0 0.0
    %2831 = vmatprep.subr.mxu0 0.0
    %2832 = vmatpush1.xpose.msra.mxu0 0.0
    %2833 = vmatprep.subr.mxu0 0.0
    %2834 = vmatpush1.xpose.msra.mxu0 0.0
    %2835 = vmatprep.subr.mxu0 0.0
    %2836 = vmatpush1.xpose.msra.mxu0 0.0
    %2837 = vmatprep.subr.mxu0 0.0
    %2838 = vmatpush1.xpose.msra.mxu0 0.0
    %2839 = vmatprep.subr.mxu0 0.0
    %2840 = vmatpush1.xpose.msra.mxu0 0.0
    %2841 = vmatprep.subr.mxu0 0.0
    %2842 = vmatpush1.xpose.msra.mxu0 0.0
    %2843 = vmatprep.subr.mxu0 0.0
    %2844 = vmatpush1.xpose.msra.mxu0 0.0
    %2845 = vmatprep.mubr.f32.mxu0 0.0
    %2846 = vmatmul.mubr.f32.gmra.mrb[0].mxu0 %v663
    %v2847 = vpop.f32.mrb[0].mxu0
    %v2848 = vadd.f32 %v2776, %v2847
    %v2849 = vpop.f32.mrb[0].mxu0
    %2850 = vmatprep.mubr.f32.mxu0 0.0
    %2851 = vmatmul.mubr.f32.gmra.mrb[0].mxu0 %v666
    %v2852 = vpop.f32.mrb[0].mxu0
    %v2853 = vadd.f32 %v2776, %v2852
    %v2854 = vpop.f32.mrb[0].mxu0
    %2855 = vdwg.mxu0
    %v2857 = vsel %vm912, %v2692, 0
    %v2860 = vsel %vm912, %v2767, 0
    %2862 = vmatprep.subr.mxu0 0.0
    %2863 = vmatpush1.xpose.msra.mxu0 %v2860
    %2864 = vmatprep.subr.mxu0 0.0
    %2865 = vmatpush1.xpose.msra.mxu0 0.0
    %2866 = vmatprep.subr.mxu0 0.0
    %2867 = vmatpush1.xpose.msra.mxu0 0.0
    %2868 = vmatprep.subr.mxu0 0.0
    %2869 = vmatpush1.xpose.msra.mxu0 0.0
    %2870 = vmatprep.subr.mxu0 0.0
    %2871 = vmatpush1.xpose.msra.mxu0 0.0
    %2872 = vmatprep.subr.mxu0 0.0
    %2873 = vmatpush1.xpose.msra.mxu0 0.0
    %2874 = vmatprep.subr.mxu0 0.0
    %2875 = vmatpush1.xpose.msra.mxu0 0.0
    %2876 = vmatprep.subr.mxu0 0.0
    %2877 = vmatpush1.xpose.msra.mxu0 0.0
    %2878 = vmatprep.subr.mxu0 0.0
    %2879 = vmatpush1.xpose.msra.mxu0 0.0
    %2880 = vmatprep.subr.mxu0 0.0
    %2881 = vmatpush1.xpose.msra.mxu0 0.0
    %2882 = vmatprep.subr.mxu0 0.0
    %2883 = vmatpush1.xpose.msra.mxu0 0.0
    %2884 = vmatprep.subr.mxu0 0.0
    %2885 = vmatpush1.xpose.msra.mxu0 0.0
    %2886 = vmatprep.subr.mxu0 0.0
    %2887 = vmatpush1.xpose.msra.mxu0 0.0
    %2888 = vmatprep.subr.mxu0 0.0
    %2889 = vmatpush1.xpose.msra.mxu0 0.0
    %2890 = vmatprep.subr.mxu0 0.0
    %2891 = vmatpush1.xpose.msra.mxu0 0.0
    %2892 = vmatprep.subr.mxu0 0.0
    %2893 = vmatpush1.xpose.msra.mxu0 0.0
    %2894 = vmatprep.subr.mxu0 0.0
    %2895 = vmatpush1.xpose.msra.mxu0 0.0
    %2896 = vmatprep.subr.mxu0 0.0
    %2897 = vmatpush1.xpose.msra.mxu0 0.0
    %2898 = vmatprep.subr.mxu0 0.0
    %2899 = vmatpush1.xpose.msra.mxu0 0.0
    %2900 = vmatprep.subr.mxu0 0.0
    %2901 = vmatpush1.xpose.msra.mxu0 0.0
    %2902 = vmatprep.subr.mxu0 0.0
    %2903 = vmatpush1.xpose.msra.mxu0 0.0
    %2904 = vmatprep.subr.mxu0 0.0
    %2905 = vmatpush1.xpose.msra.mxu0 0.0
    %2906 = vmatprep.subr.mxu0 0.0
    %2907 = vmatpush1.xpose.msra.mxu0 0.0
    %2908 = vmatprep.subr.mxu0 0.0
    %2909 = vmatpush1.xpose.msra.mxu0 0.0
    %2910 = vmatprep.subr.mxu0 0.0
    %2911 = vmatpush1.xpose.msra.mxu0 0.0
    %2912 = vmatprep.subr.mxu0 0.0
    %2913 = vmatpush1.xpose.msra.mxu0 0.0
    %2914 = vmatprep.subr.mxu0 0.0
    %2915 = vmatpush1.xpose.msra.mxu0 0.0
    %2916 = vmatprep.subr.mxu0 0.0
    %2917 = vmatpush1.xpose.msra.mxu0 0.0
    %2918 = vmatprep.subr.mxu0 0.0
    %2919 = vmatpush1.xpose.msra.mxu0 0.0
    %2920 = vmatprep.subr.mxu0 0.0
    %2921 = vmatpush1.xpose.msra.mxu0 0.0
    %2922 = vmatprep.subr.mxu0 0.0
    %2923 = vmatpush1.xpose.msra.mxu0 0.0
    %2924 = vmatprep.subr.mxu0 0.0
    %2925 = vmatpush1.xpose.msra.mxu0 0.0
    %2926 = vmatprep.mubr.f32.mxu0 0.0
    %2927 = vmatmul.mubr.f32.gmra.mrb[0].mxu0 %v2857
    %v2928 = vpop.f32.mrb[0].mxu0
    %v2929 = vadd.f32 0.0, %v2928
    %v2930 = vpop.f32.mrb[0].mxu0
    %2931 = vdwg.mxu0
    %v2933 = vsel %vm912, %v2693, 0
    %v2936 = vsel %vm912, %v2772, 0
    %2938 = vmatprep.subr.mxu0 0.0
    %2939 = vmatpush1.xpose.msra.mxu0 %v2936
    %2940 = vmatprep.subr.mxu0 0.0
    %2941 = vmatpush1.xpose.msra.mxu0 0.0
    %2942 = vmatprep.subr.mxu0 0.0
    %2943 = vmatpush1.xpose.msra.mxu0 0.0
    %2944 = vmatprep.subr.mxu0 0.0
    %2945 = vmatpush1.xpose.msra.mxu0 0.0
    %2946 = vmatprep.subr.mxu0 0.0
    %2947 = vmatpush1.xpose.msra.mxu0 0.0
    %2948 = vmatprep.subr.mxu0 0.0
    %2949 = vmatpush1.xpose.msra.mxu0 0.0
    %2950 = vmatprep.subr.mxu0 0.0
    %2951 = vmatpush1.xpose.msra.mxu0 0.0
    %2952 = vmatprep.subr.mxu0 0.0
    %2953 = vmatpush1.xpose.msra.mxu0 0.0
    %2954 = vmatprep.subr.mxu0 0.0
    %2955 = vmatpush1.xpose.msra.mxu0 0.0
    %2956 = vmatprep.subr.mxu0 0.0
    %2957 = vmatpush1.xpose.msra.mxu0 0.0
    %2958 = vmatprep.subr.mxu0 0.0
    %2959 = vmatpush1.xpose.msra.mxu0 0.0
    %2960 = vmatprep.subr.mxu0 0.0
    %2961 = vmatpush1.xpose.msra.mxu0 0.0
    %2962 = vmatprep.subr.mxu0 0.0
    %2963 = vmatpush1.xpose.msra.mxu0 0.0
    %2964 = vmatprep.subr.mxu0 0.0
    %2965 = vmatpush1.xpose.msra.mxu0 0.0
    %2966 = vmatprep.subr.mxu0 0.0
    %2967 = vmatpush1.xpose.msra.mxu0 0.0
    %2968 = vmatprep.subr.mxu0 0.0
    %2969 = vmatpush1.xpose.msra.mxu0 0.0
    %2970 = vmatprep.subr.mxu0 0.0
    %2971 = vmatpush1.xpose.msra.mxu0 0.0
    %2972 = vmatprep.subr.mxu0 0.0
    %2973 = vmatpush1.xpose.msra.mxu0 0.0
    %2974 = vmatprep.subr.mxu0 0.0
    %2975 = vmatpush1.xpose.msra.mxu0 0.0
    %2976 = vmatprep.subr.mxu0 0.0
    %2977 = vmatpush1.xpose.msra.mxu0 0.0
    %2978 = vmatprep.subr.mxu0 0.0
    %2979 = vmatpush1.xpose.msra.mxu0 0.0
    %2980 = vmatprep.subr.mxu0 0.0
    %2981 = vmatpush1.xpose.msra.mxu0 0.0
    %2982 = vmatprep.subr.mxu0 0.0
    %2983 = vmatpush1.xpose.msra.mxu0 0.0
    %2984 = vmatprep.subr.mxu0 0.0
    %2985 = vmatpush1.xpose.msra.mxu0 0.0
    %2986 = vmatprep.subr.mxu0 0.0
    %2987 = vmatpush1.xpose.msra.mxu0 0.0
    %2988 = vmatprep.subr.mxu0 0.0
    %2989 = vmatpush1.xpose.msra.mxu0 0.0
    %2990 = vmatprep.subr.mxu0 0.0
    %2991 = vmatpush1.xpose.msra.mxu0 0.0
    %2992 = vmatprep.subr.mxu0 0.0
    %2993 = vmatpush1.xpose.msra.mxu0 0.0
    %2994 = vmatprep.subr.mxu0 0.0
    %2995 = vmatpush1.xpose.msra.mxu0 0.0
    %2996 = vmatprep.subr.mxu0 0.0
    %2997 = vmatpush1.xpose.msra.mxu0 0.0
    %2998 = vmatprep.subr.mxu0 0.0
    %2999 = vmatpush1.xpose.msra.mxu0 0.0
    %3000 = vmatprep.subr.mxu0 0.0
    %3001 = vmatpush1.xpose.msra.mxu0 0.0
    %3002 = vmatprep.mubr.f32.mxu0 0.0
    %3003 = vmatmul.mubr.f32.gmra.mrb[0].mxu0 %v2933
    %v3004 = vpop.f32.mrb[0].mxu0
    %v3005 = vadd.f32 0.0, %v3004
    %v3006 = vpop.f32.mrb[0].mxu0
    %3007 = vdwg.mxu0
    %v3008 = vsel %vm912, %v2929, -inf
    %3009 = vmax.xlane.f32.xlu0 %v3008
    %v3010 = vpop.xlane.xlu0 %3009
    %v3011 = vsel %vm912, %v3005, -inf
    %3012 = vmax.xlane.f32.xlu0 %v3011
    %v3013 = vpop.xlane.xlu0 %3012
    %v3014 = vsub.f32 %v2929, %v3010
    %v3015 = vsub.f32 %v3005, %v3013
    %v3016 = vmul.f32 %v3014, 1.442695
    %v3017 = vpow.pop %v3016
    %v3018 = vmul.f32 %v3015, 1.442695
    %v3019 = vpow.pop %v3018
    %v3020 = vsel %vm912, %v3017, 0.0
    %3021 = vadd.xlane.f32.xlu0 %v3020
    %v3022 = vpop.xlane.xlu0 %3021
    %v3023 = vsel %vm912, %v3019, 0.0
    %3024 = vadd.xlane.f32.xlu0 %v3023
    %v3025 = vpop.xlane.xlu0 %3024
    %v3026 = vrcp.pop %v3022
    %v3027 = vrcp.pop %v3025
    %v3028 = vmul.f32 %v3017, %v3026
    %v3029 = vmul.f32 %v3019, %v3027
    %v3031 = vsel %vm912, %v3028, 0
    %3033 = vmatprep.subr.mxu0 0.0
    %3034 = vmatpush1.msra.mxu0 %v2848
    %3035 = vmatprep.subr.mxu0 0.0
    %3036 = vmatpush1.msra.mxu0 0.0
    %3037 = vmatprep.subr.mxu0 0.0
    %3038 = vmatpush1.msra.mxu0 0.0
    %3039 = vmatprep.subr.mxu0 0.0
    %3040 = vmatpush1.msra.mxu0 0.0
    %3041 = vmatprep.subr.mxu0 0.0
    %3042 = vmatpush1.msra.mxu0 0.0
    %3043 = vmatprep.subr.mxu0 0.0
    %3044 = vmatpush1.msra.mxu0 0.0
    %3045 = vmatprep.subr.mxu0 0.0
    %3046 = vmatpush1.msra.mxu0 0.0
    %3047 = vmatprep.subr.mxu0 0.0
    %3048 = vmatpush1.msra.mxu0 0.0
    %3049 = vmatprep.subr.mxu0 0.0
    %3050 = vmatpush1.msra.mxu0 0.0
    %3051 = vmatprep.subr.mxu0 0.0
    %3052 = vmatpush1.msra.mxu0 0.0
    %3053 = vmatprep.subr.mxu0 0.0
    %3054 = vmatpush1.msra.mxu0 0.0
    %3055 = vmatprep.subr.mxu0 0.0
    %3056 = vmatpush1.msra.mxu0 0.0
    %3057 = vmatprep.subr.mxu0 0.0
    %3058 = vmatpush1.msra.mxu0 0.0
    %3059 = vmatprep.subr.mxu0 0.0
    %3060 = vmatpush1.msra.mxu0 0.0
    %3061 = vmatprep.subr.mxu0 0.0
    %3062 = vmatpush1.msra.mxu0 0.0
    %3063 = vmatprep.subr.mxu0 0.0
    %3064 = vmatpush1.msra.mxu0 0.0
    %3065 = vmatprep.subr.mxu0 0.0
    %3066 = vmatpush1.msra.mxu0 0.0
    %3067 = vmatprep.subr.mxu0 0.0
    %3068 = vmatpush1.msra.mxu0 0.0
    %3069 = vmatprep.subr.mxu0 0.0
    %3070 = vmatpush1.msra.mxu0 0.0
    %3071 = vmatprep.subr.mxu0 0.0
    %3072 = vmatpush1.msra.mxu0 0.0
    %3073 = vmatprep.subr.mxu0 0.0
    %3074 = vmatpush1.msra.mxu0 0.0
    %3075 = vmatprep.subr.mxu0 0.0
    %3076 = vmatpush1.msra.mxu0 0.0
    %3077 = vmatprep.subr.mxu0 0.0
    %3078 = vmatpush1.msra.mxu0 0.0
    %3079 = vmatprep.subr.mxu0 0.0
    %3080 = vmatpush1.msra.mxu0 0.0
    %3081 = vmatprep.subr.mxu0 0.0
    %3082 = vmatpush1.msra.mxu0 0.0
    %3083 = vmatprep.subr.mxu0 0.0
    %3084 = vmatpush1.msra.mxu0 0.0
    %3085 = vmatprep.subr.mxu0 0.0
    %3086 = vmatpush1.msra.mxu0 0.0
    %3087 = vmatprep.subr.mxu0 0.0
    %3088 = vmatpush1.msra.mxu0 0.0
    %3089 = vmatprep.subr.mxu0 0.0
    %3090 = vmatpush1.msra.mxu0 0.0
    %3091 = vmatprep.subr.mxu0 0.0
    %3092 = vmatpush1.msra.mxu0 0.0
    %3093 = vmatprep.subr.mxu0 0.0
    %3094 = vmatpush1.msra.mxu0 0.0
    %3095 = vmatprep.subr.mxu0 0.0
    %3096 = vmatpush1.msra.mxu0 0.0
    %3097 = vmatprep.mubr.f32.mxu0 0.0
    %3098 = vmatmul.mubr.f32.gmra.mrb[0].mxu0 %v3031
    %v3099 = vpop.f32.mrb[0].mxu0
    %v3100 = vadd.f32 0.0, %v3099
    %v3101 = vpop.f32.mrb[0].mxu0
    %3102 = vdwg.mxu0
    %v3104 = vsel %vm912, %v3029, 0
    %3106 = vmatprep.subr.mxu0 0.0
    %3107 = vmatpush1.msra.mxu0 %v2853
    %3108 = vmatprep.subr.mxu0 0.0
    %3109 = vmatpush1.msra.mxu0 0.0
    %3110 = vmatprep.subr.mxu0 0.0
    %3111 = vmatpush1.msra.mxu0 0.0
    %3112 = vmatprep.subr.mxu0 0.0
    %3113 = vmatpush1.msra.mxu0 0.0
    %3114 = vmatprep.subr.mxu0 0.0
    %3115 = vmatpush1.msra.mxu0 0.0
    %3116 = vmatprep.subr.mxu0 0.0
    %3117 = vmatpush1.msra.mxu0 0.0
    %3118 = vmatprep.subr.mxu0 0.0
    %3119 = vmatpush1.msra.mxu0 0.0
    %3120 = vmatprep.subr.mxu0 0.0
    %3121 = vmatpush1.msra.mxu0 0.0
    %3122 = vmatprep.subr.mxu0 0.0
    %3123 = vmatpush1.msra.mxu0 0.0
    %3124 = vmatprep.subr.mxu0 0.0
    %3125 = vmatpush1.msra.mxu0 0.0
    %3126 = vmatprep.subr.mxu0 0.0
    %3127 = vmatpush1.msra.mxu0 0.0
    %3128 = vmatprep.subr.mxu0 0.0
    %3129 = vmatpush1.msra.mxu0 0.0
    %3130 = vmatprep.subr.mxu0 0.0
    %3131 = vmatpush1.msra.mxu0 0.0
    %3132 = vmatprep.subr.mxu0 0.0
    %3133 = vmatpush1.msra.mxu0 0.0
    %3134 = vmatprep.subr.mxu0 0.0
    %3135 = vmatpush1.msra.mxu0 0.0
    %3136 = vmatprep.subr.mxu0 0.0
    %3137 = vmatpush1.msra.mxu0 0.0
    %3138 = vmatprep.subr.mxu0 0.0
    %3139 = vmatpush1.msra.mxu0 0.0
    %3140 = vmatprep.subr.mxu0 0.0
    %3141 = vmatpush1.msra.mxu0 0.0
    %3142 = vmatprep.subr.mxu0 0.0
    %3143 = vmatpush1.msra.mxu0 0.0
    %3144 = vmatprep.subr.mxu0 0.0
    %3145 = vmatpush1.msra.mxu0 0.0
    %3146 = vmatprep.subr.mxu0 0.0
    %3147 = vmatpush1.msra.mxu0 0.0
    %3148 = vmatprep.subr.mxu0 0.0
    %3149 = vmatpush1.msra.mxu0 0.0
    %3150 = vmatprep.subr.mxu0 0.0
    %3151 = vmatpush1.msra.mxu0 0.0
    %3152 = vmatprep.subr.mxu0 0.0
    %3153 = vmatpush1.msra.mxu0 0.0
    %3154 = vmatprep.subr.mxu0 0.0
    %3155 = vmatpush1.msra.mxu0 0.0
    %3156 = vmatprep.subr.mxu0 0.0
    %3157 = vmatpush1.msra.mxu0 0.0
    %3158 = vmatprep.subr.mxu0 0.0
    %3159 = vmatpush1.msra.mxu0 0.0
    %3160 = vmatprep.subr.mxu0 0.0
    %3161 = vmatpush1.msra.mxu0 0.0
    %3162 = vmatprep.subr.mxu0 0.0
    %3163 = vmatpush1.msra.mxu0 0.0
    %3164 = vmatprep.subr.mxu0 0.0
    %3165 = vmatpush1.msra.mxu0 0.0
    %3166 = vmatprep.subr.mxu0 0.0
    %3167 = vmatpush1.msra.mxu0 0.0
    %3168 = vmatprep.subr.mxu0 0.0
    %3169 = vmatpush1.msra.mxu0 0.0
    %3170 = vmatprep.mubr.f32.mxu0 0.0
    %3171 = vmatmul.mubr.f32.gmra.mrb[0].mxu0 %v3104
    %v3172 = vpop.f32.mrb[0].mxu0
    %v3173 = vadd.f32 0.0, %v3172
    %v3174 = vpop.f32.mrb[0].mxu0
    %3175 = vdwg.mxu0
    %v3177 = vsel %vm912, %v3100, 0
    %v3180 = vsel %vm912, %v3173, 0
    %3182 = vmatprep.subr.mxu0 0.0
    %3183 = vmatpush1.msra.mxu0 %v49
    %3184 = vmatprep.subr.mxu0 0.0
    %3185 = vmatpush1.msra.mxu0 0.0
    %3186 = vmatprep.subr.mxu0 0.0
    %3187 = vmatpush1.msra.mxu0 0.0
    %3188 = vmatprep.subr.mxu0 0.0
    %3189 = vmatpush1.msra.mxu0 0.0
    %3190 = vmatprep.subr.mxu0 0.0
    %3191 = vmatpush1.msra.mxu0 0.0
    %3192 = vmatprep.subr.mxu0 0.0
    %3193 = vmatpush1.msra.mxu0 0.0
    %3194 = vmatprep.subr.mxu0 0.0
    %3195 = vmatpush1.msra.mxu0 0.0
    %3196 = vmatprep.subr.mxu0 0.0
    %3197 = vmatpush1.msra.mxu0 0.0
    %3198 = vmatprep.subr.mxu0 0.0
    %3199 = vmatpush1.msra.mxu0 0.0
    %3200 = vmatprep.subr.mxu0 0.0
    %3201 = vmatpush1.msra.mxu0 0.0
    %3202 = vmatprep.subr.mxu0 0.0
    %3203 = vmatpush1.msra.mxu0 0.0
    %3204 = vmatprep.subr.mxu0 0.0
    %3205 = vmatpush1.msra.mxu0 0.0
    %3206 = vmatprep.subr.mxu0 0.0
    %3207 = vmatpush1.msra.mxu0 0.0
    %3208 = vmatprep.subr.mxu0 0.0
    %3209 = vmatpush1.msra.mxu0 0.0
    %3210 = vmatprep.subr.mxu0 0.0
    %3211 = vmatpush1.msra.mxu0 0.0
    %3212 = vmatprep.subr.mxu0 0.0
    %3213 = vmatpush1.msra.mxu0 0.0
    %3214 = vmatprep.subr.mxu0 0.0
    %3215 = vmatpush1.msra.mxu0 0.0
    %3216 = vmatprep.subr.mxu0 0.0
    %3217 = vmatpush1.msra.mxu0 0.0
    %3218 = vmatprep.subr.mxu0 0.0
    %3219 = vmatpush1.msra.mxu0 0.0
    %3220 = vmatprep.subr.mxu0 0.0
    %3221 = vmatpush1.msra.mxu0 0.0
    %3222 = vmatprep.subr.mxu0 0.0
    %3223 = vmatpush1.msra.mxu0 0.0
    %3224 = vmatprep.subr.mxu0 0.0
    %3225 = vmatpush1.msra.mxu0 0.0
    %3226 = vmatprep.subr.mxu0 0.0
    %3227 = vmatpush1.msra.mxu0 0.0
    %3228 = vmatprep.subr.mxu0 0.0
    %3229 = vmatpush1.msra.mxu0 0.0
    %3230 = vmatprep.subr.mxu0 0.0
    %3231 = vmatpush1.msra.mxu0 0.0
    %3232 = vmatprep.subr.mxu0 0.0
    %3233 = vmatpush1.msra.mxu0 0.0
    %3234 = vmatprep.subr.mxu0 0.0
    %3235 = vmatpush1.msra.mxu0 0.0
    %3236 = vmatprep.subr.mxu0 0.0
    %3237 = vmatpush1.msra.mxu0 0.0
    %3238 = vmatprep.subr.mxu0 0.0
    %3239 = vmatpush1.msra.mxu0 0.0
    %3240 = vmatprep.subr.mxu0 0.0
    %3241 = vmatpush1.msra.mxu0 0.0
    %3242 = vmatprep.subr.mxu0 0.0
    %3243 = vmatpush1.msra.mxu0 0.0
    %3244 = vmatprep.subr.mxu0 0.0
    %3245 = vmatpush1.msra.mxu0 0.0
    %3246 = vmatprep.mubr.f32.mxu0 0.0
    %3247 = vmatmul.mubr.f32.gmra.mrb[0].mxu0 %v3177
    %v3248 = vpop.f32.mrb[0].mxu0
    %v3249 = vadd.f32 0.0, %v3248
    %v3250 = vpop.f32.mrb[0].mxu0
    %3251 = vmatprep.mubr.f32.mxu0 0.0
    %3252 = vmatmul.mubr.f32.gmra.mrb[0].mxu0 %v3180
    %v3253 = vpop.f32.mrb[0].mxu0
    %v3254 = vadd.f32 0.0, %v3253
    %v3255 = vpop.f32.mrb[0].mxu0
    %3256 = vdwg.mxu0
    %v3257 = vadd.f32 %v2609, %v3249
    %v3258 = vadd.f32 %v2610, %v3254
    %v3259 = vlaneseq
    %v3260 = vshrl.u32 %v3259, 7
    %v3261 = vsub.s32 3, %v3260
    %v3262 = vrot.slane %v646, %v3261
    %v3263 = vadd.f32 %v3257, %v3262
    %v3264 = vadd.f32 %v3258, %v3262
    %v3265 = vadd.f32 %v31, %v3263
    %v3266 = vadd.f32 %v32, %v3264
    %v3267 = vsel %vm661, %v3265, 0.0
    %3268 = vadd.xlane.f32.xlu0 %v3267
    %v3269 = vpop.xlane.xlu0 %3268
    %v3270 = vsel %vm661, %v3266, 0.0
    %3271 = vadd.xlane.f32.xlu0 %v3270
    %v3272 = vpop.xlane.xlu0 %3271
    %v3273 = vrcp.pop 32.0
    %v3274 = vmul.f32 %v3269, %v3273
    %v3275 = vmul.f32 %v3272, %v3273
    %v3276 = vsub.f32 %v3265, %v3274
    %v3277 = vsub.f32 %v3266, %v3275
    %v3278 = vmul.f32 %v3276, %v3276
    %v3279 = vmul.f32 %v3277, %v3277
    %v3280 = vsel %vm661, %v3278, 0.0
    %3281 = vadd.xlane.f32.xlu0 %v3280
    %v3282 = vpop.xlane.xlu0 %3281
    %v3283 = vsel %vm661, %v3279, 0.0
    %3284 = vadd.xlane.f32.xlu0 %v3283
    %v3285 = vpop.xlane.xlu0 %3284
    %v3286 = vmul.f32 %v3282, %v3273
    %v3287 = vmul.f32 %v3285, %v3273
    %v3288 = vadd.f32 %v3286, 1e-05
    %v3289 = vadd.f32 %v3287, 1e-05
    %v3290 = vrsqrt.pop %v3288
    %v3291 = vrsqrt.pop %v3289
    %v3292 = vmul.f32 %v3276, %v3290
    %v3293 = vmul.f32 %v3277, %v3291
    %v3294 = vlaneseq
    %v3295 = vshrl.u32 %v3294, 7
    %v3296 = vsub.s32 5, %v3295
    %v3297 = vrot.slane %v646, %v3296
    %v3298 = vmul.f32 %v3292, %v3297
    %v3299 = vmul.f32 %v3293, %v3297
    %v3300 = vlaneseq
    %v3301 = vshrl.u32 %v3300, 7
    %v3302 = vsub.s32 6, %v3301
    %v3303 = vrot.slane %v646, %v3302
    %v3304 = vadd.f32 %v3298, %v3303
    %v3305 = vadd.f32 %v3299, %v3303
    %v3306 = vpack.c.bf16 %v3305, %v3304
    %v3311 = vlaneseq
    %v3312 = vshrl.u32 %v3311, 7
    %v3313 = vsub.s32 0, %v3312
    %v3314 = vrot.slane %v642, %v3313
    %v3315 = vlaneseq
    %v3316 = vshrl.u32 %v3315, 7
    %v3317 = vsub.s32 2, %v3316
    %v3318 = vrot.slane %v642, %v3317
    %v3319 = vlaneseq
    %v3320 = vshrl.u32 %v3319, 7
    %v3321 = vsub.s32 4, %v3320
    %v3322 = vrot.slane %v642, %v3321
    %v3323 = vlaneseq
    %v3324 = vshrl.u32 %v3323, 7
    %v3325 = vsub.s32 6, %v3324
    %v3326 = vrot.slane %v642, %v3325
    %v3327 = vlaneseq
    %v3328 = vshrl.u32 %v3327, 7
    %v3329 = vsub.s32 0, %v3328
    %v3330 = vrot.slane %v643, %v3329
    %v3331 = vlaneseq
    %v3332 = vshrl.u32 %v3331, 7
    %v3333 = vsub.s32 2, %v3332
    %v3334 = vrot.slane %v643, %v3333
    %v3335 = vlaneseq
    %v3336 = vshrl.u32 %v3335, 7
    %v3337 = vsub.s32 4, %v3336
    %v3338 = vrot.slane %v643, %v3337
    %v3339 = vlaneseq
    %v3340 = vshrl.u32 %v3339, 7
    %v3341 = vsub.s32 6, %v3340
    %v3342 = vrot.slane %v643, %v3341
    %v3343 = vlaneseq
    %v3344 = vshrl.u32 %v3343, 7
    %v3345 = vsub.s32 0, %v3344
    %v3346 = vrot.slane %v644, %v3345
    %v3347 = vlaneseq
    %v3348 = vshrl.u32 %v3347, 7
    %v3349 = vsub.s32 2, %v3348
    %v3350 = vrot.slane %v644, %v3349
    %v3351 = vlaneseq
    %v3352 = vshrl.u32 %v3351, 7
    %v3353 = vsub.s32 4, %v3352
    %v3354 = vrot.slane %v644, %v3353
    %v3355 = vlaneseq
    %v3356 = vshrl.u32 %v3355, 7
    %v3357 = vsub.s32 6, %v3356
    %v3358 = vrot.slane %v644, %v3357
    %v3359 = vlaneseq
    %v3360 = vshrl.u32 %v3359, 7
    %v3361 = vsub.s32 0, %v3360
    %v3362 = vrot.slane %v645, %v3361
    %v3363 = vlaneseq
    %v3364 = vshrl.u32 %v3363, 7
    %v3365 = vsub.s32 2, %v3364
    %v3366 = vrot.slane %v645, %v3365
    %v3367 = vlaneseq
    %v3368 = vshrl.u32 %v3367, 7
    %v3369 = vsub.s32 4, %v3368
    %v3370 = vrot.slane %v645, %v3369
    %v3371 = vlaneseq
    %v3372 = vshrl.u32 %v3371, 7
    %v3373 = vsub.s32 6, %v3372
    %v3374 = vrot.slane %v645, %v3373
    %v3391 = vlaneseq
    %v3392 = vshrl.u32 %v3391, 7
    %v3393 = vsub.s32 0, %v3392
    %v3394 = vrot.slane %v3314, %v3393
    %v3395 = vlaneseq
    %v3396 = vshrl.u32 %v3395, 7
    %v3397 = vsub.s32 0, %v3396
    %v3398 = vrot.slane %v3318, %v3397
    %v3399 = vlaneseq
    %v3400 = vshrl.u32 %v3399, 7
    %v3401 = vsub.s32 0, %v3400
    %v3402 = vrot.slane %v3322, %v3401
    %v3403 = vlaneseq
    %v3404 = vshrl.u32 %v3403, 7
    %v3405 = vsub.s32 0, %v3404
    %v3406 = vrot.slane %v3326, %v3405
    %v3407 = vlaneseq
    %v3408 = vshrl.u32 %v3407, 7
    %v3409 = vsub.s32 0, %v3408
    %v3410 = vrot.slane %v3330, %v3409
    %v3411 = vlaneseq
    %v3412 = vshrl.u32 %v3411, 7
    %v3413 = vsub.s32 0, %v3412
    %v3414 = vrot.slane %v3334, %v3413
    %v3415 = vlaneseq
    %v3416 = vshrl.u32 %v3415, 7
    %v3417 = vsub.s32 0, %v3416
    %v3418 = vrot.slane %v3338, %v3417
    %v3419 = vlaneseq
    %v3420 = vshrl.u32 %v3419, 7
    %v3421 = vsub.s32 0, %v3420
    %v3422 = vrot.slane %v3342, %v3421
    %v3423 = vlaneseq
    %v3424 = vshrl.u32 %v3423, 7
    %v3425 = vsub.s32 0, %v3424
    %v3426 = vrot.slane %v3346, %v3425
    %v3427 = vlaneseq
    %v3428 = vshrl.u32 %v3427, 7
    %v3429 = vsub.s32 0, %v3428
    %v3430 = vrot.slane %v3350, %v3429
    %v3431 = vlaneseq
    %v3432 = vshrl.u32 %v3431, 7
    %v3433 = vsub.s32 0, %v3432
    %v3434 = vrot.slane %v3354, %v3433
    %v3435 = vlaneseq
    %v3436 = vshrl.u32 %v3435, 7
    %v3437 = vsub.s32 0, %v3436
    %v3438 = vrot.slane %v3358, %v3437
    %v3439 = vlaneseq
    %v3440 = vshrl.u32 %v3439, 7
    %v3441 = vsub.s32 0, %v3440
    %v3442 = vrot.slane %v3362, %v3441
    %v3443 = vlaneseq
    %v3444 = vshrl.u32 %v3443, 7
    %v3445 = vsub.s32 0, %v3444
    %v3446 = vrot.slane %v3366, %v3445
    %v3447 = vlaneseq
    %v3448 = vshrl.u32 %v3447, 7
    %v3449 = vsub.s32 0, %v3448
    %v3450 = vrot.slane %v3370, %v3449
    %v3451 = vlaneseq
    %v3452 = vshrl.u32 %v3451, 7
    %v3453 = vsub.s32 0, %v3452
    %v3454 = vrot.slane %v3374, %v3453
    %v3711 = vunpack.c.l.b16 %v66
    %v3712 = vunpack.c.l.b16 %v67
    %v3713 = vunpack.c.l.b16 %v68
    %v3714 = vunpack.c.l.b16 %v69
    %v3715 = vunpack.c.l.b16 %v70
    %v3716 = vunpack.c.l.b16 %v71
    %v3717 = vunpack.c.l.b16 %v72
    %v3718 = vunpack.c.l.b16 %v73
    %v3719 = vunpack.c.l.b16 %v74
    %v3720 = vunpack.c.l.b16 %v75
    %v3721 = vunpack.c.l.b16 %v76
    %v3722 = vunpack.c.l.b16 %v77
    %v3723 = vunpack.c.l.b16 %v78
    %v3724 = vunpack.c.l.b16 %v79
    %v3725 = vunpack.c.l.b16 %v80
    %v3726 = vunpack.c.l.b16 %v81
    %v3727 = vunpack.c.l.b16 %v82
    %v3728 = vunpack.c.l.b16 %v83
    %v3729 = vunpack.c.l.b16 %v84
    %v3730 = vunpack.c.l.b16 %v85
    %v3731 = vunpack.c.l.b16 %v86
    %v3732 = vunpack.c.l.b16 %v87
    %v3733 = vunpack.c.l.b16 %v88
    %v3734 = vunpack.c.l.b16 %v89
    %v3735 = vunpack.c.l.b16 %v90
    %v3736 = vunpack.c.l.b16 %v91
    %v3737 = vunpack.c.l.b16 %v92
    %v3738 = vunpack.c.l.b16 %v93
    %v3739 = vunpack.c.l.b16 %v94
    %v3740 = vunpack.c.l.b16 %v95
    %v3741 = vunpack.c.l.b16 %v96
    %v3742 = vunpack.c.l.b16 %v97
    %v3743 = vunpack.c.l.b16 %v98
    %v3744 = vunpack.c.l.b16 %v99
    %v3745 = vunpack.c.l.b16 %v100
    %v3746 = vunpack.c.l.b16 %v101
    %v3747 = vunpack.c.l.b16 %v102
    %v3748 = vunpack.c.l.b16 %v103
    %v3749 = vunpack.c.l.b16 %v104
    %v3750 = vunpack.c.l.b16 %v105
    %v3751 = vunpack.c.l.b16 %v106
    %v3752 = vunpack.c.l.b16 %v107
    %v3753 = vunpack.c.l.b16 %v108
    %v3754 = vunpack.c.l.b16 %v109
    %v3755 = vunpack.c.l.b16 %v110
    %v3756 = vunpack.c.l.b16 %v111
    %v3757 = vunpack.c.l.b16 %v112
    %v3758 = vunpack.c.l.b16 %v113
    %v3759 = vunpack.c.l.b16 %v114
    %v3760 = vunpack.c.l.b16 %v115
    %v3761 = vunpack.c.l.b16 %v116
    %v3762 = vunpack.c.l.b16 %v117
    %v3763 = vunpack.c.l.b16 %v118
    %v3764 = vunpack.c.l.b16 %v119
    %v3765 = vunpack.c.l.b16 %v120
    %v3766 = vunpack.c.l.b16 %v121
    %v3767 = vunpack.c.l.b16 %v122
    %v3768 = vunpack.c.l.b16 %v123
    %v3769 = vunpack.c.l.b16 %v124
    %v3770 = vunpack.c.l.b16 %v125
    %v3771 = vunpack.c.l.b16 %v126
    %v3772 = vunpack.c.l.b16 %v127
    %v3773 = vunpack.c.l.b16 %v128
    %v3774 = vunpack.c.l.b16 %v129
    %v3775 = vunpack.c.l.b16 %v130
    %v3776 = vunpack.c.l.b16 %v131
    %v3777 = vunpack.c.l.b16 %v132
    %v3778 = vunpack.c.l.b16 %v133
    %v3779 = vunpack.c.l.b16 %v134
    %v3780 = vunpack.c.l.b16 %v135
    %v3781 = vunpack.c.l.b16 %v136
    %v3782 = vunpack.c.l.b16 %v137
    %v3783 = vunpack.c.l.b16 %v138
    %v3784 = vunpack.c.l.b16 %v139
    %v3785 = vunpack.c.l.b16 %v140
    %v3786 = vunpack.c.l.b16 %v141
    %v3787 = vunpack.c.l.b16 %v142
    %v3788 = vunpack.c.l.b16 %v143
    %v3789 = vunpack.c.l.b16 %v144
    %v3790 = vunpack.c.l.b16 %v145
    %v3791 = vunpack.c.l.b16 %v146
    %v3792 = vunpack.c.l.b16 %v147
    %v3793 = vunpack.c.l.b16 %v148
    %v3794 = vunpack.c.l.b16 %v149
    %v3795 = vunpack.c.l.b16 %v150
    %v3796 = vunpack.c.l.b16 %v151
    %v3797 = vunpack.c.l.b16 %v152
    %v3798 = vunpack.c.l.b16 %v153
    %v3799 = vunpack.c.l.b16 %v154
    %v3800 = vunpack.c.l.b16 %v155
    %v3801 = vunpack.c.l.b16 %v156
    %v3802 = vunpack.c.l.b16 %v157
    %v3803 = vunpack.c.l.b16 %v158
    %v3804 = vunpack.c.l.b16 %v159
    %v3805 = vunpack.c.l.b16 %v160
    %v3806 = vunpack.c.l.b16 %v161
    %v3807 = vunpack.c.l.b16 %v162
    %v3808 = vunpack.c.l.b16 %v163
    %v3809 = vunpack.c.l.b16 %v164
    %v3810 = vunpack.c.l.b16 %v165
    %v3811 = vunpack.c.l.b16 %v166
    %v3812 = vunpack.c.l.b16 %v167
    %v3813 = vunpack.c.l.b16 %v168
    %v3814 = vunpack.c.l.b16 %v169
    %v3815 = vunpack.c.l.b16 %v170
    %v3816 = vunpack.c.l.b16 %v171
    %v3817 = vunpack.c.l.b16 %v172
    %v3818 = vunpack.c.l.b16 %v173
    %v3819 = vunpack.c.l.b16 %v174
    %v3820 = vunpack.c.l.b16 %v175
    %v3821 = vunpack.c.l.b16 %v176
    %v3822 = vunpack.c.l.b16 %v177
    %v3823 = vunpack.c.l.b16 %v178
    %v3824 = vunpack.c.l.b16 %v179
    %v3825 = vunpack.c.l.b16 %v180
    %v3826 = vunpack.c.l.b16 %v181
    %v3827 = vunpack.c.l.b16 %v182
    %v3828 = vunpack.c.l.b16 %v183
    %v3829 = vunpack.c.l.b16 %v184
    %v3830 = vunpack.c.l.b16 %v185
    %v3831 = vunpack.c.l.b16 %v186
    %v3832 = vunpack.c.l.b16 %v187
    %v3833 = vunpack.c.l.b16 %v188
    %v3834 = vunpack.c.l.b16 %v189
    %v3835 = vunpack.c.l.b16 %v190
    %v3836 = vunpack.c.l.b16 %v191
    %v3837 = vunpack.c.l.b16 %v192
    %v3838 = vunpack.c.l.b16 %v193
    %v3839 = vunpack.c.l.b16 %v194
    %v3840 = vunpack.c.l.b16 %v195
    %v3841 = vunpack.c.l.b16 %v196
    %v3842 = vunpack.c.l.b16 %v197
    %v3843 = vunpack.c.l.b16 %v198
    %v3844 = vunpack.c.l.b16 %v199
    %v3845 = vunpack.c.l.b16 %v200
    %v3846 = vunpack.c.l.b16 %v201
    %v3847 = vunpack.c.l.b16 %v202
    %v3848 = vunpack.c.l.b16 %v203
    %v3849 = vunpack.c.l.b16 %v204
    %v3850 = vunpack.c.l.b16 %v205
    %v3851 = vunpack.c.l.b16 %v206
    %v3852 = vunpack.c.l.b16 %v207
    %v3853 = vunpack.c.l.b16 %v208
    %v3854 = vunpack.c.l.b16 %v209
    %v3855 = vunpack.c.l.b16 %v210
    %v3856 = vunpack.c.l.b16 %v211
    %v3857 = vunpack.c.l.b16 %v212
    %v3858 = vunpack.c.l.b16 %v213
    %v3859 = vunpack.c.l.b16 %v214
    %v3860 = vunpack.c.l.b16 %v215
    %v3861 = vunpack.c.l.b16 %v216
    %v3862 = vunpack.c.l.b16 %v217
    %v3863 = vunpack.c.l.b16 %v218
    %v3864 = vunpack.c.l.b16 %v219
    %v3865 = vunpack.c.l.b16 %v220
    %v3866 = vunpack.c.l.b16 %v221
    %v3867 = vunpack.c.l.b16 %v222
    %v3868 = vunpack.c.l.b16 %v223
    %v3869 = vunpack.c.l.b16 %v224
    %v3870 = vunpack.c.l.b16 %v225
    %v3871 = vunpack.c.l.b16 %v226
    %v3872 = vunpack.c.l.b16 %v227
    %v3873 = vunpack.c.l.b16 %v228
    %v3874 = vunpack.c.l.b16 %v229
    %v3875 = vunpack.c.l.b16 %v230
    %v3876 = vunpack.c.l.b16 %v231
    %v3877 = vunpack.c.l.b16 %v232
    %v3878 = vunpack.c.l.b16 %v233
    %v3879 = vunpack.c.l.b16 %v234
    %v3880 = vunpack.c.l.b16 %v235
    %v3881 = vunpack.c.l.b16 %v236
    %v3882 = vunpack.c.l.b16 %v237
    %v3883 = vunpack.c.l.b16 %v238
    %v3884 = vunpack.c.l.b16 %v239
    %v3885 = vunpack.c.l.b16 %v240
    %v3886 = vunpack.c.l.b16 %v241
    %v3887 = vunpack.c.l.b16 %v242
    %v3888 = vunpack.c.l.b16 %v243
    %v3889 = vunpack.c.l.b16 %v244
    %v3890 = vunpack.c.l.b16 %v245
    %v3891 = vunpack.c.l.b16 %v246
    %v3892 = vunpack.c.l.b16 %v247
    %v3893 = vunpack.c.l.b16 %v248
    %v3894 = vunpack.c.l.b16 %v249
    %v3895 = vunpack.c.l.b16 %v250
    %v3896 = vunpack.c.l.b16 %v251
    %v3897 = vunpack.c.l.b16 %v252
    %v3898 = vunpack.c.l.b16 %v253
    %v3899 = vunpack.c.l.b16 %v254
    %v3900 = vunpack.c.l.b16 %v255
    %v3901 = vunpack.c.l.b16 %v256
    %v3902 = vunpack.c.l.b16 %v257
    %v3903 = vunpack.c.l.b16 %v258
    %v3904 = vunpack.c.l.b16 %v259
    %v3905 = vunpack.c.l.b16 %v260
    %v3906 = vunpack.c.l.b16 %v261
    %v3907 = vunpack.c.l.b16 %v262
    %v3908 = vunpack.c.l.b16 %v263
    %v3909 = vunpack.c.l.b16 %v264
    %v3910 = vunpack.c.l.b16 %v265
    %v3911 = vunpack.c.l.b16 %v266
    %v3912 = vunpack.c.l.b16 %v267
    %v3913 = vunpack.c.l.b16 %v268
    %v3914 = vunpack.c.l.b16 %v269
    %v3915 = vunpack.c.l.b16 %v270
    %v3916 = vunpack.c.l.b16 %v271
    %v3917 = vunpack.c.l.b16 %v272
    %v3918 = vunpack.c.l.b16 %v273
    %v3919 = vunpack.c.l.b16 %v274
    %v3920 = vunpack.c.l.b16 %v275
    %v3921 = vunpack.c.l.b16 %v276
    %v3922 = vunpack.c.l.b16 %v277
    %v3923 = vunpack.c.l.b16 %v278
    %v3924 = vunpack.c.l.b16 %v279
    %v3925 = vunpack.c.l.b16 %v280
    %v3926 = vunpack.c.l.b16 %v281
    %v3927 = vunpack.c.l.b16 %v282
    %v3928 = vunpack.c.l.b16 %v283
    %v3929 = vunpack.c.l.b16 %v284
    %v3930 = vunpack.c.l.b16 %v285
    %v3931 = vunpack.c.l.b16 %v286
    %v3932 = vunpack.c.l.b16 %v287
    %v3933 = vunpack.c.l.b16 %v288
    %v3934 = vunpack.c.l.b16 %v289
    %v3935 = vunpack.c.l.b16 %v290
    %v3936 = vunpack.c.l.b16 %v291
    %v3937 = vunpack.c.l.b16 %v292
    %v3938 = vunpack.c.l.b16 %v293
    %v3939 = vunpack.c.l.b16 %v294
    %v3940 = vunpack.c.l.b16 %v295
    %v3941 = vunpack.c.l.b16 %v296
    %v3942 = vunpack.c.l.b16 %v297
    %v3943 = vunpack.c.l.b16 %v298
    %v3944 = vunpack.c.l.b16 %v299
    %v3945 = vunpack.c.l.b16 %v300
    %v3946 = vunpack.c.l.b16 %v301
    %v3947 = vunpack.c.l.b16 %v302
    %v3948 = vunpack.c.l.b16 %v303
    %v3949 = vunpack.c.l.b16 %v304
    %v3950 = vunpack.c.l.b16 %v305
    %v3951 = vunpack.c.l.b16 %v306
    %v3952 = vunpack.c.l.b16 %v307
    %v3953 = vunpack.c.l.b16 %v308
    %v3954 = vunpack.c.l.b16 %v309
    %v3955 = vunpack.c.l.b16 %v310
    %v3956 = vunpack.c.l.b16 %v311
    %v3957 = vunpack.c.l.b16 %v312
    %v3958 = vunpack.c.l.b16 %v313
    %v3959 = vunpack.c.l.b16 %v314
    %v3960 = vunpack.c.l.b16 %v315
    %v3961 = vunpack.c.l.b16 %v316
    %v3962 = vunpack.c.l.b16 %v317
    %v3963 = vunpack.c.l.b16 %v318
    %v3964 = vunpack.c.l.b16 %v319
    %v3965 = vunpack.c.l.b16 %v320
    %v3966 = vunpack.c.l.b16 %v321
    %v3967 = vpack.c.b16 %v3712, %v3711
    %v3968 = vpack.c.b16 %v3714, %v3713
    %v3969 = vpack.c.b16 %v3716, %v3715
    %v3970 = vpack.c.b16 %v3718, %v3717
    %v3971 = vpack.c.b16 %v3720, %v3719
    %v3972 = vpack.c.b16 %v3722, %v3721
    %v3973 = vpack.c.b16 %v3724, %v3723
    %v3974 = vpack.c.b16 %v3726, %v3725
    %v3975 = vpack.c.b16 %v3728, %v3727
    %v3976 = vpack.c.b16 %v3730, %v3729
    %v3977 = vpack.c.b16 %v3732, %v3731
    %v3978 = vpack.c.b16 %v3734, %v3733
    %v3979 = vpack.c.b16 %v3736, %v3735
    %v3980 = vpack.c.b16 %v3738, %v3737
    %v3981 = vpack.c.b16 %v3740, %v3739
    %v3982 = vpack.c.b16 %v3742, %v3741
    %v3983 = vpack.c.b16 %v3744, %v3743
    %v3984 = vpack.c.b16 %v3746, %v3745
    %v3985 = vpack.c.b16 %v3748, %v3747
    %v3986 = vpack.c.b16 %v3750, %v3749
    %v3987 = vpack.c.b16 %v3752, %v3751
    %v3988 = vpack.c.b16 %v3754, %v3753
    %v3989 = vpack.c.b16 %v3756, %v3755
    %v3990 = vpack.c.b16 %v3758, %v3757
    %v3991 = vpack.c.b16 %v3760, %v3759
    %v3992 = vpack.c.b16 %v3762, %v3761
    %v3993 = vpack.c.b16 %v3764, %v3763
    %v3994 = vpack.c.b16 %v3766, %v3765
    %v3995 = vpack.c.b16 %v3768, %v3767
    %v3996 = vpack.c.b16 %v3770, %v3769
    %v3997 = vpack.c.b16 %v3772, %v3771
    %v3998 = vpack.c.b16 %v3774, %v3773
    %v3999 = vpack.c.b16 %v3776, %v3775
    %v4000 = vpack.c.b16 %v3778, %v3777
    %v4001 = vpack.c.b16 %v3780, %v3779
    %v4002 = vpack.c.b16 %v3782, %v3781
    %v4003 = vpack.c.b16 %v3784, %v3783
    %v4004 = vpack.c.b16 %v3786, %v3785
    %v4005 = vpack.c.b16 %v3788, %v3787
    %v4006 = vpack.c.b16 %v3790, %v3789
    %v4007 = vpack.c.b16 %v3792, %v3791
    %v4008 = vpack.c.b16 %v3794, %v3793
    %v4009 = vpack.c.b16 %v3796, %v3795
    %v4010 = vpack.c.b16 %v3798, %v3797
    %v4011 = vpack.c.b16 %v3800, %v3799
    %v4012 = vpack.c.b16 %v3802, %v3801
    %v4013 = vpack.c.b16 %v3804, %v3803
    %v4014 = vpack.c.b16 %v3806, %v3805
    %v4015 = vpack.c.b16 %v3808, %v3807
    %v4016 = vpack.c.b16 %v3810, %v3809
    %v4017 = vpack.c.b16 %v3812, %v3811
    %v4018 = vpack.c.b16 %v3814, %v3813
    %v4019 = vpack.c.b16 %v3816, %v3815
    %v4020 = vpack.c.b16 %v3818, %v3817
    %v4021 = vpack.c.b16 %v3820, %v3819
    %v4022 = vpack.c.b16 %v3822, %v3821
    %v4023 = vpack.c.b16 %v3824, %v3823
    %v4024 = vpack.c.b16 %v3826, %v3825
    %v4025 = vpack.c.b16 %v3828, %v3827
    %v4026 = vpack.c.b16 %v3830, %v3829
    %v4027 = vpack.c.b16 %v3832, %v3831
    %v4028 = vpack.c.b16 %v3834, %v3833
    %v4029 = vpack.c.b16 %v3836, %v3835
    %v4030 = vpack.c.b16 %v3838, %v3837
    %v4031 = vpack.c.b16 %v3840, %v3839
    %v4032 = vpack.c.b16 %v3842, %v3841
    %v4033 = vpack.c.b16 %v3844, %v3843
    %v4034 = vpack.c.b16 %v3846, %v3845
    %v4035 = vpack.c.b16 %v3848, %v3847
    %v4036 = vpack.c.b16 %v3850, %v3849
    %v4037 = vpack.c.b16 %v3852, %v3851
    %v4038 = vpack.c.b16 %v3854, %v3853
    %v4039 = vpack.c.b16 %v3856, %v3855
    %v4040 = vpack.c.b16 %v3858, %v3857
    %v4041 = vpack.c.b16 %v3860, %v3859
    %v4042 = vpack.c.b16 %v3862, %v3861
    %v4043 = vpack.c.b16 %v3864, %v3863
    %v4044 = vpack.c.b16 %v3866, %v3865
    %v4045 = vpack.c.b16 %v3868, %v3867
    %v4046 = vpack.c.b16 %v3870, %v3869
    %v4047 = vpack.c.b16 %v3872, %v3871
    %v4048 = vpack.c.b16 %v3874, %v3873
    %v4049 = vpack.c.b16 %v3876, %v3875
    %v4050 = vpack.c.b16 %v3878, %v3877
    %v4051 = vpack.c.b16 %v3880, %v3879
    %v4052 = vpack.c.b16 %v3882, %v3881
    %v4053 = vpack.c.b16 %v3884, %v3883
    %v4054 = vpack.c.b16 %v3886, %v3885
    %v4055 = vpack.c.b16 %v3888, %v3887
    %v4056 = vpack.c.b16 %v3890, %v3889
    %v4057 = vpack.c.b16 %v3892, %v3891
    %v4058 = vpack.c.b16 %v3894, %v3893
    %v4059 = vpack.c.b16 %v3896, %v3895
    %v4060 = vpack.c.b16 %v3898, %v3897
    %v4061 = vpack.c.b16 %v3900, %v3899
    %v4062 = vpack.c.b16 %v3902, %v3901
    %v4063 = vpack.c.b16 %v3904, %v3903
    %v4064 = vpack.c.b16 %v3906, %v3905
    %v4065 = vpack.c.b16 %v3908, %v3907
    %v4066 = vpack.c.b16 %v3910, %v3909
    %v4067 = vpack.c.b16 %v3912, %v3911
    %v4068 = vpack.c.b16 %v3914, %v3913
    %v4069 = vpack.c.b16 %v3916, %v3915
    %v4070 = vpack.c.b16 %v3918, %v3917
    %v4071 = vpack.c.b16 %v3920, %v3919
    %v4072 = vpack.c.b16 %v3922, %v3921
    %v4073 = vpack.c.b16 %v3924, %v3923
    %v4074 = vpack.c.b16 %v3926, %v3925
    %v4075 = vpack.c.b16 %v3928, %v3927
    %v4076 = vpack.c.b16 %v3930, %v3929
    %v4077 = vpack.c.b16 %v3932, %v3931
    %v4078 = vpack.c.b16 %v3934, %v3933
    %v4079 = vpack.c.b16 %v3936, %v3935
    %v4080 = vpack.c.b16 %v3938, %v3937
    %v4081 = vpack.c.b16 %v3940, %v3939
    %v4082 = vpack.c.b16 %v3942, %v3941
    %v4083 = vpack.c.b16 %v3944, %v3943
    %v4084 = vpack.c.b16 %v3946, %v3945
    %v4085 = vpack.c.b16 %v3948, %v3947
    %v4086 = vpack.c.b16 %v3950, %v3949
    %v4087 = vpack.c.b16 %v3952, %v3951
    %v4088 = vpack.c.b16 %v3954, %v3953
    %v4089 = vpack.c.b16 %v3956, %v3955
    %v4090 = vpack.c.b16 %v3958, %v3957
    %v4091 = vpack.c.b16 %v3960, %v3959
    %v4092 = vpack.c.b16 %v3962, %v3961
    %v4093 = vpack.c.b16 %v3964, %v3963
    %v4094 = vpack.c.b16 %v3966, %v3965
    %v4096 = vsel %vm661, %v3306, 0
    %v4099 = vsel %vm661, %v3967, 0
    %v4102 = vsel %vm661, %v3968, 0
    %v4105 = vsel %vm661, %v3969, 0
    %v4108 = vsel %vm661, %v3970, 0
    %v4111 = vsel %vm661, %v3971, 0
    %v4114 = vsel %vm661, %v3972, 0
    %v4117 = vsel %vm661, %v3973, 0
    %v4120 = vsel %vm661, %v3974, 0
    %v4123 = vsel %vm661, %v3975, 0
    %v4126 = vsel %vm661, %v3976, 0
    %v4129 = vsel %vm661, %v3977, 0
    %v4132 = vsel %vm661, %v3978, 0
    %v4135 = vsel %vm661, %v3979, 0
    %v4138 = vsel %vm661, %v3980, 0
    %v4141 = vsel %vm661, %v3981, 0
    %v4144 = vsel %vm661, %v3982, 0
    %v4147 = vsel %vm661, %v3983, 0
    %v4150 = vsel %vm661, %v3984, 0
    %v4153 = vsel %vm661, %v3985, 0
    %v4156 = vsel %vm661, %v3986, 0
    %v4159 = vsel %vm661, %v3987, 0
    %v4162 = vsel %vm661, %v3988, 0
    %v4165 = vsel %vm661, %v3989, 0
    %v4168 = vsel %vm661, %v3990, 0
    %v4171 = vsel %vm661, %v3991, 0
    %v4174 = vsel %vm661, %v3992, 0
    %v4177 = vsel %vm661, %v3993, 0
    %v4180 = vsel %vm661, %v3994, 0
    %v4183 = vsel %vm661, %v3995, 0
    %v4186 = vsel %vm661, %v3996, 0
    %v4189 = vsel %vm661, %v3997, 0
    %v4192 = vsel %vm661, %v3998, 0
    %v4195 = vsel %vm661, %v3999, 0
    %v4198 = vsel %vm661, %v4000, 0
    %v4201 = vsel %vm661, %v4001, 0
    %v4204 = vsel %vm661, %v4002, 0
    %v4207 = vsel %vm661, %v4003, 0
    %v4210 = vsel %vm661, %v4004, 0
    %v4213 = vsel %vm661, %v4005, 0
    %v4216 = vsel %vm661, %v4006, 0
    %v4219 = vsel %vm661, %v4007, 0
    %v4222 = vsel %vm661, %v4008, 0
    %v4225 = vsel %vm661, %v4009, 0
    %v4228 = vsel %vm661, %v4010, 0
    %v4231 = vsel %vm661, %v4011, 0
    %v4234 = vsel %vm661, %v4012, 0
    %v4237 = vsel %vm661, %v4013, 0
    %v4240 = vsel %vm661, %v4014, 0
    %v4243 = vsel %vm661, %v4015, 0
    %v4246 = vsel %vm661, %v4016, 0
    %v4249 = vsel %vm661, %v4017, 0
    %v4252 = vsel %vm661, %v4018, 0
    %v4255 = vsel %vm661, %v4019, 0
    %v4258 = vsel %vm661, %v4020, 0
    %v4261 = vsel %vm661, %v4021, 0
    %v4264 = vsel %vm661, %v4022, 0
    %v4267 = vsel %vm661, %v4023, 0
    %v4270 = vsel %vm661, %v4024, 0
    %v4273 = vsel %vm661, %v4025, 0
    %v4276 = vsel %vm661, %v4026, 0
    %v4279 = vsel %vm661, %v4027, 0
    %v4282 = vsel %vm661, %v4028, 0
    %v4285 = vsel %vm661, %v4029, 0
    %v4288 = vsel %vm661, %v4030, 0
    %v4291 = vsel %vm661, %v4031, 0
    %v4294 = vsel %vm661, %v4032, 0
    %v4297 = vsel %vm661, %v4033, 0
    %v4300 = vsel %vm661, %v4034, 0
    %v4303 = vsel %vm661, %v4035, 0
    %v4306 = vsel %vm661, %v4036, 0
    %v4309 = vsel %vm661, %v4037, 0
    %v4312 = vsel %vm661, %v4038, 0
    %v4315 = vsel %vm661, %v4039, 0
    %v4318 = vsel %vm661, %v4040, 0
    %v4321 = vsel %vm661, %v4041, 0
    %v4324 = vsel %vm661, %v4042, 0
    %v4327 = vsel %vm661, %v4043, 0
    %v4330 = vsel %vm661, %v4044, 0
    %v4333 = vsel %vm661, %v4045, 0
    %v4336 = vsel %vm661, %v4046, 0
    %v4339 = vsel %vm661, %v4047, 0
    %v4342 = vsel %vm661, %v4048, 0
    %v4345 = vsel %vm661, %v4049, 0
    %v4348 = vsel %vm661, %v4050, 0
    %v4351 = vsel %vm661, %v4051, 0
    %v4354 = vsel %vm661, %v4052, 0
    %v4357 = vsel %vm661, %v4053, 0
    %v4360 = vsel %vm661, %v4054, 0
    %v4363 = vsel %vm661, %v4055, 0
    %v4366 = vsel %vm661, %v4056, 0
    %v4369 = vsel %vm661, %v4057, 0
    %v4372 = vsel %vm661, %v4058, 0
    %v4375 = vsel %vm661, %v4059, 0
    %v4378 = vsel %vm661, %v4060, 0
    %v4381 = vsel %vm661, %v4061, 0
    %v4384 = vsel %vm661, %v4062, 0
    %v4387 = vsel %vm661, %v4063, 0
    %v4390 = vsel %vm661, %v4064, 0
    %v4393 = vsel %vm661, %v4065, 0
    %v4396 = vsel %vm661, %v4066, 0
    %v4399 = vsel %vm661, %v4067, 0
    %v4402 = vsel %vm661, %v4068, 0
    %v4405 = vsel %vm661, %v4069, 0
    %v4408 = vsel %vm661, %v4070, 0
    %v4411 = vsel %vm661, %v4071, 0
    %v4414 = vsel %vm661, %v4072, 0
    %v4417 = vsel %vm661, %v4073, 0
    %v4420 = vsel %vm661, %v4074, 0
    %v4423 = vsel %vm661, %v4075, 0
    %v4426 = vsel %vm661, %v4076, 0
    %v4429 = vsel %vm661, %v4077, 0
    %v4432 = vsel %vm661, %v4078, 0
    %v4435 = vsel %vm661, %v4079, 0
    %v4438 = vsel %vm661, %v4080, 0
    %v4441 = vsel %vm661, %v4081, 0
    %v4444 = vsel %vm661, %v4082, 0
    %v4447 = vsel %vm661, %v4083, 0
    %v4450 = vsel %vm661, %v4084, 0
    %v4453 = vsel %vm661, %v4085, 0
    %v4456 = vsel %vm661, %v4086, 0
    %v4459 = vsel %vm661, %v4087, 0
    %v4462 = vsel %vm661, %v4088, 0
    %v4465 = vsel %vm661, %v4089, 0
    %v4468 = vsel %vm661, %v4090, 0
    %v4471 = vsel %vm661, %v4091, 0
    %v4474 = vsel %vm661, %v4092, 0
    %v4477 = vsel %vm661, %v4093, 0
    %v4480 = vsel %vm661, %v4094, 0
    %4482 = vmatprep.subr.bf16.mxu0 0
    %4483 = vmatpush1.bf16.xpose.msra.mxu0 %v4099
    %4484 = vmatprep.subr.bf16.mxu0 0
    %4485 = vmatpush1.bf16.xpose.msra.mxu0 %v4102
    %4486 = vmatprep.subr.bf16.mxu0 0
    %4487 = vmatpush1.bf16.xpose.msra.mxu0 %v4105
    %4488 = vmatprep.subr.bf16.mxu0 0
    %4489 = vmatpush1.bf16.xpose.msra.mxu0 %v4108
    %4490 = vmatprep.subr.bf16.mxu0 0
    %4491 = vmatpush1.bf16.xpose.msra.mxu0 %v4111
    %4492 = vmatprep.subr.bf16.mxu0 0
    %4493 = vmatpush1.bf16.xpose.msra.mxu0 %v4114
    %4494 = vmatprep.subr.bf16.mxu0 0
    %4495 = vmatpush1.bf16.xpose.msra.mxu0 %v4117
    %4496 = vmatprep.subr.bf16.mxu0 0
    %4497 = vmatpush1.bf16.xpose.msra.mxu0 %v4120
    %4498 = vmatprep.subr.bf16.mxu0 0
    %4499 = vmatpush1.bf16.xpose.msra.mxu0 %v4123
    %4500 = vmatprep.subr.bf16.mxu0 0
    %4501 = vmatpush1.bf16.xpose.msra.mxu0 %v4126
    %4502 = vmatprep.subr.bf16.mxu0 0
    %4503 = vmatpush1.bf16.xpose.msra.mxu0 %v4129
    %4504 = vmatprep.subr.bf16.mxu0 0
    %4505 = vmatpush1.bf16.xpose.msra.mxu0 %v4132
    %4506 = vmatprep.subr.bf16.mxu0 0
    %4507 = vmatpush1.bf16.xpose.msra.mxu0 %v4135
    %4508 = vmatprep.subr.bf16.mxu0 0
    %4509 = vmatpush1.bf16.xpose.msra.mxu0 %v4138
    %4510 = vmatprep.subr.bf16.mxu0 0
    %4511 = vmatpush1.bf16.xpose.msra.mxu0 %v4141
    %4512 = vmatprep.subr.bf16.mxu0 0
    %4513 = vmatpush1.bf16.xpose.msra.mxu0 %v4144
    %4514 = vmatprep.mubr.bf16.mxu0 0
    %4515 = vmatmul.mubr.bf16.gmra.mrb[0].mxu0 %v4096
    %v4516 = vpop.f32.mrb[0].mxu0
    %v4517 = vadd.f32 %v3394, %v4516
    %v4518 = vpop.f32.mrb[0].mxu0
    %v4519 = vadd.f32 %v3398, %v4518
    %v4520 = vpop.f32.mrb[0].mxu0
    %v4521 = vadd.f32 %v3394, %v4520
    %v4522 = vpop.f32.mrb[0].mxu0
    %v4523 = vadd.f32 %v3398, %v4522
    %4524 = vdwg.mxu0
    %4525 = vmatprep.subr.bf16.mxu0 0
    %4526 = vmatpush1.bf16.xpose.msra.mxu0 %v4147
    %4527 = vmatprep.subr.bf16.mxu0 0
    %4528 = vmatpush1.bf16.xpose.msra.mxu0 %v4150
    %4529 = vmatprep.subr.bf16.mxu0 0
    %4530 = vmatpush1.bf16.xpose.msra.mxu0 %v4153
    %4531 = vmatprep.subr.bf16.mxu0 0
    %4532 = vmatpush1.bf16.xpose.msra.mxu0 %v4156
    %4533 = vmatprep.subr.bf16.mxu0 0
    %4534 = vmatpush1.bf16.xpose.msra.mxu0 %v4159
    %4535 = vmatprep.subr.bf16.mxu0 0
    %4536 = vmatpush1.bf16.xpose.msra.mxu0 %v4162
    %4537 = vmatprep.subr.bf16.mxu0 0
    %4538 = vmatpush1.bf16.xpose.msra.mxu0 %v4165
    %4539 = vmatprep.subr.bf16.mxu0 0
    %4540 = vmatpush1.bf16.xpose.msra.mxu0 %v4168
    %4541 = vmatprep.subr.bf16.mxu0 0
    %4542 = vmatpush1.bf16.xpose.msra.mxu0 %v4171
    %4543 = vmatprep.subr.bf16.mxu0 0
    %4544 = vmatpush1.bf16.xpose.msra.mxu0 %v4174
    %4545 = vmatprep.subr.bf16.mxu0 0
    %4546 = vmatpush1.bf16.xpose.msra.mxu0 %v4177
    %4547 = vmatprep.subr.bf16.mxu0 0
    %4548 = vmatpush1.bf16.xpose.msra.mxu0 %v4180
    %4549 = vmatprep.subr.bf16.mxu0 0
    %4550 = vmatpush1.bf16.xpose.msra.mxu0 %v4183
    %4551 = vmatprep.subr.bf16.mxu0 0
    %4552 = vmatpush1.bf16.xpose.msra.mxu0 %v4186
    %4553 = vmatprep.subr.bf16.mxu0 0
    %4554 = vmatpush1.bf16.xpose.msra.mxu0 %v4189
    %4555 = vmatprep.subr.bf16.mxu0 0
    %4556 = vmatpush1.bf16.xpose.msra.mxu0 %v4192
    %4557 = vmatprep.mubr.bf16.mxu0 0
    %4558 = vmatmul.mubr.bf16.gmra.mrb[0].mxu0 %v4096
    %v4559 = vpop.f32.mrb[0].mxu0
    %v4560 = vadd.f32 %v3402, %v4559
    %v4561 = vpop.f32.mrb[0].mxu0
    %v4562 = vadd.f32 %v3406, %v4561
    %v4563 = vpop.f32.mrb[0].mxu0
    %v4564 = vadd.f32 %v3402, %v4563
    %v4565 = vpop.f32.mrb[0].mxu0
    %v4566 = vadd.f32 %v3406, %v4565
    %4567 = vdwg.mxu0
    %4568 = vmatprep.subr.bf16.mxu0 0
    %4569 = vmatpush1.bf16.xpose.msra.mxu0 %v4195
    %4570 = vmatprep.subr.bf16.mxu0 0
    %4571 = vmatpush1.bf16.xpose.msra.mxu0 %v4198
    %4572 = vmatprep.subr.bf16.mxu0 0
    %4573 = vmatpush1.bf16.xpose.msra.mxu0 %v4201
    %4574 = vmatprep.subr.bf16.mxu0 0
    %4575 = vmatpush1.bf16.xpose.msra.mxu0 %v4204
    %4576 = vmatprep.subr.bf16.mxu0 0
    %4577 = vmatpush1.bf16.xpose.msra.mxu0 %v4207
    %4578 = vmatprep.subr.bf16.mxu0 0
    %4579 = vmatpush1.bf16.xpose.msra.mxu0 %v4210
    %4580 = vmatprep.subr.bf16.mxu0 0
    %4581 = vmatpush1.bf16.xpose.msra.mxu0 %v4213
    %4582 = vmatprep.subr.bf16.mxu0 0
    %4583 = vmatpush1.bf16.xpose.msra.mxu0 %v4216
    %4584 = vmatprep.subr.bf16.mxu0 0
    %4585 = vmatpush1.bf16.xpose.msra.mxu0 %v4219
    %4586 = vmatprep.subr.bf16.mxu0 0
    %4587 = vmatpush1.bf16.xpose.msra.mxu0 %v4222
    %4588 = vmatprep.subr.bf16.mxu0 0
    %4589 = vmatpush1.bf16.xpose.msra.mxu0 %v4225
    %4590 = vmatprep.subr.bf16.mxu0 0
    %4591 = vmatpush1.bf16.xpose.msra.mxu0 %v4228
    %4592 = vmatprep.subr.bf16.mxu0 0
    %4593 = vmatpush1.bf16.xpose.msra.mxu0 %v4231
    %4594 = vmatprep.subr.bf16.mxu0 0
    %4595 = vmatpush1.bf16.xpose.msra.mxu0 %v4234
    %4596 = vmatprep.subr.bf16.mxu0 0
    %4597 = vmatpush1.bf16.xpose.msra.mxu0 %v4237
    %4598 = vmatprep.subr.bf16.mxu0 0
    %4599 = vmatpush1.bf16.xpose.msra.mxu0 %v4240
    %4600 = vmatprep.mubr.bf16.mxu0 0
    %4601 = vmatmul.mubr.bf16.gmra.mrb[0].mxu0 %v4096
    %v4602 = vpop.f32.mrb[0].mxu0
    %v4603 = vadd.f32 %v3410, %v4602
    %v4604 = vpop.f32.mrb[0].mxu0
    %v4605 = vadd.f32 %v3414, %v4604
    %v4606 = vpop.f32.mrb[0].mxu0
    %v4607 = vadd.f32 %v3410, %v4606
    %v4608 = vpop.f32.mrb[0].mxu0
    %v4609 = vadd.f32 %v3414, %v4608
    %4610 = vdwg.mxu0
    %4611 = vmatprep.subr.bf16.mxu0 0
    %4612 = vmatpush1.bf16.xpose.msra.mxu0 %v4243
    %4613 = vmatprep.subr.bf16.mxu0 0
    %4614 = vmatpush1.bf16.xpose.msra.mxu0 %v4246
    %4615 = vmatprep.subr.bf16.mxu0 0
    %4616 = vmatpush1.bf16.xpose.msra.mxu0 %v4249
    %4617 = vmatprep.subr.bf16.mxu0 0
    %4618 = vmatpush1.bf16.xpose.msra.mxu0 %v4252
    %4619 = vmatprep.subr.bf16.mxu0 0
    %4620 = vmatpush1.bf16.xpose.msra.mxu0 %v4255
    %4621 = vmatprep.subr.bf16.mxu0 0
    %4622 = vmatpush1.bf16.xpose.msra.mxu0 %v4258
    %4623 = vmatprep.subr.bf16.mxu0 0
    %4624 = vmatpush1.bf16.xpose.msra.mxu0 %v4261
    %4625 = vmatprep.subr.bf16.mxu0 0
    %4626 = vmatpush1.bf16.xpose.msra.mxu0 %v4264
    %4627 = vmatprep.subr.bf16.mxu0 0
    %4628 = vmatpush1.bf16.xpose.msra.mxu0 %v4267
    %4629 = vmatprep.subr.bf16.mxu0 0
    %4630 = vmatpush1.bf16.xpose.msra.mxu0 %v4270
    %4631 = vmatprep.subr.bf16.mxu0 0
    %4632 = vmatpush1.bf16.xpose.msra.mxu0 %v4273
    %4633 = vmatprep.subr.bf16.mxu0 0
    %4634 = vmatpush1.bf16.xpose.msra.mxu0 %v4276
    %4635 = vmatprep.subr.bf16.mxu0 0
    %4636 = vmatpush1.bf16.xpose.msra.mxu0 %v4279
    %4637 = vmatprep.subr.bf16.mxu0 0
    %4638 = vmatpush1.bf16.xpose.msra.mxu0 %v4282
    %4639 = vmatprep.subr.bf16.mxu0 0
    %4640 = vmatpush1.bf16.xpose.msra.mxu0 %v4285
    %4641 = vmatprep.subr.bf16.mxu0 0
    %4642 = vmatpush1.bf16.xpose.msra.mxu0 %v4288
    %4643 = vmatprep.mubr.bf16.mxu0 0
    %4644 = vmatmul.mubr.bf16.gmra.mrb[0].mxu0 %v4096
    %v4645 = vpop.f32.mrb[0].mxu0
    %v4646 = vadd.f32 %v3418, %v4645
    %v4647 = vpop.f32.mrb[0].mxu0
    %v4648 = vadd.f32 %v3422, %v4647
    %v4649 = vpop.f32.mrb[0].mxu0
    %v4650 = vadd.f32 %v3418, %v4649
    %v4651 = vpop.f32.mrb[0].mxu0
    %v4652 = vadd.f32 %v3422, %v4651
    %4653 = vdwg.mxu0
    %4654 = vmatprep.subr.bf16.mxu0 0
    %4655 = vmatpush1.bf16.xpose.msra.mxu0 %v4291
    %4656 = vmatprep.subr.bf16.mxu0 0
    %4657 = vmatpush1.bf16.xpose.msra.mxu0 %v4294
    %4658 = vmatprep.subr.bf16.mxu0 0
    %4659 = vmatpush1.bf16.xpose.msra.mxu0 %v4297
    %4660 = vmatprep.subr.bf16.mxu0 0
    %4661 = vmatpush1.bf16.xpose.msra.mxu0 %v4300
    %4662 = vmatprep.subr.bf16.mxu0 0
    %4663 = vmatpush1.bf16.xpose.msra.mxu0 %v4303
    %4664 = vmatprep.subr.bf16.mxu0 0
    %4665 = vmatpush1.bf16.xpose.msra.mxu0 %v4306
    %4666 = vmatprep.subr.bf16.mxu0 0
    %4667 = vmatpush1.bf16.xpose.msra.mxu0 %v4309
    %4668 = vmatprep.subr.bf16.mxu0 0
    %4669 = vmatpush1.bf16.xpose.msra.mxu0 %v4312
    %4670 = vmatprep.subr.bf16.mxu0 0
    %4671 = vmatpush1.bf16.xpose.msra.mxu0 %v4315
    %4672 = vmatprep.subr.bf16.mxu0 0
    %4673 = vmatpush1.bf16.xpose.msra.mxu0 %v4318
    %4674 = vmatprep.subr.bf16.mxu0 0
    %4675 = vmatpush1.bf16.xpose.msra.mxu0 %v4321
    %4676 = vmatprep.subr.bf16.mxu0 0
    %4677 = vmatpush1.bf16.xpose.msra.mxu0 %v4324
    %4678 = vmatprep.subr.bf16.mxu0 0
    %4679 = vmatpush1.bf16.xpose.msra.mxu0 %v4327
    %4680 = vmatprep.subr.bf16.mxu0 0
    %4681 = vmatpush1.bf16.xpose.msra.mxu0 %v4330
    %4682 = vmatprep.subr.bf16.mxu0 0
    %4683 = vmatpush1.bf16.xpose.msra.mxu0 %v4333
    %4684 = vmatprep.subr.bf16.mxu0 0
    %4685 = vmatpush1.bf16.xpose.msra.mxu0 %v4336
    %4686 = vmatprep.mubr.bf16.mxu0 0
    %4687 = vmatmul.mubr.bf16.gmra.mrb[0].mxu0 %v4096
    %v4688 = vpop.f32.mrb[0].mxu0
    %v4689 = vadd.f32 %v3426, %v4688
    %v4690 = vpop.f32.mrb[0].mxu0
    %v4691 = vadd.f32 %v3430, %v4690
    %v4692 = vpop.f32.mrb[0].mxu0
    %v4693 = vadd.f32 %v3426, %v4692
    %v4694 = vpop.f32.mrb[0].mxu0
    %v4695 = vadd.f32 %v3430, %v4694
    %4696 = vdwg.mxu0
    %4697 = vmatprep.subr.bf16.mxu0 0
    %4698 = vmatpush1.bf16.xpose.msra.mxu0 %v4339
    %4699 = vmatprep.subr.bf16.mxu0 0
    %4700 = vmatpush1.bf16.xpose.msra.mxu0 %v4342
    %4701 = vmatprep.subr.bf16.mxu0 0
    %4702 = vmatpush1.bf16.xpose.msra.mxu0 %v4345
    %4703 = vmatprep.subr.bf16.mxu0 0
    %4704 = vmatpush1.bf16.xpose.msra.mxu0 %v4348
    %4705 = vmatprep.subr.bf16.mxu0 0
    %4706 = vmatpush1.bf16.xpose.msra.mxu0 %v4351
    %4707 = vmatprep.subr.bf16.mxu0 0
    %4708 = vmatpush1.bf16.xpose.msra.mxu0 %v4354
    %4709 = vmatprep.subr.bf16.mxu0 0
    %4710 = vmatpush1.bf16.xpose.msra.mxu0 %v4357
    %4711 = vmatprep.subr.bf16.mxu0 0
    %4712 = vmatpush1.bf16.xpose.msra.mxu0 %v4360
    %4713 = vmatprep.subr.bf16.mxu0 0
    %4714 = vmatpush1.bf16.xpose.msra.mxu0 %v4363
    %4715 = vmatprep.subr.bf16.mxu0 0
    %4716 = vmatpush1.bf16.xpose.msra.mxu0 %v4366
    %4717 = vmatprep.subr.bf16.mxu0 0
    %4718 = vmatpush1.bf16.xpose.msra.mxu0 %v4369
    %4719 = vmatprep.subr.bf16.mxu0 0
    %4720 = vmatpush1.bf16.xpose.msra.mxu0 %v4372
    %4721 = vmatprep.subr.bf16.mxu0 0
    %4722 = vmatpush1.bf16.xpose.msra.mxu0 %v4375
    %4723 = vmatprep.subr.bf16.mxu0 0
    %4724 = vmatpush1.bf16.xpose.msra.mxu0 %v4378
    %4725 = vmatprep.subr.bf16.mxu0 0
    %4726 = vmatpush1.bf16.xpose.msra.mxu0 %v4381
    %4727 = vmatprep.subr.bf16.mxu0 0
    %4728 = vmatpush1.bf16.xpose.msra.mxu0 %v4384
    %4729 = vmatprep.mubr.bf16.mxu0 0
    %4730 = vmatmul.mubr.bf16.gmra.mrb[0].mxu0 %v4096
    %v4731 = vpop.f32.mrb[0].mxu0
    %v4732 = vadd.f32 %v3434, %v4731
    %v4733 = vpop.f32.mrb[0].mxu0
    %v4734 = vadd.f32 %v3438, %v4733
    %v4735 = vpop.f32.mrb[0].mxu0
    %v4736 = vadd.f32 %v3434, %v4735
    %v4737 = vpop.f32.mrb[0].mxu0
    %v4738 = vadd.f32 %v3438, %v4737
    %4739 = vdwg.mxu0
    %4740 = vmatprep.subr.bf16.mxu0 0
    %4741 = vmatpush1.bf16.xpose.msra.mxu0 %v4387
    %4742 = vmatprep.subr.bf16.mxu0 0
    %4743 = vmatpush1.bf16.xpose.msra.mxu0 %v4390
    %4744 = vmatprep.subr.bf16.mxu0 0
    %4745 = vmatpush1.bf16.xpose.msra.mxu0 %v4393
    %4746 = vmatprep.subr.bf16.mxu0 0
    %4747 = vmatpush1.bf16.xpose.msra.mxu0 %v4396
    %4748 = vmatprep.subr.bf16.mxu0 0
    %4749 = vmatpush1.bf16.xpose.msra.mxu0 %v4399
    %4750 = vmatprep.subr.bf16.mxu0 0
    %4751 = vmatpush1.bf16.xpose.msra.mxu0 %v4402
    %4752 = vmatprep.subr.bf16.mxu0 0
    %4753 = vmatpush1.bf16.xpose.msra.mxu0 %v4405
    %4754 = vmatprep.subr.bf16.mxu0 0
    %4755 = vmatpush1.bf16.xpose.msra.mxu0 %v4408
    %4756 = vmatprep.subr.bf16.mxu0 0
    %4757 = vmatpush1.bf16.xpose.msra.mxu0 %v4411
    %4758 = vmatprep.subr.bf16.mxu0 0
    %4759 = vmatpush1.bf16.xpose.msra.mxu0 %v4414
    %4760 = vmatprep.subr.bf16.mxu0 0
    %4761 = vmatpush1.bf16.xpose.msra.mxu0 %v4417
    %4762 = vmatprep.subr.bf16.mxu0 0
    %4763 = vmatpush1.bf16.xpose.msra.mxu0 %v4420
    %4764 = vmatprep.subr.bf16.mxu0 0
    %4765 = vmatpush1.bf16.xpose.msra.mxu0 %v4423
    %4766 = vmatprep.subr.bf16.mxu0 0
    %4767 = vmatpush1.bf16.xpose.msra.mxu0 %v4426
    %4768 = vmatprep.subr.bf16.mxu0 0
    %4769 = vmatpush1.bf16.xpose.msra.mxu0 %v4429
    %4770 = vmatprep.subr.bf16.mxu0 0
    %4771 = vmatpush1.bf16.xpose.msra.mxu0 %v4432
    %4772 = vmatprep.mubr.bf16.mxu0 0
    %4773 = vmatmul.mubr.bf16.gmra.mrb[0].mxu0 %v4096
    %v4774 = vpop.f32.mrb[0].mxu0
    %v4775 = vadd.f32 %v3442, %v4774
    %v4776 = vpop.f32.mrb[0].mxu0
    %v4777 = vadd.f32 %v3446, %v4776
    %v4778 = vpop.f32.mrb[0].mxu0
    %v4779 = vadd.f32 %v3442, %v4778
    %v4780 = vpop.f32.mrb[0].mxu0
    %v4781 = vadd.f32 %v3446, %v4780
    %4782 = vdwg.mxu0
    %4783 = vmatprep.subr.bf16.mxu0 0
    %4784 = vmatpush1.bf16.xpose.msra.mxu0 %v4435
    %4785 = vmatprep.subr.bf16.mxu0 0
    %4786 = vmatpush1.bf16.xpose.msra.mxu0 %v4438
    %4787 = vmatprep.subr.bf16.mxu0 0
    %4788 = vmatpush1.bf16.xpose.msra.mxu0 %v4441
    %4789 = vmatprep.subr.bf16.mxu0 0
    %4790 = vmatpush1.bf16.xpose.msra.mxu0 %v4444
    %4791 = vmatprep.subr.bf16.mxu0 0
    %4792 = vmatpush1.bf16.xpose.msra.mxu0 %v4447
    %4793 = vmatprep.subr.bf16.mxu0 0
    %4794 = vmatpush1.bf16.xpose.msra.mxu0 %v4450
    %4795 = vmatprep.subr.bf16.mxu0 0
    %4796 = vmatpush1.bf16.xpose.msra.mxu0 %v4453
    %4797 = vmatprep.subr.bf16.mxu0 0
    %4798 = vmatpush1.bf16.xpose.msra.mxu0 %v4456
    %4799 = vmatprep.subr.bf16.mxu0 0
    %4800 = vmatpush1.bf16.xpose.msra.mxu0 %v4459
    %4801 = vmatprep.subr.bf16.mxu0 0
    %4802 = vmatpush1.bf16.xpose.msra.mxu0 %v4462
    %4803 = vmatprep.subr.bf16.mxu0 0
    %4804 = vmatpush1.bf16.xpose.msra.mxu0 %v4465
    %4805 = vmatprep.subr.bf16.mxu0 0
    %4806 = vmatpush1.bf16.xpose.msra.mxu0 %v4468
    %4807 = vmatprep.subr.bf16.mxu0 0
    %4808 = vmatpush1.bf16.xpose.msra.mxu0 %v4471
    %4809 = vmatprep.subr.bf16.mxu0 0
    %4810 = vmatpush1.bf16.xpose.msra.mxu0 %v4474
    %4811 = vmatprep.subr.bf16.mxu0 0
    %4812 = vmatpush1.bf16.xpose.msra.mxu0 %v4477
    %4813 = vmatprep.subr.bf16.mxu0 0
    %4814 = vmatpush1.bf16.xpose.msra.mxu0 %v4480
    %4815 = vmatprep.mubr.bf16.mxu0 0
    %4816 = vmatmul.mubr.bf16.gmra.mrb[0].mxu0 %v4096
    %v4817 = vpop.f32.mrb[0].mxu0
    %v4818 = vadd.f32 %v3450, %v4817
    %v4819 = vpop.f32.mrb[0].mxu0
    %v4820 = vadd.f32 %v3454, %v4819
    %v4821 = vpop.f32.mrb[0].mxu0
    %v4822 = vadd.f32 %v3450, %v4821
    %v4823 = vpop.f32.mrb[0].mxu0
    %v4824 = vadd.f32 %v3454, %v4823
    %4825 = vdwg.mxu0
    %v4826 = vmax.f32 %v4517, 0.0
    %v4827 = vmax.f32 %v4519, 0.0
    %v4828 = vmax.f32 %v4560, 0.0
    %v4829 = vmax.f32 %v4562, 0.0
    %v4830 = vmax.f32 %v4603, 0.0
    %v4831 = vmax.f32 %v4605, 0.0
    %v4832 = vmax.f32 %v4646, 0.0
    %v4833 = vmax.f32 %v4648, 0.0
    %v4834 = vmax.f32 %v4689, 0.0
    %v4835 = vmax.f32 %v4691, 0.0
    %v4836 = vmax.f32 %v4732, 0.0
    %v4837 = vmax.f32 %v4734, 0.0
    %v4838 = vmax.f32 %v4775, 0.0
    %v4839 = vmax.f32 %v4777, 0.0
    %v4840 = vmax.f32 %v4818, 0.0
    %v4841 = vmax.f32 %v4820, 0.0
    %v4842 = vmax.f32 %v4521, 0.0
    %v4843 = vmax.f32 %v4523, 0.0
    %v4844 = vmax.f32 %v4564, 0.0
    %v4845 = vmax.f32 %v4566, 0.0
    %v4846 = vmax.f32 %v4607, 0.0
    %v4847 = vmax.f32 %v4609, 0.0
    %v4848 = vmax.f32 %v4650, 0.0
    %v4849 = vmax.f32 %v4652, 0.0
    %v4850 = vmax.f32 %v4693, 0.0
    %v4851 = vmax.f32 %v4695, 0.0
    %v4852 = vmax.f32 %v4736, 0.0
    %v4853 = vmax.f32 %v4738, 0.0
    %v4854 = vmax.f32 %v4779, 0.0
    %v4855 = vmax.f32 %v4781, 0.0
    %v4856 = vmax.f32 %v4822, 0.0
    %v4857 = vmax.f32 %v4824, 0.0
    %v4858 = vpack.c.bf16 %v4842, %v4826
    %v4859 = vpack.c.bf16 %v4843, %v4827
    %v4860 = vpack.c.bf16 %v4844, %v4828
    %v4861 = vpack.c.bf16 %v4845, %v4829
    %v4862 = vpack.c.bf16 %v4846, %v4830
    %v4863 = vpack.c.bf16 %v4847, %v4831
    %v4864 = vpack.c.bf16 %v4848, %v4832
    %v4865 = vpack.c.bf16 %v4849, %v4833
    %v4866 = vpack.c.bf16 %v4850, %v4834
    %v4867 = vpack.c.bf16 %v4851, %v4835
    %v4868 = vpack.c.bf16 %v4852, %v4836
    %v4869 = vpack.c.bf16 %v4853, %v4837
    %v4870 = vpack.c.bf16 %v4854, %v4838
    %v4871 = vpack.c.bf16 %v4855, %v4839
    %v4872 = vpack.c.bf16 %v4856, %v4840
    %v4873 = vpack.c.bf16 %v4857, %v4841
    %v4874 = vlaneseq
    %v4875 = vshrl.u32 %v4874, 7
    %v4876 = vsub.s32 4, %v4875
    %v4877 = vrot.slane %v646, %v4876
    %v4910 = vunpack.c.l.b16 %v578
    %v4911 = vunpack.c.h.b16 %v578
    %v4912 = vunpack.c.l.b16 %v579
    %v4913 = vunpack.c.h.b16 %v579
    %v4914 = vunpack.c.l.b16 %v580
    %v4915 = vunpack.c.h.b16 %v580
    %v4916 = vunpack.c.l.b16 %v581
    %v4917 = vunpack.c.h.b16 %v581
    %v4918 = vunpack.c.l.b16 %v582
    %v4919 = vunpack.c.h.b16 %v582
    %v4920 = vunpack.c.l.b16 %v583
    %v4921 = vunpack.c.h.b16 %v583
    %v4922 = vunpack.c.l.b16 %v584
    %v4923 = vunpack.c.h.b16 %v584
    %v4924 = vunpack.c.l.b16 %v585
    %v4925 = vunpack.c.h.b16 %v585
    %v4926 = vunpack.c.l.b16 %v586
    %v4927 = vunpack.c.h.b16 %v586
    %v4928 = vunpack.c.l.b16 %v587
    %v4929 = vunpack.c.h.b16 %v587
    %v4930 = vunpack.c.l.b16 %v588
    %v4931 = vunpack.c.h.b16 %v588
    %v4932 = vunpack.c.l.b16 %v589
    %v4933 = vunpack.c.h.b16 %v589
    %v4934 = vunpack.c.l.b16 %v590
    %v4935 = vunpack.c.h.b16 %v590
    %v4936 = vunpack.c.l.b16 %v591
    %v4937 = vunpack.c.h.b16 %v591
    %v4938 = vunpack.c.l.b16 %v592
    %v4939 = vunpack.c.h.b16 %v592
    %v4940 = vunpack.c.l.b16 %v593
    %v4941 = vunpack.c.h.b16 %v593
    %v4942 = vunpack.c.l.b16 %v594
    %v4943 = vunpack.c.h.b16 %v594
    %v4944 = vunpack.c.l.b16 %v595
    %v4945 = vunpack.c.h.b16 %v595
    %v4946 = vunpack.c.l.b16 %v596
    %v4947 = vunpack.c.h.b16 %v596
    %v4948 = vunpack.c.l.b16 %v597
    %v4949 = vunpack.c.h.b16 %v597
    %v4950 = vunpack.c.l.b16 %v598
    %v4951 = vunpack.c.h.b16 %v598
    %v4952 = vunpack.c.l.b16 %v599
    %v4953 = vunpack.c.h.b16 %v599
    %v4954 = vunpack.c.l.b16 %v600
    %v4955 = vunpack.c.h.b16 %v600
    %v4956 = vunpack.c.l.b16 %v601
    %v4957 = vunpack.c.h.b16 %v601
    %v4958 = vunpack.c.l.b16 %v602
    %v4959 = vunpack.c.h.b16 %v602
    %v4960 = vunpack.c.l.b16 %v603
    %v4961 = vunpack.c.h.b16 %v603
    %v4962 = vunpack.c.l.b16 %v604
    %v4963 = vunpack.c.h.b16 %v604
    %v4964 = vunpack.c.l.b16 %v605
    %v4965 = vunpack.c.h.b16 %v605
    %v4966 = vunpack.c.l.b16 %v606
    %v4967 = vunpack.c.h.b16 %v606
    %v4968 = vunpack.c.l.b16 %v607
    %v4969 = vunpack.c.h.b16 %v607
    %v4970 = vunpack.c.l.b16 %v608
    %v4971 = vunpack.c.h.b16 %v608
    %v4972 = vunpack.c.l.b16 %v609
    %v4973 = vunpack.c.h.b16 %v609
    %v4974 = vpack.c.b16 %v4926, %v4910
    %v4975 = vpack.c.b16 %v4927, %v4911
    %v4976 = vpack.c.b16 %v4928, %v4912
    %v4977 = vpack.c.b16 %v4929, %v4913
    %v4978 = vpack.c.b16 %v4930, %v4914
    %v4979 = vpack.c.b16 %v4931, %v4915
    %v4980 = vpack.c.b16 %v4932, %v4916
    %v4981 = vpack.c.b16 %v4933, %v4917
    %v4982 = vpack.c.b16 %v4934, %v4918
    %v4983 = vpack.c.b16 %v4935, %v4919
    %v4984 = vpack.c.b16 %v4936, %v4920
    %v4985 = vpack.c.b16 %v4937, %v4921
    %v4986 = vpack.c.b16 %v4938, %v4922
    %v4987 = vpack.c.b16 %v4939, %v4923
    %v4988 = vpack.c.b16 %v4940, %v4924
    %v4989 = vpack.c.b16 %v4941, %v4925
    %v4990 = vpack.c.b16 %v4958, %v4942
    %v4991 = vpack.c.b16 %v4959, %v4943
    %v4992 = vpack.c.b16 %v4960, %v4944
    %v4993 = vpack.c.b16 %v4961, %v4945
    %v4994 = vpack.c.b16 %v4962, %v4946
    %v4995 = vpack.c.b16 %v4963, %v4947
    %v4996 = vpack.c.b16 %v4964, %v4948
    %v4997 = vpack.c.b16 %v4965, %v4949
    %v4998 = vpack.c.b16 %v4966, %v4950
    %v4999 = vpack.c.b16 %v4967, %v4951
    %v5000 = vpack.c.b16 %v4968, %v4952
    %v5001 = vpack.c.b16 %v4969, %v4953
    %v5002 = vpack.c.b16 %v4970, %v4954
    %v5003 = vpack.c.b16 %v4971, %v4955
    %v5004 = vpack.c.b16 %v4972, %v4956
    %v5005 = vpack.c.b16 %v4973, %v4957
    %5038 = vmatprep.subr.bf16.mxu0 %v4975
    %5039 = vmatpush1.bf16.xpose.msra.mxu0 %v4974
    %5040 = vmatprep.subr.bf16.mxu0 %v4991
    %5041 = vmatpush1.bf16.xpose.msra.mxu0 %v4990
    %5042 = vmatprep.subr.bf16.mxu0 0
    %5043 = vmatpush1.bf16.xpose.msra.mxu0 0
    %5044 = vmatprep.subr.bf16.mxu0 0
    %5045 = vmatpush1.bf16.xpose.msra.mxu0 0
    %5046 = vmatprep.subr.bf16.mxu0 0
    %5047 = vmatpush1.bf16.xpose.msra.mxu0 0
    %5048 = vmatprep.subr.bf16.mxu0 0
    %5049 = vmatpush1.bf16.xpose.msra.mxu0 0
    %5050 = vmatprep.subr.bf16.mxu0 0
    %5051 = vmatpush1.bf16.xpose.msra.mxu0 0
    %5052 = vmatprep.subr.bf16.mxu0 0
    %5053 = vmatpush1.bf16.xpose.msra.mxu0 0
    %5054 = vmatprep.subr.bf16.mxu0 0
    %5055 = vmatpush1.bf16.xpose.msra.mxu0 0
    %5056 = vmatprep.subr.bf16.mxu0 0
    %5057 = vmatpush1.bf16.xpose.msra.mxu0 0
    %5058 = vmatprep.subr.bf16.mxu0 0
    %5059 = vmatpush1.bf16.xpose.msra.mxu0 0
    %5060 = vmatprep.subr.bf16.mxu0 0
    %5061 = vmatpush1.bf16.xpose.msra.mxu0 0
    %5062 = vmatprep.subr.bf16.mxu0 0
    %5063 = vmatpush1.bf16.xpose.msra.mxu0 0
    %5064 = vmatprep.subr.bf16.mxu0 0
    %5065 = vmatpush1.bf16.xpose.msra.mxu0 0
    %5066 = vmatprep.subr.bf16.mxu0 0
    %5067 = vmatpush1.bf16.xpose.msra.mxu0 0
    %5068 = vmatprep.subr.bf16.mxu0 0
    %5069 = vmatpush1.bf16.xpose.msra.mxu0 0
    %5070 = vmatprep.mubr.bf16.mxu0 %v4859
    %5071 = vmatmul.mubr.bf16.gmra.mrb[0].mxu0 %v4858
    %v5072 = vpop.f32.mrb[0].mxu0
    %v5073 = vadd.f32 %v4877, %v5072
    %v5074 = vpop.f32.mrb[0].mxu0
    %v5075 = vpop.f32.mrb[0].mxu0
    %v5076 = vadd.f32 %v4877, %v5075
    %v5077 = vpop.f32.mrb[0].mxu0
    %5078 = vdwg.mxu0
    %5079 = vmatprep.subr.bf16.mxu0 %v4977
    %5080 = vmatpush1.bf16.xpose.msra.mxu0 %v4976
    %5081 = vmatprep.subr.bf16.mxu0 %v4993
    %5082 = vmatpush1.bf16.xpose.msra.mxu0 %v4992
    %5083 = vmatprep.subr.bf16.mxu0 0
    %5084 = vmatpush1.bf16.xpose.msra.mxu0 0
    %5085 = vmatprep.subr.bf16.mxu0 0
    %5086 = vmatpush1.bf16.xpose.msra.mxu0 0
    %5087 = vmatprep.subr.bf16.mxu0 0
    %5088 = vmatpush1.bf16.xpose.msra.mxu0 0
    %5089 = vmatprep.subr.bf16.mxu0 0
    %5090 = vmatpush1.bf16.xpose.msra.mxu0 0
    %5091 = vmatprep.subr.bf16.mxu0 0
    %5092 = vmatpush1.bf16.xpose.msra.mxu0 0
    %5093 = vmatprep.subr.bf16.mxu0 0
    %5094 = vmatpush1.bf16.xpose.msra.mxu0 0
    %5095 = vmatprep.subr.bf16.mxu0 0
    %5096 = vmatpush1.bf16.xpose.msra.mxu0 0
    %5097 = vmatprep.subr.bf16.mxu0 0
    %5098 = vmatpush1.bf16.xpose.msra.mxu0 0
    %5099 = vmatprep.subr.bf16.mxu0 0
    %5100 = vmatpush1.bf16.xpose.msra.mxu0 0
    %5101 = vmatprep.subr.bf16.mxu0 0
    %5102 = vmatpush1.bf16.xpose.msra.mxu0 0
    %5103 = vmatprep.subr.bf16.mxu0 0
    %5104 = vmatpush1.bf16.xpose.msra.mxu0 0
    %5105 = vmatprep.subr.bf16.mxu0 0
    %5106 = vmatpush1.bf16.xpose.msra.mxu0 0
    %5107 = vmatprep.subr.bf16.mxu0 0
    %5108 = vmatpush1.bf16.xpose.msra.mxu0 0
    %5109 = vmatprep.subr.bf16.mxu0 0
    %5110 = vmatpush1.bf16.xpose.msra.mxu0 0
    %5111 = vmatprep.mubr.bf16.mxu0 %v4861
    %5112 = vmatmul.mubr.bf16.gmra.mrb[0].mxu0 %v4860
    %v5113 = vpop.f32.mrb[0].mxu0
    %v5114 = vadd.f32 %v5073, %v5113
    %v5115 = vpop.f32.mrb[0].mxu0
    %v5116 = vpop.f32.mrb[0].mxu0
    %v5117 = vadd.f32 %v5076, %v5116
    %v5118 = vpop.f32.mrb[0].mxu0
    %5119 = vdwg.mxu0
    %5120 = vmatprep.subr.bf16.mxu0 %v4979
    %5121 = vmatpush1.bf16.xpose.msra.mxu0 %v4978
    %5122 = vmatprep.subr.bf16.mxu0 %v4995
    %5123 = vmatpush1.bf16.xpose.msra.mxu0 %v4994
    %5124 = vmatprep.subr.bf16.mxu0 0
    %5125 = vmatpush1.bf16.xpose.msra.mxu0 0
    %5126 = vmatprep.subr.bf16.mxu0 0
    %5127 = vmatpush1.bf16.xpose.msra.mxu0 0
    %5128 = vmatprep.subr.bf16.mxu0 0
    %5129 = vmatpush1.bf16.xpose.msra.mxu0 0
    %5130 = vmatprep.subr.bf16.mxu0 0
    %5131 = vmatpush1.bf16.xpose.msra.mxu0 0
    %5132 = vmatprep.subr.bf16.mxu0 0
    %5133 = vmatpush1.bf16.xpose.msra.mxu0 0
    %5134 = vmatprep.subr.bf16.mxu0 0
    %5135 = vmatpush1.bf16.xpose.msra.mxu0 0
    %5136 = vmatprep.subr.bf16.mxu0 0
    %5137 = vmatpush1.bf16.xpose.msra.mxu0 0
    %5138 = vmatprep.subr.bf16.mxu0 0
    %5139 = vmatpush1.bf16.xpose.msra.mxu0 0
    %5140 = vmatprep.subr.bf16.mxu0 0
    %5141 = vmatpush1.bf16.xpose.msra.mxu0 0
    %5142 = vmatprep.subr.bf16.mxu0 0
    %5143 = vmatpush1.bf16.xpose.msra.mxu0 0
    %5144 = vmatprep.subr.bf16.mxu0 0
    %5145 = vmatpush1.bf16.xpose.msra.mxu0 0
    %5146 = vmatprep.subr.bf16.mxu0 0
    %5147 = vmatpush1.bf16.xpose.msra.mxu0 0
    %5148 = vmatprep.subr.bf16.mxu0 0
    %5149 = vmatpush1.bf16.xpose.msra.mxu0 0
    %5150 = vmatprep.subr.bf16.mxu0 0
    %5151 = vmatpush1.bf16.xpose.msra.mxu0 0
    %5152 = vmatprep.mubr.bf16.mxu0 %v4863
    %5153 = vmatmul.mubr.bf16.gmra.mrb[0].mxu0 %v4862
    %v5154 = vpop.f32.mrb[0].mxu0
    %v5155 = vadd.f32 %v5114, %v5154
    %v5156 = vpop.f32.mrb[0].mxu0
    %v5157 = vpop.f32.mrb[0].mxu0
    %v5158 = vadd.f32 %v5117, %v5157
    %v5159 = vpop.f32.mrb[0].mxu0
    %5160 = vdwg.mxu0
    %5161 = vmatprep.subr.bf16.mxu0 %v4981
    %5162 = vmatpush1.bf16.xpose.msra.mxu0 %v4980
    %5163 = vmatprep.subr.bf16.mxu0 %v4997
    %5164 = vmatpush1.bf16.xpose.msra.mxu0 %v4996
    %5165 = vmatprep.subr.bf16.mxu0 0
    %5166 = vmatpush1.bf16.xpose.msra.mxu0 0
    %5167 = vmatprep.subr.bf16.mxu0 0
    %5168 = vmatpush1.bf16.xpose.msra.mxu0 0
    %5169 = vmatprep.subr.bf16.mxu0 0
    %5170 = vmatpush1.bf16.xpose.msra.mxu0 0
    %5171 = vmatprep.subr.bf16.mxu0 0
    %5172 = vmatpush1.bf16.xpose.msra.mxu0 0
    %5173 = vmatprep.subr.bf16.mxu0 0
    %5174 = vmatpush1.bf16.xpose.msra.mxu0 0
    %5175 = vmatprep.subr.bf16.mxu0 0
    %5176 = vmatpush1.bf16.xpose.msra.mxu0 0
    %5177 = vmatprep.subr.bf16.mxu0 0
    %5178 = vmatpush1.bf16.xpose.msra.mxu0 0
    %5179 = vmatprep.subr.bf16.mxu0 0
    %5180 = vmatpush1.bf16.xpose.msra.mxu0 0
    %5181 = vmatprep.subr.bf16.mxu0 0
    %5182 = vmatpush1.bf16.xpose.msra.mxu0 0
    %5183 = vmatprep.subr.bf16.mxu0 0
    %5184 = vmatpush1.bf16.xpose.msra.mxu0 0
    %5185 = vmatprep.subr.bf16.mxu0 0
    %5186 = vmatpush1.bf16.xpose.msra.mxu0 0
    %5187 = vmatprep.subr.bf16.mxu0 0
    %5188 = vmatpush1.bf16.xpose.msra.mxu0 0
    %5189 = vmatprep.subr.bf16.mxu0 0
    %5190 = vmatpush1.bf16.xpose.msra.mxu0 0
    %5191 = vmatprep.subr.bf16.mxu0 0
    %5192 = vmatpush1.bf16.xpose.msra.mxu0 0
    %5193 = vmatprep.mubr.bf16.mxu0 %v4865
    %5194 = vmatmul.mubr.bf16.gmra.mrb[0].mxu0 %v4864
    %v5195 = vpop.f32.mrb[0].mxu0
    %v5196 = vadd.f32 %v5155, %v5195
    %v5197 = vpop.f32.mrb[0].mxu0
    %v5198 = vpop.f32.mrb[0].mxu0
    %v5199 = vadd.f32 %v5158, %v5198
    %v5200 = vpop.f32.mrb[0].mxu0
    %5201 = vdwg.mxu0
    %5202 = vmatprep.subr.bf16.mxu0 %v4983
    %5203 = vmatpush1.bf16.xpose.msra.mxu0 %v4982
    %5204 = vmatprep.subr.bf16.mxu0 %v4999
    %5205 = vmatpush1.bf16.xpose.msra.mxu0 %v4998
    %5206 = vmatprep.subr.bf16.mxu0 0
    %5207 = vmatpush1.bf16.xpose.msra.mxu0 0
    %5208 = vmatprep.subr.bf16.mxu0 0
    %5209 = vmatpush1.bf16.xpose.msra.mxu0 0
    %5210 = vmatprep.subr.bf16.mxu0 0
    %5211 = vmatpush1.bf16.xpose.msra.mxu0 0
    %5212 = vmatprep.subr.bf16.mxu0 0
    %5213 = vmatpush1.bf16.xpose.msra.mxu0 0
    %5214 = vmatprep.subr.bf16.mxu0 0
    %5215 = vmatpush1.bf16.xpose.msra.mxu0 0
    %5216 = vmatprep.subr.bf16.mxu0 0
    %5217 = vmatpush1.bf16.xpose.msra.mxu0 0
    %5218 = vmatprep.subr.bf16.mxu0 0
    %5219 = vmatpush1.bf16.xpose.msra.mxu0 0
    %5220 = vmatprep.subr.bf16.mxu0 0
    %5221 = vmatpush1.bf16.xpose.msra.mxu0 0
    %5222 = vmatprep.subr.bf16.mxu0 0
    %5223 = vmatpush1.bf16.xpose.msra.mxu0 0
    %5224 = vmatprep.subr.bf16.mxu0 0
    %5225 = vmatpush1.bf16.xpose.msra.mxu0 0
    %5226 = vmatprep.subr.bf16.mxu0 0
    %5227 = vmatpush1.bf16.xpose.msra.mxu0 0
    %5228 = vmatprep.subr.bf16.mxu0 0
    %5229 = vmatpush1.bf16.xpose.msra.mxu0 0
    %5230 = vmatprep.subr.bf16.mxu0 0
    %5231 = vmatpush1.bf16.xpose.msra.mxu0 0
    %5232 = vmatprep.subr.bf16.mxu0 0
    %5233 = vmatpush1.bf16.xpose.msra.mxu0 0
    %5234 = vmatprep.mubr.bf16.mxu0 %v4867
    %5235 = vmatmul.mubr.bf16.gmra.mrb[0].mxu0 %v4866
    %v5236 = vpop.f32.mrb[0].mxu0
    %v5237 = vadd.f32 %v5196, %v5236
    %v5238 = vpop.f32.mrb[0].mxu0
    %v5239 = vpop.f32.mrb[0].mxu0
    %v5240 = vadd.f32 %v5199, %v5239
    %v5241 = vpop.f32.mrb[0].mxu0
    %5242 = vdwg.mxu0
    %5243 = vmatprep.subr.bf16.mxu0 %v4985
    %5244 = vmatpush1.bf16.xpose.msra.mxu0 %v4984
    %5245 = vmatprep.subr.bf16.mxu0 %v5001
    %5246 = vmatpush1.bf16.xpose.msra.mxu0 %v5000
    %5247 = vmatprep.subr.bf16.mxu0 0
    %5248 = vmatpush1.bf16.xpose.msra.mxu0 0
    %5249 = vmatprep.subr.bf16.mxu0 0
    %5250 = vmatpush1.bf16.xpose.msra.mxu0 0
    %5251 = vmatprep.subr.bf16.mxu0 0
    %5252 = vmatpush1.bf16.xpose.msra.mxu0 0
    %5253 = vmatprep.subr.bf16.mxu0 0
    %5254 = vmatpush1.bf16.xpose.msra.mxu0 0
    %5255 = vmatprep.subr.bf16.mxu0 0
    %5256 = vmatpush1.bf16.xpose.msra.mxu0 0
    %5257 = vmatprep.subr.bf16.mxu0 0
    %5258 = vmatpush1.bf16.xpose.msra.mxu0 0
    %5259 = vmatprep.subr.bf16.mxu0 0
    %5260 = vmatpush1.bf16.xpose.msra.mxu0 0
    %5261 = vmatprep.subr.bf16.mxu0 0
    %5262 = vmatpush1.bf16.xpose.msra.mxu0 0
    %5263 = vmatprep.subr.bf16.mxu0 0
    %5264 = vmatpush1.bf16.xpose.msra.mxu0 0
    %5265 = vmatprep.subr.bf16.mxu0 0
    %5266 = vmatpush1.bf16.xpose.msra.mxu0 0
    %5267 = vmatprep.subr.bf16.mxu0 0
    %5268 = vmatpush1.bf16.xpose.msra.mxu0 0
    %5269 = vmatprep.subr.bf16.mxu0 0
    %5270 = vmatpush1.bf16.xpose.msra.mxu0 0
    %5271 = vmatprep.subr.bf16.mxu0 0
    %5272 = vmatpush1.bf16.xpose.msra.mxu0 0
    %5273 = vmatprep.subr.bf16.mxu0 0
    %5274 = vmatpush1.bf16.xpose.msra.mxu0 0
    %5275 = vmatprep.mubr.bf16.mxu0 %v4869
    %5276 = vmatmul.mubr.bf16.gmra.mrb[0].mxu0 %v4868
    %v5277 = vpop.f32.mrb[0].mxu0
    %v5278 = vadd.f32 %v5237, %v5277
    %v5279 = vpop.f32.mrb[0].mxu0
    %v5280 = vpop.f32.mrb[0].mxu0
    %v5281 = vadd.f32 %v5240, %v5280
    %v5282 = vpop.f32.mrb[0].mxu0
    %5283 = vdwg.mxu0
    %5284 = vmatprep.subr.bf16.mxu0 %v4987
    %5285 = vmatpush1.bf16.xpose.msra.mxu0 %v4986
    %5286 = vmatprep.subr.bf16.mxu0 %v5003
    %5287 = vmatpush1.bf16.xpose.msra.mxu0 %v5002
    %5288 = vmatprep.subr.bf16.mxu0 0
    %5289 = vmatpush1.bf16.xpose.msra.mxu0 0
    %5290 = vmatprep.subr.bf16.mxu0 0
    %5291 = vmatpush1.bf16.xpose.msra.mxu0 0
    %5292 = vmatprep.subr.bf16.mxu0 0
    %5293 = vmatpush1.bf16.xpose.msra.mxu0 0
    %5294 = vmatprep.subr.bf16.mxu0 0
    %5295 = vmatpush1.bf16.xpose.msra.mxu0 0
    %5296 = vmatprep.subr.bf16.mxu0 0
    %5297 = vmatpush1.bf16.xpose.msra.mxu0 0
    %5298 = vmatprep.subr.bf16.mxu0 0
    %5299 = vmatpush1.bf16.xpose.msra.mxu0 0
    %5300 = vmatprep.subr.bf16.mxu0 0
    %5301 = vmatpush1.bf16.xpose.msra.mxu0 0
    %5302 = vmatprep.subr.bf16.mxu0 0
    %5303 = vmatpush1.bf16.xpose.msra.mxu0 0
    %5304 = vmatprep.subr.bf16.mxu0 0
    %5305 = vmatpush1.bf16.xpose.msra.mxu0 0
    %5306 = vmatprep.subr.bf16.mxu0 0
    %5307 = vmatpush1.bf16.xpose.msra.mxu0 0
    %5308 = vmatprep.subr.bf16.mxu0 0
    %5309 = vmatpush1.bf16.xpose.msra.mxu0 0
    %5310 = vmatprep.subr.bf16.mxu0 0
    %5311 = vmatpush1.bf16.xpose.msra.mxu0 0
    %5312 = vmatprep.subr.bf16.mxu0 0
    %5313 = vmatpush1.bf16.xpose.msra.mxu0 0
    %5314 = vmatprep.subr.bf16.mxu0 0
    %5315 = vmatpush1.bf16.xpose.msra.mxu0 0
    %5316 = vmatprep.mubr.bf16.mxu0 %v4871
    %5317 = vmatmul.mubr.bf16.gmra.mrb[0].mxu0 %v4870
    %v5318 = vpop.f32.mrb[0].mxu0
    %v5319 = vadd.f32 %v5278, %v5318
    %v5320 = vpop.f32.mrb[0].mxu0
    %v5321 = vpop.f32.mrb[0].mxu0
    %v5322 = vadd.f32 %v5281, %v5321
    %v5323 = vpop.f32.mrb[0].mxu0
    %5324 = vdwg.mxu0
    %5325 = vmatprep.subr.bf16.mxu0 %v4989
    %5326 = vmatpush1.bf16.xpose.msra.mxu0 %v4988
    %5327 = vmatprep.subr.bf16.mxu0 %v5005
    %5328 = vmatpush1.bf16.xpose.msra.mxu0 %v5004
    %5329 = vmatprep.subr.bf16.mxu0 0
    %5330 = vmatpush1.bf16.xpose.msra.mxu0 0
    %5331 = vmatprep.subr.bf16.mxu0 0
    %5332 = vmatpush1.bf16.xpose.msra.mxu0 0
    %5333 = vmatprep.subr.bf16.mxu0 0
    %5334 = vmatpush1.bf16.xpose.msra.mxu0 0
    %5335 = vmatprep.subr.bf16.mxu0 0
    %5336 = vmatpush1.bf16.xpose.msra.mxu0 0
    %5337 = vmatprep.subr.bf16.mxu0 0
    %5338 = vmatpush1.bf16.xpose.msra.mxu0 0
    %5339 = vmatprep.subr.bf16.mxu0 0
    %5340 = vmatpush1.bf16.xpose.msra.mxu0 0
    %5341 = vmatprep.subr.bf16.mxu0 0
    %5342 = vmatpush1.bf16.xpose.msra.mxu0 0
    %5343 = vmatprep.subr.bf16.mxu0 0
    %5344 = vmatpush1.bf16.xpose.msra.mxu0 0
    %5345 = vmatprep.subr.bf16.mxu0 0
    %5346 = vmatpush1.bf16.xpose.msra.mxu0 0
    %5347 = vmatprep.subr.bf16.mxu0 0
    %5348 = vmatpush1.bf16.xpose.msra.mxu0 0
    %5349 = vmatprep.subr.bf16.mxu0 0
    %5350 = vmatpush1.bf16.xpose.msra.mxu0 0
    %5351 = vmatprep.subr.bf16.mxu0 0
    %5352 = vmatpush1.bf16.xpose.msra.mxu0 0
    %5353 = vmatprep.subr.bf16.mxu0 0
    %5354 = vmatpush1.bf16.xpose.msra.mxu0 0
    %5355 = vmatprep.subr.bf16.mxu0 0
    %5356 = vmatpush1.bf16.xpose.msra.mxu0 0
    %5357 = vmatprep.mubr.bf16.mxu0 %v4873
    %5358 = vmatmul.mubr.bf16.gmra.mrb[0].mxu0 %v4872
    %v5359 = vpop.f32.mrb[0].mxu0
    %v5360 = vadd.f32 %v5319, %v5359
    %v5361 = vpop.f32.mrb[0].mxu0
    %v5362 = vpop.f32.mrb[0].mxu0
    %v5363 = vadd.f32 %v5322, %v5362
    %v5364 = vpop.f32.mrb[0].mxu0
    %5365 = vdwg.mxu0
    %v5366 = vadd.f32 %v3304, %v5360
    %v5367 = vadd.f32 %v3305, %v5363
    %v5368 = vsel %vm661, %v5366, 0.0
    %5369 = vadd.xlane.f32.xlu0 %v5368
    %v5370 = vpop.xlane.xlu0 %5369
    %v5371 = vsel %vm661, %v5367, 0.0
    %5372 = vadd.xlane.f32.xlu0 %v5371
    %v5373 = vpop.xlane.xlu0 %5372
    %v5374 = vmul.f32 %v5370, %v3273
    %v5375 = vmul.f32 %v5373, %v3273
    %v5376 = vsub.f32 %v5366, %v5374
    %v5377 = vsub.f32 %v5367, %v5375
    %v5378 = vmul.f32 %v5376, %v5376
    %v5379 = vmul.f32 %v5377, %v5377
    %v5380 = vsel %vm661, %v5378, 0.0
    %5381 = vadd.xlane.f32.xlu0 %v5380
    %v5382 = vpop.xlane.xlu0 %5381
    %v5383 = vsel %vm661, %v5379, 0.0
    %5384 = vadd.xlane.f32.xlu0 %v5383
    %v5385 = vpop.xlane.xlu0 %5384
    %v5386 = vmul.f32 %v5382, %v3273
    %v5387 = vmul.f32 %v5385, %v3273
    %v5388 = vadd.f32 %v5386, 1e-05
    %v5389 = vadd.f32 %v5387, 1e-05
    %v5390 = vrsqrt.pop %v5388
    %v5391 = vrsqrt.pop %v5389
    %v5392 = vmul.f32 %v5376, %v5390
    %v5393 = vmul.f32 %v5377, %v5391
    %v5394 = vlaneseq
    %v5395 = vshrl.u32 %v5394, 7
    %v5396 = vsub.s32 7, %v5395
    %v5397 = vrot.slane %v646, %v5396
    %v5398 = vmul.f32 %v5392, %v5397
    %v5399 = vmul.f32 %v5393, %v5397
    %v5400 = vlaneseq
    %v5401 = vshrl.u32 %v5400, 7
    %v5402 = vsub.s32 0, %v5401
    %v5403 = vrot.slane %v647, %v5402
    %v5404 = vadd.f32 %v5398, %v5403
    %v5405 = vadd.f32 %v5399, %v5403
    %v5406 = vlaneseq
    %v5407 = vshrl.u32 %v5406, 7
    %v5408 = vsub.s32 1, %v5407
    %v5409 = vrot.slane %v647, %v5408
    %v5411 = vsel %vm661, %v5404, 0
    %v5414 = vsel %vm661, %v5405, 0
    %v5417 = vsel %vm661, %v50, 0
    %5419 = vmatprep.subr.mxu0 0.0
    %5420 = vmatpush1.xpose.msra.mxu0 %v5417
    %5421 = vmatprep.subr.mxu0 0.0
    %5422 = vmatpush1.xpose.msra.mxu0 0.0
    %5423 = vmatprep.subr.mxu0 0.0
    %5424 = vmatpush1.xpose.msra.mxu0 0.0
    %5425 = vmatprep.subr.mxu0 0.0
    %5426 = vmatpush1.xpose.msra.mxu0 0.0
    %5427 = vmatprep.subr.mxu0 0.0
    %5428 = vmatpush1.xpose.msra.mxu0 0.0
    %5429 = vmatprep.subr.mxu0 0.0
    %5430 = vmatpush1.xpose.msra.mxu0 0.0
    %5431 = vmatprep.subr.mxu0 0.0
    %5432 = vmatpush1.xpose.msra.mxu0 0.0
    %5433 = vmatprep.subr.mxu0 0.0
    %5434 = vmatpush1.xpose.msra.mxu0 0.0
    %5435 = vmatprep.subr.mxu0 0.0
    %5436 = vmatpush1.xpose.msra.mxu0 0.0
    %5437 = vmatprep.subr.mxu0 0.0
    %5438 = vmatpush1.xpose.msra.mxu0 0.0
    %5439 = vmatprep.subr.mxu0 0.0
    %5440 = vmatpush1.xpose.msra.mxu0 0.0
    %5441 = vmatprep.subr.mxu0 0.0
    %5442 = vmatpush1.xpose.msra.mxu0 0.0
    %5443 = vmatprep.subr.mxu0 0.0
    %5444 = vmatpush1.xpose.msra.mxu0 0.0
    %5445 = vmatprep.subr.mxu0 0.0
    %5446 = vmatpush1.xpose.msra.mxu0 0.0
    %5447 = vmatprep.subr.mxu0 0.0
    %5448 = vmatpush1.xpose.msra.mxu0 0.0
    %5449 = vmatprep.subr.mxu0 0.0
    %5450 = vmatpush1.xpose.msra.mxu0 0.0
    %5451 = vmatprep.subr.mxu0 0.0
    %5452 = vmatpush1.xpose.msra.mxu0 0.0
    %5453 = vmatprep.subr.mxu0 0.0
    %5454 = vmatpush1.xpose.msra.mxu0 0.0
    %5455 = vmatprep.subr.mxu0 0.0
    %5456 = vmatpush1.xpose.msra.mxu0 0.0
    %5457 = vmatprep.subr.mxu0 0.0
    %5458 = vmatpush1.xpose.msra.mxu0 0.0
    %5459 = vmatprep.subr.mxu0 0.0
    %5460 = vmatpush1.xpose.msra.mxu0 0.0
    %5461 = vmatprep.subr.mxu0 0.0
    %5462 = vmatpush1.xpose.msra.mxu0 0.0
    %5463 = vmatprep.subr.mxu0 0.0
    %5464 = vmatpush1.xpose.msra.mxu0 0.0
    %5465 = vmatprep.subr.mxu0 0.0
    %5466 = vmatpush1.xpose.msra.mxu0 0.0
    %5467 = vmatprep.subr.mxu0 0.0
    %5468 = vmatpush1.xpose.msra.mxu0 0.0
    %5469 = vmatprep.subr.mxu0 0.0
    %5470 = vmatpush1.xpose.msra.mxu0 0.0
    %5471 = vmatprep.subr.mxu0 0.0
    %5472 = vmatpush1.xpose.msra.mxu0 0.0
    %5473 = vmatprep.subr.mxu0 0.0
    %5474 = vmatpush1.xpose.msra.mxu0 0.0
    %5475 = vmatprep.subr.mxu0 0.0
    %5476 = vmatpush1.xpose.msra.mxu0 0.0
    %5477 = vmatprep.subr.mxu0 0.0
    %5478 = vmatpush1.xpose.msra.mxu0 0.0
    %5479 = vmatprep.subr.mxu0 0.0
    %5480 = vmatpush1.xpose.msra.mxu0 0.0
    %5481 = vmatprep.subr.mxu0 0.0
    %5482 = vmatpush1.xpose.msra.mxu0 0.0
    %5483 = vmatprep.mubr.f32.mxu0 0.0
    %5484 = vmatmul.mubr.f32.gmra.mrb[0].mxu0 %v5411
    %v5485 = vpop.f32.mrb[0].mxu0
    %v5486 = vadd.f32 %v5409, %v5485
    %v5487 = vpop.f32.mrb[0].mxu0
    %5488 = vmatprep.mubr.f32.mxu0 0.0
    %5489 = vmatmul.mubr.f32.gmra.mrb[0].mxu0 %v5414
    %v5490 = vpop.f32.mrb[0].mxu0
    %v5491 = vadd.f32 %v5409, %v5490
    %v5492 = vpop.f32.mrb[0].mxu0
    %5493 = vdwg.mxu0
    %v5494 = vmul.f32 %v5486, 0.35355338
    %v5495 = vmul.f32 %v5491, 0.35355338
    %v5496 = vlaneseq
    %v5497 = vshrl.u32 %v5496, 7
    %v5498 = vsub.s32 2, %v5497
    %v5499 = vrot.slane %v647, %v5498
    %v5501 = vsel %vm661, %v54, 0
    %5503 = vmatprep.subr.mxu0 0.0
    %5504 = vmatpush1.xpose.msra.mxu0 %v5501
    %5505 = vmatprep.subr.mxu0 0.0
    %5506 = vmatpush1.xpose.msra.mxu0 0.0
    %5507 = vmatprep.subr.mxu0 0.0
    %5508 = vmatpush1.xpose.msra.mxu0 0.0
    %5509 = vmatprep.subr.mxu0 0.0
    %5510 = vmatpush1.xpose.msra.mxu0 0.0
    %5511 = vmatprep.subr.mxu0 0.0
    %5512 = vmatpush1.xpose.msra.mxu0 0.0
    %5513 = vmatprep.subr.mxu0 0.0
    %5514 = vmatpush1.xpose.msra.mxu0 0.0
    %5515 = vmatprep.subr.mxu0 0.0
    %5516 = vmatpush1.xpose.msra.mxu0 0.0
    %5517 = vmatprep.subr.mxu0 0.0
    %5518 = vmatpush1.xpose.msra.mxu0 0.0
    %5519 = vmatprep.subr.mxu0 0.0
    %5520 = vmatpush1.xpose.msra.mxu0 0.0
    %5521 = vmatprep.subr.mxu0 0.0
    %5522 = vmatpush1.xpose.msra.mxu0 0.0
    %5523 = vmatprep.subr.mxu0 0.0
    %5524 = vmatpush1.xpose.msra.mxu0 0.0
    %5525 = vmatprep.subr.mxu0 0.0
    %5526 = vmatpush1.xpose.msra.mxu0 0.0
    %5527 = vmatprep.subr.mxu0 0.0
    %5528 = vmatpush1.xpose.msra.mxu0 0.0
    %5529 = vmatprep.subr.mxu0 0.0
    %5530 = vmatpush1.xpose.msra.mxu0 0.0
    %5531 = vmatprep.subr.mxu0 0.0
    %5532 = vmatpush1.xpose.msra.mxu0 0.0
    %5533 = vmatprep.subr.mxu0 0.0
    %5534 = vmatpush1.xpose.msra.mxu0 0.0
    %5535 = vmatprep.subr.mxu0 0.0
    %5536 = vmatpush1.xpose.msra.mxu0 0.0
    %5537 = vmatprep.subr.mxu0 0.0
    %5538 = vmatpush1.xpose.msra.mxu0 0.0
    %5539 = vmatprep.subr.mxu0 0.0
    %5540 = vmatpush1.xpose.msra.mxu0 0.0
    %5541 = vmatprep.subr.mxu0 0.0
    %5542 = vmatpush1.xpose.msra.mxu0 0.0
    %5543 = vmatprep.subr.mxu0 0.0
    %5544 = vmatpush1.xpose.msra.mxu0 0.0
    %5545 = vmatprep.subr.mxu0 0.0
    %5546 = vmatpush1.xpose.msra.mxu0 0.0
    %5547 = vmatprep.subr.mxu0 0.0
    %5548 = vmatpush1.xpose.msra.mxu0 0.0
    %5549 = vmatprep.subr.mxu0 0.0
    %5550 = vmatpush1.xpose.msra.mxu0 0.0
    %5551 = vmatprep.subr.mxu0 0.0
    %5552 = vmatpush1.xpose.msra.mxu0 0.0
    %5553 = vmatprep.subr.mxu0 0.0
    %5554 = vmatpush1.xpose.msra.mxu0 0.0
    %5555 = vmatprep.subr.mxu0 0.0
    %5556 = vmatpush1.xpose.msra.mxu0 0.0
    %5557 = vmatprep.subr.mxu0 0.0
    %5558 = vmatpush1.xpose.msra.mxu0 0.0
    %5559 = vmatprep.subr.mxu0 0.0
    %5560 = vmatpush1.xpose.msra.mxu0 0.0
    %5561 = vmatprep.subr.mxu0 0.0
    %5562 = vmatpush1.xpose.msra.mxu0 0.0
    %5563 = vmatprep.subr.mxu0 0.0
    %5564 = vmatpush1.xpose.msra.mxu0 0.0
    %5565 = vmatprep.subr.mxu0 0.0
    %5566 = vmatpush1.xpose.msra.mxu0 0.0
    %5567 = vmatprep.mubr.f32.mxu0 0.0
    %5568 = vmatmul.mubr.f32.gmra.mrb[0].mxu0 %v5411
    %v5569 = vpop.f32.mrb[0].mxu0
    %v5570 = vadd.f32 %v5499, %v5569
    %v5571 = vpop.f32.mrb[0].mxu0
    %5572 = vmatprep.mubr.f32.mxu0 0.0
    %5573 = vmatmul.mubr.f32.gmra.mrb[0].mxu0 %v5414
    %v5574 = vpop.f32.mrb[0].mxu0
    %v5575 = vadd.f32 %v5499, %v5574
    %v5576 = vpop.f32.mrb[0].mxu0
    %5577 = vdwg.mxu0
    %v5578 = vlaneseq
    %v5579 = vshrl.u32 %v5578, 7
    %v5580 = vsub.s32 3, %v5579
    %v5581 = vrot.slane %v647, %v5580
    %v5583 = vsel %vm661, %v58, 0
    %5585 = vmatprep.subr.mxu0 0.0
    %5586 = vmatpush1.xpose.msra.mxu0 %v5583
    %5587 = vmatprep.subr.mxu0 0.0
    %5588 = vmatpush1.xpose.msra.mxu0 0.0
    %5589 = vmatprep.subr.mxu0 0.0
    %5590 = vmatpush1.xpose.msra.mxu0 0.0
    %5591 = vmatprep.subr.mxu0 0.0
    %5592 = vmatpush1.xpose.msra.mxu0 0.0
    %5593 = vmatprep.subr.mxu0 0.0
    %5594 = vmatpush1.xpose.msra.mxu0 0.0
    %5595 = vmatprep.subr.mxu0 0.0
    %5596 = vmatpush1.xpose.msra.mxu0 0.0
    %5597 = vmatprep.subr.mxu0 0.0
    %5598 = vmatpush1.xpose.msra.mxu0 0.0
    %5599 = vmatprep.subr.mxu0 0.0
    %5600 = vmatpush1.xpose.msra.mxu0 0.0
    %5601 = vmatprep.subr.mxu0 0.0
    %5602 = vmatpush1.xpose.msra.mxu0 0.0
    %5603 = vmatprep.subr.mxu0 0.0
    %5604 = vmatpush1.xpose.msra.mxu0 0.0
    %5605 = vmatprep.subr.mxu0 0.0
    %5606 = vmatpush1.xpose.msra.mxu0 0.0
    %5607 = vmatprep.subr.mxu0 0.0
    %5608 = vmatpush1.xpose.msra.mxu0 0.0
    %5609 = vmatprep.subr.mxu0 0.0
    %5610 = vmatpush1.xpose.msra.mxu0 0.0
    %5611 = vmatprep.subr.mxu0 0.0
    %5612 = vmatpush1.xpose.msra.mxu0 0.0
    %5613 = vmatprep.subr.mxu0 0.0
    %5614 = vmatpush1.xpose.msra.mxu0 0.0
    %5615 = vmatprep.subr.mxu0 0.0
    %5616 = vmatpush1.xpose.msra.mxu0 0.0
    %5617 = vmatprep.subr.mxu0 0.0
    %5618 = vmatpush1.xpose.msra.mxu0 0.0
    %5619 = vmatprep.subr.mxu0 0.0
    %5620 = vmatpush1.xpose.msra.mxu0 0.0
    %5621 = vmatprep.subr.mxu0 0.0
    %5622 = vmatpush1.xpose.msra.mxu0 0.0
    %5623 = vmatprep.subr.mxu0 0.0
    %5624 = vmatpush1.xpose.msra.mxu0 0.0
    %5625 = vmatprep.subr.mxu0 0.0
    %5626 = vmatpush1.xpose.msra.mxu0 0.0
    %5627 = vmatprep.subr.mxu0 0.0
    %5628 = vmatpush1.xpose.msra.mxu0 0.0
    %5629 = vmatprep.subr.mxu0 0.0
    %5630 = vmatpush1.xpose.msra.mxu0 0.0
    %5631 = vmatprep.subr.mxu0 0.0
    %5632 = vmatpush1.xpose.msra.mxu0 0.0
    %5633 = vmatprep.subr.mxu0 0.0
    %5634 = vmatpush1.xpose.msra.mxu0 0.0
    %5635 = vmatprep.subr.mxu0 0.0
    %5636 = vmatpush1.xpose.msra.mxu0 0.0
    %5637 = vmatprep.subr.mxu0 0.0
    %5638 = vmatpush1.xpose.msra.mxu0 0.0
    %5639 = vmatprep.subr.mxu0 0.0
    %5640 = vmatpush1.xpose.msra.mxu0 0.0
    %5641 = vmatprep.subr.mxu0 0.0
    %5642 = vmatpush1.xpose.msra.mxu0 0.0
    %5643 = vmatprep.subr.mxu0 0.0
    %5644 = vmatpush1.xpose.msra.mxu0 0.0
    %5645 = vmatprep.subr.mxu0 0.0
    %5646 = vmatpush1.xpose.msra.mxu0 0.0
    %5647 = vmatprep.subr.mxu0 0.0
    %5648 = vmatpush1.xpose.msra.mxu0 0.0
    %5649 = vmatprep.mubr.f32.mxu0 0.0
    %5650 = vmatmul.mubr.f32.gmra.mrb[0].mxu0 %v5411
    %v5651 = vpop.f32.mrb[0].mxu0
    %v5652 = vadd.f32 %v5581, %v5651
    %v5653 = vpop.f32.mrb[0].mxu0
    %5654 = vmatprep.mubr.f32.mxu0 0.0
    %5655 = vmatmul.mubr.f32.gmra.mrb[0].mxu0 %v5414
    %v5656 = vpop.f32.mrb[0].mxu0
    %v5657 = vadd.f32 %v5581, %v5656
    %v5658 = vpop.f32.mrb[0].mxu0
    %5659 = vdwg.mxu0
    %v5661 = vsel %vm912, %v5494, 0
    %v5664 = vsel %vm912, %v5570, 0
    %5666 = vmatprep.subr.mxu0 0.0
    %5667 = vmatpush1.xpose.msra.mxu0 %v5664
    %5668 = vmatprep.subr.mxu0 0.0
    %5669 = vmatpush1.xpose.msra.mxu0 0.0
    %5670 = vmatprep.subr.mxu0 0.0
    %5671 = vmatpush1.xpose.msra.mxu0 0.0
    %5672 = vmatprep.subr.mxu0 0.0
    %5673 = vmatpush1.xpose.msra.mxu0 0.0
    %5674 = vmatprep.subr.mxu0 0.0
    %5675 = vmatpush1.xpose.msra.mxu0 0.0
    %5676 = vmatprep.subr.mxu0 0.0
    %5677 = vmatpush1.xpose.msra.mxu0 0.0
    %5678 = vmatprep.subr.mxu0 0.0
    %5679 = vmatpush1.xpose.msra.mxu0 0.0
    %5680 = vmatprep.subr.mxu0 0.0
    %5681 = vmatpush1.xpose.msra.mxu0 0.0
    %5682 = vmatprep.subr.mxu0 0.0
    %5683 = vmatpush1.xpose.msra.mxu0 0.0
    %5684 = vmatprep.subr.mxu0 0.0
    %5685 = vmatpush1.xpose.msra.mxu0 0.0
    %5686 = vmatprep.subr.mxu0 0.0
    %5687 = vmatpush1.xpose.msra.mxu0 0.0
    %5688 = vmatprep.subr.mxu0 0.0
    %5689 = vmatpush1.xpose.msra.mxu0 0.0
    %5690 = vmatprep.subr.mxu0 0.0
    %5691 = vmatpush1.xpose.msra.mxu0 0.0
    %5692 = vmatprep.subr.mxu0 0.0
    %5693 = vmatpush1.xpose.msra.mxu0 0.0
    %5694 = vmatprep.subr.mxu0 0.0
    %5695 = vmatpush1.xpose.msra.mxu0 0.0
    %5696 = vmatprep.subr.mxu0 0.0
    %5697 = vmatpush1.xpose.msra.mxu0 0.0
    %5698 = vmatprep.subr.mxu0 0.0
    %5699 = vmatpush1.xpose.msra.mxu0 0.0
    %5700 = vmatprep.subr.mxu0 0.0
    %5701 = vmatpush1.xpose.msra.mxu0 0.0
    %5702 = vmatprep.subr.mxu0 0.0
    %5703 = vmatpush1.xpose.msra.mxu0 0.0
    %5704 = vmatprep.subr.mxu0 0.0
    %5705 = vmatpush1.xpose.msra.mxu0 0.0
    %5706 = vmatprep.subr.mxu0 0.0
    %5707 = vmatpush1.xpose.msra.mxu0 0.0
    %5708 = vmatprep.subr.mxu0 0.0
    %5709 = vmatpush1.xpose.msra.mxu0 0.0
    %5710 = vmatprep.subr.mxu0 0.0
    %5711 = vmatpush1.xpose.msra.mxu0 0.0
    %5712 = vmatprep.subr.mxu0 0.0
    %5713 = vmatpush1.xpose.msra.mxu0 0.0
    %5714 = vmatprep.subr.mxu0 0.0
    %5715 = vmatpush1.xpose.msra.mxu0 0.0
    %5716 = vmatprep.subr.mxu0 0.0
    %5717 = vmatpush1.xpose.msra.mxu0 0.0
    %5718 = vmatprep.subr.mxu0 0.0
    %5719 = vmatpush1.xpose.msra.mxu0 0.0
    %5720 = vmatprep.subr.mxu0 0.0
    %5721 = vmatpush1.xpose.msra.mxu0 0.0
    %5722 = vmatprep.subr.mxu0 0.0
    %5723 = vmatpush1.xpose.msra.mxu0 0.0
    %5724 = vmatprep.subr.mxu0 0.0
    %5725 = vmatpush1.xpose.msra.mxu0 0.0
    %5726 = vmatprep.subr.mxu0 0.0
    %5727 = vmatpush1.xpose.msra.mxu0 0.0
    %5728 = vmatprep.subr.mxu0 0.0
    %5729 = vmatpush1.xpose.msra.mxu0 0.0
    %5730 = vmatprep.mubr.f32.mxu0 0.0
    %5731 = vmatmul.mubr.f32.gmra.mrb[0].mxu0 %v5661
    %v5732 = vpop.f32.mrb[0].mxu0
    %v5733 = vadd.f32 0.0, %v5732
    %v5734 = vpop.f32.mrb[0].mxu0
    %5735 = vdwg.mxu0
    %v5737 = vsel %vm912, %v5495, 0
    %v5740 = vsel %vm912, %v5575, 0
    %5742 = vmatprep.subr.mxu0 0.0
    %5743 = vmatpush1.xpose.msra.mxu0 %v5740
    %5744 = vmatprep.subr.mxu0 0.0
    %5745 = vmatpush1.xpose.msra.mxu0 0.0
    %5746 = vmatprep.subr.mxu0 0.0
    %5747 = vmatpush1.xpose.msra.mxu0 0.0
    %5748 = vmatprep.subr.mxu0 0.0
    %5749 = vmatpush1.xpose.msra.mxu0 0.0
    %5750 = vmatprep.subr.mxu0 0.0
    %5751 = vmatpush1.xpose.msra.mxu0 0.0
    %5752 = vmatprep.subr.mxu0 0.0
    %5753 = vmatpush1.xpose.msra.mxu0 0.0
    %5754 = vmatprep.subr.mxu0 0.0
    %5755 = vmatpush1.xpose.msra.mxu0 0.0
    %5756 = vmatprep.subr.mxu0 0.0
    %5757 = vmatpush1.xpose.msra.mxu0 0.0
    %5758 = vmatprep.subr.mxu0 0.0
    %5759 = vmatpush1.xpose.msra.mxu0 0.0
    %5760 = vmatprep.subr.mxu0 0.0
    %5761 = vmatpush1.xpose.msra.mxu0 0.0
    %5762 = vmatprep.subr.mxu0 0.0
    %5763 = vmatpush1.xpose.msra.mxu0 0.0
    %5764 = vmatprep.subr.mxu0 0.0
    %5765 = vmatpush1.xpose.msra.mxu0 0.0
    %5766 = vmatprep.subr.mxu0 0.0
    %5767 = vmatpush1.xpose.msra.mxu0 0.0
    %5768 = vmatprep.subr.mxu0 0.0
    %5769 = vmatpush1.xpose.msra.mxu0 0.0
    %5770 = vmatprep.subr.mxu0 0.0
    %5771 = vmatpush1.xpose.msra.mxu0 0.0
    %5772 = vmatprep.subr.mxu0 0.0
    %5773 = vmatpush1.xpose.msra.mxu0 0.0
    %5774 = vmatprep.subr.mxu0 0.0
    %5775 = vmatpush1.xpose.msra.mxu0 0.0
    %5776 = vmatprep.subr.mxu0 0.0
    %5777 = vmatpush1.xpose.msra.mxu0 0.0
    %5778 = vmatprep.subr.mxu0 0.0
    %5779 = vmatpush1.xpose.msra.mxu0 0.0
    %5780 = vmatprep.subr.mxu0 0.0
    %5781 = vmatpush1.xpose.msra.mxu0 0.0
    %5782 = vmatprep.subr.mxu0 0.0
    %5783 = vmatpush1.xpose.msra.mxu0 0.0
    %5784 = vmatprep.subr.mxu0 0.0
    %5785 = vmatpush1.xpose.msra.mxu0 0.0
    %5786 = vmatprep.subr.mxu0 0.0
    %5787 = vmatpush1.xpose.msra.mxu0 0.0
    %5788 = vmatprep.subr.mxu0 0.0
    %5789 = vmatpush1.xpose.msra.mxu0 0.0
    %5790 = vmatprep.subr.mxu0 0.0
    %5791 = vmatpush1.xpose.msra.mxu0 0.0
    %5792 = vmatprep.subr.mxu0 0.0
    %5793 = vmatpush1.xpose.msra.mxu0 0.0
    %5794 = vmatprep.subr.mxu0 0.0
    %5795 = vmatpush1.xpose.msra.mxu0 0.0
    %5796 = vmatprep.subr.mxu0 0.0
    %5797 = vmatpush1.xpose.msra.mxu0 0.0
    %5798 = vmatprep.subr.mxu0 0.0
    %5799 = vmatpush1.xpose.msra.mxu0 0.0
    %5800 = vmatprep.subr.mxu0 0.0
    %5801 = vmatpush1.xpose.msra.mxu0 0.0
    %5802 = vmatprep.subr.mxu0 0.0
    %5803 = vmatpush1.xpose.msra.mxu0 0.0
    %5804 = vmatprep.subr.mxu0 0.0
    %5805 = vmatpush1.xpose.msra.mxu0 0.0
    %5806 = vmatprep.mubr.f32.mxu0 0.0
    %5807 = vmatmul.mubr.f32.gmra.mrb[0].mxu0 %v5737
    %v5808 = vpop.f32.mrb[0].mxu0
    %v5809 = vadd.f32 0.0, %v5808
    %v5810 = vpop.f32.mrb[0].mxu0
    %5811 = vdwg.mxu0
    %v5812 = vsel %vm912, %v5733, -inf
    %5813 = vmax.xlane.f32.xlu0 %v5812
    %v5814 = vpop.xlane.xlu0 %5813
    %v5815 = vsel %vm912, %v5809, -inf
    %5816 = vmax.xlane.f32.xlu0 %v5815
    %v5817 = vpop.xlane.xlu0 %5816
    %v5818 = vsub.f32 %v5733, %v5814
    %v5819 = vsub.f32 %v5809, %v5817
    %v5820 = vmul.f32 %v5818, 1.442695
    %v5821 = vpow.pop %v5820
    %v5822 = vmul.f32 %v5819, 1.442695
    %v5823 = vpow.pop %v5822
    %v5824 = vsel %vm912, %v5821, 0.0
    %5825 = vadd.xlane.f32.xlu0 %v5824
    %v5826 = vpop.xlane.xlu0 %5825
    %v5827 = vsel %vm912, %v5823, 0.0
    %5828 = vadd.xlane.f32.xlu0 %v5827
    %v5829 = vpop.xlane.xlu0 %5828
    %v5830 = vrcp.pop %v5826
    %v5831 = vrcp.pop %v5829
    %v5832 = vmul.f32 %v5821, %v5830
    %v5833 = vmul.f32 %v5823, %v5831
    %v5835 = vsel %vm912, %v5832, 0
    %5837 = vmatprep.subr.mxu0 0.0
    %5838 = vmatpush1.msra.mxu0 %v5652
    %5839 = vmatprep.subr.mxu0 0.0
    %5840 = vmatpush1.msra.mxu0 0.0
    %5841 = vmatprep.subr.mxu0 0.0
    %5842 = vmatpush1.msra.mxu0 0.0
    %5843 = vmatprep.subr.mxu0 0.0
    %5844 = vmatpush1.msra.mxu0 0.0
    %5845 = vmatprep.subr.mxu0 0.0
    %5846 = vmatpush1.msra.mxu0 0.0
    %5847 = vmatprep.subr.mxu0 0.0
    %5848 = vmatpush1.msra.mxu0 0.0
    %5849 = vmatprep.subr.mxu0 0.0
    %5850 = vmatpush1.msra.mxu0 0.0
    %5851 = vmatprep.subr.mxu0 0.0
    %5852 = vmatpush1.msra.mxu0 0.0
    %5853 = vmatprep.subr.mxu0 0.0
    %5854 = vmatpush1.msra.mxu0 0.0
    %5855 = vmatprep.subr.mxu0 0.0
    %5856 = vmatpush1.msra.mxu0 0.0
    %5857 = vmatprep.subr.mxu0 0.0
    %5858 = vmatpush1.msra.mxu0 0.0
    %5859 = vmatprep.subr.mxu0 0.0
    %5860 = vmatpush1.msra.mxu0 0.0
    %5861 = vmatprep.subr.mxu0 0.0
    %5862 = vmatpush1.msra.mxu0 0.0
    %5863 = vmatprep.subr.mxu0 0.0
    %5864 = vmatpush1.msra.mxu0 0.0
    %5865 = vmatprep.subr.mxu0 0.0
    %5866 = vmatpush1.msra.mxu0 0.0
    %5867 = vmatprep.subr.mxu0 0.0
    %5868 = vmatpush1.msra.mxu0 0.0
    %5869 = vmatprep.subr.mxu0 0.0
    %5870 = vmatpush1.msra.mxu0 0.0
    %5871 = vmatprep.subr.mxu0 0.0
    %5872 = vmatpush1.msra.mxu0 0.0
    %5873 = vmatprep.subr.mxu0 0.0
    %5874 = vmatpush1.msra.mxu0 0.0
    %5875 = vmatprep.subr.mxu0 0.0
    %5876 = vmatpush1.msra.mxu0 0.0
    %5877 = vmatprep.subr.mxu0 0.0
    %5878 = vmatpush1.msra.mxu0 0.0
    %5879 = vmatprep.subr.mxu0 0.0
    %5880 = vmatpush1.msra.mxu0 0.0
    %5881 = vmatprep.subr.mxu0 0.0
    %5882 = vmatpush1.msra.mxu0 0.0
    %5883 = vmatprep.subr.mxu0 0.0
    %5884 = vmatpush1.msra.mxu0 0.0
    %5885 = vmatprep.subr.mxu0 0.0
    %5886 = vmatpush1.msra.mxu0 0.0
    %5887 = vmatprep.subr.mxu0 0.0
    %5888 = vmatpush1.msra.mxu0 0.0
    %5889 = vmatprep.subr.mxu0 0.0
    %5890 = vmatpush1.msra.mxu0 0.0
    %5891 = vmatprep.subr.mxu0 0.0
    %5892 = vmatpush1.msra.mxu0 0.0
    %5893 = vmatprep.subr.mxu0 0.0
    %5894 = vmatpush1.msra.mxu0 0.0
    %5895 = vmatprep.subr.mxu0 0.0
    %5896 = vmatpush1.msra.mxu0 0.0
    %5897 = vmatprep.subr.mxu0 0.0
    %5898 = vmatpush1.msra.mxu0 0.0
    %5899 = vmatprep.subr.mxu0 0.0
    %5900 = vmatpush1.msra.mxu0 0.0
    %5901 = vmatprep.mubr.f32.mxu0 0.0
    %5902 = vmatmul.mubr.f32.gmra.mrb[0].mxu0 %v5835
    %v5903 = vpop.f32.mrb[0].mxu0
    %v5904 = vadd.f32 0.0, %v5903
    %v5905 = vpop.f32.mrb[0].mxu0
    %5906 = vdwg.mxu0
    %v5908 = vsel %vm912, %v5833, 0
    %5910 = vmatprep.subr.mxu0 0.0
    %5911 = vmatpush1.msra.mxu0 %v5657
    %5912 = vmatprep.subr.mxu0 0.0
    %5913 = vmatpush1.msra.mxu0 0.0
    %5914 = vmatprep.subr.mxu0 0.0
    %5915 = vmatpush1.msra.mxu0 0.0
    %5916 = vmatprep.subr.mxu0 0.0
    %5917 = vmatpush1.msra.mxu0 0.0
    %5918 = vmatprep.subr.mxu0 0.0
    %5919 = vmatpush1.msra.mxu0 0.0
    %5920 = vmatprep.subr.mxu0 0.0
    %5921 = vmatpush1.msra.mxu0 0.0
    %5922 = vmatprep.subr.mxu0 0.0
    %5923 = vmatpush1.msra.mxu0 0.0
    %5924 = vmatprep.subr.mxu0 0.0
    %5925 = vmatpush1.msra.mxu0 0.0
    %5926 = vmatprep.subr.mxu0 0.0
    %5927 = vmatpush1.msra.mxu0 0.0
    %5928 = vmatprep.subr.mxu0 0.0
    %5929 = vmatpush1.msra.mxu0 0.0
    %5930 = vmatprep.subr.mxu0 0.0
    %5931 = vmatpush1.msra.mxu0 0.0
    %5932 = vmatprep.subr.mxu0 0.0
    %5933 = vmatpush1.msra.mxu0 0.0
    %5934 = vmatprep.subr.mxu0 0.0
    %5935 = vmatpush1.msra.mxu0 0.0
    %5936 = vmatprep.subr.mxu0 0.0
    %5937 = vmatpush1.msra.mxu0 0.0
    %5938 = vmatprep.subr.mxu0 0.0
    %5939 = vmatpush1.msra.mxu0 0.0
    %5940 = vmatprep.subr.mxu0 0.0
    %5941 = vmatpush1.msra.mxu0 0.0
    %5942 = vmatprep.subr.mxu0 0.0
    %5943 = vmatpush1.msra.mxu0 0.0
    %5944 = vmatprep.subr.mxu0 0.0
    %5945 = vmatpush1.msra.mxu0 0.0
    %5946 = vmatprep.subr.mxu0 0.0
    %5947 = vmatpush1.msra.mxu0 0.0
    %5948 = vmatprep.subr.mxu0 0.0
    %5949 = vmatpush1.msra.mxu0 0.0
    %5950 = vmatprep.subr.mxu0 0.0
    %5951 = vmatpush1.msra.mxu0 0.0
    %5952 = vmatprep.subr.mxu0 0.0
    %5953 = vmatpush1.msra.mxu0 0.0
    %5954 = vmatprep.subr.mxu0 0.0
    %5955 = vmatpush1.msra.mxu0 0.0
    %5956 = vmatprep.subr.mxu0 0.0
    %5957 = vmatpush1.msra.mxu0 0.0
    %5958 = vmatprep.subr.mxu0 0.0
    %5959 = vmatpush1.msra.mxu0 0.0
    %5960 = vmatprep.subr.mxu0 0.0
    %5961 = vmatpush1.msra.mxu0 0.0
    %5962 = vmatprep.subr.mxu0 0.0
    %5963 = vmatpush1.msra.mxu0 0.0
    %5964 = vmatprep.subr.mxu0 0.0
    %5965 = vmatpush1.msra.mxu0 0.0
    %5966 = vmatprep.subr.mxu0 0.0
    %5967 = vmatpush1.msra.mxu0 0.0
    %5968 = vmatprep.subr.mxu0 0.0
    %5969 = vmatpush1.msra.mxu0 0.0
    %5970 = vmatprep.subr.mxu0 0.0
    %5971 = vmatpush1.msra.mxu0 0.0
    %5972 = vmatprep.subr.mxu0 0.0
    %5973 = vmatpush1.msra.mxu0 0.0
    %5974 = vmatprep.mubr.f32.mxu0 0.0
    %5975 = vmatmul.mubr.f32.gmra.mrb[0].mxu0 %v5908
    %v5976 = vpop.f32.mrb[0].mxu0
    %v5977 = vadd.f32 0.0, %v5976
    %v5978 = vpop.f32.mrb[0].mxu0
    %5979 = vdwg.mxu0
    %5981 = vrot.lane.b32.xlu0 %v5409, 120
    %v5982 = vpop.permute.xlu0 %5981
    %v5985 = vsel %vm661, %v51, 0
    %5987 = vmatprep.subr.mxu0 0.0
    %5988 = vmatpush1.xpose.msra.mxu0 %v5985
    %5989 = vmatprep.subr.mxu0 0.0
    %5990 = vmatpush1.xpose.msra.mxu0 0.0
    %5991 = vmatprep.subr.mxu0 0.0
    %5992 = vmatpush1.xpose.msra.mxu0 0.0
    %5993 = vmatprep.subr.mxu0 0.0
    %5994 = vmatpush1.xpose.msra.mxu0 0.0
    %5995 = vmatprep.subr.mxu0 0.0
    %5996 = vmatpush1.xpose.msra.mxu0 0.0
    %5997 = vmatprep.subr.mxu0 0.0
    %5998 = vmatpush1.xpose.msra.mxu0 0.0
    %5999 = vmatprep.subr.mxu0 0.0
    %6000 = vmatpush1.xpose.msra.mxu0 0.0
    %6001 = vmatprep.subr.mxu0 0.0
    %6002 = vmatpush1.xpose.msra.mxu0 0.0
    %6003 = vmatprep.subr.mxu0 0.0
    %6004 = vmatpush1.xpose.msra.mxu0 0.0
    %6005 = vmatprep.subr.mxu0 0.0
    %6006 = vmatpush1.xpose.msra.mxu0 0.0
    %6007 = vmatprep.subr.mxu0 0.0
    %6008 = vmatpush1.xpose.msra.mxu0 0.0
    %6009 = vmatprep.subr.mxu0 0.0
    %6010 = vmatpush1.xpose.msra.mxu0 0.0
    %6011 = vmatprep.subr.mxu0 0.0
    %6012 = vmatpush1.xpose.msra.mxu0 0.0
    %6013 = vmatprep.subr.mxu0 0.0
    %6014 = vmatpush1.xpose.msra.mxu0 0.0
    %6015 = vmatprep.subr.mxu0 0.0
    %6016 = vmatpush1.xpose.msra.mxu0 0.0
    %6017 = vmatprep.subr.mxu0 0.0
    %6018 = vmatpush1.xpose.msra.mxu0 0.0
    %6019 = vmatprep.subr.mxu0 0.0
    %6020 = vmatpush1.xpose.msra.mxu0 0.0
    %6021 = vmatprep.subr.mxu0 0.0
    %6022 = vmatpush1.xpose.msra.mxu0 0.0
    %6023 = vmatprep.subr.mxu0 0.0
    %6024 = vmatpush1.xpose.msra.mxu0 0.0
    %6025 = vmatprep.subr.mxu0 0.0
    %6026 = vmatpush1.xpose.msra.mxu0 0.0
    %6027 = vmatprep.subr.mxu0 0.0
    %6028 = vmatpush1.xpose.msra.mxu0 0.0
    %6029 = vmatprep.subr.mxu0 0.0
    %6030 = vmatpush1.xpose.msra.mxu0 0.0
    %6031 = vmatprep.subr.mxu0 0.0
    %6032 = vmatpush1.xpose.msra.mxu0 0.0
    %6033 = vmatprep.subr.mxu0 0.0
    %6034 = vmatpush1.xpose.msra.mxu0 0.0
    %6035 = vmatprep.subr.mxu0 0.0
    %6036 = vmatpush1.xpose.msra.mxu0 0.0
    %6037 = vmatprep.subr.mxu0 0.0
    %6038 = vmatpush1.xpose.msra.mxu0 0.0
    %6039 = vmatprep.subr.mxu0 0.0
    %6040 = vmatpush1.xpose.msra.mxu0 0.0
    %6041 = vmatprep.subr.mxu0 0.0
    %6042 = vmatpush1.xpose.msra.mxu0 0.0
    %6043 = vmatprep.subr.mxu0 0.0
    %6044 = vmatpush1.xpose.msra.mxu0 0.0
    %6045 = vmatprep.subr.mxu0 0.0
    %6046 = vmatpush1.xpose.msra.mxu0 0.0
    %6047 = vmatprep.subr.mxu0 0.0
    %6048 = vmatpush1.xpose.msra.mxu0 0.0
    %6049 = vmatprep.subr.mxu0 0.0
    %6050 = vmatpush1.xpose.msra.mxu0 0.0
    %6051 = vmatprep.mubr.f32.mxu0 0.0
    %6052 = vmatmul.mubr.f32.gmra.mrb[0].mxu0 %v5411
    %v6053 = vpop.f32.mrb[0].mxu0
    %v6054 = vadd.f32 %v5982, %v6053
    %v6055 = vpop.f32.mrb[0].mxu0
    %6056 = vmatprep.mubr.f32.mxu0 0.0
    %6057 = vmatmul.mubr.f32.gmra.mrb[0].mxu0 %v5414
    %v6058 = vpop.f32.mrb[0].mxu0
    %v6059 = vadd.f32 %v5982, %v6058
    %v6060 = vpop.f32.mrb[0].mxu0
    %6061 = vdwg.mxu0
    %v6062 = vmul.f32 %v6054, 0.35355338
    %v6063 = vmul.f32 %v6059, 0.35355338
    %6065 = vrot.lane.b32.xlu0 %v5499, 120
    %v6066 = vpop.permute.xlu0 %6065
    %v6069 = vsel %vm661, %v55, 0
    %6071 = vmatprep.subr.mxu0 0.0
    %6072 = vmatpush1.xpose.msra.mxu0 %v6069
    %6073 = vmatprep.subr.mxu0 0.0
    %6074 = vmatpush1.xpose.msra.mxu0 0.0
    %6075 = vmatprep.subr.mxu0 0.0
    %6076 = vmatpush1.xpose.msra.mxu0 0.0
    %6077 = vmatprep.subr.mxu0 0.0
    %6078 = vmatpush1.xpose.msra.mxu0 0.0
    %6079 = vmatprep.subr.mxu0 0.0
    %6080 = vmatpush1.xpose.msra.mxu0 0.0
    %6081 = vmatprep.subr.mxu0 0.0
    %6082 = vmatpush1.xpose.msra.mxu0 0.0
    %6083 = vmatprep.subr.mxu0 0.0
    %6084 = vmatpush1.xpose.msra.mxu0 0.0
    %6085 = vmatprep.subr.mxu0 0.0
    %6086 = vmatpush1.xpose.msra.mxu0 0.0
    %6087 = vmatprep.subr.mxu0 0.0
    %6088 = vmatpush1.xpose.msra.mxu0 0.0
    %6089 = vmatprep.subr.mxu0 0.0
    %6090 = vmatpush1.xpose.msra.mxu0 0.0
    %6091 = vmatprep.subr.mxu0 0.0
    %6092 = vmatpush1.xpose.msra.mxu0 0.0
    %6093 = vmatprep.subr.mxu0 0.0
    %6094 = vmatpush1.xpose.msra.mxu0 0.0
    %6095 = vmatprep.subr.mxu0 0.0
    %6096 = vmatpush1.xpose.msra.mxu0 0.0
    %6097 = vmatprep.subr.mxu0 0.0
    %6098 = vmatpush1.xpose.msra.mxu0 0.0
    %6099 = vmatprep.subr.mxu0 0.0
    %6100 = vmatpush1.xpose.msra.mxu0 0.0
    %6101 = vmatprep.subr.mxu0 0.0
    %6102 = vmatpush1.xpose.msra.mxu0 0.0
    %6103 = vmatprep.subr.mxu0 0.0
    %6104 = vmatpush1.xpose.msra.mxu0 0.0
    %6105 = vmatprep.subr.mxu0 0.0
    %6106 = vmatpush1.xpose.msra.mxu0 0.0
    %6107 = vmatprep.subr.mxu0 0.0
    %6108 = vmatpush1.xpose.msra.mxu0 0.0
    %6109 = vmatprep.subr.mxu0 0.0
    %6110 = vmatpush1.xpose.msra.mxu0 0.0
    %6111 = vmatprep.subr.mxu0 0.0
    %6112 = vmatpush1.xpose.msra.mxu0 0.0
    %6113 = vmatprep.subr.mxu0 0.0
    %6114 = vmatpush1.xpose.msra.mxu0 0.0
    %6115 = vmatprep.subr.mxu0 0.0
    %6116 = vmatpush1.xpose.msra.mxu0 0.0
    %6117 = vmatprep.subr.mxu0 0.0
    %6118 = vmatpush1.xpose.msra.mxu0 0.0
    %6119 = vmatprep.subr.mxu0 0.0
    %6120 = vmatpush1.xpose.msra.mxu0 0.0
    %6121 = vmatprep.subr.mxu0 0.0
    %6122 = vmatpush1.xpose.msra.mxu0 0.0
    %6123 = vmatprep.subr.mxu0 0.0
    %6124 = vmatpush1.xpose.msra.mxu0 0.0
    %6125 = vmatprep.subr.mxu0 0.0
    %6126 = vmatpush1.xpose.msra.mxu0 0.0
    %6127 = vmatprep.subr.mxu0 0.0
    %6128 = vmatpush1.xpose.msra.mxu0 0.0
    %6129 = vmatprep.subr.mxu0 0.0
    %6130 = vmatpush1.xpose.msra.mxu0 0.0
    %6131 = vmatprep.subr.mxu0 0.0
    %6132 = vmatpush1.xpose.msra.mxu0 0.0
    %6133 = vmatprep.subr.mxu0 0.0
    %6134 = vmatpush1.xpose.msra.mxu0 0.0
    %6135 = vmatprep.mubr.f32.mxu0 0.0
    %6136 = vmatmul.mubr.f32.gmra.mrb[0].mxu0 %v5411
    %v6137 = vpop.f32.mrb[0].mxu0
    %v6138 = vadd.f32 %v6066, %v6137
    %v6139 = vpop.f32.mrb[0].mxu0
    %6140 = vmatprep.mubr.f32.mxu0 0.0
    %6141 = vmatmul.mubr.f32.gmra.mrb[0].mxu0 %v5414
    %v6142 = vpop.f32.mrb[0].mxu0
    %v6143 = vadd.f32 %v6066, %v6142
    %v6144 = vpop.f32.mrb[0].mxu0
    %6145 = vdwg.mxu0
    %6147 = vrot.lane.b32.xlu0 %v5581, 120
    %v6148 = vpop.permute.xlu0 %6147
    %v6151 = vsel %vm661, %v59, 0
    %6153 = vmatprep.subr.mxu0 0.0
    %6154 = vmatpush1.xpose.msra.mxu0 %v6151
    %6155 = vmatprep.subr.mxu0 0.0
    %6156 = vmatpush1.xpose.msra.mxu0 0.0
    %6157 = vmatprep.subr.mxu0 0.0
    %6158 = vmatpush1.xpose.msra.mxu0 0.0
    %6159 = vmatprep.subr.mxu0 0.0
    %6160 = vmatpush1.xpose.msra.mxu0 0.0
    %6161 = vmatprep.subr.mxu0 0.0
    %6162 = vmatpush1.xpose.msra.mxu0 0.0
    %6163 = vmatprep.subr.mxu0 0.0
    %6164 = vmatpush1.xpose.msra.mxu0 0.0
    %6165 = vmatprep.subr.mxu0 0.0
    %6166 = vmatpush1.xpose.msra.mxu0 0.0
    %6167 = vmatprep.subr.mxu0 0.0
    %6168 = vmatpush1.xpose.msra.mxu0 0.0
    %6169 = vmatprep.subr.mxu0 0.0
    %6170 = vmatpush1.xpose.msra.mxu0 0.0
    %6171 = vmatprep.subr.mxu0 0.0
    %6172 = vmatpush1.xpose.msra.mxu0 0.0
    %6173 = vmatprep.subr.mxu0 0.0
    %6174 = vmatpush1.xpose.msra.mxu0 0.0
    %6175 = vmatprep.subr.mxu0 0.0
    %6176 = vmatpush1.xpose.msra.mxu0 0.0
    %6177 = vmatprep.subr.mxu0 0.0
    %6178 = vmatpush1.xpose.msra.mxu0 0.0
    %6179 = vmatprep.subr.mxu0 0.0
    %6180 = vmatpush1.xpose.msra.mxu0 0.0
    %6181 = vmatprep.subr.mxu0 0.0
    %6182 = vmatpush1.xpose.msra.mxu0 0.0
    %6183 = vmatprep.subr.mxu0 0.0
    %6184 = vmatpush1.xpose.msra.mxu0 0.0
    %6185 = vmatprep.subr.mxu0 0.0
    %6186 = vmatpush1.xpose.msra.mxu0 0.0
    %6187 = vmatprep.subr.mxu0 0.0
    %6188 = vmatpush1.xpose.msra.mxu0 0.0
    %6189 = vmatprep.subr.mxu0 0.0
    %6190 = vmatpush1.xpose.msra.mxu0 0.0
    %6191 = vmatprep.subr.mxu0 0.0
    %6192 = vmatpush1.xpose.msra.mxu0 0.0
    %6193 = vmatprep.subr.mxu0 0.0
    %6194 = vmatpush1.xpose.msra.mxu0 0.0
    %6195 = vmatprep.subr.mxu0 0.0
    %6196 = vmatpush1.xpose.msra.mxu0 0.0
    %6197 = vmatprep.subr.mxu0 0.0
    %6198 = vmatpush1.xpose.msra.mxu0 0.0
    %6199 = vmatprep.subr.mxu0 0.0
    %6200 = vmatpush1.xpose.msra.mxu0 0.0
    %6201 = vmatprep.subr.mxu0 0.0
    %6202 = vmatpush1.xpose.msra.mxu0 0.0
    %6203 = vmatprep.subr.mxu0 0.0
    %6204 = vmatpush1.xpose.msra.mxu0 0.0
    %6205 = vmatprep.subr.mxu0 0.0
    %6206 = vmatpush1.xpose.msra.mxu0 0.0
    %6207 = vmatprep.subr.mxu0 0.0
    %6208 = vmatpush1.xpose.msra.mxu0 0.0
    %6209 = vmatprep.subr.mxu0 0.0
    %6210 = vmatpush1.xpose.msra.mxu0 0.0
    %6211 = vmatprep.subr.mxu0 0.0
    %6212 = vmatpush1.xpose.msra.mxu0 0.0
    %6213 = vmatprep.subr.mxu0 0.0
    %6214 = vmatpush1.xpose.msra.mxu0 0.0
    %6215 = vmatprep.subr.mxu0 0.0
    %6216 = vmatpush1.xpose.msra.mxu0 0.0
    %6217 = vmatprep.mubr.f32.mxu0 0.0
    %6218 = vmatmul.mubr.f32.gmra.mrb[0].mxu0 %v5411
    %v6219 = vpop.f32.mrb[0].mxu0
    %v6220 = vadd.f32 %v6148, %v6219
    %v6221 = vpop.f32.mrb[0].mxu0
    %6222 = vmatprep.mubr.f32.mxu0 0.0
    %6223 = vmatmul.mubr.f32.gmra.mrb[0].mxu0 %v5414
    %v6224 = vpop.f32.mrb[0].mxu0
    %v6225 = vadd.f32 %v6148, %v6224
    %v6226 = vpop.f32.mrb[0].mxu0
    %6227 = vdwg.mxu0
    %v6229 = vsel %vm912, %v6062, 0
    %v6232 = vsel %vm912, %v6138, 0
    %6234 = vmatprep.subr.mxu0 0.0
    %6235 = vmatpush1.xpose.msra.mxu0 %v6232
    %6236 = vmatprep.subr.mxu0 0.0
    %6237 = vmatpush1.xpose.msra.mxu0 0.0
    %6238 = vmatprep.subr.mxu0 0.0
    %6239 = vmatpush1.xpose.msra.mxu0 0.0
    %6240 = vmatprep.subr.mxu0 0.0
    %6241 = vmatpush1.xpose.msra.mxu0 0.0
    %6242 = vmatprep.subr.mxu0 0.0
    %6243 = vmatpush1.xpose.msra.mxu0 0.0
    %6244 = vmatprep.subr.mxu0 0.0
    %6245 = vmatpush1.xpose.msra.mxu0 0.0
    %6246 = vmatprep.subr.mxu0 0.0
    %6247 = vmatpush1.xpose.msra.mxu0 0.0
    %6248 = vmatprep.subr.mxu0 0.0
    %6249 = vmatpush1.xpose.msra.mxu0 0.0
    %6250 = vmatprep.subr.mxu0 0.0
    %6251 = vmatpush1.xpose.msra.mxu0 0.0
    %6252 = vmatprep.subr.mxu0 0.0
    %6253 = vmatpush1.xpose.msra.mxu0 0.0
    %6254 = vmatprep.subr.mxu0 0.0
    %6255 = vmatpush1.xpose.msra.mxu0 0.0
    %6256 = vmatprep.subr.mxu0 0.0
    %6257 = vmatpush1.xpose.msra.mxu0 0.0
    %6258 = vmatprep.subr.mxu0 0.0
    %6259 = vmatpush1.xpose.msra.mxu0 0.0
    %6260 = vmatprep.subr.mxu0 0.0
    %6261 = vmatpush1.xpose.msra.mxu0 0.0
    %6262 = vmatprep.subr.mxu0 0.0
    %6263 = vmatpush1.xpose.msra.mxu0 0.0
    %6264 = vmatprep.subr.mxu0 0.0
    %6265 = vmatpush1.xpose.msra.mxu0 0.0
    %6266 = vmatprep.subr.mxu0 0.0
    %6267 = vmatpush1.xpose.msra.mxu0 0.0
    %6268 = vmatprep.subr.mxu0 0.0
    %6269 = vmatpush1.xpose.msra.mxu0 0.0
    %6270 = vmatprep.subr.mxu0 0.0
    %6271 = vmatpush1.xpose.msra.mxu0 0.0
    %6272 = vmatprep.subr.mxu0 0.0
    %6273 = vmatpush1.xpose.msra.mxu0 0.0
    %6274 = vmatprep.subr.mxu0 0.0
    %6275 = vmatpush1.xpose.msra.mxu0 0.0
    %6276 = vmatprep.subr.mxu0 0.0
    %6277 = vmatpush1.xpose.msra.mxu0 0.0
    %6278 = vmatprep.subr.mxu0 0.0
    %6279 = vmatpush1.xpose.msra.mxu0 0.0
    %6280 = vmatprep.subr.mxu0 0.0
    %6281 = vmatpush1.xpose.msra.mxu0 0.0
    %6282 = vmatprep.subr.mxu0 0.0
    %6283 = vmatpush1.xpose.msra.mxu0 0.0
    %6284 = vmatprep.subr.mxu0 0.0
    %6285 = vmatpush1.xpose.msra.mxu0 0.0
    %6286 = vmatprep.subr.mxu0 0.0
    %6287 = vmatpush1.xpose.msra.mxu0 0.0
    %6288 = vmatprep.subr.mxu0 0.0
    %6289 = vmatpush1.xpose.msra.mxu0 0.0
    %6290 = vmatprep.subr.mxu0 0.0
    %6291 = vmatpush1.xpose.msra.mxu0 0.0
    %6292 = vmatprep.subr.mxu0 0.0
    %6293 = vmatpush1.xpose.msra.mxu0 0.0
    %6294 = vmatprep.subr.mxu0 0.0
    %6295 = vmatpush1.xpose.msra.mxu0 0.0
    %6296 = vmatprep.subr.mxu0 0.0
    %6297 = vmatpush1.xpose.msra.mxu0 0.0
    %6298 = vmatprep.mubr.f32.mxu0 0.0
    %6299 = vmatmul.mubr.f32.gmra.mrb[0].mxu0 %v6229
    %v6300 = vpop.f32.mrb[0].mxu0
    %v6301 = vadd.f32 0.0, %v6300
    %v6302 = vpop.f32.mrb[0].mxu0
    %6303 = vdwg.mxu0
    %v6305 = vsel %vm912, %v6063, 0
    %v6308 = vsel %vm912, %v6143, 0
    %6310 = vmatprep.subr.mxu0 0.0
    %6311 = vmatpush1.xpose.msra.mxu0 %v6308
    %6312 = vmatprep.subr.mxu0 0.0
    %6313 = vmatpush1.xpose.msra.mxu0 0.0
    %6314 = vmatprep.subr.mxu0 0.0
    %6315 = vmatpush1.xpose.msra.mxu0 0.0
    %6316 = vmatprep.subr.mxu0 0.0
    %6317 = vmatpush1.xpose.msra.mxu0 0.0
    %6318 = vmatprep.subr.mxu0 0.0
    %6319 = vmatpush1.xpose.msra.mxu0 0.0
    %6320 = vmatprep.subr.mxu0 0.0
    %6321 = vmatpush1.xpose.msra.mxu0 0.0
    %6322 = vmatprep.subr.mxu0 0.0
    %6323 = vmatpush1.xpose.msra.mxu0 0.0
    %6324 = vmatprep.subr.mxu0 0.0
    %6325 = vmatpush1.xpose.msra.mxu0 0.0
    %6326 = vmatprep.subr.mxu0 0.0
    %6327 = vmatpush1.xpose.msra.mxu0 0.0
    %6328 = vmatprep.subr.mxu0 0.0
    %6329 = vmatpush1.xpose.msra.mxu0 0.0
    %6330 = vmatprep.subr.mxu0 0.0
    %6331 = vmatpush1.xpose.msra.mxu0 0.0
    %6332 = vmatprep.subr.mxu0 0.0
    %6333 = vmatpush1.xpose.msra.mxu0 0.0
    %6334 = vmatprep.subr.mxu0 0.0
    %6335 = vmatpush1.xpose.msra.mxu0 0.0
    %6336 = vmatprep.subr.mxu0 0.0
    %6337 = vmatpush1.xpose.msra.mxu0 0.0
    %6338 = vmatprep.subr.mxu0 0.0
    %6339 = vmatpush1.xpose.msra.mxu0 0.0
    %6340 = vmatprep.subr.mxu0 0.0
    %6341 = vmatpush1.xpose.msra.mxu0 0.0
    %6342 = vmatprep.subr.mxu0 0.0
    %6343 = vmatpush1.xpose.msra.mxu0 0.0
    %6344 = vmatprep.subr.mxu0 0.0
    %6345 = vmatpush1.xpose.msra.mxu0 0.0
    %6346 = vmatprep.subr.mxu0 0.0
    %6347 = vmatpush1.xpose.msra.mxu0 0.0
    %6348 = vmatprep.subr.mxu0 0.0
    %6349 = vmatpush1.xpose.msra.mxu0 0.0
    %6350 = vmatprep.subr.mxu0 0.0
    %6351 = vmatpush1.xpose.msra.mxu0 0.0
    %6352 = vmatprep.subr.mxu0 0.0
    %6353 = vmatpush1.xpose.msra.mxu0 0.0
    %6354 = vmatprep.subr.mxu0 0.0
    %6355 = vmatpush1.xpose.msra.mxu0 0.0
    %6356 = vmatprep.subr.mxu0 0.0
    %6357 = vmatpush1.xpose.msra.mxu0 0.0
    %6358 = vmatprep.subr.mxu0 0.0
    %6359 = vmatpush1.xpose.msra.mxu0 0.0
    %6360 = vmatprep.subr.mxu0 0.0
    %6361 = vmatpush1.xpose.msra.mxu0 0.0
    %6362 = vmatprep.subr.mxu0 0.0
    %6363 = vmatpush1.xpose.msra.mxu0 0.0
    %6364 = vmatprep.subr.mxu0 0.0
    %6365 = vmatpush1.xpose.msra.mxu0 0.0
    %6366 = vmatprep.subr.mxu0 0.0
    %6367 = vmatpush1.xpose.msra.mxu0 0.0
    %6368 = vmatprep.subr.mxu0 0.0
    %6369 = vmatpush1.xpose.msra.mxu0 0.0
    %6370 = vmatprep.subr.mxu0 0.0
    %6371 = vmatpush1.xpose.msra.mxu0 0.0
    %6372 = vmatprep.subr.mxu0 0.0
    %6373 = vmatpush1.xpose.msra.mxu0 0.0
    %6374 = vmatprep.mubr.f32.mxu0 0.0
    %6375 = vmatmul.mubr.f32.gmra.mrb[0].mxu0 %v6305
    %v6376 = vpop.f32.mrb[0].mxu0
    %v6377 = vadd.f32 0.0, %v6376
    %v6378 = vpop.f32.mrb[0].mxu0
    %6379 = vdwg.mxu0
    %v6380 = vsel %vm912, %v6301, -inf
    %6381 = vmax.xlane.f32.xlu0 %v6380
    %v6382 = vpop.xlane.xlu0 %6381
    %v6383 = vsel %vm912, %v6377, -inf
    %6384 = vmax.xlane.f32.xlu0 %v6383
    %v6385 = vpop.xlane.xlu0 %6384
    %v6386 = vsub.f32 %v6301, %v6382
    %v6387 = vsub.f32 %v6377, %v6385
    %v6388 = vmul.f32 %v6386, 1.442695
    %v6389 = vpow.pop %v6388
    %v6390 = vmul.f32 %v6387, 1.442695
    %v6391 = vpow.pop %v6390
    %v6392 = vsel %vm912, %v6389, 0.0
    %6393 = vadd.xlane.f32.xlu0 %v6392
    %v6394 = vpop.xlane.xlu0 %6393
    %v6395 = vsel %vm912, %v6391, 0.0
    %6396 = vadd.xlane.f32.xlu0 %v6395
    %v6397 = vpop.xlane.xlu0 %6396
    %v6398 = vrcp.pop %v6394
    %v6399 = vrcp.pop %v6397
    %v6400 = vmul.f32 %v6389, %v6398
    %v6401 = vmul.f32 %v6391, %v6399
    %v6403 = vsel %vm912, %v6400, 0
    %6405 = vmatprep.subr.mxu0 0.0
    %6406 = vmatpush1.msra.mxu0 %v6220
    %6407 = vmatprep.subr.mxu0 0.0
    %6408 = vmatpush1.msra.mxu0 0.0
    %6409 = vmatprep.subr.mxu0 0.0
    %6410 = vmatpush1.msra.mxu0 0.0
    %6411 = vmatprep.subr.mxu0 0.0
    %6412 = vmatpush1.msra.mxu0 0.0
    %6413 = vmatprep.subr.mxu0 0.0
    %6414 = vmatpush1.msra.mxu0 0.0
    %6415 = vmatprep.subr.mxu0 0.0
    %6416 = vmatpush1.msra.mxu0 0.0
    %6417 = vmatprep.subr.mxu0 0.0
    %6418 = vmatpush1.msra.mxu0 0.0
    %6419 = vmatprep.subr.mxu0 0.0
    %6420 = vmatpush1.msra.mxu0 0.0
    %6421 = vmatprep.subr.mxu0 0.0
    %6422 = vmatpush1.msra.mxu0 0.0
    %6423 = vmatprep.subr.mxu0 0.0
    %6424 = vmatpush1.msra.mxu0 0.0
    %6425 = vmatprep.subr.mxu0 0.0
    %6426 = vmatpush1.msra.mxu0 0.0
    %6427 = vmatprep.subr.mxu0 0.0
    %6428 = vmatpush1.msra.mxu0 0.0
    %6429 = vmatprep.subr.mxu0 0.0
    %6430 = vmatpush1.msra.mxu0 0.0
    %6431 = vmatprep.subr.mxu0 0.0
    %6432 = vmatpush1.msra.mxu0 0.0
    %6433 = vmatprep.subr.mxu0 0.0
    %6434 = vmatpush1.msra.mxu0 0.0
    %6435 = vmatprep.subr.mxu0 0.0
    %6436 = vmatpush1.msra.mxu0 0.0
    %6437 = vmatprep.subr.mxu0 0.0
    %6438 = vmatpush1.msra.mxu0 0.0
    %6439 = vmatprep.subr.mxu0 0.0
    %6440 = vmatpush1.msra.mxu0 0.0
    %6441 = vmatprep.subr.mxu0 0.0
    %6442 = vmatpush1.msra.mxu0 0.0
    %6443 = vmatprep.subr.mxu0 0.0
    %6444 = vmatpush1.msra.mxu0 0.0
    %6445 = vmatprep.subr.mxu0 0.0
    %6446 = vmatpush1.msra.mxu0 0.0
    %6447 = vmatprep.subr.mxu0 0.0
    %6448 = vmatpush1.msra.mxu0 0.0
    %6449 = vmatprep.subr.mxu0 0.0
    %6450 = vmatpush1.msra.mxu0 0.0
    %6451 = vmatprep.subr.mxu0 0.0
    %6452 = vmatpush1.msra.mxu0 0.0
    %6453 = vmatprep.subr.mxu0 0.0
    %6454 = vmatpush1.msra.mxu0 0.0
    %6455 = vmatprep.subr.mxu0 0.0
    %6456 = vmatpush1.msra.mxu0 0.0
    %6457 = vmatprep.subr.mxu0 0.0
    %6458 = vmatpush1.msra.mxu0 0.0
    %6459 = vmatprep.subr.mxu0 0.0
    %6460 = vmatpush1.msra.mxu0 0.0
    %6461 = vmatprep.subr.mxu0 0.0
    %6462 = vmatpush1.msra.mxu0 0.0
    %6463 = vmatprep.subr.mxu0 0.0
    %6464 = vmatpush1.msra.mxu0 0.0
    %6465 = vmatprep.subr.mxu0 0.0
    %6466 = vmatpush1.msra.mxu0 0.0
    %6467 = vmatprep.subr.mxu0 0.0
    %6468 = vmatpush1.msra.mxu0 0.0
    %6469 = vmatprep.mubr.f32.mxu0 0.0
    %6470 = vmatmul.mubr.f32.gmra.mrb[0].mxu0 %v6403
    %v6471 = vpop.f32.mrb[0].mxu0
    %v6472 = vadd.f32 0.0, %v6471
    %v6473 = vpop.f32.mrb[0].mxu0
    %6474 = vdwg.mxu0
    %v6476 = vsel %vm912, %v6401, 0
    %6478 = vmatprep.subr.mxu0 0.0
    %6479 = vmatpush1.msra.mxu0 %v6225
    %6480 = vmatprep.subr.mxu0 0.0
    %6481 = vmatpush1.msra.mxu0 0.0
    %6482 = vmatprep.subr.mxu0 0.0
    %6483 = vmatpush1.msra.mxu0 0.0
    %6484 = vmatprep.subr.mxu0 0.0
    %6485 = vmatpush1.msra.mxu0 0.0
    %6486 = vmatprep.subr.mxu0 0.0
    %6487 = vmatpush1.msra.mxu0 0.0
    %6488 = vmatprep.subr.mxu0 0.0
    %6489 = vmatpush1.msra.mxu0 0.0
    %6490 = vmatprep.subr.mxu0 0.0
    %6491 = vmatpush1.msra.mxu0 0.0
    %6492 = vmatprep.subr.mxu0 0.0
    %6493 = vmatpush1.msra.mxu0 0.0
    %6494 = vmatprep.subr.mxu0 0.0
    %6495 = vmatpush1.msra.mxu0 0.0
    %6496 = vmatprep.subr.mxu0 0.0
    %6497 = vmatpush1.msra.mxu0 0.0
    %6498 = vmatprep.subr.mxu0 0.0
    %6499 = vmatpush1.msra.mxu0 0.0
    %6500 = vmatprep.subr.mxu0 0.0
    %6501 = vmatpush1.msra.mxu0 0.0
    %6502 = vmatprep.subr.mxu0 0.0
    %6503 = vmatpush1.msra.mxu0 0.0
    %6504 = vmatprep.subr.mxu0 0.0
    %6505 = vmatpush1.msra.mxu0 0.0
    %6506 = vmatprep.subr.mxu0 0.0
    %6507 = vmatpush1.msra.mxu0 0.0
    %6508 = vmatprep.subr.mxu0 0.0
    %6509 = vmatpush1.msra.mxu0 0.0
    %6510 = vmatprep.subr.mxu0 0.0
    %6511 = vmatpush1.msra.mxu0 0.0
    %6512 = vmatprep.subr.mxu0 0.0
    %6513 = vmatpush1.msra.mxu0 0.0
    %6514 = vmatprep.subr.mxu0 0.0
    %6515 = vmatpush1.msra.mxu0 0.0
    %6516 = vmatprep.subr.mxu0 0.0
    %6517 = vmatpush1.msra.mxu0 0.0
    %6518 = vmatprep.subr.mxu0 0.0
    %6519 = vmatpush1.msra.mxu0 0.0
    %6520 = vmatprep.subr.mxu0 0.0
    %6521 = vmatpush1.msra.mxu0 0.0
    %6522 = vmatprep.subr.mxu0 0.0
    %6523 = vmatpush1.msra.mxu0 0.0
    %6524 = vmatprep.subr.mxu0 0.0
    %6525 = vmatpush1.msra.mxu0 0.0
    %6526 = vmatprep.subr.mxu0 0.0
    %6527 = vmatpush1.msra.mxu0 0.0
    %6528 = vmatprep.subr.mxu0 0.0
    %6529 = vmatpush1.msra.mxu0 0.0
    %6530 = vmatprep.subr.mxu0 0.0
    %6531 = vmatpush1.msra.mxu0 0.0
    %6532 = vmatprep.subr.mxu0 0.0
    %6533 = vmatpush1.msra.mxu0 0.0
    %6534 = vmatprep.subr.mxu0 0.0
    %6535 = vmatpush1.msra.mxu0 0.0
    %6536 = vmatprep.subr.mxu0 0.0
    %6537 = vmatpush1.msra.mxu0 0.0
    %6538 = vmatprep.subr.mxu0 0.0
    %6539 = vmatpush1.msra.mxu0 0.0
    %6540 = vmatprep.subr.mxu0 0.0
    %6541 = vmatpush1.msra.mxu0 0.0
    %6542 = vmatprep.mubr.f32.mxu0 0.0
    %6543 = vmatmul.mubr.f32.gmra.mrb[0].mxu0 %v6476
    %v6544 = vpop.f32.mrb[0].mxu0
    %v6545 = vadd.f32 0.0, %v6544
    %v6546 = vpop.f32.mrb[0].mxu0
    %6547 = vdwg.mxu0
    %v6549 = vsel %vm912, %v6472, 0
    %v6552 = vsel %vm912, %v6545, 0
    %6554 = vmatprep.subr.mxu0 0.0
    %6555 = vmatpush1.msra.mxu0 %v63
    %6556 = vmatprep.subr.mxu0 0.0
    %6557 = vmatpush1.msra.mxu0 0.0
    %6558 = vmatprep.subr.mxu0 0.0
    %6559 = vmatpush1.msra.mxu0 0.0
    %6560 = vmatprep.subr.mxu0 0.0
    %6561 = vmatpush1.msra.mxu0 0.0
    %6562 = vmatprep.subr.mxu0 0.0
    %6563 = vmatpush1.msra.mxu0 0.0
    %6564 = vmatprep.subr.mxu0 0.0
    %6565 = vmatpush1.msra.mxu0 0.0
    %6566 = vmatprep.subr.mxu0 0.0
    %6567 = vmatpush1.msra.mxu0 0.0
    %6568 = vmatprep.subr.mxu0 0.0
    %6569 = vmatpush1.msra.mxu0 0.0
    %6570 = vmatprep.subr.mxu0 0.0
    %6571 = vmatpush1.msra.mxu0 0.0
    %6572 = vmatprep.subr.mxu0 0.0
    %6573 = vmatpush1.msra.mxu0 0.0
    %6574 = vmatprep.subr.mxu0 0.0
    %6575 = vmatpush1.msra.mxu0 0.0
    %6576 = vmatprep.subr.mxu0 0.0
    %6577 = vmatpush1.msra.mxu0 0.0
    %6578 = vmatprep.subr.mxu0 0.0
    %6579 = vmatpush1.msra.mxu0 0.0
    %6580 = vmatprep.subr.mxu0 0.0
    %6581 = vmatpush1.msra.mxu0 0.0
    %6582 = vmatprep.subr.mxu0 0.0
    %6583 = vmatpush1.msra.mxu0 0.0
    %6584 = vmatprep.subr.mxu0 0.0
    %6585 = vmatpush1.msra.mxu0 0.0
    %6586 = vmatprep.subr.mxu0 0.0
    %6587 = vmatpush1.msra.mxu0 0.0
    %6588 = vmatprep.subr.mxu0 0.0
    %6589 = vmatpush1.msra.mxu0 0.0
    %6590 = vmatprep.subr.mxu0 0.0
    %6591 = vmatpush1.msra.mxu0 0.0
    %6592 = vmatprep.subr.mxu0 0.0
    %6593 = vmatpush1.msra.mxu0 0.0
    %6594 = vmatprep.subr.mxu0 0.0
    %6595 = vmatpush1.msra.mxu0 0.0
    %6596 = vmatprep.subr.mxu0 0.0
    %6597 = vmatpush1.msra.mxu0 0.0
    %6598 = vmatprep.subr.mxu0 0.0
    %6599 = vmatpush1.msra.mxu0 0.0
    %6600 = vmatprep.subr.mxu0 0.0
    %6601 = vmatpush1.msra.mxu0 0.0
    %6602 = vmatprep.subr.mxu0 0.0
    %6603 = vmatpush1.msra.mxu0 0.0
    %6604 = vmatprep.subr.mxu0 0.0
    %6605 = vmatpush1.msra.mxu0 0.0
    %6606 = vmatprep.subr.mxu0 0.0
    %6607 = vmatpush1.msra.mxu0 0.0
    %6608 = vmatprep.subr.mxu0 0.0
    %6609 = vmatpush1.msra.mxu0 0.0
    %6610 = vmatprep.subr.mxu0 0.0
    %6611 = vmatpush1.msra.mxu0 0.0
    %6612 = vmatprep.subr.mxu0 0.0
    %6613 = vmatpush1.msra.mxu0 0.0
    %6614 = vmatprep.subr.mxu0 0.0
    %6615 = vmatpush1.msra.mxu0 0.0
    %6616 = vmatprep.subr.mxu0 0.0
    %6617 = vmatpush1.msra.mxu0 0.0
    %6618 = vmatprep.mubr.f32.mxu0 0.0
    %6619 = vmatmul.mubr.f32.gmra.mrb[0].mxu0 %v6549
    %v6620 = vpop.f32.mrb[0].mxu0
    %v6621 = vadd.f32 0.0, %v6620
    %v6622 = vpop.f32.mrb[0].mxu0
    %6623 = vmatprep.mubr.f32.mxu0 0.0
    %6624 = vmatmul.mubr.f32.gmra.mrb[0].mxu0 %v6552
    %v6625 = vpop.f32.mrb[0].mxu0
    %v6626 = vadd.f32 0.0, %v6625
    %v6627 = vpop.f32.mrb[0].mxu0
    %6628 = vdwg.mxu0
    %v6630 = vsel %vm912, %v5904, 0
    %v6633 = vsel %vm912, %v5977, 0
    %6635 = vmatprep.subr.mxu0 0.0
    %6636 = vmatpush1.msra.mxu0 %v62
    %6637 = vmatprep.subr.mxu0 0.0
    %6638 = vmatpush1.msra.mxu0 0.0
    %6639 = vmatprep.subr.mxu0 0.0
    %6640 = vmatpush1.msra.mxu0 0.0
    %6641 = vmatprep.subr.mxu0 0.0
    %6642 = vmatpush1.msra.mxu0 0.0
    %6643 = vmatprep.subr.mxu0 0.0
    %6644 = vmatpush1.msra.mxu0 0.0
    %6645 = vmatprep.subr.mxu0 0.0
    %6646 = vmatpush1.msra.mxu0 0.0
    %6647 = vmatprep.subr.mxu0 0.0
    %6648 = vmatpush1.msra.mxu0 0.0
    %6649 = vmatprep.subr.mxu0 0.0
    %6650 = vmatpush1.msra.mxu0 0.0
    %6651 = vmatprep.subr.mxu0 0.0
    %6652 = vmatpush1.msra.mxu0 0.0
    %6653 = vmatprep.subr.mxu0 0.0
    %6654 = vmatpush1.msra.mxu0 0.0
    %6655 = vmatprep.subr.mxu0 0.0
    %6656 = vmatpush1.msra.mxu0 0.0
    %6657 = vmatprep.subr.mxu0 0.0
    %6658 = vmatpush1.msra.mxu0 0.0
    %6659 = vmatprep.subr.mxu0 0.0
    %6660 = vmatpush1.msra.mxu0 0.0
    %6661 = vmatprep.subr.mxu0 0.0
    %6662 = vmatpush1.msra.mxu0 0.0
    %6663 = vmatprep.subr.mxu0 0.0
    %6664 = vmatpush1.msra.mxu0 0.0
    %6665 = vmatprep.subr.mxu0 0.0
    %6666 = vmatpush1.msra.mxu0 0.0
    %6667 = vmatprep.subr.mxu0 0.0
    %6668 = vmatpush1.msra.mxu0 0.0
    %6669 = vmatprep.subr.mxu0 0.0
    %6670 = vmatpush1.msra.mxu0 0.0
    %6671 = vmatprep.subr.mxu0 0.0
    %6672 = vmatpush1.msra.mxu0 0.0
    %6673 = vmatprep.subr.mxu0 0.0
    %6674 = vmatpush1.msra.mxu0 0.0
    %6675 = vmatprep.subr.mxu0 0.0
    %6676 = vmatpush1.msra.mxu0 0.0
    %6677 = vmatprep.subr.mxu0 0.0
    %6678 = vmatpush1.msra.mxu0 0.0
    %6679 = vmatprep.subr.mxu0 0.0
    %6680 = vmatpush1.msra.mxu0 0.0
    %6681 = vmatprep.subr.mxu0 0.0
    %6682 = vmatpush1.msra.mxu0 0.0
    %6683 = vmatprep.subr.mxu0 0.0
    %6684 = vmatpush1.msra.mxu0 0.0
    %6685 = vmatprep.subr.mxu0 0.0
    %6686 = vmatpush1.msra.mxu0 0.0
    %6687 = vmatprep.subr.mxu0 0.0
    %6688 = vmatpush1.msra.mxu0 0.0
    %6689 = vmatprep.subr.mxu0 0.0
    %6690 = vmatpush1.msra.mxu0 0.0
    %6691 = vmatprep.subr.mxu0 0.0
    %6692 = vmatpush1.msra.mxu0 0.0
    %6693 = vmatprep.subr.mxu0 0.0
    %6694 = vmatpush1.msra.mxu0 0.0
    %6695 = vmatprep.subr.mxu0 0.0
    %6696 = vmatpush1.msra.mxu0 0.0
    %6697 = vmatprep.subr.mxu0 0.0
    %6698 = vmatpush1.msra.mxu0 0.0
    %6699 = vmatprep.mubr.f32.mxu0 0.0
    %6700 = vmatmul.mubr.f32.gmra.mrb[0].mxu0 %v6630
    %v6701 = vpop.f32.mrb[0].mxu0
    %v6702 = vadd.f32 %v6621, %v6701
    %v6703 = vpop.f32.mrb[0].mxu0
    %6704 = vmatprep.mubr.f32.mxu0 0.0
    %6705 = vmatmul.mubr.f32.gmra.mrb[0].mxu0 %v6633
    %v6706 = vpop.f32.mrb[0].mxu0
    %v6707 = vadd.f32 %v6626, %v6706
    %v6708 = vpop.f32.mrb[0].mxu0
    %6709 = vdwg.mxu0
    %6710 = vrot.lane.b32.xlu0 %v5409, 112
    %v6711 = vpop.permute.xlu0 %6710
    %v6714 = vsel %vm661, %v52, 0
    %6716 = vmatprep.subr.mxu0 0.0
    %6717 = vmatpush1.xpose.msra.mxu0 %v6714
    %6718 = vmatprep.subr.mxu0 0.0
    %6719 = vmatpush1.xpose.msra.mxu0 0.0
    %6720 = vmatprep.subr.mxu0 0.0
    %6721 = vmatpush1.xpose.msra.mxu0 0.0
    %6722 = vmatprep.subr.mxu0 0.0
    %6723 = vmatpush1.xpose.msra.mxu0 0.0
    %6724 = vmatprep.subr.mxu0 0.0
    %6725 = vmatpush1.xpose.msra.mxu0 0.0
    %6726 = vmatprep.subr.mxu0 0.0
    %6727 = vmatpush1.xpose.msra.mxu0 0.0
    %6728 = vmatprep.subr.mxu0 0.0
    %6729 = vmatpush1.xpose.msra.mxu0 0.0
    %6730 = vmatprep.subr.mxu0 0.0
    %6731 = vmatpush1.xpose.msra.mxu0 0.0
    %6732 = vmatprep.subr.mxu0 0.0
    %6733 = vmatpush1.xpose.msra.mxu0 0.0
    %6734 = vmatprep.subr.mxu0 0.0
    %6735 = vmatpush1.xpose.msra.mxu0 0.0
    %6736 = vmatprep.subr.mxu0 0.0
    %6737 = vmatpush1.xpose.msra.mxu0 0.0
    %6738 = vmatprep.subr.mxu0 0.0
    %6739 = vmatpush1.xpose.msra.mxu0 0.0
    %6740 = vmatprep.subr.mxu0 0.0
    %6741 = vmatpush1.xpose.msra.mxu0 0.0
    %6742 = vmatprep.subr.mxu0 0.0
    %6743 = vmatpush1.xpose.msra.mxu0 0.0
    %6744 = vmatprep.subr.mxu0 0.0
    %6745 = vmatpush1.xpose.msra.mxu0 0.0
    %6746 = vmatprep.subr.mxu0 0.0
    %6747 = vmatpush1.xpose.msra.mxu0 0.0
    %6748 = vmatprep.subr.mxu0 0.0
    %6749 = vmatpush1.xpose.msra.mxu0 0.0
    %6750 = vmatprep.subr.mxu0 0.0
    %6751 = vmatpush1.xpose.msra.mxu0 0.0
    %6752 = vmatprep.subr.mxu0 0.0
    %6753 = vmatpush1.xpose.msra.mxu0 0.0
    %6754 = vmatprep.subr.mxu0 0.0
    %6755 = vmatpush1.xpose.msra.mxu0 0.0
    %6756 = vmatprep.subr.mxu0 0.0
    %6757 = vmatpush1.xpose.msra.mxu0 0.0
    %6758 = vmatprep.subr.mxu0 0.0
    %6759 = vmatpush1.xpose.msra.mxu0 0.0
    %6760 = vmatprep.subr.mxu0 0.0
    %6761 = vmatpush1.xpose.msra.mxu0 0.0
    %6762 = vmatprep.subr.mxu0 0.0
    %6763 = vmatpush1.xpose.msra.mxu0 0.0
    %6764 = vmatprep.subr.mxu0 0.0
    %6765 = vmatpush1.xpose.msra.mxu0 0.0
    %6766 = vmatprep.subr.mxu0 0.0
    %6767 = vmatpush1.xpose.msra.mxu0 0.0
    %6768 = vmatprep.subr.mxu0 0.0
    %6769 = vmatpush1.xpose.msra.mxu0 0.0
    %6770 = vmatprep.subr.mxu0 0.0
    %6771 = vmatpush1.xpose.msra.mxu0 0.0
    %6772 = vmatprep.subr.mxu0 0.0
    %6773 = vmatpush1.xpose.msra.mxu0 0.0
    %6774 = vmatprep.subr.mxu0 0.0
    %6775 = vmatpush1.xpose.msra.mxu0 0.0
    %6776 = vmatprep.subr.mxu0 0.0
    %6777 = vmatpush1.xpose.msra.mxu0 0.0
    %6778 = vmatprep.subr.mxu0 0.0
    %6779 = vmatpush1.xpose.msra.mxu0 0.0
    %6780 = vmatprep.mubr.f32.mxu0 0.0
    %6781 = vmatmul.mubr.f32.gmra.mrb[0].mxu0 %v5411
    %v6782 = vpop.f32.mrb[0].mxu0
    %v6783 = vadd.f32 %v6711, %v6782
    %v6784 = vpop.f32.mrb[0].mxu0
    %6785 = vmatprep.mubr.f32.mxu0 0.0
    %6786 = vmatmul.mubr.f32.gmra.mrb[0].mxu0 %v5414
    %v6787 = vpop.f32.mrb[0].mxu0
    %v6788 = vadd.f32 %v6711, %v6787
    %v6789 = vpop.f32.mrb[0].mxu0
    %6790 = vdwg.mxu0
    %v6791 = vmul.f32 %v6783, 0.35355338
    %v6792 = vmul.f32 %v6788, 0.35355338
    %6793 = vrot.lane.b32.xlu0 %v5499, 112
    %v6794 = vpop.permute.xlu0 %6793
    %v6797 = vsel %vm661, %v56, 0
    %6799 = vmatprep.subr.mxu0 0.0
    %6800 = vmatpush1.xpose.msra.mxu0 %v6797
    %6801 = vmatprep.subr.mxu0 0.0
    %6802 = vmatpush1.xpose.msra.mxu0 0.0
    %6803 = vmatprep.subr.mxu0 0.0
    %6804 = vmatpush1.xpose.msra.mxu0 0.0
    %6805 = vmatprep.subr.mxu0 0.0
    %6806 = vmatpush1.xpose.msra.mxu0 0.0
    %6807 = vmatprep.subr.mxu0 0.0
    %6808 = vmatpush1.xpose.msra.mxu0 0.0
    %6809 = vmatprep.subr.mxu0 0.0
    %6810 = vmatpush1.xpose.msra.mxu0 0.0
    %6811 = vmatprep.subr.mxu0 0.0
    %6812 = vmatpush1.xpose.msra.mxu0 0.0
    %6813 = vmatprep.subr.mxu0 0.0
    %6814 = vmatpush1.xpose.msra.mxu0 0.0
    %6815 = vmatprep.subr.mxu0 0.0
    %6816 = vmatpush1.xpose.msra.mxu0 0.0
    %6817 = vmatprep.subr.mxu0 0.0
    %6818 = vmatpush1.xpose.msra.mxu0 0.0
    %6819 = vmatprep.subr.mxu0 0.0
    %6820 = vmatpush1.xpose.msra.mxu0 0.0
    %6821 = vmatprep.subr.mxu0 0.0
    %6822 = vmatpush1.xpose.msra.mxu0 0.0
    %6823 = vmatprep.subr.mxu0 0.0
    %6824 = vmatpush1.xpose.msra.mxu0 0.0
    %6825 = vmatprep.subr.mxu0 0.0
    %6826 = vmatpush1.xpose.msra.mxu0 0.0
    %6827 = vmatprep.subr.mxu0 0.0
    %6828 = vmatpush1.xpose.msra.mxu0 0.0
    %6829 = vmatprep.subr.mxu0 0.0
    %6830 = vmatpush1.xpose.msra.mxu0 0.0
    %6831 = vmatprep.subr.mxu0 0.0
    %6832 = vmatpush1.xpose.msra.mxu0 0.0
    %6833 = vmatprep.subr.mxu0 0.0
    %6834 = vmatpush1.xpose.msra.mxu0 0.0
    %6835 = vmatprep.subr.mxu0 0.0
    %6836 = vmatpush1.xpose.msra.mxu0 0.0
    %6837 = vmatprep.subr.mxu0 0.0
    %6838 = vmatpush1.xpose.msra.mxu0 0.0
    %6839 = vmatprep.subr.mxu0 0.0
    %6840 = vmatpush1.xpose.msra.mxu0 0.0
    %6841 = vmatprep.subr.mxu0 0.0
    %6842 = vmatpush1.xpose.msra.mxu0 0.0
    %6843 = vmatprep.subr.mxu0 0.0
    %6844 = vmatpush1.xpose.msra.mxu0 0.0
    %6845 = vmatprep.subr.mxu0 0.0
    %6846 = vmatpush1.xpose.msra.mxu0 0.0
    %6847 = vmatprep.subr.mxu0 0.0
    %6848 = vmatpush1.xpose.msra.mxu0 0.0
    %6849 = vmatprep.subr.mxu0 0.0
    %6850 = vmatpush1.xpose.msra.mxu0 0.0
    %6851 = vmatprep.subr.mxu0 0.0
    %6852 = vmatpush1.xpose.msra.mxu0 0.0
    %6853 = vmatprep.subr.mxu0 0.0
    %6854 = vmatpush1.xpose.msra.mxu0 0.0
    %6855 = vmatprep.subr.mxu0 0.0
    %6856 = vmatpush1.xpose.msra.mxu0 0.0
    %6857 = vmatprep.subr.mxu0 0.0
    %6858 = vmatpush1.xpose.msra.mxu0 0.0
    %6859 = vmatprep.subr.mxu0 0.0
    %6860 = vmatpush1.xpose.msra.mxu0 0.0
    %6861 = vmatprep.subr.mxu0 0.0
    %6862 = vmatpush1.xpose.msra.mxu0 0.0
    %6863 = vmatprep.mubr.f32.mxu0 0.0
    %6864 = vmatmul.mubr.f32.gmra.mrb[0].mxu0 %v5411
    %v6865 = vpop.f32.mrb[0].mxu0
    %v6866 = vadd.f32 %v6794, %v6865
    %v6867 = vpop.f32.mrb[0].mxu0
    %6868 = vmatprep.mubr.f32.mxu0 0.0
    %6869 = vmatmul.mubr.f32.gmra.mrb[0].mxu0 %v5414
    %v6870 = vpop.f32.mrb[0].mxu0
    %v6871 = vadd.f32 %v6794, %v6870
    %v6872 = vpop.f32.mrb[0].mxu0
    %6873 = vdwg.mxu0
    %6874 = vrot.lane.b32.xlu0 %v5581, 112
    %v6875 = vpop.permute.xlu0 %6874
    %v6878 = vsel %vm661, %v60, 0
    %6880 = vmatprep.subr.mxu0 0.0
    %6881 = vmatpush1.xpose.msra.mxu0 %v6878
    %6882 = vmatprep.subr.mxu0 0.0
    %6883 = vmatpush1.xpose.msra.mxu0 0.0
    %6884 = vmatprep.subr.mxu0 0.0
    %6885 = vmatpush1.xpose.msra.mxu0 0.0
    %6886 = vmatprep.subr.mxu0 0.0
    %6887 = vmatpush1.xpose.msra.mxu0 0.0
    %6888 = vmatprep.subr.mxu0 0.0
    %6889 = vmatpush1.xpose.msra.mxu0 0.0
    %6890 = vmatprep.subr.mxu0 0.0
    %6891 = vmatpush1.xpose.msra.mxu0 0.0
    %6892 = vmatprep.subr.mxu0 0.0
    %6893 = vmatpush1.xpose.msra.mxu0 0.0
    %6894 = vmatprep.subr.mxu0 0.0
    %6895 = vmatpush1.xpose.msra.mxu0 0.0
    %6896 = vmatprep.subr.mxu0 0.0
    %6897 = vmatpush1.xpose.msra.mxu0 0.0
    %6898 = vmatprep.subr.mxu0 0.0
    %6899 = vmatpush1.xpose.msra.mxu0 0.0
    %6900 = vmatprep.subr.mxu0 0.0
    %6901 = vmatpush1.xpose.msra.mxu0 0.0
    %6902 = vmatprep.subr.mxu0 0.0
    %6903 = vmatpush1.xpose.msra.mxu0 0.0
    %6904 = vmatprep.subr.mxu0 0.0
    %6905 = vmatpush1.xpose.msra.mxu0 0.0
    %6906 = vmatprep.subr.mxu0 0.0
    %6907 = vmatpush1.xpose.msra.mxu0 0.0
    %6908 = vmatprep.subr.mxu0 0.0
    %6909 = vmatpush1.xpose.msra.mxu0 0.0
    %6910 = vmatprep.subr.mxu0 0.0
    %6911 = vmatpush1.xpose.msra.mxu0 0.0
    %6912 = vmatprep.subr.mxu0 0.0
    %6913 = vmatpush1.xpose.msra.mxu0 0.0
    %6914 = vmatprep.subr.mxu0 0.0
    %6915 = vmatpush1.xpose.msra.mxu0 0.0
    %6916 = vmatprep.subr.mxu0 0.0
    %6917 = vmatpush1.xpose.msra.mxu0 0.0
    %6918 = vmatprep.subr.mxu0 0.0
    %6919 = vmatpush1.xpose.msra.mxu0 0.0
    %6920 = vmatprep.subr.mxu0 0.0
    %6921 = vmatpush1.xpose.msra.mxu0 0.0
    %6922 = vmatprep.subr.mxu0 0.0
    %6923 = vmatpush1.xpose.msra.mxu0 0.0
    %6924 = vmatprep.subr.mxu0 0.0
    %6925 = vmatpush1.xpose.msra.mxu0 0.0
    %6926 = vmatprep.subr.mxu0 0.0
    %6927 = vmatpush1.xpose.msra.mxu0 0.0
    %6928 = vmatprep.subr.mxu0 0.0
    %6929 = vmatpush1.xpose.msra.mxu0 0.0
    %6930 = vmatprep.subr.mxu0 0.0
    %6931 = vmatpush1.xpose.msra.mxu0 0.0
    %6932 = vmatprep.subr.mxu0 0.0
    %6933 = vmatpush1.xpose.msra.mxu0 0.0
    %6934 = vmatprep.subr.mxu0 0.0
    %6935 = vmatpush1.xpose.msra.mxu0 0.0
    %6936 = vmatprep.subr.mxu0 0.0
    %6937 = vmatpush1.xpose.msra.mxu0 0.0
    %6938 = vmatprep.subr.mxu0 0.0
    %6939 = vmatpush1.xpose.msra.mxu0 0.0
    %6940 = vmatprep.subr.mxu0 0.0
    %6941 = vmatpush1.xpose.msra.mxu0 0.0
    %6942 = vmatprep.subr.mxu0 0.0
    %6943 = vmatpush1.xpose.msra.mxu0 0.0
    %6944 = vmatprep.mubr.f32.mxu0 0.0
    %6945 = vmatmul.mubr.f32.gmra.mrb[0].mxu0 %v5411
    %v6946 = vpop.f32.mrb[0].mxu0
    %v6947 = vadd.f32 %v6875, %v6946
    %v6948 = vpop.f32.mrb[0].mxu0
    %6949 = vmatprep.mubr.f32.mxu0 0.0
    %6950 = vmatmul.mubr.f32.gmra.mrb[0].mxu0 %v5414
    %v6951 = vpop.f32.mrb[0].mxu0
    %v6952 = vadd.f32 %v6875, %v6951
    %v6953 = vpop.f32.mrb[0].mxu0
    %6954 = vdwg.mxu0
    %v6956 = vsel %vm912, %v6791, 0
    %v6959 = vsel %vm912, %v6866, 0
    %6961 = vmatprep.subr.mxu0 0.0
    %6962 = vmatpush1.xpose.msra.mxu0 %v6959
    %6963 = vmatprep.subr.mxu0 0.0
    %6964 = vmatpush1.xpose.msra.mxu0 0.0
    %6965 = vmatprep.subr.mxu0 0.0
    %6966 = vmatpush1.xpose.msra.mxu0 0.0
    %6967 = vmatprep.subr.mxu0 0.0
    %6968 = vmatpush1.xpose.msra.mxu0 0.0
    %6969 = vmatprep.subr.mxu0 0.0
    %6970 = vmatpush1.xpose.msra.mxu0 0.0
    %6971 = vmatprep.subr.mxu0 0.0
    %6972 = vmatpush1.xpose.msra.mxu0 0.0
    %6973 = vmatprep.subr.mxu0 0.0
    %6974 = vmatpush1.xpose.msra.mxu0 0.0
    %6975 = vmatprep.subr.mxu0 0.0
    %6976 = vmatpush1.xpose.msra.mxu0 0.0
    %6977 = vmatprep.subr.mxu0 0.0
    %6978 = vmatpush1.xpose.msra.mxu0 0.0
    %6979 = vmatprep.subr.mxu0 0.0
    %6980 = vmatpush1.xpose.msra.mxu0 0.0
    %6981 = vmatprep.subr.mxu0 0.0
    %6982 = vmatpush1.xpose.msra.mxu0 0.0
    %6983 = vmatprep.subr.mxu0 0.0
    %6984 = vmatpush1.xpose.msra.mxu0 0.0
    %6985 = vmatprep.subr.mxu0 0.0
    %6986 = vmatpush1.xpose.msra.mxu0 0.0
    %6987 = vmatprep.subr.mxu0 0.0
    %6988 = vmatpush1.xpose.msra.mxu0 0.0
    %6989 = vmatprep.subr.mxu0 0.0
    %6990 = vmatpush1.xpose.msra.mxu0 0.0
    %6991 = vmatprep.subr.mxu0 0.0
    %6992 = vmatpush1.xpose.msra.mxu0 0.0
    %6993 = vmatprep.subr.mxu0 0.0
    %6994 = vmatpush1.xpose.msra.mxu0 0.0
    %6995 = vmatprep.subr.mxu0 0.0
    %6996 = vmatpush1.xpose.msra.mxu0 0.0
    %6997 = vmatprep.subr.mxu0 0.0
    %6998 = vmatpush1.xpose.msra.mxu0 0.0
    %6999 = vmatprep.subr.mxu0 0.0
    %7000 = vmatpush1.xpose.msra.mxu0 0.0
    %7001 = vmatprep.subr.mxu0 0.0
    %7002 = vmatpush1.xpose.msra.mxu0 0.0
    %7003 = vmatprep.subr.mxu0 0.0
    %7004 = vmatpush1.xpose.msra.mxu0 0.0
    %7005 = vmatprep.subr.mxu0 0.0
    %7006 = vmatpush1.xpose.msra.mxu0 0.0
    %7007 = vmatprep.subr.mxu0 0.0
    %7008 = vmatpush1.xpose.msra.mxu0 0.0
    %7009 = vmatprep.subr.mxu0 0.0
    %7010 = vmatpush1.xpose.msra.mxu0 0.0
    %7011 = vmatprep.subr.mxu0 0.0
    %7012 = vmatpush1.xpose.msra.mxu0 0.0
    %7013 = vmatprep.subr.mxu0 0.0
    %7014 = vmatpush1.xpose.msra.mxu0 0.0
    %7015 = vmatprep.subr.mxu0 0.0
    %7016 = vmatpush1.xpose.msra.mxu0 0.0
    %7017 = vmatprep.subr.mxu0 0.0
    %7018 = vmatpush1.xpose.msra.mxu0 0.0
    %7019 = vmatprep.subr.mxu0 0.0
    %7020 = vmatpush1.xpose.msra.mxu0 0.0
    %7021 = vmatprep.subr.mxu0 0.0
    %7022 = vmatpush1.xpose.msra.mxu0 0.0
    %7023 = vmatprep.subr.mxu0 0.0
    %7024 = vmatpush1.xpose.msra.mxu0 0.0
    %7025 = vmatprep.mubr.f32.mxu0 0.0
    %7026 = vmatmul.mubr.f32.gmra.mrb[0].mxu0 %v6956
    %v7027 = vpop.f32.mrb[0].mxu0
    %v7028 = vadd.f32 0.0, %v7027
    %v7029 = vpop.f32.mrb[0].mxu0
    %7030 = vdwg.mxu0
    %v7032 = vsel %vm912, %v6792, 0
    %v7035 = vsel %vm912, %v6871, 0
    %7037 = vmatprep.subr.mxu0 0.0
    %7038 = vmatpush1.xpose.msra.mxu0 %v7035
    %7039 = vmatprep.subr.mxu0 0.0
    %7040 = vmatpush1.xpose.msra.mxu0 0.0
    %7041 = vmatprep.subr.mxu0 0.0
    %7042 = vmatpush1.xpose.msra.mxu0 0.0
    %7043 = vmatprep.subr.mxu0 0.0
    %7044 = vmatpush1.xpose.msra.mxu0 0.0
    %7045 = vmatprep.subr.mxu0 0.0
    %7046 = vmatpush1.xpose.msra.mxu0 0.0
    %7047 = vmatprep.subr.mxu0 0.0
    %7048 = vmatpush1.xpose.msra.mxu0 0.0
    %7049 = vmatprep.subr.mxu0 0.0
    %7050 = vmatpush1.xpose.msra.mxu0 0.0
    %7051 = vmatprep.subr.mxu0 0.0
    %7052 = vmatpush1.xpose.msra.mxu0 0.0
    %7053 = vmatprep.subr.mxu0 0.0
    %7054 = vmatpush1.xpose.msra.mxu0 0.0
    %7055 = vmatprep.subr.mxu0 0.0
    %7056 = vmatpush1.xpose.msra.mxu0 0.0
    %7057 = vmatprep.subr.mxu0 0.0
    %7058 = vmatpush1.xpose.msra.mxu0 0.0
    %7059 = vmatprep.subr.mxu0 0.0
    %7060 = vmatpush1.xpose.msra.mxu0 0.0
    %7061 = vmatprep.subr.mxu0 0.0
    %7062 = vmatpush1.xpose.msra.mxu0 0.0
    %7063 = vmatprep.subr.mxu0 0.0
    %7064 = vmatpush1.xpose.msra.mxu0 0.0
    %7065 = vmatprep.subr.mxu0 0.0
    %7066 = vmatpush1.xpose.msra.mxu0 0.0
    %7067 = vmatprep.subr.mxu0 0.0
    %7068 = vmatpush1.xpose.msra.mxu0 0.0
    %7069 = vmatprep.subr.mxu0 0.0
    %7070 = vmatpush1.xpose.msra.mxu0 0.0
    %7071 = vmatprep.subr.mxu0 0.0
    %7072 = vmatpush1.xpose.msra.mxu0 0.0
    %7073 = vmatprep.subr.mxu0 0.0
    %7074 = vmatpush1.xpose.msra.mxu0 0.0
    %7075 = vmatprep.subr.mxu0 0.0
    %7076 = vmatpush1.xpose.msra.mxu0 0.0
    %7077 = vmatprep.subr.mxu0 0.0
    %7078 = vmatpush1.xpose.msra.mxu0 0.0
    %7079 = vmatprep.subr.mxu0 0.0
    %7080 = vmatpush1.xpose.msra.mxu0 0.0
    %7081 = vmatprep.subr.mxu0 0.0
    %7082 = vmatpush1.xpose.msra.mxu0 0.0
    %7083 = vmatprep.subr.mxu0 0.0
    %7084 = vmatpush1.xpose.msra.mxu0 0.0
    %7085 = vmatprep.subr.mxu0 0.0
    %7086 = vmatpush1.xpose.msra.mxu0 0.0
    %7087 = vmatprep.subr.mxu0 0.0
    %7088 = vmatpush1.xpose.msra.mxu0 0.0
    %7089 = vmatprep.subr.mxu0 0.0
    %7090 = vmatpush1.xpose.msra.mxu0 0.0
    %7091 = vmatprep.subr.mxu0 0.0
    %7092 = vmatpush1.xpose.msra.mxu0 0.0
    %7093 = vmatprep.subr.mxu0 0.0
    %7094 = vmatpush1.xpose.msra.mxu0 0.0
    %7095 = vmatprep.subr.mxu0 0.0
    %7096 = vmatpush1.xpose.msra.mxu0 0.0
    %7097 = vmatprep.subr.mxu0 0.0
    %7098 = vmatpush1.xpose.msra.mxu0 0.0
    %7099 = vmatprep.subr.mxu0 0.0
    %7100 = vmatpush1.xpose.msra.mxu0 0.0
    %7101 = vmatprep.mubr.f32.mxu0 0.0
    %7102 = vmatmul.mubr.f32.gmra.mrb[0].mxu0 %v7032
    %v7103 = vpop.f32.mrb[0].mxu0
    %v7104 = vadd.f32 0.0, %v7103
    %v7105 = vpop.f32.mrb[0].mxu0
    %7106 = vdwg.mxu0
    %v7107 = vsel %vm912, %v7028, -inf
    %7108 = vmax.xlane.f32.xlu0 %v7107
    %v7109 = vpop.xlane.xlu0 %7108
    %v7110 = vsel %vm912, %v7104, -inf
    %7111 = vmax.xlane.f32.xlu0 %v7110
    %v7112 = vpop.xlane.xlu0 %7111
    %v7113 = vsub.f32 %v7028, %v7109
    %v7114 = vsub.f32 %v7104, %v7112
    %v7115 = vmul.f32 %v7113, 1.442695
    %v7116 = vpow.pop %v7115
    %v7117 = vmul.f32 %v7114, 1.442695
    %v7118 = vpow.pop %v7117
    %v7119 = vsel %vm912, %v7116, 0.0
    %7120 = vadd.xlane.f32.xlu0 %v7119
    %v7121 = vpop.xlane.xlu0 %7120
    %v7122 = vsel %vm912, %v7118, 0.0
    %7123 = vadd.xlane.f32.xlu0 %v7122
    %v7124 = vpop.xlane.xlu0 %7123
    %v7125 = vrcp.pop %v7121
    %v7126 = vrcp.pop %v7124
    %v7127 = vmul.f32 %v7116, %v7125
    %v7128 = vmul.f32 %v7118, %v7126
    %v7130 = vsel %vm912, %v7127, 0
    %7132 = vmatprep.subr.mxu0 0.0
    %7133 = vmatpush1.msra.mxu0 %v6947
    %7134 = vmatprep.subr.mxu0 0.0
    %7135 = vmatpush1.msra.mxu0 0.0
    %7136 = vmatprep.subr.mxu0 0.0
    %7137 = vmatpush1.msra.mxu0 0.0
    %7138 = vmatprep.subr.mxu0 0.0
    %7139 = vmatpush1.msra.mxu0 0.0
    %7140 = vmatprep.subr.mxu0 0.0
    %7141 = vmatpush1.msra.mxu0 0.0
    %7142 = vmatprep.subr.mxu0 0.0
    %7143 = vmatpush1.msra.mxu0 0.0
    %7144 = vmatprep.subr.mxu0 0.0
    %7145 = vmatpush1.msra.mxu0 0.0
    %7146 = vmatprep.subr.mxu0 0.0
    %7147 = vmatpush1.msra.mxu0 0.0
    %7148 = vmatprep.subr.mxu0 0.0
    %7149 = vmatpush1.msra.mxu0 0.0
    %7150 = vmatprep.subr.mxu0 0.0
    %7151 = vmatpush1.msra.mxu0 0.0
    %7152 = vmatprep.subr.mxu0 0.0
    %7153 = vmatpush1.msra.mxu0 0.0
    %7154 = vmatprep.subr.mxu0 0.0
    %7155 = vmatpush1.msra.mxu0 0.0
    %7156 = vmatprep.subr.mxu0 0.0
    %7157 = vmatpush1.msra.mxu0 0.0
    %7158 = vmatprep.subr.mxu0 0.0
    %7159 = vmatpush1.msra.mxu0 0.0
    %7160 = vmatprep.subr.mxu0 0.0
    %7161 = vmatpush1.msra.mxu0 0.0
    %7162 = vmatprep.subr.mxu0 0.0
    %7163 = vmatpush1.msra.mxu0 0.0
    %7164 = vmatprep.subr.mxu0 0.0
    %7165 = vmatpush1.msra.mxu0 0.0
    %7166 = vmatprep.subr.mxu0 0.0
    %7167 = vmatpush1.msra.mxu0 0.0
    %7168 = vmatprep.subr.mxu0 0.0
    %7169 = vmatpush1.msra.mxu0 0.0
    %7170 = vmatprep.subr.mxu0 0.0
    %7171 = vmatpush1.msra.mxu0 0.0
    %7172 = vmatprep.subr.mxu0 0.0
    %7173 = vmatpush1.msra.mxu0 0.0
    %7174 = vmatprep.subr.mxu0 0.0
    %7175 = vmatpush1.msra.mxu0 0.0
    %7176 = vmatprep.subr.mxu0 0.0
    %7177 = vmatpush1.msra.mxu0 0.0
    %7178 = vmatprep.subr.mxu0 0.0
    %7179 = vmatpush1.msra.mxu0 0.0
    %7180 = vmatprep.subr.mxu0 0.0
    %7181 = vmatpush1.msra.mxu0 0.0
    %7182 = vmatprep.subr.mxu0 0.0
    %7183 = vmatpush1.msra.mxu0 0.0
    %7184 = vmatprep.subr.mxu0 0.0
    %7185 = vmatpush1.msra.mxu0 0.0
    %7186 = vmatprep.subr.mxu0 0.0
    %7187 = vmatpush1.msra.mxu0 0.0
    %7188 = vmatprep.subr.mxu0 0.0
    %7189 = vmatpush1.msra.mxu0 0.0
    %7190 = vmatprep.subr.mxu0 0.0
    %7191 = vmatpush1.msra.mxu0 0.0
    %7192 = vmatprep.subr.mxu0 0.0
    %7193 = vmatpush1.msra.mxu0 0.0
    %7194 = vmatprep.subr.mxu0 0.0
    %7195 = vmatpush1.msra.mxu0 0.0
    %7196 = vmatprep.mubr.f32.mxu0 0.0
    %7197 = vmatmul.mubr.f32.gmra.mrb[0].mxu0 %v7130
    %v7198 = vpop.f32.mrb[0].mxu0
    %v7199 = vadd.f32 0.0, %v7198
    %v7200 = vpop.f32.mrb[0].mxu0
    %7201 = vdwg.mxu0
    %v7203 = vsel %vm912, %v7128, 0
    %7205 = vmatprep.subr.mxu0 0.0
    %7206 = vmatpush1.msra.mxu0 %v6952
    %7207 = vmatprep.subr.mxu0 0.0
    %7208 = vmatpush1.msra.mxu0 0.0
    %7209 = vmatprep.subr.mxu0 0.0
    %7210 = vmatpush1.msra.mxu0 0.0
    %7211 = vmatprep.subr.mxu0 0.0
    %7212 = vmatpush1.msra.mxu0 0.0
    %7213 = vmatprep.subr.mxu0 0.0
    %7214 = vmatpush1.msra.mxu0 0.0
    %7215 = vmatprep.subr.mxu0 0.0
    %7216 = vmatpush1.msra.mxu0 0.0
    %7217 = vmatprep.subr.mxu0 0.0
    %7218 = vmatpush1.msra.mxu0 0.0
    %7219 = vmatprep.subr.mxu0 0.0
    %7220 = vmatpush1.msra.mxu0 0.0
    %7221 = vmatprep.subr.mxu0 0.0
    %7222 = vmatpush1.msra.mxu0 0.0
    %7223 = vmatprep.subr.mxu0 0.0
    %7224 = vmatpush1.msra.mxu0 0.0
    %7225 = vmatprep.subr.mxu0 0.0
    %7226 = vmatpush1.msra.mxu0 0.0
    %7227 = vmatprep.subr.mxu0 0.0
    %7228 = vmatpush1.msra.mxu0 0.0
    %7229 = vmatprep.subr.mxu0 0.0
    %7230 = vmatpush1.msra.mxu0 0.0
    %7231 = vmatprep.subr.mxu0 0.0
    %7232 = vmatpush1.msra.mxu0 0.0
    %7233 = vmatprep.subr.mxu0 0.0
    %7234 = vmatpush1.msra.mxu0 0.0
    %7235 = vmatprep.subr.mxu0 0.0
    %7236 = vmatpush1.msra.mxu0 0.0
    %7237 = vmatprep.subr.mxu0 0.0
    %7238 = vmatpush1.msra.mxu0 0.0
    %7239 = vmatprep.subr.mxu0 0.0
    %7240 = vmatpush1.msra.mxu0 0.0
    %7241 = vmatprep.subr.mxu0 0.0
    %7242 = vmatpush1.msra.mxu0 0.0
    %7243 = vmatprep.subr.mxu0 0.0
    %7244 = vmatpush1.msra.mxu0 0.0
    %7245 = vmatprep.subr.mxu0 0.0
    %7246 = vmatpush1.msra.mxu0 0.0
    %7247 = vmatprep.subr.mxu0 0.0
    %7248 = vmatpush1.msra.mxu0 0.0
    %7249 = vmatprep.subr.mxu0 0.0
    %7250 = vmatpush1.msra.mxu0 0.0
    %7251 = vmatprep.subr.mxu0 0.0
    %7252 = vmatpush1.msra.mxu0 0.0
    %7253 = vmatprep.subr.mxu0 0.0
    %7254 = vmatpush1.msra.mxu0 0.0
    %7255 = vmatprep.subr.mxu0 0.0
    %7256 = vmatpush1.msra.mxu0 0.0
    %7257 = vmatprep.subr.mxu0 0.0
    %7258 = vmatpush1.msra.mxu0 0.0
    %7259 = vmatprep.subr.mxu0 0.0
    %7260 = vmatpush1.msra.mxu0 0.0
    %7261 = vmatprep.subr.mxu0 0.0
    %7262 = vmatpush1.msra.mxu0 0.0
    %7263 = vmatprep.subr.mxu0 0.0
    %7264 = vmatpush1.msra.mxu0 0.0
    %7265 = vmatprep.subr.mxu0 0.0
    %7266 = vmatpush1.msra.mxu0 0.0
    %7267 = vmatprep.subr.mxu0 0.0
    %7268 = vmatpush1.msra.mxu0 0.0
    %7269 = vmatprep.mubr.f32.mxu0 0.0
    %7270 = vmatmul.mubr.f32.gmra.mrb[0].mxu0 %v7203
    %v7271 = vpop.f32.mrb[0].mxu0
    %v7272 = vadd.f32 0.0, %v7271
    %v7273 = vpop.f32.mrb[0].mxu0
    %7274 = vdwg.mxu0
    %v7276 = vsel %vm912, %v7199, 0
    %v7279 = vsel %vm912, %v7272, 0
    %7281 = vmatprep.subr.mxu0 0.0
    %7282 = vmatpush1.msra.mxu0 %v64
    %7283 = vmatprep.subr.mxu0 0.0
    %7284 = vmatpush1.msra.mxu0 0.0
    %7285 = vmatprep.subr.mxu0 0.0
    %7286 = vmatpush1.msra.mxu0 0.0
    %7287 = vmatprep.subr.mxu0 0.0
    %7288 = vmatpush1.msra.mxu0 0.0
    %7289 = vmatprep.subr.mxu0 0.0
    %7290 = vmatpush1.msra.mxu0 0.0
    %7291 = vmatprep.subr.mxu0 0.0
    %7292 = vmatpush1.msra.mxu0 0.0
    %7293 = vmatprep.subr.mxu0 0.0
    %7294 = vmatpush1.msra.mxu0 0.0
    %7295 = vmatprep.subr.mxu0 0.0
    %7296 = vmatpush1.msra.mxu0 0.0
    %7297 = vmatprep.subr.mxu0 0.0
    %7298 = vmatpush1.msra.mxu0 0.0
    %7299 = vmatprep.subr.mxu0 0.0
    %7300 = vmatpush1.msra.mxu0 0.0
    %7301 = vmatprep.subr.mxu0 0.0
    %7302 = vmatpush1.msra.mxu0 0.0
    %7303 = vmatprep.subr.mxu0 0.0
    %7304 = vmatpush1.msra.mxu0 0.0
    %7305 = vmatprep.subr.mxu0 0.0
    %7306 = vmatpush1.msra.mxu0 0.0
    %7307 = vmatprep.subr.mxu0 0.0
    %7308 = vmatpush1.msra.mxu0 0.0
    %7309 = vmatprep.subr.mxu0 0.0
    %7310 = vmatpush1.msra.mxu0 0.0
    %7311 = vmatprep.subr.mxu0 0.0
    %7312 = vmatpush1.msra.mxu0 0.0
    %7313 = vmatprep.subr.mxu0 0.0
    %7314 = vmatpush1.msra.mxu0 0.0
    %7315 = vmatprep.subr.mxu0 0.0
    %7316 = vmatpush1.msra.mxu0 0.0
    %7317 = vmatprep.subr.mxu0 0.0
    %7318 = vmatpush1.msra.mxu0 0.0
    %7319 = vmatprep.subr.mxu0 0.0
    %7320 = vmatpush1.msra.mxu0 0.0
    %7321 = vmatprep.subr.mxu0 0.0
    %7322 = vmatpush1.msra.mxu0 0.0
    %7323 = vmatprep.subr.mxu0 0.0
    %7324 = vmatpush1.msra.mxu0 0.0
    %7325 = vmatprep.subr.mxu0 0.0
    %7326 = vmatpush1.msra.mxu0 0.0
    %7327 = vmatprep.subr.mxu0 0.0
    %7328 = vmatpush1.msra.mxu0 0.0
    %7329 = vmatprep.subr.mxu0 0.0
    %7330 = vmatpush1.msra.mxu0 0.0
    %7331 = vmatprep.subr.mxu0 0.0
    %7332 = vmatpush1.msra.mxu0 0.0
    %7333 = vmatprep.subr.mxu0 0.0
    %7334 = vmatpush1.msra.mxu0 0.0
    %7335 = vmatprep.subr.mxu0 0.0
    %7336 = vmatpush1.msra.mxu0 0.0
    %7337 = vmatprep.subr.mxu0 0.0
    %7338 = vmatpush1.msra.mxu0 0.0
    %7339 = vmatprep.subr.mxu0 0.0
    %7340 = vmatpush1.msra.mxu0 0.0
    %7341 = vmatprep.subr.mxu0 0.0
    %7342 = vmatpush1.msra.mxu0 0.0
    %7343 = vmatprep.subr.mxu0 0.0
    %7344 = vmatpush1.msra.mxu0 0.0
    %7345 = vmatprep.mubr.f32.mxu0 0.0
    %7346 = vmatmul.mubr.f32.gmra.mrb[0].mxu0 %v7276
    %v7347 = vpop.f32.mrb[0].mxu0
    %v7348 = vadd.f32 0.0, %v7347
    %v7349 = vpop.f32.mrb[0].mxu0
    %7350 = vmatprep.mubr.f32.mxu0 0.0
    %7351 = vmatmul.mubr.f32.gmra.mrb[0].mxu0 %v7279
    %v7352 = vpop.f32.mrb[0].mxu0
    %v7353 = vadd.f32 0.0, %v7352
    %v7354 = vpop.f32.mrb[0].mxu0
    %7355 = vdwg.mxu0
    %v7356 = vadd.f32 %v6702, %v7348
    %v7357 = vadd.f32 %v6707, %v7353
    %7358 = vrot.lane.b32.xlu0 %v5409, 104
    %v7359 = vpop.permute.xlu0 %7358
    %v7362 = vsel %vm661, %v53, 0
    %7364 = vmatprep.subr.mxu0 0.0
    %7365 = vmatpush1.xpose.msra.mxu0 %v7362
    %7366 = vmatprep.subr.mxu0 0.0
    %7367 = vmatpush1.xpose.msra.mxu0 0.0
    %7368 = vmatprep.subr.mxu0 0.0
    %7369 = vmatpush1.xpose.msra.mxu0 0.0
    %7370 = vmatprep.subr.mxu0 0.0
    %7371 = vmatpush1.xpose.msra.mxu0 0.0
    %7372 = vmatprep.subr.mxu0 0.0
    %7373 = vmatpush1.xpose.msra.mxu0 0.0
    %7374 = vmatprep.subr.mxu0 0.0
    %7375 = vmatpush1.xpose.msra.mxu0 0.0
    %7376 = vmatprep.subr.mxu0 0.0
    %7377 = vmatpush1.xpose.msra.mxu0 0.0
    %7378 = vmatprep.subr.mxu0 0.0
    %7379 = vmatpush1.xpose.msra.mxu0 0.0
    %7380 = vmatprep.subr.mxu0 0.0
    %7381 = vmatpush1.xpose.msra.mxu0 0.0
    %7382 = vmatprep.subr.mxu0 0.0
    %7383 = vmatpush1.xpose.msra.mxu0 0.0
    %7384 = vmatprep.subr.mxu0 0.0
    %7385 = vmatpush1.xpose.msra.mxu0 0.0
    %7386 = vmatprep.subr.mxu0 0.0
    %7387 = vmatpush1.xpose.msra.mxu0 0.0
    %7388 = vmatprep.subr.mxu0 0.0
    %7389 = vmatpush1.xpose.msra.mxu0 0.0
    %7390 = vmatprep.subr.mxu0 0.0
    %7391 = vmatpush1.xpose.msra.mxu0 0.0
    %7392 = vmatprep.subr.mxu0 0.0
    %7393 = vmatpush1.xpose.msra.mxu0 0.0
    %7394 = vmatprep.subr.mxu0 0.0
    %7395 = vmatpush1.xpose.msra.mxu0 0.0
    %7396 = vmatprep.subr.mxu0 0.0
    %7397 = vmatpush1.xpose.msra.mxu0 0.0
    %7398 = vmatprep.subr.mxu0 0.0
    %7399 = vmatpush1.xpose.msra.mxu0 0.0
    %7400 = vmatprep.subr.mxu0 0.0
    %7401 = vmatpush1.xpose.msra.mxu0 0.0
    %7402 = vmatprep.subr.mxu0 0.0
    %7403 = vmatpush1.xpose.msra.mxu0 0.0
    %7404 = vmatprep.subr.mxu0 0.0
    %7405 = vmatpush1.xpose.msra.mxu0 0.0
    %7406 = vmatprep.subr.mxu0 0.0
    %7407 = vmatpush1.xpose.msra.mxu0 0.0
    %7408 = vmatprep.subr.mxu0 0.0
    %7409 = vmatpush1.xpose.msra.mxu0 0.0
    %7410 = vmatprep.subr.mxu0 0.0
    %7411 = vmatpush1.xpose.msra.mxu0 0.0
    %7412 = vmatprep.subr.mxu0 0.0
    %7413 = vmatpush1.xpose.msra.mxu0 0.0
    %7414 = vmatprep.subr.mxu0 0.0
    %7415 = vmatpush1.xpose.msra.mxu0 0.0
    %7416 = vmatprep.subr.mxu0 0.0
    %7417 = vmatpush1.xpose.msra.mxu0 0.0
    %7418 = vmatprep.subr.mxu0 0.0
    %7419 = vmatpush1.xpose.msra.mxu0 0.0
    %7420 = vmatprep.subr.mxu0 0.0
    %7421 = vmatpush1.xpose.msra.mxu0 0.0
    %7422 = vmatprep.subr.mxu0 0.0
    %7423 = vmatpush1.xpose.msra.mxu0 0.0
    %7424 = vmatprep.subr.mxu0 0.0
    %7425 = vmatpush1.xpose.msra.mxu0 0.0
    %7426 = vmatprep.subr.mxu0 0.0
    %7427 = vmatpush1.xpose.msra.mxu0 0.0
    %7428 = vmatprep.mubr.f32.mxu0 0.0
    %7429 = vmatmul.mubr.f32.gmra.mrb[0].mxu0 %v5411
    %v7430 = vpop.f32.mrb[0].mxu0
    %v7431 = vadd.f32 %v7359, %v7430
    %v7432 = vpop.f32.mrb[0].mxu0
    %7433 = vmatprep.mubr.f32.mxu0 0.0
    %7434 = vmatmul.mubr.f32.gmra.mrb[0].mxu0 %v5414
    %v7435 = vpop.f32.mrb[0].mxu0
    %v7436 = vadd.f32 %v7359, %v7435
    %v7437 = vpop.f32.mrb[0].mxu0
    %7438 = vdwg.mxu0
    %v7439 = vmul.f32 %v7431, 0.35355338
    %v7440 = vmul.f32 %v7436, 0.35355338
    %7441 = vrot.lane.b32.xlu0 %v5499, 104
    %v7442 = vpop.permute.xlu0 %7441
    %v7445 = vsel %vm661, %v57, 0
    %7447 = vmatprep.subr.mxu0 0.0
    %7448 = vmatpush1.xpose.msra.mxu0 %v7445
    %7449 = vmatprep.subr.mxu0 0.0
    %7450 = vmatpush1.xpose.msra.mxu0 0.0
    %7451 = vmatprep.subr.mxu0 0.0
    %7452 = vmatpush1.xpose.msra.mxu0 0.0
    %7453 = vmatprep.subr.mxu0 0.0
    %7454 = vmatpush1.xpose.msra.mxu0 0.0
    %7455 = vmatprep.subr.mxu0 0.0
    %7456 = vmatpush1.xpose.msra.mxu0 0.0
    %7457 = vmatprep.subr.mxu0 0.0
    %7458 = vmatpush1.xpose.msra.mxu0 0.0
    %7459 = vmatprep.subr.mxu0 0.0
    %7460 = vmatpush1.xpose.msra.mxu0 0.0
    %7461 = vmatprep.subr.mxu0 0.0
    %7462 = vmatpush1.xpose.msra.mxu0 0.0
    %7463 = vmatprep.subr.mxu0 0.0
    %7464 = vmatpush1.xpose.msra.mxu0 0.0
    %7465 = vmatprep.subr.mxu0 0.0
    %7466 = vmatpush1.xpose.msra.mxu0 0.0
    %7467 = vmatprep.subr.mxu0 0.0
    %7468 = vmatpush1.xpose.msra.mxu0 0.0
    %7469 = vmatprep.subr.mxu0 0.0
    %7470 = vmatpush1.xpose.msra.mxu0 0.0
    %7471 = vmatprep.subr.mxu0 0.0
    %7472 = vmatpush1.xpose.msra.mxu0 0.0
    %7473 = vmatprep.subr.mxu0 0.0
    %7474 = vmatpush1.xpose.msra.mxu0 0.0
    %7475 = vmatprep.subr.mxu0 0.0
    %7476 = vmatpush1.xpose.msra.mxu0 0.0
    %7477 = vmatprep.subr.mxu0 0.0
    %7478 = vmatpush1.xpose.msra.mxu0 0.0
    %7479 = vmatprep.subr.mxu0 0.0
    %7480 = vmatpush1.xpose.msra.mxu0 0.0
    %7481 = vmatprep.subr.mxu0 0.0
    %7482 = vmatpush1.xpose.msra.mxu0 0.0
    %7483 = vmatprep.subr.mxu0 0.0
    %7484 = vmatpush1.xpose.msra.mxu0 0.0
    %7485 = vmatprep.subr.mxu0 0.0
    %7486 = vmatpush1.xpose.msra.mxu0 0.0
    %7487 = vmatprep.subr.mxu0 0.0
    %7488 = vmatpush1.xpose.msra.mxu0 0.0
    %7489 = vmatprep.subr.mxu0 0.0
    %7490 = vmatpush1.xpose.msra.mxu0 0.0
    %7491 = vmatprep.subr.mxu0 0.0
    %7492 = vmatpush1.xpose.msra.mxu0 0.0
    %7493 = vmatprep.subr.mxu0 0.0
    %7494 = vmatpush1.xpose.msra.mxu0 0.0
    %7495 = vmatprep.subr.mxu0 0.0
    %7496 = vmatpush1.xpose.msra.mxu0 0.0
    %7497 = vmatprep.subr.mxu0 0.0
    %7498 = vmatpush1.xpose.msra.mxu0 0.0
    %7499 = vmatprep.subr.mxu0 0.0
    %7500 = vmatpush1.xpose.msra.mxu0 0.0
    %7501 = vmatprep.subr.mxu0 0.0
    %7502 = vmatpush1.xpose.msra.mxu0 0.0
    %7503 = vmatprep.subr.mxu0 0.0
    %7504 = vmatpush1.xpose.msra.mxu0 0.0
    %7505 = vmatprep.subr.mxu0 0.0
    %7506 = vmatpush1.xpose.msra.mxu0 0.0
    %7507 = vmatprep.subr.mxu0 0.0
    %7508 = vmatpush1.xpose.msra.mxu0 0.0
    %7509 = vmatprep.subr.mxu0 0.0
    %7510 = vmatpush1.xpose.msra.mxu0 0.0
    %7511 = vmatprep.mubr.f32.mxu0 0.0
    %7512 = vmatmul.mubr.f32.gmra.mrb[0].mxu0 %v5411
    %v7513 = vpop.f32.mrb[0].mxu0
    %v7514 = vadd.f32 %v7442, %v7513
    %v7515 = vpop.f32.mrb[0].mxu0
    %7516 = vmatprep.mubr.f32.mxu0 0.0
    %7517 = vmatmul.mubr.f32.gmra.mrb[0].mxu0 %v5414
    %v7518 = vpop.f32.mrb[0].mxu0
    %v7519 = vadd.f32 %v7442, %v7518
    %v7520 = vpop.f32.mrb[0].mxu0
    %7521 = vdwg.mxu0
    %7522 = vrot.lane.b32.xlu0 %v5581, 104
    %v7523 = vpop.permute.xlu0 %7522
    %v7526 = vsel %vm661, %v61, 0
    %7528 = vmatprep.subr.mxu0 0.0
    %7529 = vmatpush1.xpose.msra.mxu0 %v7526
    %7530 = vmatprep.subr.mxu0 0.0
    %7531 = vmatpush1.xpose.msra.mxu0 0.0
    %7532 = vmatprep.subr.mxu0 0.0
    %7533 = vmatpush1.xpose.msra.mxu0 0.0
    %7534 = vmatprep.subr.mxu0 0.0
    %7535 = vmatpush1.xpose.msra.mxu0 0.0
    %7536 = vmatprep.subr.mxu0 0.0
    %7537 = vmatpush1.xpose.msra.mxu0 0.0
    %7538 = vmatprep.subr.mxu0 0.0
    %7539 = vmatpush1.xpose.msra.mxu0 0.0
    %7540 = vmatprep.subr.mxu0 0.0
    %7541 = vmatpush1.xpose.msra.mxu0 0.0
    %7542 = vmatprep.subr.mxu0 0.0
    %7543 = vmatpush1.xpose.msra.mxu0 0.0
    %7544 = vmatprep.subr.mxu0 0.0
    %7545 = vmatpush1.xpose.msra.mxu0 0.0
    %7546 = vmatprep.subr.mxu0 0.0
    %7547 = vmatpush1.xpose.msra.mxu0 0.0
    %7548 = vmatprep.subr.mxu0 0.0
    %7549 = vmatpush1.xpose.msra.mxu0 0.0
    %7550 = vmatprep.subr.mxu0 0.0
    %7551 = vmatpush1.xpose.msra.mxu0 0.0
    %7552 = vmatprep.subr.mxu0 0.0
    %7553 = vmatpush1.xpose.msra.mxu0 0.0
    %7554 = vmatprep.subr.mxu0 0.0
    %7555 = vmatpush1.xpose.msra.mxu0 0.0
    %7556 = vmatprep.subr.mxu0 0.0
    %7557 = vmatpush1.xpose.msra.mxu0 0.0
    %7558 = vmatprep.subr.mxu0 0.0
    %7559 = vmatpush1.xpose.msra.mxu0 0.0
    %7560 = vmatprep.subr.mxu0 0.0
    %7561 = vmatpush1.xpose.msra.mxu0 0.0
    %7562 = vmatprep.subr.mxu0 0.0
    %7563 = vmatpush1.xpose.msra.mxu0 0.0
    %7564 = vmatprep.subr.mxu0 0.0
    %7565 = vmatpush1.xpose.msra.mxu0 0.0
    %7566 = vmatprep.subr.mxu0 0.0
    %7567 = vmatpush1.xpose.msra.mxu0 0.0
    %7568 = vmatprep.subr.mxu0 0.0
    %7569 = vmatpush1.xpose.msra.mxu0 0.0
    %7570 = vmatprep.subr.mxu0 0.0
    %7571 = vmatpush1.xpose.msra.mxu0 0.0
    %7572 = vmatprep.subr.mxu0 0.0
    %7573 = vmatpush1.xpose.msra.mxu0 0.0
    %7574 = vmatprep.subr.mxu0 0.0
    %7575 = vmatpush1.xpose.msra.mxu0 0.0
    %7576 = vmatprep.subr.mxu0 0.0
    %7577 = vmatpush1.xpose.msra.mxu0 0.0
    %7578 = vmatprep.subr.mxu0 0.0
    %7579 = vmatpush1.xpose.msra.mxu0 0.0
    %7580 = vmatprep.subr.mxu0 0.0
    %7581 = vmatpush1.xpose.msra.mxu0 0.0
    %7582 = vmatprep.subr.mxu0 0.0
    %7583 = vmatpush1.xpose.msra.mxu0 0.0
    %7584 = vmatprep.subr.mxu0 0.0
    %7585 = vmatpush1.xpose.msra.mxu0 0.0
    %7586 = vmatprep.subr.mxu0 0.0
    %7587 = vmatpush1.xpose.msra.mxu0 0.0
    %7588 = vmatprep.subr.mxu0 0.0
    %7589 = vmatpush1.xpose.msra.mxu0 0.0
    %7590 = vmatprep.subr.mxu0 0.0
    %7591 = vmatpush1.xpose.msra.mxu0 0.0
    %7592 = vmatprep.mubr.f32.mxu0 0.0
    %7593 = vmatmul.mubr.f32.gmra.mrb[0].mxu0 %v5411
    %v7594 = vpop.f32.mrb[0].mxu0
    %v7595 = vadd.f32 %v7523, %v7594
    %v7596 = vpop.f32.mrb[0].mxu0
    %7597 = vmatprep.mubr.f32.mxu0 0.0
    %7598 = vmatmul.mubr.f32.gmra.mrb[0].mxu0 %v5414
    %v7599 = vpop.f32.mrb[0].mxu0
    %v7600 = vadd.f32 %v7523, %v7599
    %v7601 = vpop.f32.mrb[0].mxu0
    %7602 = vdwg.mxu0
    %v7604 = vsel %vm912, %v7439, 0
    %v7607 = vsel %vm912, %v7514, 0
    %7609 = vmatprep.subr.mxu0 0.0
    %7610 = vmatpush1.xpose.msra.mxu0 %v7607
    %7611 = vmatprep.subr.mxu0 0.0
    %7612 = vmatpush1.xpose.msra.mxu0 0.0
    %7613 = vmatprep.subr.mxu0 0.0
    %7614 = vmatpush1.xpose.msra.mxu0 0.0
    %7615 = vmatprep.subr.mxu0 0.0
    %7616 = vmatpush1.xpose.msra.mxu0 0.0
    %7617 = vmatprep.subr.mxu0 0.0
    %7618 = vmatpush1.xpose.msra.mxu0 0.0
    %7619 = vmatprep.subr.mxu0 0.0
    %7620 = vmatpush1.xpose.msra.mxu0 0.0
    %7621 = vmatprep.subr.mxu0 0.0
    %7622 = vmatpush1.xpose.msra.mxu0 0.0
    %7623 = vmatprep.subr.mxu0 0.0
    %7624 = vmatpush1.xpose.msra.mxu0 0.0
    %7625 = vmatprep.subr.mxu0 0.0
    %7626 = vmatpush1.xpose.msra.mxu0 0.0
    %7627 = vmatprep.subr.mxu0 0.0
    %7628 = vmatpush1.xpose.msra.mxu0 0.0
    %7629 = vmatprep.subr.mxu0 0.0
    %7630 = vmatpush1.xpose.msra.mxu0 0.0
    %7631 = vmatprep.subr.mxu0 0.0
    %7632 = vmatpush1.xpose.msra.mxu0 0.0
    %7633 = vmatprep.subr.mxu0 0.0
    %7634 = vmatpush1.xpose.msra.mxu0 0.0
    %7635 = vmatprep.subr.mxu0 0.0
    %7636 = vmatpush1.xpose.msra.mxu0 0.0
    %7637 = vmatprep.subr.mxu0 0.0
    %7638 = vmatpush1.xpose.msra.mxu0 0.0
    %7639 = vmatprep.subr.mxu0 0.0
    %7640 = vmatpush1.xpose.msra.mxu0 0.0
    %7641 = vmatprep.subr.mxu0 0.0
    %7642 = vmatpush1.xpose.msra.mxu0 0.0
    %7643 = vmatprep.subr.mxu0 0.0
    %7644 = vmatpush1.xpose.msra.mxu0 0.0
    %7645 = vmatprep.subr.mxu0 0.0
    %7646 = vmatpush1.xpose.msra.mxu0 0.0
    %7647 = vmatprep.subr.mxu0 0.0
    %7648 = vmatpush1.xpose.msra.mxu0 0.0
    %7649 = vmatprep.subr.mxu0 0.0
    %7650 = vmatpush1.xpose.msra.mxu0 0.0
    %7651 = vmatprep.subr.mxu0 0.0
    %7652 = vmatpush1.xpose.msra.mxu0 0.0
    %7653 = vmatprep.subr.mxu0 0.0
    %7654 = vmatpush1.xpose.msra.mxu0 0.0
    %7655 = vmatprep.subr.mxu0 0.0
    %7656 = vmatpush1.xpose.msra.mxu0 0.0
    %7657 = vmatprep.subr.mxu0 0.0
    %7658 = vmatpush1.xpose.msra.mxu0 0.0
    %7659 = vmatprep.subr.mxu0 0.0
    %7660 = vmatpush1.xpose.msra.mxu0 0.0
    %7661 = vmatprep.subr.mxu0 0.0
    %7662 = vmatpush1.xpose.msra.mxu0 0.0
    %7663 = vmatprep.subr.mxu0 0.0
    %7664 = vmatpush1.xpose.msra.mxu0 0.0
    %7665 = vmatprep.subr.mxu0 0.0
    %7666 = vmatpush1.xpose.msra.mxu0 0.0
    %7667 = vmatprep.subr.mxu0 0.0
    %7668 = vmatpush1.xpose.msra.mxu0 0.0
    %7669 = vmatprep.subr.mxu0 0.0
    %7670 = vmatpush1.xpose.msra.mxu0 0.0
    %7671 = vmatprep.subr.mxu0 0.0
    %7672 = vmatpush1.xpose.msra.mxu0 0.0
    %7673 = vmatprep.mubr.f32.mxu0 0.0
    %7674 = vmatmul.mubr.f32.gmra.mrb[0].mxu0 %v7604
    %v7675 = vpop.f32.mrb[0].mxu0
    %v7676 = vadd.f32 0.0, %v7675
    %v7677 = vpop.f32.mrb[0].mxu0
    %7678 = vdwg.mxu0
    %v7680 = vsel %vm912, %v7440, 0
    %v7683 = vsel %vm912, %v7519, 0
    %7685 = vmatprep.subr.mxu0 0.0
    %7686 = vmatpush1.xpose.msra.mxu0 %v7683
    %7687 = vmatprep.subr.mxu0 0.0
    %7688 = vmatpush1.xpose.msra.mxu0 0.0
    %7689 = vmatprep.subr.mxu0 0.0
    %7690 = vmatpush1.xpose.msra.mxu0 0.0
    %7691 = vmatprep.subr.mxu0 0.0
    %7692 = vmatpush1.xpose.msra.mxu0 0.0
    %7693 = vmatprep.subr.mxu0 0.0
    %7694 = vmatpush1.xpose.msra.mxu0 0.0
    %7695 = vmatprep.subr.mxu0 0.0
    %7696 = vmatpush1.xpose.msra.mxu0 0.0
    %7697 = vmatprep.subr.mxu0 0.0
    %7698 = vmatpush1.xpose.msra.mxu0 0.0
    %7699 = vmatprep.subr.mxu0 0.0
    %7700 = vmatpush1.xpose.msra.mxu0 0.0
    %7701 = vmatprep.subr.mxu0 0.0
    %7702 = vmatpush1.xpose.msra.mxu0 0.0
    %7703 = vmatprep.subr.mxu0 0.0
    %7704 = vmatpush1.xpose.msra.mxu0 0.0
    %7705 = vmatprep.subr.mxu0 0.0
    %7706 = vmatpush1.xpose.msra.mxu0 0.0
    %7707 = vmatprep.subr.mxu0 0.0
    %7708 = vmatpush1.xpose.msra.mxu0 0.0
    %7709 = vmatprep.subr.mxu0 0.0
    %7710 = vmatpush1.xpose.msra.mxu0 0.0
    %7711 = vmatprep.subr.mxu0 0.0
    %7712 = vmatpush1.xpose.msra.mxu0 0.0
    %7713 = vmatprep.subr.mxu0 0.0
    %7714 = vmatpush1.xpose.msra.mxu0 0.0
    %7715 = vmatprep.subr.mxu0 0.0
    %7716 = vmatpush1.xpose.msra.mxu0 0.0
    %7717 = vmatprep.subr.mxu0 0.0
    %7718 = vmatpush1.xpose.msra.mxu0 0.0
    %7719 = vmatprep.subr.mxu0 0.0
    %7720 = vmatpush1.xpose.msra.mxu0 0.0
    %7721 = vmatprep.subr.mxu0 0.0
    %7722 = vmatpush1.xpose.msra.mxu0 0.0
    %7723 = vmatprep.subr.mxu0 0.0
    %7724 = vmatpush1.xpose.msra.mxu0 0.0
    %7725 = vmatprep.subr.mxu0 0.0
    %7726 = vmatpush1.xpose.msra.mxu0 0.0
    %7727 = vmatprep.subr.mxu0 0.0
    %7728 = vmatpush1.xpose.msra.mxu0 0.0
    %7729 = vmatprep.subr.mxu0 0.0
    %7730 = vmatpush1.xpose.msra.mxu0 0.0
    %7731 = vmatprep.subr.mxu0 0.0
    %7732 = vmatpush1.xpose.msra.mxu0 0.0
    %7733 = vmatprep.subr.mxu0 0.0
    %7734 = vmatpush1.xpose.msra.mxu0 0.0
    %7735 = vmatprep.subr.mxu0 0.0
    %7736 = vmatpush1.xpose.msra.mxu0 0.0
    %7737 = vmatprep.subr.mxu0 0.0
    %7738 = vmatpush1.xpose.msra.mxu0 0.0
    %7739 = vmatprep.subr.mxu0 0.0
    %7740 = vmatpush1.xpose.msra.mxu0 0.0
    %7741 = vmatprep.subr.mxu0 0.0
    %7742 = vmatpush1.xpose.msra.mxu0 0.0
    %7743 = vmatprep.subr.mxu0 0.0
    %7744 = vmatpush1.xpose.msra.mxu0 0.0
    %7745 = vmatprep.subr.mxu0 0.0
    %7746 = vmatpush1.xpose.msra.mxu0 0.0
    %7747 = vmatprep.subr.mxu0 0.0
    %7748 = vmatpush1.xpose.msra.mxu0 0.0
    %7749 = vmatprep.mubr.f32.mxu0 0.0
    %7750 = vmatmul.mubr.f32.gmra.mrb[0].mxu0 %v7680
    %v7751 = vpop.f32.mrb[0].mxu0
    %v7752 = vadd.f32 0.0, %v7751
    %v7753 = vpop.f32.mrb[0].mxu0
    %7754 = vdwg.mxu0
    %v7755 = vsel %vm912, %v7676, -inf
    %7756 = vmax.xlane.f32.xlu0 %v7755
    %v7757 = vpop.xlane.xlu0 %7756
    %v7758 = vsel %vm912, %v7752, -inf
    %7759 = vmax.xlane.f32.xlu0 %v7758
    %v7760 = vpop.xlane.xlu0 %7759
    %v7761 = vsub.f32 %v7676, %v7757
    %v7762 = vsub.f32 %v7752, %v7760
    %v7763 = vmul.f32 %v7761, 1.442695
    %v7764 = vpow.pop %v7763
    %v7765 = vmul.f32 %v7762, 1.442695
    %v7766 = vpow.pop %v7765
    %v7767 = vsel %vm912, %v7764, 0.0
    %7768 = vadd.xlane.f32.xlu0 %v7767
    %v7769 = vpop.xlane.xlu0 %7768
    %v7770 = vsel %vm912, %v7766, 0.0
    %7771 = vadd.xlane.f32.xlu0 %v7770
    %v7772 = vpop.xlane.xlu0 %7771
    %v7773 = vrcp.pop %v7769
    %v7774 = vrcp.pop %v7772
    %v7775 = vmul.f32 %v7764, %v7773
    %v7776 = vmul.f32 %v7766, %v7774
    %v7778 = vsel %vm912, %v7775, 0
    %7780 = vmatprep.subr.mxu0 0.0
    %7781 = vmatpush1.msra.mxu0 %v7595
    %7782 = vmatprep.subr.mxu0 0.0
    %7783 = vmatpush1.msra.mxu0 0.0
    %7784 = vmatprep.subr.mxu0 0.0
    %7785 = vmatpush1.msra.mxu0 0.0
    %7786 = vmatprep.subr.mxu0 0.0
    %7787 = vmatpush1.msra.mxu0 0.0
    %7788 = vmatprep.subr.mxu0 0.0
    %7789 = vmatpush1.msra.mxu0 0.0
    %7790 = vmatprep.subr.mxu0 0.0
    %7791 = vmatpush1.msra.mxu0 0.0
    %7792 = vmatprep.subr.mxu0 0.0
    %7793 = vmatpush1.msra.mxu0 0.0
    %7794 = vmatprep.subr.mxu0 0.0
    %7795 = vmatpush1.msra.mxu0 0.0
    %7796 = vmatprep.subr.mxu0 0.0
    %7797 = vmatpush1.msra.mxu0 0.0
    %7798 = vmatprep.subr.mxu0 0.0
    %7799 = vmatpush1.msra.mxu0 0.0
    %7800 = vmatprep.subr.mxu0 0.0
    %7801 = vmatpush1.msra.mxu0 0.0
    %7802 = vmatprep.subr.mxu0 0.0
    %7803 = vmatpush1.msra.mxu0 0.0
    %7804 = vmatprep.subr.mxu0 0.0
    %7805 = vmatpush1.msra.mxu0 0.0
    %7806 = vmatprep.subr.mxu0 0.0
    %7807 = vmatpush1.msra.mxu0 0.0
    %7808 = vmatprep.subr.mxu0 0.0
    %7809 = vmatpush1.msra.mxu0 0.0
    %7810 = vmatprep.subr.mxu0 0.0
    %7811 = vmatpush1.msra.mxu0 0.0
    %7812 = vmatprep.subr.mxu0 0.0
    %7813 = vmatpush1.msra.mxu0 0.0
    %7814 = vmatprep.subr.mxu0 0.0
    %7815 = vmatpush1.msra.mxu0 0.0
    %7816 = vmatprep.subr.mxu0 0.0
    %7817 = vmatpush1.msra.mxu0 0.0
    %7818 = vmatprep.subr.mxu0 0.0
    %7819 = vmatpush1.msra.mxu0 0.0
    %7820 = vmatprep.subr.mxu0 0.0
    %7821 = vmatpush1.msra.mxu0 0.0
    %7822 = vmatprep.subr.mxu0 0.0
    %7823 = vmatpush1.msra.mxu0 0.0
    %7824 = vmatprep.subr.mxu0 0.0
    %7825 = vmatpush1.msra.mxu0 0.0
    %7826 = vmatprep.subr.mxu0 0.0
    %7827 = vmatpush1.msra.mxu0 0.0
    %7828 = vmatprep.subr.mxu0 0.0
    %7829 = vmatpush1.msra.mxu0 0.0
    %7830 = vmatprep.subr.mxu0 0.0
    %7831 = vmatpush1.msra.mxu0 0.0
    %7832 = vmatprep.subr.mxu0 0.0
    %7833 = vmatpush1.msra.mxu0 0.0
    %7834 = vmatprep.subr.mxu0 0.0
    %7835 = vmatpush1.msra.mxu0 0.0
    %7836 = vmatprep.subr.mxu0 0.0
    %7837 = vmatpush1.msra.mxu0 0.0
    %7838 = vmatprep.subr.mxu0 0.0
    %7839 = vmatpush1.msra.mxu0 0.0
    %7840 = vmatprep.subr.mxu0 0.0
    %7841 = vmatpush1.msra.mxu0 0.0
    %7842 = vmatprep.subr.mxu0 0.0
    %7843 = vmatpush1.msra.mxu0 0.0
    %7844 = vmatprep.mubr.f32.mxu0 0.0
    %7845 = vmatmul.mubr.f32.gmra.mrb[0].mxu0 %v7778
    %v7846 = vpop.f32.mrb[0].mxu0
    %v7847 = vadd.f32 0.0, %v7846
    %v7848 = vpop.f32.mrb[0].mxu0
    %7849 = vdwg.mxu0
    %v7851 = vsel %vm912, %v7776, 0
    %7853 = vmatprep.subr.mxu0 0.0
    %7854 = vmatpush1.msra.mxu0 %v7600
    %7855 = vmatprep.subr.mxu0 0.0
    %7856 = vmatpush1.msra.mxu0 0.0
    %7857 = vmatprep.subr.mxu0 0.0
    %7858 = vmatpush1.msra.mxu0 0.0
    %7859 = vmatprep.subr.mxu0 0.0
    %7860 = vmatpush1.msra.mxu0 0.0
    %7861 = vmatprep.subr.mxu0 0.0
    %7862 = vmatpush1.msra.mxu0 0.0
    %7863 = vmatprep.subr.mxu0 0.0
    %7864 = vmatpush1.msra.mxu0 0.0
    %7865 = vmatprep.subr.mxu0 0.0
    %7866 = vmatpush1.msra.mxu0 0.0
    %7867 = vmatprep.subr.mxu0 0.0
    %7868 = vmatpush1.msra.mxu0 0.0
    %7869 = vmatprep.subr.mxu0 0.0
    %7870 = vmatpush1.msra.mxu0 0.0
    %7871 = vmatprep.subr.mxu0 0.0
    %7872 = vmatpush1.msra.mxu0 0.0
    %7873 = vmatprep.subr.mxu0 0.0
    %7874 = vmatpush1.msra.mxu0 0.0
    %7875 = vmatprep.subr.mxu0 0.0
    %7876 = vmatpush1.msra.mxu0 0.0
    %7877 = vmatprep.subr.mxu0 0.0
    %7878 = vmatpush1.msra.mxu0 0.0
    %7879 = vmatprep.subr.mxu0 0.0
    %7880 = vmatpush1.msra.mxu0 0.0
    %7881 = vmatprep.subr.mxu0 0.0
    %7882 = vmatpush1.msra.mxu0 0.0
    %7883 = vmatprep.subr.mxu0 0.0
    %7884 = vmatpush1.msra.mxu0 0.0
    %7885 = vmatprep.subr.mxu0 0.0
    %7886 = vmatpush1.msra.mxu0 0.0
    %7887 = vmatprep.subr.mxu0 0.0
    %7888 = vmatpush1.msra.mxu0 0.0
    %7889 = vmatprep.subr.mxu0 0.0
    %7890 = vmatpush1.msra.mxu0 0.0
    %7891 = vmatprep.subr.mxu0 0.0
    %7892 = vmatpush1.msra.mxu0 0.0
    %7893 = vmatprep.subr.mxu0 0.0
    %7894 = vmatpush1.msra.mxu0 0.0
    %7895 = vmatprep.subr.mxu0 0.0
    %7896 = vmatpush1.msra.mxu0 0.0
    %7897 = vmatprep.subr.mxu0 0.0
    %7898 = vmatpush1.msra.mxu0 0.0
    %7899 = vmatprep.subr.mxu0 0.0
    %7900 = vmatpush1.msra.mxu0 0.0
    %7901 = vmatprep.subr.mxu0 0.0
    %7902 = vmatpush1.msra.mxu0 0.0
    %7903 = vmatprep.subr.mxu0 0.0
    %7904 = vmatpush1.msra.mxu0 0.0
    %7905 = vmatprep.subr.mxu0 0.0
    %7906 = vmatpush1.msra.mxu0 0.0
    %7907 = vmatprep.subr.mxu0 0.0
    %7908 = vmatpush1.msra.mxu0 0.0
    %7909 = vmatprep.subr.mxu0 0.0
    %7910 = vmatpush1.msra.mxu0 0.0
    %7911 = vmatprep.subr.mxu0 0.0
    %7912 = vmatpush1.msra.mxu0 0.0
    %7913 = vmatprep.subr.mxu0 0.0
    %7914 = vmatpush1.msra.mxu0 0.0
    %7915 = vmatprep.subr.mxu0 0.0
    %7916 = vmatpush1.msra.mxu0 0.0
    %7917 = vmatprep.mubr.f32.mxu0 0.0
    %7918 = vmatmul.mubr.f32.gmra.mrb[0].mxu0 %v7851
    %v7919 = vpop.f32.mrb[0].mxu0
    %v7920 = vadd.f32 0.0, %v7919
    %v7921 = vpop.f32.mrb[0].mxu0
    %7922 = vdwg.mxu0
    %v7924 = vsel %vm912, %v7847, 0
    %v7927 = vsel %vm912, %v7920, 0
    %7929 = vmatprep.subr.mxu0 0.0
    %7930 = vmatpush1.msra.mxu0 %v65
    %7931 = vmatprep.subr.mxu0 0.0
    %7932 = vmatpush1.msra.mxu0 0.0
    %7933 = vmatprep.subr.mxu0 0.0
    %7934 = vmatpush1.msra.mxu0 0.0
    %7935 = vmatprep.subr.mxu0 0.0
    %7936 = vmatpush1.msra.mxu0 0.0
    %7937 = vmatprep.subr.mxu0 0.0
    %7938 = vmatpush1.msra.mxu0 0.0
    %7939 = vmatprep.subr.mxu0 0.0
    %7940 = vmatpush1.msra.mxu0 0.0
    %7941 = vmatprep.subr.mxu0 0.0
    %7942 = vmatpush1.msra.mxu0 0.0
    %7943 = vmatprep.subr.mxu0 0.0
    %7944 = vmatpush1.msra.mxu0 0.0
    %7945 = vmatprep.subr.mxu0 0.0
    %7946 = vmatpush1.msra.mxu0 0.0
    %7947 = vmatprep.subr.mxu0 0.0
    %7948 = vmatpush1.msra.mxu0 0.0
    %7949 = vmatprep.subr.mxu0 0.0
    %7950 = vmatpush1.msra.mxu0 0.0
    %7951 = vmatprep.subr.mxu0 0.0
    %7952 = vmatpush1.msra.mxu0 0.0
    %7953 = vmatprep.subr.mxu0 0.0
    %7954 = vmatpush1.msra.mxu0 0.0
    %7955 = vmatprep.subr.mxu0 0.0
    %7956 = vmatpush1.msra.mxu0 0.0
    %7957 = vmatprep.subr.mxu0 0.0
    %7958 = vmatpush1.msra.mxu0 0.0
    %7959 = vmatprep.subr.mxu0 0.0
    %7960 = vmatpush1.msra.mxu0 0.0
    %7961 = vmatprep.subr.mxu0 0.0
    %7962 = vmatpush1.msra.mxu0 0.0
    %7963 = vmatprep.subr.mxu0 0.0
    %7964 = vmatpush1.msra.mxu0 0.0
    %7965 = vmatprep.subr.mxu0 0.0
    %7966 = vmatpush1.msra.mxu0 0.0
    %7967 = vmatprep.subr.mxu0 0.0
    %7968 = vmatpush1.msra.mxu0 0.0
    %7969 = vmatprep.subr.mxu0 0.0
    %7970 = vmatpush1.msra.mxu0 0.0
    %7971 = vmatprep.subr.mxu0 0.0
    %7972 = vmatpush1.msra.mxu0 0.0
    %7973 = vmatprep.subr.mxu0 0.0
    %7974 = vmatpush1.msra.mxu0 0.0
    %7975 = vmatprep.subr.mxu0 0.0
    %7976 = vmatpush1.msra.mxu0 0.0
    %7977 = vmatprep.subr.mxu0 0.0
    %7978 = vmatpush1.msra.mxu0 0.0
    %7979 = vmatprep.subr.mxu0 0.0
    %7980 = vmatpush1.msra.mxu0 0.0
    %7981 = vmatprep.subr.mxu0 0.0
    %7982 = vmatpush1.msra.mxu0 0.0
    %7983 = vmatprep.subr.mxu0 0.0
    %7984 = vmatpush1.msra.mxu0 0.0
    %7985 = vmatprep.subr.mxu0 0.0
    %7986 = vmatpush1.msra.mxu0 0.0
    %7987 = vmatprep.subr.mxu0 0.0
    %7988 = vmatpush1.msra.mxu0 0.0
    %7989 = vmatprep.subr.mxu0 0.0
    %7990 = vmatpush1.msra.mxu0 0.0
    %7991 = vmatprep.subr.mxu0 0.0
    %7992 = vmatpush1.msra.mxu0 0.0
    %7993 = vmatprep.mubr.f32.mxu0 0.0
    %7994 = vmatmul.mubr.f32.gmra.mrb[0].mxu0 %v7924
    %v7995 = vpop.f32.mrb[0].mxu0
    %v7996 = vadd.f32 0.0, %v7995
    %v7997 = vpop.f32.mrb[0].mxu0
    %7998 = vmatprep.mubr.f32.mxu0 0.0
    %7999 = vmatmul.mubr.f32.gmra.mrb[0].mxu0 %v7927
    %v8000 = vpop.f32.mrb[0].mxu0
    %v8001 = vadd.f32 0.0, %v8000
    %v8002 = vpop.f32.mrb[0].mxu0
    %8003 = vdwg.mxu0
    %v8004 = vadd.f32 %v7356, %v7996
    %v8005 = vadd.f32 %v7357, %v8001
    %v8006 = vlaneseq
    %v8007 = vshrl.u32 %v8006, 7
    %v8008 = vsub.s32 4, %v8007
    %v8009 = vrot.slane %v647, %v8008
    %v8010 = vadd.f32 %v8004, %v8009
    %v8011 = vadd.f32 %v8005, %v8009
    %v8012 = vadd.f32 %v5404, %v8010
    %v8013 = vadd.f32 %v5405, %v8011
    %v8014 = vsel %vm661, %v8012, 0.0
    %8015 = vadd.xlane.f32.xlu0 %v8014
    %v8016 = vpop.xlane.xlu0 %8015
    %v8017 = vsel %vm661, %v8013, 0.0
    %8018 = vadd.xlane.f32.xlu0 %v8017
    %v8019 = vpop.xlane.xlu0 %8018
    %v8020 = vmul.f32 %v8016, %v3273
    %v8021 = vmul.f32 %v8019, %v3273
    %v8022 = vsub.f32 %v8012, %v8020
    %v8023 = vsub.f32 %v8013, %v8021
    %v8024 = vmul.f32 %v8022, %v8022
    %v8025 = vmul.f32 %v8023, %v8023
    %v8026 = vsel %vm661, %v8024, 0.0
    %8027 = vadd.xlane.f32.xlu0 %v8026
    %v8028 = vpop.xlane.xlu0 %8027
    %v8029 = vsel %vm661, %v8025, 0.0
    %8030 = vadd.xlane.f32.xlu0 %v8029
    %v8031 = vpop.xlane.xlu0 %8030
    %v8032 = vmul.f32 %v8028, %v3273
    %v8033 = vmul.f32 %v8031, %v3273
    %v8034 = vadd.f32 %v8032, 1e-05
    %v8035 = vadd.f32 %v8033, 1e-05
    %v8036 = vrsqrt.pop %v8034
    %v8037 = vrsqrt.pop %v8035
    %v8038 = vmul.f32 %v8022, %v8036
    %v8039 = vmul.f32 %v8023, %v8037
    %v8040 = vlaneseq
    %v8041 = vshrl.u32 %v8040, 7
    %v8042 = vsub.s32 6, %v8041
    %v8043 = vrot.slane %v647, %v8042
    %v8044 = vmul.f32 %v8038, %v8043
    %v8045 = vmul.f32 %v8039, %v8043
    %v8046 = vlaneseq
    %v8047 = vshrl.u32 %v8046, 7
    %v8048 = vsub.s32 7, %v8047
    %v8049 = vrot.slane %v647, %v8048
    %v8050 = vadd.f32 %v8044, %v8049
    %v8051 = vadd.f32 %v8045, %v8049
    %v8052 = vpack.c.bf16 %v8051, %v8050
    %v8053 = vlaneseq
    %v8054 = vshrl.u32 %v8053, 7
    %v8055 = vsub.s32 1, %v8054
    %v8056 = vrot.slane %v642, %v8055
    %v8057 = vlaneseq
    %v8058 = vshrl.u32 %v8057, 7
    %v8059 = vsub.s32 3, %v8058
    %v8060 = vrot.slane %v642, %v8059
    %v8061 = vlaneseq
    %v8062 = vshrl.u32 %v8061, 7
    %v8063 = vsub.s32 5, %v8062
    %v8064 = vrot.slane %v642, %v8063
    %v8065 = vlaneseq
    %v8066 = vshrl.u32 %v8065, 7
    %v8067 = vsub.s32 7, %v8066
    %v8068 = vrot.slane %v642, %v8067
    %v8069 = vlaneseq
    %v8070 = vshrl.u32 %v8069, 7
    %v8071 = vsub.s32 1, %v8070
    %v8072 = vrot.slane %v643, %v8071
    %v8073 = vlaneseq
    %v8074 = vshrl.u32 %v8073, 7
    %v8075 = vsub.s32 3, %v8074
    %v8076 = vrot.slane %v643, %v8075
    %v8077 = vlaneseq
    %v8078 = vshrl.u32 %v8077, 7
    %v8079 = vsub.s32 5, %v8078
    %v8080 = vrot.slane %v643, %v8079
    %v8081 = vlaneseq
    %v8082 = vshrl.u32 %v8081, 7
    %v8083 = vsub.s32 7, %v8082
    %v8084 = vrot.slane %v643, %v8083
    %v8085 = vlaneseq
    %v8086 = vshrl.u32 %v8085, 7
    %v8087 = vsub.s32 1, %v8086
    %v8088 = vrot.slane %v644, %v8087
    %v8089 = vlaneseq
    %v8090 = vshrl.u32 %v8089, 7
    %v8091 = vsub.s32 3, %v8090
    %v8092 = vrot.slane %v644, %v8091
    %v8093 = vlaneseq
    %v8094 = vshrl.u32 %v8093, 7
    %v8095 = vsub.s32 5, %v8094
    %v8096 = vrot.slane %v644, %v8095
    %v8097 = vlaneseq
    %v8098 = vshrl.u32 %v8097, 7
    %v8099 = vsub.s32 7, %v8098
    %v8100 = vrot.slane %v644, %v8099
    %v8101 = vlaneseq
    %v8102 = vshrl.u32 %v8101, 7
    %v8103 = vsub.s32 1, %v8102
    %v8104 = vrot.slane %v645, %v8103
    %v8105 = vlaneseq
    %v8106 = vshrl.u32 %v8105, 7
    %v8107 = vsub.s32 3, %v8106
    %v8108 = vrot.slane %v645, %v8107
    %v8109 = vlaneseq
    %v8110 = vshrl.u32 %v8109, 7
    %v8111 = vsub.s32 5, %v8110
    %v8112 = vrot.slane %v645, %v8111
    %v8113 = vlaneseq
    %v8114 = vshrl.u32 %v8113, 7
    %v8115 = vsub.s32 7, %v8114
    %v8116 = vrot.slane %v645, %v8115
    %v8133 = vlaneseq
    %v8134 = vshrl.u32 %v8133, 7
    %v8135 = vsub.s32 1, %v8134
    %v8136 = vrot.slane %v8056, %v8135
    %v8137 = vlaneseq
    %v8138 = vshrl.u32 %v8137, 7
    %v8139 = vsub.s32 1, %v8138
    %v8140 = vrot.slane %v8060, %v8139
    %v8141 = vlaneseq
    %v8142 = vshrl.u32 %v8141, 7
    %v8143 = vsub.s32 1, %v8142
    %v8144 = vrot.slane %v8064, %v8143
    %v8145 = vlaneseq
    %v8146 = vshrl.u32 %v8145, 7
    %v8147 = vsub.s32 1, %v8146
    %v8148 = vrot.slane %v8068, %v8147
    %v8149 = vlaneseq
    %v8150 = vshrl.u32 %v8149, 7
    %v8151 = vsub.s32 1, %v8150
    %v8152 = vrot.slane %v8072, %v8151
    %v8153 = vlaneseq
    %v8154 = vshrl.u32 %v8153, 7
    %v8155 = vsub.s32 1, %v8154
    %v8156 = vrot.slane %v8076, %v8155
    %v8157 = vlaneseq
    %v8158 = vshrl.u32 %v8157, 7
    %v8159 = vsub.s32 1, %v8158
    %v8160 = vrot.slane %v8080, %v8159
    %v8161 = vlaneseq
    %v8162 = vshrl.u32 %v8161, 7
    %v8163 = vsub.s32 1, %v8162
    %v8164 = vrot.slane %v8084, %v8163
    %v8165 = vlaneseq
    %v8166 = vshrl.u32 %v8165, 7
    %v8167 = vsub.s32 1, %v8166
    %v8168 = vrot.slane %v8088, %v8167
    %v8169 = vlaneseq
    %v8170 = vshrl.u32 %v8169, 7
    %v8171 = vsub.s32 1, %v8170
    %v8172 = vrot.slane %v8092, %v8171
    %v8173 = vlaneseq
    %v8174 = vshrl.u32 %v8173, 7
    %v8175 = vsub.s32 1, %v8174
    %v8176 = vrot.slane %v8096, %v8175
    %v8177 = vlaneseq
    %v8178 = vshrl.u32 %v8177, 7
    %v8179 = vsub.s32 1, %v8178
    %v8180 = vrot.slane %v8100, %v8179
    %v8181 = vlaneseq
    %v8182 = vshrl.u32 %v8181, 7
    %v8183 = vsub.s32 1, %v8182
    %v8184 = vrot.slane %v8104, %v8183
    %v8185 = vlaneseq
    %v8186 = vshrl.u32 %v8185, 7
    %v8187 = vsub.s32 1, %v8186
    %v8188 = vrot.slane %v8108, %v8187
    %v8189 = vlaneseq
    %v8190 = vshrl.u32 %v8189, 7
    %v8191 = vsub.s32 1, %v8190
    %v8192 = vrot.slane %v8112, %v8191
    %v8193 = vlaneseq
    %v8194 = vshrl.u32 %v8193, 7
    %v8195 = vsub.s32 1, %v8194
    %v8196 = vrot.slane %v8116, %v8195
    %v8453 = vunpack.c.l.b16 %v322
    %v8454 = vunpack.c.l.b16 %v323
    %v8455 = vunpack.c.l.b16 %v324
    %v8456 = vunpack.c.l.b16 %v325
    %v8457 = vunpack.c.l.b16 %v326
    %v8458 = vunpack.c.l.b16 %v327
    %v8459 = vunpack.c.l.b16 %v328
    %v8460 = vunpack.c.l.b16 %v329
    %v8461 = vunpack.c.l.b16 %v330
    %v8462 = vunpack.c.l.b16 %v331
    %v8463 = vunpack.c.l.b16 %v332
    %v8464 = vunpack.c.l.b16 %v333
    %v8465 = vunpack.c.l.b16 %v334
    %v8466 = vunpack.c.l.b16 %v335
    %v8467 = vunpack.c.l.b16 %v336
    %v8468 = vunpack.c.l.b16 %v337
    %v8469 = vunpack.c.l.b16 %v338
    %v8470 = vunpack.c.l.b16 %v339
    %v8471 = vunpack.c.l.b16 %v340
    %v8472 = vunpack.c.l.b16 %v341
    %v8473 = vunpack.c.l.b16 %v342
    %v8474 = vunpack.c.l.b16 %v343
    %v8475 = vunpack.c.l.b16 %v344
    %v8476 = vunpack.c.l.b16 %v345
    %v8477 = vunpack.c.l.b16 %v346
    %v8478 = vunpack.c.l.b16 %v347
    %v8479 = vunpack.c.l.b16 %v348
    %v8480 = vunpack.c.l.b16 %v349
    %v8481 = vunpack.c.l.b16 %v350
    %v8482 = vunpack.c.l.b16 %v351
    %v8483 = vunpack.c.l.b16 %v352
    %v8484 = vunpack.c.l.b16 %v353
    %v8485 = vunpack.c.l.b16 %v354
    %v8486 = vunpack.c.l.b16 %v355
    %v8487 = vunpack.c.l.b16 %v356
    %v8488 = vunpack.c.l.b16 %v357
    %v8489 = vunpack.c.l.b16 %v358
    %v8490 = vunpack.c.l.b16 %v359
    %v8491 = vunpack.c.l.b16 %v360
    %v8492 = vunpack.c.l.b16 %v361
    %v8493 = vunpack.c.l.b16 %v362
    %v8494 = vunpack.c.l.b16 %v363
    %v8495 = vunpack.c.l.b16 %v364
    %v8496 = vunpack.c.l.b16 %v365
    %v8497 = vunpack.c.l.b16 %v366
    %v8498 = vunpack.c.l.b16 %v367
    %v8499 = vunpack.c.l.b16 %v368
    %v8500 = vunpack.c.l.b16 %v369
    %v8501 = vunpack.c.l.b16 %v370
    %v8502 = vunpack.c.l.b16 %v371
    %v8503 = vunpack.c.l.b16 %v372
    %v8504 = vunpack.c.l.b16 %v373
    %v8505 = vunpack.c.l.b16 %v374
    %v8506 = vunpack.c.l.b16 %v375
    %v8507 = vunpack.c.l.b16 %v376
    %v8508 = vunpack.c.l.b16 %v377
    %v8509 = vunpack.c.l.b16 %v378
    %v8510 = vunpack.c.l.b16 %v379
    %v8511 = vunpack.c.l.b16 %v380
    %v8512 = vunpack.c.l.b16 %v381
    %v8513 = vunpack.c.l.b16 %v382
    %v8514 = vunpack.c.l.b16 %v383
    %v8515 = vunpack.c.l.b16 %v384
    %v8516 = vunpack.c.l.b16 %v385
    %v8517 = vunpack.c.l.b16 %v386
    %v8518 = vunpack.c.l.b16 %v387
    %v8519 = vunpack.c.l.b16 %v388
    %v8520 = vunpack.c.l.b16 %v389
    %v8521 = vunpack.c.l.b16 %v390
    %v8522 = vunpack.c.l.b16 %v391
    %v8523 = vunpack.c.l.b16 %v392
    %v8524 = vunpack.c.l.b16 %v393
    %v8525 = vunpack.c.l.b16 %v394
    %v8526 = vunpack.c.l.b16 %v395
    %v8527 = vunpack.c.l.b16 %v396
    %v8528 = vunpack.c.l.b16 %v397
    %v8529 = vunpack.c.l.b16 %v398
    %v8530 = vunpack.c.l.b16 %v399
    %v8531 = vunpack.c.l.b16 %v400
    %v8532 = vunpack.c.l.b16 %v401
    %v8533 = vunpack.c.l.b16 %v402
    %v8534 = vunpack.c.l.b16 %v403
    %v8535 = vunpack.c.l.b16 %v404
    %v8536 = vunpack.c.l.b16 %v405
    %v8537 = vunpack.c.l.b16 %v406
    %v8538 = vunpack.c.l.b16 %v407
    %v8539 = vunpack.c.l.b16 %v408
    %v8540 = vunpack.c.l.b16 %v409
    %v8541 = vunpack.c.l.b16 %v410
    %v8542 = vunpack.c.l.b16 %v411
    %v8543 = vunpack.c.l.b16 %v412
    %v8544 = vunpack.c.l.b16 %v413
    %v8545 = vunpack.c.l.b16 %v414
    %v8546 = vunpack.c.l.b16 %v415
    %v8547 = vunpack.c.l.b16 %v416
    %v8548 = vunpack.c.l.b16 %v417
    %v8549 = vunpack.c.l.b16 %v418
    %v8550 = vunpack.c.l.b16 %v419
    %v8551 = vunpack.c.l.b16 %v420
    %v8552 = vunpack.c.l.b16 %v421
    %v8553 = vunpack.c.l.b16 %v422
    %v8554 = vunpack.c.l.b16 %v423
    %v8555 = vunpack.c.l.b16 %v424
    %v8556 = vunpack.c.l.b16 %v425
    %v8557 = vunpack.c.l.b16 %v426
    %v8558 = vunpack.c.l.b16 %v427
    %v8559 = vunpack.c.l.b16 %v428
    %v8560 = vunpack.c.l.b16 %v429
    %v8561 = vunpack.c.l.b16 %v430
    %v8562 = vunpack.c.l.b16 %v431
    %v8563 = vunpack.c.l.b16 %v432
    %v8564 = vunpack.c.l.b16 %v433
    %v8565 = vunpack.c.l.b16 %v434
    %v8566 = vunpack.c.l.b16 %v435
    %v8567 = vunpack.c.l.b16 %v436
    %v8568 = vunpack.c.l.b16 %v437
    %v8569 = vunpack.c.l.b16 %v438
    %v8570 = vunpack.c.l.b16 %v439
    %v8571 = vunpack.c.l.b16 %v440
    %v8572 = vunpack.c.l.b16 %v441
    %v8573 = vunpack.c.l.b16 %v442
    %v8574 = vunpack.c.l.b16 %v443
    %v8575 = vunpack.c.l.b16 %v444
    %v8576 = vunpack.c.l.b16 %v445
    %v8577 = vunpack.c.l.b16 %v446
    %v8578 = vunpack.c.l.b16 %v447
    %v8579 = vunpack.c.l.b16 %v448
    %v8580 = vunpack.c.l.b16 %v449
    %v8581 = vunpack.c.l.b16 %v450
    %v8582 = vunpack.c.l.b16 %v451
    %v8583 = vunpack.c.l.b16 %v452
    %v8584 = vunpack.c.l.b16 %v453
    %v8585 = vunpack.c.l.b16 %v454
    %v8586 = vunpack.c.l.b16 %v455
    %v8587 = vunpack.c.l.b16 %v456
    %v8588 = vunpack.c.l.b16 %v457
    %v8589 = vunpack.c.l.b16 %v458
    %v8590 = vunpack.c.l.b16 %v459
    %v8591 = vunpack.c.l.b16 %v460
    %v8592 = vunpack.c.l.b16 %v461
    %v8593 = vunpack.c.l.b16 %v462
    %v8594 = vunpack.c.l.b16 %v463
    %v8595 = vunpack.c.l.b16 %v464
    %v8596 = vunpack.c.l.b16 %v465
    %v8597 = vunpack.c.l.b16 %v466
    %v8598 = vunpack.c.l.b16 %v467
    %v8599 = vunpack.c.l.b16 %v468
    %v8600 = vunpack.c.l.b16 %v469
    %v8601 = vunpack.c.l.b16 %v470
    %v8602 = vunpack.c.l.b16 %v471
    %v8603 = vunpack.c.l.b16 %v472
    %v8604 = vunpack.c.l.b16 %v473
    %v8605 = vunpack.c.l.b16 %v474
    %v8606 = vunpack.c.l.b16 %v475
    %v8607 = vunpack.c.l.b16 %v476
    %v8608 = vunpack.c.l.b16 %v477
    %v8609 = vunpack.c.l.b16 %v478
    %v8610 = vunpack.c.l.b16 %v479
    %v8611 = vunpack.c.l.b16 %v480
    %v8612 = vunpack.c.l.b16 %v481
    %v8613 = vunpack.c.l.b16 %v482
    %v8614 = vunpack.c.l.b16 %v483
    %v8615 = vunpack.c.l.b16 %v484
    %v8616 = vunpack.c.l.b16 %v485
    %v8617 = vunpack.c.l.b16 %v486
    %v8618 = vunpack.c.l.b16 %v487
    %v8619 = vunpack.c.l.b16 %v488
    %v8620 = vunpack.c.l.b16 %v489
    %v8621 = vunpack.c.l.b16 %v490
    %v8622 = vunpack.c.l.b16 %v491
    %v8623 = vunpack.c.l.b16 %v492
    %v8624 = vunpack.c.l.b16 %v493
    %v8625 = vunpack.c.l.b16 %v494
    %v8626 = vunpack.c.l.b16 %v495
    %v8627 = vunpack.c.l.b16 %v496
    %v8628 = vunpack.c.l.b16 %v497
    %v8629 = vunpack.c.l.b16 %v498
    %v8630 = vunpack.c.l.b16 %v499
    %v8631 = vunpack.c.l.b16 %v500
    %v8632 = vunpack.c.l.b16 %v501
    %v8633 = vunpack.c.l.b16 %v502
    %v8634 = vunpack.c.l.b16 %v503
    %v8635 = vunpack.c.l.b16 %v504
    %v8636 = vunpack.c.l.b16 %v505
    %v8637 = vunpack.c.l.b16 %v506
    %v8638 = vunpack.c.l.b16 %v507
    %v8639 = vunpack.c.l.b16 %v508
    %v8640 = vunpack.c.l.b16 %v509
    %v8641 = vunpack.c.l.b16 %v510
    %v8642 = vunpack.c.l.b16 %v511
    %v8643 = vunpack.c.l.b16 %v512
    %v8644 = vunpack.c.l.b16 %v513
    %v8645 = vunpack.c.l.b16 %v514
    %v8646 = vunpack.c.l.b16 %v515
    %v8647 = vunpack.c.l.b16 %v516
    %v8648 = vunpack.c.l.b16 %v517
    %v8649 = vunpack.c.l.b16 %v518
    %v8650 = vunpack.c.l.b16 %v519
    %v8651 = vunpack.c.l.b16 %v520
    %v8652 = vunpack.c.l.b16 %v521
    %v8653 = vunpack.c.l.b16 %v522
    %v8654 = vunpack.c.l.b16 %v523
    %v8655 = vunpack.c.l.b16 %v524
    %v8656 = vunpack.c.l.b16 %v525
    %v8657 = vunpack.c.l.b16 %v526
    %v8658 = vunpack.c.l.b16 %v527
    %v8659 = vunpack.c.l.b16 %v528
    %v8660 = vunpack.c.l.b16 %v529
    %v8661 = vunpack.c.l.b16 %v530
    %v8662 = vunpack.c.l.b16 %v531
    %v8663 = vunpack.c.l.b16 %v532
    %v8664 = vunpack.c.l.b16 %v533
    %v8665 = vunpack.c.l.b16 %v534
    %v8666 = vunpack.c.l.b16 %v535
    %v8667 = vunpack.c.l.b16 %v536
    %v8668 = vunpack.c.l.b16 %v537
    %v8669 = vunpack.c.l.b16 %v538
    %v8670 = vunpack.c.l.b16 %v539
    %v8671 = vunpack.c.l.b16 %v540
    %v8672 = vunpack.c.l.b16 %v541
    %v8673 = vunpack.c.l.b16 %v542
    %v8674 = vunpack.c.l.b16 %v543
    %v8675 = vunpack.c.l.b16 %v544
    %v8676 = vunpack.c.l.b16 %v545
    %v8677 = vunpack.c.l.b16 %v546
    %v8678 = vunpack.c.l.b16 %v547
    %v8679 = vunpack.c.l.b16 %v548
    %v8680 = vunpack.c.l.b16 %v549
    %v8681 = vunpack.c.l.b16 %v550
    %v8682 = vunpack.c.l.b16 %v551
    %v8683 = vunpack.c.l.b16 %v552
    %v8684 = vunpack.c.l.b16 %v553
    %v8685 = vunpack.c.l.b16 %v554
    %v8686 = vunpack.c.l.b16 %v555
    %v8687 = vunpack.c.l.b16 %v556
    %v8688 = vunpack.c.l.b16 %v557
    %v8689 = vunpack.c.l.b16 %v558
    %v8690 = vunpack.c.l.b16 %v559
    %v8691 = vunpack.c.l.b16 %v560
    %v8692 = vunpack.c.l.b16 %v561
    %v8693 = vunpack.c.l.b16 %v562
    %v8694 = vunpack.c.l.b16 %v563
    %v8695 = vunpack.c.l.b16 %v564
    %v8696 = vunpack.c.l.b16 %v565
    %v8697 = vunpack.c.l.b16 %v566
    %v8698 = vunpack.c.l.b16 %v567
    %v8699 = vunpack.c.l.b16 %v568
    %v8700 = vunpack.c.l.b16 %v569
    %v8701 = vunpack.c.l.b16 %v570
    %v8702 = vunpack.c.l.b16 %v571
    %v8703 = vunpack.c.l.b16 %v572
    %v8704 = vunpack.c.l.b16 %v573
    %v8705 = vunpack.c.l.b16 %v574
    %v8706 = vunpack.c.l.b16 %v575
    %v8707 = vunpack.c.l.b16 %v576
    %v8708 = vunpack.c.l.b16 %v577
    %v8709 = vpack.c.b16 %v8454, %v8453
    %v8710 = vpack.c.b16 %v8456, %v8455
    %v8711 = vpack.c.b16 %v8458, %v8457
    %v8712 = vpack.c.b16 %v8460, %v8459
    %v8713 = vpack.c.b16 %v8462, %v8461
    %v8714 = vpack.c.b16 %v8464, %v8463
    %v8715 = vpack.c.b16 %v8466, %v8465
    %v8716 = vpack.c.b16 %v8468, %v8467
    %v8717 = vpack.c.b16 %v8470, %v8469
    %v8718 = vpack.c.b16 %v8472, %v8471
    %v8719 = vpack.c.b16 %v8474, %v8473
    %v8720 = vpack.c.b16 %v8476, %v8475
    %v8721 = vpack.c.b16 %v8478, %v8477
    %v8722 = vpack.c.b16 %v8480, %v8479
    %v8723 = vpack.c.b16 %v8482, %v8481
    %v8724 = vpack.c.b16 %v8484, %v8483
    %v8725 = vpack.c.b16 %v8486, %v8485
    %v8726 = vpack.c.b16 %v8488, %v8487
    %v8727 = vpack.c.b16 %v8490, %v8489
    %v8728 = vpack.c.b16 %v8492, %v8491
    %v8729 = vpack.c.b16 %v8494, %v8493
    %v8730 = vpack.c.b16 %v8496, %v8495
    %v8731 = vpack.c.b16 %v8498, %v8497
    %v8732 = vpack.c.b16 %v8500, %v8499
    %v8733 = vpack.c.b16 %v8502, %v8501
    %v8734 = vpack.c.b16 %v8504, %v8503
    %v8735 = vpack.c.b16 %v8506, %v8505
    %v8736 = vpack.c.b16 %v8508, %v8507
    %v8737 = vpack.c.b16 %v8510, %v8509
    %v8738 = vpack.c.b16 %v8512, %v8511
    %v8739 = vpack.c.b16 %v8514, %v8513
    %v8740 = vpack.c.b16 %v8516, %v8515
    %v8741 = vpack.c.b16 %v8518, %v8517
    %v8742 = vpack.c.b16 %v8520, %v8519
    %v8743 = vpack.c.b16 %v8522, %v8521
    %v8744 = vpack.c.b16 %v8524, %v8523
    %v8745 = vpack.c.b16 %v8526, %v8525
    %v8746 = vpack.c.b16 %v8528, %v8527
    %v8747 = vpack.c.b16 %v8530, %v8529
    %v8748 = vpack.c.b16 %v8532, %v8531
    %v8749 = vpack.c.b16 %v8534, %v8533
    %v8750 = vpack.c.b16 %v8536, %v8535
    %v8751 = vpack.c.b16 %v8538, %v8537
    %v8752 = vpack.c.b16 %v8540, %v8539
    %v8753 = vpack.c.b16 %v8542, %v8541
    %v8754 = vpack.c.b16 %v8544, %v8543
    %v8755 = vpack.c.b16 %v8546, %v8545
    %v8756 = vpack.c.b16 %v8548, %v8547
    %v8757 = vpack.c.b16 %v8550, %v8549
    %v8758 = vpack.c.b16 %v8552, %v8551
    %v8759 = vpack.c.b16 %v8554, %v8553
    %v8760 = vpack.c.b16 %v8556, %v8555
    %v8761 = vpack.c.b16 %v8558, %v8557
    %v8762 = vpack.c.b16 %v8560, %v8559
    %v8763 = vpack.c.b16 %v8562, %v8561
    %v8764 = vpack.c.b16 %v8564, %v8563
    %v8765 = vpack.c.b16 %v8566, %v8565
    %v8766 = vpack.c.b16 %v8568, %v8567
    %v8767 = vpack.c.b16 %v8570, %v8569
    %v8768 = vpack.c.b16 %v8572, %v8571
    %v8769 = vpack.c.b16 %v8574, %v8573
    %v8770 = vpack.c.b16 %v8576, %v8575
    %v8771 = vpack.c.b16 %v8578, %v8577
    %v8772 = vpack.c.b16 %v8580, %v8579
    %v8773 = vpack.c.b16 %v8582, %v8581
    %v8774 = vpack.c.b16 %v8584, %v8583
    %v8775 = vpack.c.b16 %v8586, %v8585
    %v8776 = vpack.c.b16 %v8588, %v8587
    %v8777 = vpack.c.b16 %v8590, %v8589
    %v8778 = vpack.c.b16 %v8592, %v8591
    %v8779 = vpack.c.b16 %v8594, %v8593
    %v8780 = vpack.c.b16 %v8596, %v8595
    %v8781 = vpack.c.b16 %v8598, %v8597
    %v8782 = vpack.c.b16 %v8600, %v8599
    %v8783 = vpack.c.b16 %v8602, %v8601
    %v8784 = vpack.c.b16 %v8604, %v8603
    %v8785 = vpack.c.b16 %v8606, %v8605
    %v8786 = vpack.c.b16 %v8608, %v8607
    %v8787 = vpack.c.b16 %v8610, %v8609
    %v8788 = vpack.c.b16 %v8612, %v8611
    %v8789 = vpack.c.b16 %v8614, %v8613
    %v8790 = vpack.c.b16 %v8616, %v8615
    %v8791 = vpack.c.b16 %v8618, %v8617
    %v8792 = vpack.c.b16 %v8620, %v8619
    %v8793 = vpack.c.b16 %v8622, %v8621
    %v8794 = vpack.c.b16 %v8624, %v8623
    %v8795 = vpack.c.b16 %v8626, %v8625
    %v8796 = vpack.c.b16 %v8628, %v8627
    %v8797 = vpack.c.b16 %v8630, %v8629
    %v8798 = vpack.c.b16 %v8632, %v8631
    %v8799 = vpack.c.b16 %v8634, %v8633
    %v8800 = vpack.c.b16 %v8636, %v8635
    %v8801 = vpack.c.b16 %v8638, %v8637
    %v8802 = vpack.c.b16 %v8640, %v8639
    %v8803 = vpack.c.b16 %v8642, %v8641
    %v8804 = vpack.c.b16 %v8644, %v8643
    %v8805 = vpack.c.b16 %v8646, %v8645
    %v8806 = vpack.c.b16 %v8648, %v8647
    %v8807 = vpack.c.b16 %v8650, %v8649
    %v8808 = vpack.c.b16 %v8652, %v8651
    %v8809 = vpack.c.b16 %v8654, %v8653
    %v8810 = vpack.c.b16 %v8656, %v8655
    %v8811 = vpack.c.b16 %v8658, %v8657
    %v8812 = vpack.c.b16 %v8660, %v8659
    %v8813 = vpack.c.b16 %v8662, %v8661
    %v8814 = vpack.c.b16 %v8664, %v8663
    %v8815 = vpack.c.b16 %v8666, %v8665
    %v8816 = vpack.c.b16 %v8668, %v8667
    %v8817 = vpack.c.b16 %v8670, %v8669
    %v8818 = vpack.c.b16 %v8672, %v8671
    %v8819 = vpack.c.b16 %v8674, %v8673
    %v8820 = vpack.c.b16 %v8676, %v8675
    %v8821 = vpack.c.b16 %v8678, %v8677
    %v8822 = vpack.c.b16 %v8680, %v8679
    %v8823 = vpack.c.b16 %v8682, %v8681
    %v8824 = vpack.c.b16 %v8684, %v8683
    %v8825 = vpack.c.b16 %v8686, %v8685
    %v8826 = vpack.c.b16 %v8688, %v8687
    %v8827 = vpack.c.b16 %v8690, %v8689
    %v8828 = vpack.c.b16 %v8692, %v8691
    %v8829 = vpack.c.b16 %v8694, %v8693
    %v8830 = vpack.c.b16 %v8696, %v8695
    %v8831 = vpack.c.b16 %v8698, %v8697
    %v8832 = vpack.c.b16 %v8700, %v8699
    %v8833 = vpack.c.b16 %v8702, %v8701
    %v8834 = vpack.c.b16 %v8704, %v8703
    %v8835 = vpack.c.b16 %v8706, %v8705
    %v8836 = vpack.c.b16 %v8708, %v8707
    %v8838 = vsel %vm661, %v8052, 0
    %v8841 = vsel %vm661, %v8709, 0
    %v8844 = vsel %vm661, %v8710, 0
    %v8847 = vsel %vm661, %v8711, 0
    %v8850 = vsel %vm661, %v8712, 0
    %v8853 = vsel %vm661, %v8713, 0
    %v8856 = vsel %vm661, %v8714, 0
    %v8859 = vsel %vm661, %v8715, 0
    %v8862 = vsel %vm661, %v8716, 0
    %v8865 = vsel %vm661, %v8717, 0
    %v8868 = vsel %vm661, %v8718, 0
    %v8871 = vsel %vm661, %v8719, 0
    %v8874 = vsel %vm661, %v8720, 0
    %v8877 = vsel %vm661, %v8721, 0
    %v8880 = vsel %vm661, %v8722, 0
    %v8883 = vsel %vm661, %v8723, 0
    %v8886 = vsel %vm661, %v8724, 0
    %v8889 = vsel %vm661, %v8725, 0
    %v8892 = vsel %vm661, %v8726, 0
    %v8895 = vsel %vm661, %v8727, 0
    %v8898 = vsel %vm661, %v8728, 0
    %v8901 = vsel %vm661, %v8729, 0
    %v8904 = vsel %vm661, %v8730, 0
    %v8907 = vsel %vm661, %v8731, 0
    %v8910 = vsel %vm661, %v8732, 0
    %v8913 = vsel %vm661, %v8733, 0
    %v8916 = vsel %vm661, %v8734, 0
    %v8919 = vsel %vm661, %v8735, 0
    %v8922 = vsel %vm661, %v8736, 0
    %v8925 = vsel %vm661, %v8737, 0
    %v8928 = vsel %vm661, %v8738, 0
    %v8931 = vsel %vm661, %v8739, 0
    %v8934 = vsel %vm661, %v8740, 0
    %v8937 = vsel %vm661, %v8741, 0
    %v8940 = vsel %vm661, %v8742, 0
    %v8943 = vsel %vm661, %v8743, 0
    %v8946 = vsel %vm661, %v8744, 0
    %v8949 = vsel %vm661, %v8745, 0
    %v8952 = vsel %vm661, %v8746, 0
    %v8955 = vsel %vm661, %v8747, 0
    %v8958 = vsel %vm661, %v8748, 0
    %v8961 = vsel %vm661, %v8749, 0
    %v8964 = vsel %vm661, %v8750, 0
    %v8967 = vsel %vm661, %v8751, 0
    %v8970 = vsel %vm661, %v8752, 0
    %v8973 = vsel %vm661, %v8753, 0
    %v8976 = vsel %vm661, %v8754, 0
    %v8979 = vsel %vm661, %v8755, 0
    %v8982 = vsel %vm661, %v8756, 0
    %v8985 = vsel %vm661, %v8757, 0
    %v8988 = vsel %vm661, %v8758, 0
    %v8991 = vsel %vm661, %v8759, 0
    %v8994 = vsel %vm661, %v8760, 0
    %v8997 = vsel %vm661, %v8761, 0
    %v9000 = vsel %vm661, %v8762, 0
    %v9003 = vsel %vm661, %v8763, 0
    %v9006 = vsel %vm661, %v8764, 0
    %v9009 = vsel %vm661, %v8765, 0
    %v9012 = vsel %vm661, %v8766, 0
    %v9015 = vsel %vm661, %v8767, 0
    %v9018 = vsel %vm661, %v8768, 0
    %v9021 = vsel %vm661, %v8769, 0
    %v9024 = vsel %vm661, %v8770, 0
    %v9027 = vsel %vm661, %v8771, 0
    %v9030 = vsel %vm661, %v8772, 0
    %v9033 = vsel %vm661, %v8773, 0
    %v9036 = vsel %vm661, %v8774, 0
    %v9039 = vsel %vm661, %v8775, 0
    %v9042 = vsel %vm661, %v8776, 0
    %v9045 = vsel %vm661, %v8777, 0
    %v9048 = vsel %vm661, %v8778, 0
    %v9051 = vsel %vm661, %v8779, 0
    %v9054 = vsel %vm661, %v8780, 0
    %v9057 = vsel %vm661, %v8781, 0
    %v9060 = vsel %vm661, %v8782, 0
    %v9063 = vsel %vm661, %v8783, 0
    %v9066 = vsel %vm661, %v8784, 0
    %v9069 = vsel %vm661, %v8785, 0
    %v9072 = vsel %vm661, %v8786, 0
    %v9075 = vsel %vm661, %v8787, 0
    %v9078 = vsel %vm661, %v8788, 0
    %v9081 = vsel %vm661, %v8789, 0
    %v9084 = vsel %vm661, %v8790, 0
    %v9087 = vsel %vm661, %v8791, 0
    %v9090 = vsel %vm661, %v8792, 0
    %v9093 = vsel %vm661, %v8793, 0
    %v9096 = vsel %vm661, %v8794, 0
    %v9099 = vsel %vm661, %v8795, 0
    %v9102 = vsel %vm661, %v8796, 0
    %v9105 = vsel %vm661, %v8797, 0
    %v9108 = vsel %vm661, %v8798, 0
    %v9111 = vsel %vm661, %v8799, 0
    %v9114 = vsel %vm661, %v8800, 0
    %v9117 = vsel %vm661, %v8801, 0
    %v9120 = vsel %vm661, %v8802, 0
    %v9123 = vsel %vm661, %v8803, 0
    %v9126 = vsel %vm661, %v8804, 0
    %v9129 = vsel %vm661, %v8805, 0
    %v9132 = vsel %vm661, %v8806, 0
    %v9135 = vsel %vm661, %v8807, 0
    %v9138 = vsel %vm661, %v8808, 0
    %v9141 = vsel %vm661, %v8809, 0
    %v9144 = vsel %vm661, %v8810, 0
    %v9147 = vsel %vm661, %v8811, 0
    %v9150 = vsel %vm661, %v8812, 0
    %v9153 = vsel %vm661, %v8813, 0
    %v9156 = vsel %vm661, %v8814, 0
    %v9159 = vsel %vm661, %v8815, 0
    %v9162 = vsel %vm661, %v8816, 0
    %v9165 = vsel %vm661, %v8817, 0
    %v9168 = vsel %vm661, %v8818, 0
    %v9171 = vsel %vm661, %v8819, 0
    %v9174 = vsel %vm661, %v8820, 0
    %v9177 = vsel %vm661, %v8821, 0
    %v9180 = vsel %vm661, %v8822, 0
    %v9183 = vsel %vm661, %v8823, 0
    %v9186 = vsel %vm661, %v8824, 0
    %v9189 = vsel %vm661, %v8825, 0
    %v9192 = vsel %vm661, %v8826, 0
    %v9195 = vsel %vm661, %v8827, 0
    %v9198 = vsel %vm661, %v8828, 0
    %v9201 = vsel %vm661, %v8829, 0
    %v9204 = vsel %vm661, %v8830, 0
    %v9207 = vsel %vm661, %v8831, 0
    %v9210 = vsel %vm661, %v8832, 0
    %v9213 = vsel %vm661, %v8833, 0
    %v9216 = vsel %vm661, %v8834, 0
    %v9219 = vsel %vm661, %v8835, 0
    %v9222 = vsel %vm661, %v8836, 0
    %9224 = vmatprep.subr.bf16.mxu0 0
    %9225 = vmatpush1.bf16.xpose.msra.mxu0 %v8841
    %9226 = vmatprep.subr.bf16.mxu0 0
    %9227 = vmatpush1.bf16.xpose.msra.mxu0 %v8844
    %9228 = vmatprep.subr.bf16.mxu0 0
    %9229 = vmatpush1.bf16.xpose.msra.mxu0 %v8847
    %9230 = vmatprep.subr.bf16.mxu0 0
    %9231 = vmatpush1.bf16.xpose.msra.mxu0 %v8850
    %9232 = vmatprep.subr.bf16.mxu0 0
    %9233 = vmatpush1.bf16.xpose.msra.mxu0 %v8853
    %9234 = vmatprep.subr.bf16.mxu0 0
    %9235 = vmatpush1.bf16.xpose.msra.mxu0 %v8856
    %9236 = vmatprep.subr.bf16.mxu0 0
    %9237 = vmatpush1.bf16.xpose.msra.mxu0 %v8859
    %9238 = vmatprep.subr.bf16.mxu0 0
    %9239 = vmatpush1.bf16.xpose.msra.mxu0 %v8862
    %9240 = vmatprep.subr.bf16.mxu0 0
    %9241 = vmatpush1.bf16.xpose.msra.mxu0 %v8865
    %9242 = vmatprep.subr.bf16.mxu0 0
    %9243 = vmatpush1.bf16.xpose.msra.mxu0 %v8868
    %9244 = vmatprep.subr.bf16.mxu0 0
    %9245 = vmatpush1.bf16.xpose.msra.mxu0 %v8871
    %9246 = vmatprep.subr.bf16.mxu0 0
    %9247 = vmatpush1.bf16.xpose.msra.mxu0 %v8874
    %9248 = vmatprep.subr.bf16.mxu0 0
    %9249 = vmatpush1.bf16.xpose.msra.mxu0 %v8877
    %9250 = vmatprep.subr.bf16.mxu0 0
    %9251 = vmatpush1.bf16.xpose.msra.mxu0 %v8880
    %9252 = vmatprep.subr.bf16.mxu0 0
    %9253 = vmatpush1.bf16.xpose.msra.mxu0 %v8883
    %9254 = vmatprep.subr.bf16.mxu0 0
    %9255 = vmatpush1.bf16.xpose.msra.mxu0 %v8886
    %9256 = vmatprep.mubr.bf16.mxu0 0
    %9257 = vmatmul.mubr.bf16.gmra.mrb[0].mxu0 %v8838
    %v9258 = vpop.f32.mrb[0].mxu0
    %v9259 = vadd.f32 %v8136, %v9258
    %v9260 = vpop.f32.mrb[0].mxu0
    %v9261 = vadd.f32 %v8140, %v9260
    %v9262 = vpop.f32.mrb[0].mxu0
    %v9263 = vadd.f32 %v8136, %v9262
    %v9264 = vpop.f32.mrb[0].mxu0
    %v9265 = vadd.f32 %v8140, %v9264
    %9266 = vdwg.mxu0
    %9267 = vmatprep.subr.bf16.mxu0 0
    %9268 = vmatpush1.bf16.xpose.msra.mxu0 %v8889
    %9269 = vmatprep.subr.bf16.mxu0 0
    %9270 = vmatpush1.bf16.xpose.msra.mxu0 %v8892
    %9271 = vmatprep.subr.bf16.mxu0 0
    %9272 = vmatpush1.bf16.xpose.msra.mxu0 %v8895
    %9273 = vmatprep.subr.bf16.mxu0 0
    %9274 = vmatpush1.bf16.xpose.msra.mxu0 %v8898
    %9275 = vmatprep.subr.bf16.mxu0 0
    %9276 = vmatpush1.bf16.xpose.msra.mxu0 %v8901
    %9277 = vmatprep.subr.bf16.mxu0 0
    %9278 = vmatpush1.bf16.xpose.msra.mxu0 %v8904
    %9279 = vmatprep.subr.bf16.mxu0 0
    %9280 = vmatpush1.bf16.xpose.msra.mxu0 %v8907
    %9281 = vmatprep.subr.bf16.mxu0 0
    %9282 = vmatpush1.bf16.xpose.msra.mxu0 %v8910
    %9283 = vmatprep.subr.bf16.mxu0 0
    %9284 = vmatpush1.bf16.xpose.msra.mxu0 %v8913
    %9285 = vmatprep.subr.bf16.mxu0 0
    %9286 = vmatpush1.bf16.xpose.msra.mxu0 %v8916
    %9287 = vmatprep.subr.bf16.mxu0 0
    %9288 = vmatpush1.bf16.xpose.msra.mxu0 %v8919
    %9289 = vmatprep.subr.bf16.mxu0 0
    %9290 = vmatpush1.bf16.xpose.msra.mxu0 %v8922
    %9291 = vmatprep.subr.bf16.mxu0 0
    %9292 = vmatpush1.bf16.xpose.msra.mxu0 %v8925
    %9293 = vmatprep.subr.bf16.mxu0 0
    %9294 = vmatpush1.bf16.xpose.msra.mxu0 %v8928
    %9295 = vmatprep.subr.bf16.mxu0 0
    %9296 = vmatpush1.bf16.xpose.msra.mxu0 %v8931
    %9297 = vmatprep.subr.bf16.mxu0 0
    %9298 = vmatpush1.bf16.xpose.msra.mxu0 %v8934
    %9299 = vmatprep.mubr.bf16.mxu0 0
    %9300 = vmatmul.mubr.bf16.gmra.mrb[0].mxu0 %v8838
    %v9301 = vpop.f32.mrb[0].mxu0
    %v9302 = vadd.f32 %v8144, %v9301
    %v9303 = vpop.f32.mrb[0].mxu0
    %v9304 = vadd.f32 %v8148, %v9303
    %v9305 = vpop.f32.mrb[0].mxu0
    %v9306 = vadd.f32 %v8144, %v9305
    %v9307 = vpop.f32.mrb[0].mxu0
    %v9308 = vadd.f32 %v8148, %v9307
    %9309 = vdwg.mxu0
    %9310 = vmatprep.subr.bf16.mxu0 0
    %9311 = vmatpush1.bf16.xpose.msra.mxu0 %v8937
    %9312 = vmatprep.subr.bf16.mxu0 0
    %9313 = vmatpush1.bf16.xpose.msra.mxu0 %v8940
    %9314 = vmatprep.subr.bf16.mxu0 0
    %9315 = vmatpush1.bf16.xpose.msra.mxu0 %v8943
    %9316 = vmatprep.subr.bf16.mxu0 0
    %9317 = vmatpush1.bf16.xpose.msra.mxu0 %v8946
    %9318 = vmatprep.subr.bf16.mxu0 0
    %9319 = vmatpush1.bf16.xpose.msra.mxu0 %v8949
    %9320 = vmatprep.subr.bf16.mxu0 0
    %9321 = vmatpush1.bf16.xpose.msra.mxu0 %v8952
    %9322 = vmatprep.subr.bf16.mxu0 0
    %9323 = vmatpush1.bf16.xpose.msra.mxu0 %v8955
    %9324 = vmatprep.subr.bf16.mxu0 0
    %9325 = vmatpush1.bf16.xpose.msra.mxu0 %v8958
    %9326 = vmatprep.subr.bf16.mxu0 0
    %9327 = vmatpush1.bf16.xpose.msra.mxu0 %v8961
    %9328 = vmatprep.subr.bf16.mxu0 0
    %9329 = vmatpush1.bf16.xpose.msra.mxu0 %v8964
    %9330 = vmatprep.subr.bf16.mxu0 0
    %9331 = vmatpush1.bf16.xpose.msra.mxu0 %v8967
    %9332 = vmatprep.subr.bf16.mxu0 0
    %9333 = vmatpush1.bf16.xpose.msra.mxu0 %v8970
    %9334 = vmatprep.subr.bf16.mxu0 0
    %9335 = vmatpush1.bf16.xpose.msra.mxu0 %v8973
    %9336 = vmatprep.subr.bf16.mxu0 0
    %9337 = vmatpush1.bf16.xpose.msra.mxu0 %v8976
    %9338 = vmatprep.subr.bf16.mxu0 0
    %9339 = vmatpush1.bf16.xpose.msra.mxu0 %v8979
    %9340 = vmatprep.subr.bf16.mxu0 0
    %9341 = vmatpush1.bf16.xpose.msra.mxu0 %v8982
    %9342 = vmatprep.mubr.bf16.mxu0 0
    %9343 = vmatmul.mubr.bf16.gmra.mrb[0].mxu0 %v8838
    %v9344 = vpop.f32.mrb[0].mxu0
    %v9345 = vadd.f32 %v8152, %v9344
    %v9346 = vpop.f32.mrb[0].mxu0
    %v9347 = vadd.f32 %v8156, %v9346
    %v9348 = vpop.f32.mrb[0].mxu0
    %v9349 = vadd.f32 %v8152, %v9348
    %v9350 = vpop.f32.mrb[0].mxu0
    %v9351 = vadd.f32 %v8156, %v9350
    %9352 = vdwg.mxu0
    %9353 = vmatprep.subr.bf16.mxu0 0
    %9354 = vmatpush1.bf16.xpose.msra.mxu0 %v8985
    %9355 = vmatprep.subr.bf16.mxu0 0
    %9356 = vmatpush1.bf16.xpose.msra.mxu0 %v8988
    %9357 = vmatprep.subr.bf16.mxu0 0
    %9358 = vmatpush1.bf16.xpose.msra.mxu0 %v8991
    %9359 = vmatprep.subr.bf16.mxu0 0
    %9360 = vmatpush1.bf16.xpose.msra.mxu0 %v8994
    %9361 = vmatprep.subr.bf16.mxu0 0
    %9362 = vmatpush1.bf16.xpose.msra.mxu0 %v8997
    %9363 = vmatprep.subr.bf16.mxu0 0
    %9364 = vmatpush1.bf16.xpose.msra.mxu0 %v9000
    %9365 = vmatprep.subr.bf16.mxu0 0
    %9366 = vmatpush1.bf16.xpose.msra.mxu0 %v9003
    %9367 = vmatprep.subr.bf16.mxu0 0
    %9368 = vmatpush1.bf16.xpose.msra.mxu0 %v9006
    %9369 = vmatprep.subr.bf16.mxu0 0
    %9370 = vmatpush1.bf16.xpose.msra.mxu0 %v9009
    %9371 = vmatprep.subr.bf16.mxu0 0
    %9372 = vmatpush1.bf16.xpose.msra.mxu0 %v9012
    %9373 = vmatprep.subr.bf16.mxu0 0
    %9374 = vmatpush1.bf16.xpose.msra.mxu0 %v9015
    %9375 = vmatprep.subr.bf16.mxu0 0
    %9376 = vmatpush1.bf16.xpose.msra.mxu0 %v9018
    %9377 = vmatprep.subr.bf16.mxu0 0
    %9378 = vmatpush1.bf16.xpose.msra.mxu0 %v9021
    %9379 = vmatprep.subr.bf16.mxu0 0
    %9380 = vmatpush1.bf16.xpose.msra.mxu0 %v9024
    %9381 = vmatprep.subr.bf16.mxu0 0
    %9382 = vmatpush1.bf16.xpose.msra.mxu0 %v9027
    %9383 = vmatprep.subr.bf16.mxu0 0
    %9384 = vmatpush1.bf16.xpose.msra.mxu0 %v9030
    %9385 = vmatprep.mubr.bf16.mxu0 0
    %9386 = vmatmul.mubr.bf16.gmra.mrb[0].mxu0 %v8838
    %v9387 = vpop.f32.mrb[0].mxu0
    %v9388 = vadd.f32 %v8160, %v9387
    %v9389 = vpop.f32.mrb[0].mxu0
    %v9390 = vadd.f32 %v8164, %v9389
    %v9391 = vpop.f32.mrb[0].mxu0
    %v9392 = vadd.f32 %v8160, %v9391
    %v9393 = vpop.f32.mrb[0].mxu0
    %v9394 = vadd.f32 %v8164, %v9393
    %9395 = vdwg.mxu0
    %9396 = vmatprep.subr.bf16.mxu0 0
    %9397 = vmatpush1.bf16.xpose.msra.mxu0 %v9033
    %9398 = vmatprep.subr.bf16.mxu0 0
    %9399 = vmatpush1.bf16.xpose.msra.mxu0 %v9036
    %9400 = vmatprep.subr.bf16.mxu0 0
    %9401 = vmatpush1.bf16.xpose.msra.mxu0 %v9039
    %9402 = vmatprep.subr.bf16.mxu0 0
    %9403 = vmatpush1.bf16.xpose.msra.mxu0 %v9042
    %9404 = vmatprep.subr.bf16.mxu0 0
    %9405 = vmatpush1.bf16.xpose.msra.mxu0 %v9045
    %9406 = vmatprep.subr.bf16.mxu0 0
    %9407 = vmatpush1.bf16.xpose.msra.mxu0 %v9048
    %9408 = vmatprep.subr.bf16.mxu0 0
    %9409 = vmatpush1.bf16.xpose.msra.mxu0 %v9051
    %9410 = vmatprep.subr.bf16.mxu0 0
    %9411 = vmatpush1.bf16.xpose.msra.mxu0 %v9054
    %9412 = vmatprep.subr.bf16.mxu0 0
    %9413 = vmatpush1.bf16.xpose.msra.mxu0 %v9057
    %9414 = vmatprep.subr.bf16.mxu0 0
    %9415 = vmatpush1.bf16.xpose.msra.mxu0 %v9060
    %9416 = vmatprep.subr.bf16.mxu0 0
    %9417 = vmatpush1.bf16.xpose.msra.mxu0 %v9063
    %9418 = vmatprep.subr.bf16.mxu0 0
    %9419 = vmatpush1.bf16.xpose.msra.mxu0 %v9066
    %9420 = vmatprep.subr.bf16.mxu0 0
    %9421 = vmatpush1.bf16.xpose.msra.mxu0 %v9069
    %9422 = vmatprep.subr.bf16.mxu0 0
    %9423 = vmatpush1.bf16.xpose.msra.mxu0 %v9072
    %9424 = vmatprep.subr.bf16.mxu0 0
    %9425 = vmatpush1.bf16.xpose.msra.mxu0 %v9075
    %9426 = vmatprep.subr.bf16.mxu0 0
    %9427 = vmatpush1.bf16.xpose.msra.mxu0 %v9078
    %9428 = vmatprep.mubr.bf16.mxu0 0
    %9429 = vmatmul.mubr.bf16.gmra.mrb[0].mxu0 %v8838
    %v9430 = vpop.f32.mrb[0].mxu0
    %v9431 = vadd.f32 %v8168, %v9430
    %v9432 = vpop.f32.mrb[0].mxu0
    %v9433 = vadd.f32 %v8172, %v9432
    %v9434 = vpop.f32.mrb[0].mxu0
    %v9435 = vadd.f32 %v8168, %v9434
    %v9436 = vpop.f32.mrb[0].mxu0
    %v9437 = vadd.f32 %v8172, %v9436
    %9438 = vdwg.mxu0
    %9439 = vmatprep.subr.bf16.mxu0 0
    %9440 = vmatpush1.bf16.xpose.msra.mxu0 %v9081
    %9441 = vmatprep.subr.bf16.mxu0 0
    %9442 = vmatpush1.bf16.xpose.msra.mxu0 %v9084
    %9443 = vmatprep.subr.bf16.mxu0 0
    %9444 = vmatpush1.bf16.xpose.msra.mxu0 %v9087
    %9445 = vmatprep.subr.bf16.mxu0 0
    %9446 = vmatpush1.bf16.xpose.msra.mxu0 %v9090
    %9447 = vmatprep.subr.bf16.mxu0 0
    %9448 = vmatpush1.bf16.xpose.msra.mxu0 %v9093
    %9449 = vmatprep.subr.bf16.mxu0 0
    %9450 = vmatpush1.bf16.xpose.msra.mxu0 %v9096
    %9451 = vmatprep.subr.bf16.mxu0 0
    %9452 = vmatpush1.bf16.xpose.msra.mxu0 %v9099
    %9453 = vmatprep.subr.bf16.mxu0 0
    %9454 = vmatpush1.bf16.xpose.msra.mxu0 %v9102
    %9455 = vmatprep.subr.bf16.mxu0 0
    %9456 = vmatpush1.bf16.xpose.msra.mxu0 %v9105
    %9457 = vmatprep.subr.bf16.mxu0 0
    %9458 = vmatpush1.bf16.xpose.msra.mxu0 %v9108
    %9459 = vmatprep.subr.bf16.mxu0 0
    %9460 = vmatpush1.bf16.xpose.msra.mxu0 %v9111
    %9461 = vmatprep.subr.bf16.mxu0 0
    %9462 = vmatpush1.bf16.xpose.msra.mxu0 %v9114
    %9463 = vmatprep.subr.bf16.mxu0 0
    %9464 = vmatpush1.bf16.xpose.msra.mxu0 %v9117
    %9465 = vmatprep.subr.bf16.mxu0 0
    %9466 = vmatpush1.bf16.xpose.msra.mxu0 %v9120
    %9467 = vmatprep.subr.bf16.mxu0 0
    %9468 = vmatpush1.bf16.xpose.msra.mxu0 %v9123
    %9469 = vmatprep.subr.bf16.mxu0 0
    %9470 = vmatpush1.bf16.xpose.msra.mxu0 %v9126
    %9471 = vmatprep.mubr.bf16.mxu0 0
    %9472 = vmatmul.mubr.bf16.gmra.mrb[0].mxu0 %v8838
    %v9473 = vpop.f32.mrb[0].mxu0
    %v9474 = vadd.f32 %v8176, %v9473
    %v9475 = vpop.f32.mrb[0].mxu0
    %v9476 = vadd.f32 %v8180, %v9475
    %v9477 = vpop.f32.mrb[0].mxu0
    %v9478 = vadd.f32 %v8176, %v9477
    %v9479 = vpop.f32.mrb[0].mxu0
    %v9480 = vadd.f32 %v8180, %v9479
    %9481 = vdwg.mxu0
    %9482 = vmatprep.subr.bf16.mxu0 0
    %9483 = vmatpush1.bf16.xpose.msra.mxu0 %v9129
    %9484 = vmatprep.subr.bf16.mxu0 0
    %9485 = vmatpush1.bf16.xpose.msra.mxu0 %v9132
    %9486 = vmatprep.subr.bf16.mxu0 0
    %9487 = vmatpush1.bf16.xpose.msra.mxu0 %v9135
    %9488 = vmatprep.subr.bf16.mxu0 0
    %9489 = vmatpush1.bf16.xpose.msra.mxu0 %v9138
    %9490 = vmatprep.subr.bf16.mxu0 0
    %9491 = vmatpush1.bf16.xpose.msra.mxu0 %v9141
    %9492 = vmatprep.subr.bf16.mxu0 0
    %9493 = vmatpush1.bf16.xpose.msra.mxu0 %v9144
    %9494 = vmatprep.subr.bf16.mxu0 0
    %9495 = vmatpush1.bf16.xpose.msra.mxu0 %v9147
    %9496 = vmatprep.subr.bf16.mxu0 0
    %9497 = vmatpush1.bf16.xpose.msra.mxu0 %v9150
    %9498 = vmatprep.subr.bf16.mxu0 0
    %9499 = vmatpush1.bf16.xpose.msra.mxu0 %v9153
    %9500 = vmatprep.subr.bf16.mxu0 0
    %9501 = vmatpush1.bf16.xpose.msra.mxu0 %v9156
    %9502 = vmatprep.subr.bf16.mxu0 0
    %9503 = vmatpush1.bf16.xpose.msra.mxu0 %v9159
    %9504 = vmatprep.subr.bf16.mxu0 0
    %9505 = vmatpush1.bf16.xpose.msra.mxu0 %v9162
    %9506 = vmatprep.subr.bf16.mxu0 0
    %9507 = vmatpush1.bf16.xpose.msra.mxu0 %v9165
    %9508 = vmatprep.subr.bf16.mxu0 0
    %9509 = vmatpush1.bf16.xpose.msra.mxu0 %v9168
    %9510 = vmatprep.subr.bf16.mxu0 0
    %9511 = vmatpush1.bf16.xpose.msra.mxu0 %v9171
    %9512 = vmatprep.subr.bf16.mxu0 0
    %9513 = vmatpush1.bf16.xpose.msra.mxu0 %v9174
    %9514 = vmatprep.mubr.bf16.mxu0 0
    %9515 = vmatmul.mubr.bf16.gmra.mrb[0].mxu0 %v8838
    %v9516 = vpop.f32.mrb[0].mxu0
    %v9517 = vadd.f32 %v8184, %v9516
    %v9518 = vpop.f32.mrb[0].mxu0
    %v9519 = vadd.f32 %v8188, %v9518
    %v9520 = vpop.f32.mrb[0].mxu0
    %v9521 = vadd.f32 %v8184, %v9520
    %v9522 = vpop.f32.mrb[0].mxu0
    %v9523 = vadd.f32 %v8188, %v9522
    %9524 = vdwg.mxu0
    %9525 = vmatprep.subr.bf16.mxu0 0
    %9526 = vmatpush1.bf16.xpose.msra.mxu0 %v9177
    %9527 = vmatprep.subr.bf16.mxu0 0
    %9528 = vmatpush1.bf16.xpose.msra.mxu0 %v9180
    %9529 = vmatprep.subr.bf16.mxu0 0
    %9530 = vmatpush1.bf16.xpose.msra.mxu0 %v9183
    %9531 = vmatprep.subr.bf16.mxu0 0
    %9532 = vmatpush1.bf16.xpose.msra.mxu0 %v9186
    %9533 = vmatprep.subr.bf16.mxu0 0
    %9534 = vmatpush1.bf16.xpose.msra.mxu0 %v9189
    %9535 = vmatprep.subr.bf16.mxu0 0
    %9536 = vmatpush1.bf16.xpose.msra.mxu0 %v9192
    %9537 = vmatprep.subr.bf16.mxu0 0
    %9538 = vmatpush1.bf16.xpose.msra.mxu0 %v9195
    %9539 = vmatprep.subr.bf16.mxu0 0
    %9540 = vmatpush1.bf16.xpose.msra.mxu0 %v9198
    %9541 = vmatprep.subr.bf16.mxu0 0
    %9542 = vmatpush1.bf16.xpose.msra.mxu0 %v9201
    %9543 = vmatprep.subr.bf16.mxu0 0
    %9544 = vmatpush1.bf16.xpose.msra.mxu0 %v9204
    %9545 = vmatprep.subr.bf16.mxu0 0
    %9546 = vmatpush1.bf16.xpose.msra.mxu0 %v9207
    %9547 = vmatprep.subr.bf16.mxu0 0
    %9548 = vmatpush1.bf16.xpose.msra.mxu0 %v9210
    %9549 = vmatprep.subr.bf16.mxu0 0
    %9550 = vmatpush1.bf16.xpose.msra.mxu0 %v9213
    %9551 = vmatprep.subr.bf16.mxu0 0
    %9552 = vmatpush1.bf16.xpose.msra.mxu0 %v9216
    %9553 = vmatprep.subr.bf16.mxu0 0
    %9554 = vmatpush1.bf16.xpose.msra.mxu0 %v9219
    %9555 = vmatprep.subr.bf16.mxu0 0
    %9556 = vmatpush1.bf16.xpose.msra.mxu0 %v9222
    %9557 = vmatprep.mubr.bf16.mxu0 0
    %9558 = vmatmul.mubr.bf16.gmra.mrb[0].mxu0 %v8838
    %v9559 = vpop.f32.mrb[0].mxu0
    %v9560 = vadd.f32 %v8192, %v9559
    %v9561 = vpop.f32.mrb[0].mxu0
    %v9562 = vadd.f32 %v8196, %v9561
    %v9563 = vpop.f32.mrb[0].mxu0
    %v9564 = vadd.f32 %v8192, %v9563
    %v9565 = vpop.f32.mrb[0].mxu0
    %v9566 = vadd.f32 %v8196, %v9565
    %9567 = vdwg.mxu0
    %v9568 = vmax.f32 %v9259, 0.0
    %v9569 = vmax.f32 %v9261, 0.0
    %v9570 = vmax.f32 %v9302, 0.0
    %v9571 = vmax.f32 %v9304, 0.0
    %v9572 = vmax.f32 %v9345, 0.0
    %v9573 = vmax.f32 %v9347, 0.0
    %v9574 = vmax.f32 %v9388, 0.0
    %v9575 = vmax.f32 %v9390, 0.0
    %v9576 = vmax.f32 %v9431, 0.0
    %v9577 = vmax.f32 %v9433, 0.0
    %v9578 = vmax.f32 %v9474, 0.0
    %v9579 = vmax.f32 %v9476, 0.0
    %v9580 = vmax.f32 %v9517, 0.0
    %v9581 = vmax.f32 %v9519, 0.0
    %v9582 = vmax.f32 %v9560, 0.0
    %v9583 = vmax.f32 %v9562, 0.0
    %v9584 = vmax.f32 %v9263, 0.0
    %v9585 = vmax.f32 %v9265, 0.0
    %v9586 = vmax.f32 %v9306, 0.0
    %v9587 = vmax.f32 %v9308, 0.0
    %v9588 = vmax.f32 %v9349, 0.0
    %v9589 = vmax.f32 %v9351, 0.0
    %v9590 = vmax.f32 %v9392, 0.0
    %v9591 = vmax.f32 %v9394, 0.0
    %v9592 = vmax.f32 %v9435, 0.0
    %v9593 = vmax.f32 %v9437, 0.0
    %v9594 = vmax.f32 %v9478, 0.0
    %v9595 = vmax.f32 %v9480, 0.0
    %v9596 = vmax.f32 %v9521, 0.0
    %v9597 = vmax.f32 %v9523, 0.0
    %v9598 = vmax.f32 %v9564, 0.0
    %v9599 = vmax.f32 %v9566, 0.0
    %v9600 = vpack.c.bf16 %v9584, %v9568
    %v9601 = vpack.c.bf16 %v9585, %v9569
    %v9602 = vpack.c.bf16 %v9586, %v9570
    %v9603 = vpack.c.bf16 %v9587, %v9571
    %v9604 = vpack.c.bf16 %v9588, %v9572
    %v9605 = vpack.c.bf16 %v9589, %v9573
    %v9606 = vpack.c.bf16 %v9590, %v9574
    %v9607 = vpack.c.bf16 %v9591, %v9575
    %v9608 = vpack.c.bf16 %v9592, %v9576
    %v9609 = vpack.c.bf16 %v9593, %v9577
    %v9610 = vpack.c.bf16 %v9594, %v9578
    %v9611 = vpack.c.bf16 %v9595, %v9579
    %v9612 = vpack.c.bf16 %v9596, %v9580
    %v9613 = vpack.c.bf16 %v9597, %v9581
    %v9614 = vpack.c.bf16 %v9598, %v9582
    %v9615 = vpack.c.bf16 %v9599, %v9583
    %v9616 = vlaneseq
    %v9617 = vshrl.u32 %v9616, 7
    %v9618 = vsub.s32 5, %v9617
    %v9619 = vrot.slane %v647, %v9618
    %v9652 = vunpack.c.l.b16 %v610
    %v9653 = vunpack.c.h.b16 %v610
    %v9654 = vunpack.c.l.b16 %v611
    %v9655 = vunpack.c.h.b16 %v611
    %v9656 = vunpack.c.l.b16 %v612
    %v9657 = vunpack.c.h.b16 %v612
    %v9658 = vunpack.c.l.b16 %v613
    %v9659 = vunpack.c.h.b16 %v613
    %v9660 = vunpack.c.l.b16 %v614
    %v9661 = vunpack.c.h.b16 %v614
    %v9662 = vunpack.c.l.b16 %v615
    %v9663 = vunpack.c.h.b16 %v615
    %v9664 = vunpack.c.l.b16 %v616
    %v9665 = vunpack.c.h.b16 %v616
    %v9666 = vunpack.c.l.b16 %v617
    %v9667 = vunpack.c.h.b16 %v617
    %v9668 = vunpack.c.l.b16 %v618
    %v9669 = vunpack.c.h.b16 %v618
    %v9670 = vunpack.c.l.b16 %v619
    %v9671 = vunpack.c.h.b16 %v619
    %v9672 = vunpack.c.l.b16 %v620
    %v9673 = vunpack.c.h.b16 %v620
    %v9674 = vunpack.c.l.b16 %v621
    %v9675 = vunpack.c.h.b16 %v621
    %v9676 = vunpack.c.l.b16 %v622
    %v9677 = vunpack.c.h.b16 %v622
    %v9678 = vunpack.c.l.b16 %v623
    %v9679 = vunpack.c.h.b16 %v623
    %v9680 = vunpack.c.l.b16 %v624
    %v9681 = vunpack.c.h.b16 %v624
    %v9682 = vunpack.c.l.b16 %v625
    %v9683 = vunpack.c.h.b16 %v625
    %v9684 = vunpack.c.l.b16 %v626
    %v9685 = vunpack.c.h.b16 %v626
    %v9686 = vunpack.c.l.b16 %v627
    %v9687 = vunpack.c.h.b16 %v627
    %v9688 = vunpack.c.l.b16 %v628
    %v9689 = vunpack.c.h.b16 %v628
    %v9690 = vunpack.c.l.b16 %v629
    %v9691 = vunpack.c.h.b16 %v629
    %v9692 = vunpack.c.l.b16 %v630
    %v9693 = vunpack.c.h.b16 %v630
    %v9694 = vunpack.c.l.b16 %v631
    %v9695 = vunpack.c.h.b16 %v631
    %v9696 = vunpack.c.l.b16 %v632
    %v9697 = vunpack.c.h.b16 %v632
    %v9698 = vunpack.c.l.b16 %v633
    %v9699 = vunpack.c.h.b16 %v633
    %v9700 = vunpack.c.l.b16 %v634
    %v9701 = vunpack.c.h.b16 %v634
    %v9702 = vunpack.c.l.b16 %v635
    %v9703 = vunpack.c.h.b16 %v635
    %v9704 = vunpack.c.l.b16 %v636
    %v9705 = vunpack.c.h.b16 %v636
    %v9706 = vunpack.c.l.b16 %v637
    %v9707 = vunpack.c.h.b16 %v637
    %v9708 = vunpack.c.l.b16 %v638
    %v9709 = vunpack.c.h.b16 %v638
    %v9710 = vunpack.c.l.b16 %v639
    %v9711 = vunpack.c.h.b16 %v639
    %v9712 = vunpack.c.l.b16 %v640
    %v9713 = vunpack.c.h.b16 %v640
    %v9714 = vunpack.c.l.b16 %v641
    %v9715 = vunpack.c.h.b16 %v641
    %v9716 = vpack.c.b16 %v9668, %v9652
    %v9717 = vpack.c.b16 %v9669, %v9653
    %v9718 = vpack.c.b16 %v9670, %v9654
    %v9719 = vpack.c.b16 %v9671, %v9655
    %v9720 = vpack.c.b16 %v9672, %v9656
    %v9721 = vpack.c.b16 %v9673, %v9657
    %v9722 = vpack.c.b16 %v9674, %v9658
    %v9723 = vpack.c.b16 %v9675, %v9659
    %v9724 = vpack.c.b16 %v9676, %v9660
    %v9725 = vpack.c.b16 %v9677, %v9661
    %v9726 = vpack.c.b16 %v9678, %v9662
    %v9727 = vpack.c.b16 %v9679, %v9663
    %v9728 = vpack.c.b16 %v9680, %v9664
    %v9729 = vpack.c.b16 %v9681, %v9665
    %v9730 = vpack.c.b16 %v9682, %v9666
    %v9731 = vpack.c.b16 %v9683, %v9667
    %v9732 = vpack.c.b16 %v9700, %v9684
    %v9733 = vpack.c.b16 %v9701, %v9685
    %v9734 = vpack.c.b16 %v9702, %v9686
    %v9735 = vpack.c.b16 %v9703, %v9687
    %v9736 = vpack.c.b16 %v9704, %v9688
    %v9737 = vpack.c.b16 %v9705, %v9689
    %v9738 = vpack.c.b16 %v9706, %v9690
    %v9739 = vpack.c.b16 %v9707, %v9691
    %v9740 = vpack.c.b16 %v9708, %v9692
    %v9741 = vpack.c.b16 %v9709, %v9693
    %v9742 = vpack.c.b16 %v9710, %v9694
    %v9743 = vpack.c.b16 %v9711, %v9695
    %v9744 = vpack.c.b16 %v9712, %v9696
    %v9745 = vpack.c.b16 %v9713, %v9697
    %v9746 = vpack.c.b16 %v9714, %v9698
    %v9747 = vpack.c.b16 %v9715, %v9699
    %9780 = vmatprep.subr.bf16.mxu0 %v9717
    %9781 = vmatpush1.bf16.xpose.msra.mxu0 %v9716
    %9782 = vmatprep.subr.bf16.mxu0 %v9733
    %9783 = vmatpush1.bf16.xpose.msra.mxu0 %v9732
    %9784 = vmatprep.subr.bf16.mxu0 0
    %9785 = vmatpush1.bf16.xpose.msra.mxu0 0
    %9786 = vmatprep.subr.bf16.mxu0 0
    %9787 = vmatpush1.bf16.xpose.msra.mxu0 0
    %9788 = vmatprep.subr.bf16.mxu0 0
    %9789 = vmatpush1.bf16.xpose.msra.mxu0 0
    %9790 = vmatprep.subr.bf16.mxu0 0
    %9791 = vmatpush1.bf16.xpose.msra.mxu0 0
    %9792 = vmatprep.subr.bf16.mxu0 0
    %9793 = vmatpush1.bf16.xpose.msra.mxu0 0
    %9794 = vmatprep.subr.bf16.mxu0 0
    %9795 = vmatpush1.bf16.xpose.msra.mxu0 0
    %9796 = vmatprep.subr.bf16.mxu0 0
    %9797 = vmatpush1.bf16.xpose.msra.mxu0 0
    %9798 = vmatprep.subr.bf16.mxu0 0
    %9799 = vmatpush1.bf16.xpose.msra.mxu0 0
    %9800 = vmatprep.subr.bf16.mxu0 0
    %9801 = vmatpush1.bf16.xpose.msra.mxu0 0
    %9802 = vmatprep.subr.bf16.mxu0 0
    %9803 = vmatpush1.bf16.xpose.msra.mxu0 0
    %9804 = vmatprep.subr.bf16.mxu0 0
    %9805 = vmatpush1.bf16.xpose.msra.mxu0 0
    %9806 = vmatprep.subr.bf16.mxu0 0
    %9807 = vmatpush1.bf16.xpose.msra.mxu0 0
    %9808 = vmatprep.subr.bf16.mxu0 0
    %9809 = vmatpush1.bf16.xpose.msra.mxu0 0
    %9810 = vmatprep.subr.bf16.mxu0 0
    %9811 = vmatpush1.bf16.xpose.msra.mxu0 0
    %9812 = vmatprep.mubr.bf16.mxu0 %v9601
    %9813 = vmatmul.mubr.bf16.gmra.mrb[0].mxu0 %v9600
    %v9814 = vpop.f32.mrb[0].mxu0
    %v9815 = vadd.f32 %v9619, %v9814
    %v9816 = vpop.f32.mrb[0].mxu0
    %v9817 = vpop.f32.mrb[0].mxu0
    %v9818 = vadd.f32 %v9619, %v9817
    %v9819 = vpop.f32.mrb[0].mxu0
    %9820 = vdwg.mxu0
    %9821 = vmatprep.subr.bf16.mxu0 %v9719
    %9822 = vmatpush1.bf16.xpose.msra.mxu0 %v9718
    %9823 = vmatprep.subr.bf16.mxu0 %v9735
    %9824 = vmatpush1.bf16.xpose.msra.mxu0 %v9734
    %9825 = vmatprep.subr.bf16.mxu0 0
    %9826 = vmatpush1.bf16.xpose.msra.mxu0 0
    %9827 = vmatprep.subr.bf16.mxu0 0
    %9828 = vmatpush1.bf16.xpose.msra.mxu0 0
    %9829 = vmatprep.subr.bf16.mxu0 0
    %9830 = vmatpush1.bf16.xpose.msra.mxu0 0
    %9831 = vmatprep.subr.bf16.mxu0 0
    %9832 = vmatpush1.bf16.xpose.msra.mxu0 0
    %9833 = vmatprep.subr.bf16.mxu0 0
    %9834 = vmatpush1.bf16.xpose.msra.mxu0 0
    %9835 = vmatprep.subr.bf16.mxu0 0
    %9836 = vmatpush1.bf16.xpose.msra.mxu0 0
    %9837 = vmatprep.subr.bf16.mxu0 0
    %9838 = vmatpush1.bf16.xpose.msra.mxu0 0
    %9839 = vmatprep.subr.bf16.mxu0 0
    %9840 = vmatpush1.bf16.xpose.msra.mxu0 0
    %9841 = vmatprep.subr.bf16.mxu0 0
    %9842 = vmatpush1.bf16.xpose.msra.mxu0 0
    %9843 = vmatprep.subr.bf16.mxu0 0
    %9844 = vmatpush1.bf16.xpose.msra.mxu0 0
    %9845 = vmatprep.subr.bf16.mxu0 0
    %9846 = vmatpush1.bf16.xpose.msra.mxu0 0
    %9847 = vmatprep.subr.bf16.mxu0 0
    %9848 = vmatpush1.bf16.xpose.msra.mxu0 0
    %9849 = vmatprep.subr.bf16.mxu0 0
    %9850 = vmatpush1.bf16.xpose.msra.mxu0 0
    %9851 = vmatprep.subr.bf16.mxu0 0
    %9852 = vmatpush1.bf16.xpose.msra.mxu0 0
    %9853 = vmatprep.mubr.bf16.mxu0 %v9603
    %9854 = vmatmul.mubr.bf16.gmra.mrb[0].mxu0 %v9602
    %v9855 = vpop.f32.mrb[0].mxu0
    %v9856 = vadd.f32 %v9815, %v9855
    %v9857 = vpop.f32.mrb[0].mxu0
    %v9858 = vpop.f32.mrb[0].mxu0
    %v9859 = vadd.f32 %v9818, %v9858
    %v9860 = vpop.f32.mrb[0].mxu0
    %9861 = vdwg.mxu0
    %9862 = vmatprep.subr.bf16.mxu0 %v9721
    %9863 = vmatpush1.bf16.xpose.msra.mxu0 %v9720
    %9864 = vmatprep.subr.bf16.mxu0 %v9737
    %9865 = vmatpush1.bf16.xpose.msra.mxu0 %v9736
    %9866 = vmatprep.subr.bf16.mxu0 0
    %9867 = vmatpush1.bf16.xpose.msra.mxu0 0
    %9868 = vmatprep.subr.bf16.mxu0 0
    %9869 = vmatpush1.bf16.xpose.msra.mxu0 0
    %9870 = vmatprep.subr.bf16.mxu0 0
    %9871 = vmatpush1.bf16.xpose.msra.mxu0 0
    %9872 = vmatprep.subr.bf16.mxu0 0
    %9873 = vmatpush1.bf16.xpose.msra.mxu0 0
    %9874 = vmatprep.subr.bf16.mxu0 0
    %9875 = vmatpush1.bf16.xpose.msra.mxu0 0
    %9876 = vmatprep.subr.bf16.mxu0 0
    %9877 = vmatpush1.bf16.xpose.msra.mxu0 0
    %9878 = vmatprep.subr.bf16.mxu0 0
    %9879 = vmatpush1.bf16.xpose.msra.mxu0 0
    %9880 = vmatprep.subr.bf16.mxu0 0
    %9881 = vmatpush1.bf16.xpose.msra.mxu0 0
    %9882 = vmatprep.subr.bf16.mxu0 0
    %9883 = vmatpush1.bf16.xpose.msra.mxu0 0
    %9884 = vmatprep.subr.bf16.mxu0 0
    %9885 = vmatpush1.bf16.xpose.msra.mxu0 0
    %9886 = vmatprep.subr.bf16.mxu0 0
    %9887 = vmatpush1.bf16.xpose.msra.mxu0 0
    %9888 = vmatprep.subr.bf16.mxu0 0
    %9889 = vmatpush1.bf16.xpose.msra.mxu0 0
    %9890 = vmatprep.subr.bf16.mxu0 0
    %9891 = vmatpush1.bf16.xpose.msra.mxu0 0
    %9892 = vmatprep.subr.bf16.mxu0 0
    %9893 = vmatpush1.bf16.xpose.msra.mxu0 0
    %9894 = vmatprep.mubr.bf16.mxu0 %v9605
    %9895 = vmatmul.mubr.bf16.gmra.mrb[0].mxu0 %v9604
    %v9896 = vpop.f32.mrb[0].mxu0
    %v9897 = vadd.f32 %v9856, %v9896
    %v9898 = vpop.f32.mrb[0].mxu0
    %v9899 = vpop.f32.mrb[0].mxu0
    %v9900 = vadd.f32 %v9859, %v9899
    %v9901 = vpop.f32.mrb[0].mxu0
    %9902 = vdwg.mxu0
    %9903 = vmatprep.subr.bf16.mxu0 %v9723
    %9904 = vmatpush1.bf16.xpose.msra.mxu0 %v9722
    %9905 = vmatprep.subr.bf16.mxu0 %v9739
    %9906 = vmatpush1.bf16.xpose.msra.mxu0 %v9738
    %9907 = vmatprep.subr.bf16.mxu0 0
    %9908 = vmatpush1.bf16.xpose.msra.mxu0 0
    %9909 = vmatprep.subr.bf16.mxu0 0
    %9910 = vmatpush1.bf16.xpose.msra.mxu0 0
    %9911 = vmatprep.subr.bf16.mxu0 0
    %9912 = vmatpush1.bf16.xpose.msra.mxu0 0
    %9913 = vmatprep.subr.bf16.mxu0 0
    %9914 = vmatpush1.bf16.xpose.msra.mxu0 0
    %9915 = vmatprep.subr.bf16.mxu0 0
    %9916 = vmatpush1.bf16.xpose.msra.mxu0 0
    %9917 = vmatprep.subr.bf16.mxu0 0
    %9918 = vmatpush1.bf16.xpose.msra.mxu0 0
    %9919 = vmatprep.subr.bf16.mxu0 0
    %9920 = vmatpush1.bf16.xpose.msra.mxu0 0
    %9921 = vmatprep.subr.bf16.mxu0 0
    %9922 = vmatpush1.bf16.xpose.msra.mxu0 0
    %9923 = vmatprep.subr.bf16.mxu0 0
    %9924 = vmatpush1.bf16.xpose.msra.mxu0 0
    %9925 = vmatprep.subr.bf16.mxu0 0
    %9926 = vmatpush1.bf16.xpose.msra.mxu0 0
    %9927 = vmatprep.subr.bf16.mxu0 0
    %9928 = vmatpush1.bf16.xpose.msra.mxu0 0
    %9929 = vmatprep.subr.bf16.mxu0 0
    %9930 = vmatpush1.bf16.xpose.msra.mxu0 0
    %9931 = vmatprep.subr.bf16.mxu0 0
    %9932 = vmatpush1.bf16.xpose.msra.mxu0 0
    %9933 = vmatprep.subr.bf16.mxu0 0
    %9934 = vmatpush1.bf16.xpose.msra.mxu0 0
    %9935 = vmatprep.mubr.bf16.mxu0 %v9607
    %9936 = vmatmul.mubr.bf16.gmra.mrb[0].mxu0 %v9606
    %v9937 = vpop.f32.mrb[0].mxu0
    %v9938 = vadd.f32 %v9897, %v9937
    %v9939 = vpop.f32.mrb[0].mxu0
    %v9940 = vpop.f32.mrb[0].mxu0
    %v9941 = vadd.f32 %v9900, %v9940
    %v9942 = vpop.f32.mrb[0].mxu0
    %9943 = vdwg.mxu0
    %9944 = vmatprep.subr.bf16.mxu0 %v9725
    %9945 = vmatpush1.bf16.xpose.msra.mxu0 %v9724
    %9946 = vmatprep.subr.bf16.mxu0 %v9741
    %9947 = vmatpush1.bf16.xpose.msra.mxu0 %v9740
    %9948 = vmatprep.subr.bf16.mxu0 0
    %9949 = vmatpush1.bf16.xpose.msra.mxu0 0
    %9950 = vmatprep.subr.bf16.mxu0 0
    %9951 = vmatpush1.bf16.xpose.msra.mxu0 0
    %9952 = vmatprep.subr.bf16.mxu0 0
    %9953 = vmatpush1.bf16.xpose.msra.mxu0 0
    %9954 = vmatprep.subr.bf16.mxu0 0
    %9955 = vmatpush1.bf16.xpose.msra.mxu0 0
    %9956 = vmatprep.subr.bf16.mxu0 0
    %9957 = vmatpush1.bf16.xpose.msra.mxu0 0
    %9958 = vmatprep.subr.bf16.mxu0 0
    %9959 = vmatpush1.bf16.xpose.msra.mxu0 0
    %9960 = vmatprep.subr.bf16.mxu0 0
    %9961 = vmatpush1.bf16.xpose.msra.mxu0 0
    %9962 = vmatprep.subr.bf16.mxu0 0
    %9963 = vmatpush1.bf16.xpose.msra.mxu0 0
    %9964 = vmatprep.subr.bf16.mxu0 0
    %9965 = vmatpush1.bf16.xpose.msra.mxu0 0
    %9966 = vmatprep.subr.bf16.mxu0 0
    %9967 = vmatpush1.bf16.xpose.msra.mxu0 0
    %9968 = vmatprep.subr.bf16.mxu0 0
    %9969 = vmatpush1.bf16.xpose.msra.mxu0 0
    %9970 = vmatprep.subr.bf16.mxu0 0
    %9971 = vmatpush1.bf16.xpose.msra.mxu0 0
    %9972 = vmatprep.subr.bf16.mxu0 0
    %9973 = vmatpush1.bf16.xpose.msra.mxu0 0
    %9974 = vmatprep.subr.bf16.mxu0 0
    %9975 = vmatpush1.bf16.xpose.msra.mxu0 0
    %9976 = vmatprep.mubr.bf16.mxu0 %v9609
    %9977 = vmatmul.mubr.bf16.gmra.mrb[0].mxu0 %v9608
    %v9978 = vpop.f32.mrb[0].mxu0
    %v9979 = vadd.f32 %v9938, %v9978
    %v9980 = vpop.f32.mrb[0].mxu0
    %v9981 = vpop.f32.mrb[0].mxu0
    %v9982 = vadd.f32 %v9941, %v9981
    %v9983 = vpop.f32.mrb[0].mxu0
    %9984 = vdwg.mxu0
    %9985 = vmatprep.subr.bf16.mxu0 %v9727
    %9986 = vmatpush1.bf16.xpose.msra.mxu0 %v9726
    %9987 = vmatprep.subr.bf16.mxu0 %v9743
    %9988 = vmatpush1.bf16.xpose.msra.mxu0 %v9742
    %9989 = vmatprep.subr.bf16.mxu0 0
    %9990 = vmatpush1.bf16.xpose.msra.mxu0 0
    %9991 = vmatprep.subr.bf16.mxu0 0
    %9992 = vmatpush1.bf16.xpose.msra.mxu0 0
    %9993 = vmatprep.subr.bf16.mxu0 0
    %9994 = vmatpush1.bf16.xpose.msra.mxu0 0
    %9995 = vmatprep.subr.bf16.mxu0 0
    %9996 = vmatpush1.bf16.xpose.msra.mxu0 0
    %9997 = vmatprep.subr.bf16.mxu0 0
    %9998 = vmatpush1.bf16.xpose.msra.mxu0 0
    %9999 = vmatprep.subr.bf16.mxu0 0
    %10000 = vmatpush1.bf16.xpose.msra.mxu0 0
    %10001 = vmatprep.subr.bf16.mxu0 0
    %10002 = vmatpush1.bf16.xpose.msra.mxu0 0
    %10003 = vmatprep.subr.bf16.mxu0 0
    %10004 = vmatpush1.bf16.xpose.msra.mxu0 0
    %10005 = vmatprep.subr.bf16.mxu0 0
    %10006 = vmatpush1.bf16.xpose.msra.mxu0 0
    %10007 = vmatprep.subr.bf16.mxu0 0
    %10008 = vmatpush1.bf16.xpose.msra.mxu0 0
    %10009 = vmatprep.subr.bf16.mxu0 0
    %10010 = vmatpush1.bf16.xpose.msra.mxu0 0
    %10011 = vmatprep.subr.bf16.mxu0 0
    %10012 = vmatpush1.bf16.xpose.msra.mxu0 0
    %10013 = vmatprep.subr.bf16.mxu0 0
    %10014 = vmatpush1.bf16.xpose.msra.mxu0 0
    %10015 = vmatprep.subr.bf16.mxu0 0
    %10016 = vmatpush1.bf16.xpose.msra.mxu0 0
    %10017 = vmatprep.mubr.bf16.mxu0 %v9611
    %10018 = vmatmul.mubr.bf16.gmra.mrb[0].mxu0 %v9610
    %v10019 = vpop.f32.mrb[0].mxu0
    %v10020 = vadd.f32 %v9979, %v10019
    %v10021 = vpop.f32.mrb[0].mxu0
    %v10022 = vpop.f32.mrb[0].mxu0
    %v10023 = vadd.f32 %v9982, %v10022
    %v10024 = vpop.f32.mrb[0].mxu0
    %10025 = vdwg.mxu0
    %10026 = vmatprep.subr.bf16.mxu0 %v9729
    %10027 = vmatpush1.bf16.xpose.msra.mxu0 %v9728
    %10028 = vmatprep.subr.bf16.mxu0 %v9745
    %10029 = vmatpush1.bf16.xpose.msra.mxu0 %v9744
    %10030 = vmatprep.subr.bf16.mxu0 0
    %10031 = vmatpush1.bf16.xpose.msra.mxu0 0
    %10032 = vmatprep.subr.bf16.mxu0 0
    %10033 = vmatpush1.bf16.xpose.msra.mxu0 0
    %10034 = vmatprep.subr.bf16.mxu0 0
    %10035 = vmatpush1.bf16.xpose.msra.mxu0 0
    %10036 = vmatprep.subr.bf16.mxu0 0
    %10037 = vmatpush1.bf16.xpose.msra.mxu0 0
    %10038 = vmatprep.subr.bf16.mxu0 0
    %10039 = vmatpush1.bf16.xpose.msra.mxu0 0
    %10040 = vmatprep.subr.bf16.mxu0 0
    %10041 = vmatpush1.bf16.xpose.msra.mxu0 0
    %10042 = vmatprep.subr.bf16.mxu0 0
    %10043 = vmatpush1.bf16.xpose.msra.mxu0 0
    %10044 = vmatprep.subr.bf16.mxu0 0
    %10045 = vmatpush1.bf16.xpose.msra.mxu0 0
    %10046 = vmatprep.subr.bf16.mxu0 0
    %10047 = vmatpush1.bf16.xpose.msra.mxu0 0
    %10048 = vmatprep.subr.bf16.mxu0 0
    %10049 = vmatpush1.bf16.xpose.msra.mxu0 0
    %10050 = vmatprep.subr.bf16.mxu0 0
    %10051 = vmatpush1.bf16.xpose.msra.mxu0 0
    %10052 = vmatprep.subr.bf16.mxu0 0
    %10053 = vmatpush1.bf16.xpose.msra.mxu0 0
    %10054 = vmatprep.subr.bf16.mxu0 0
    %10055 = vmatpush1.bf16.xpose.msra.mxu0 0
    %10056 = vmatprep.subr.bf16.mxu0 0
    %10057 = vmatpush1.bf16.xpose.msra.mxu0 0
    %10058 = vmatprep.mubr.bf16.mxu0 %v9613
    %10059 = vmatmul.mubr.bf16.gmra.mrb[0].mxu0 %v9612
    %v10060 = vpop.f32.mrb[0].mxu0
    %v10061 = vadd.f32 %v10020, %v10060
    %v10062 = vpop.f32.mrb[0].mxu0
    %v10063 = vpop.f32.mrb[0].mxu0
    %v10064 = vadd.f32 %v10023, %v10063
    %v10065 = vpop.f32.mrb[0].mxu0
    %10066 = vdwg.mxu0
    %10067 = vmatprep.subr.bf16.mxu0 %v9731
    %10068 = vmatpush1.bf16.xpose.msra.mxu0 %v9730
    %10069 = vmatprep.subr.bf16.mxu0 %v9747
    %10070 = vmatpush1.bf16.xpose.msra.mxu0 %v9746
    %10071 = vmatprep.subr.bf16.mxu0 0
    %10072 = vmatpush1.bf16.xpose.msra.mxu0 0
    %10073 = vmatprep.subr.bf16.mxu0 0
    %10074 = vmatpush1.bf16.xpose.msra.mxu0 0
    %10075 = vmatprep.subr.bf16.mxu0 0
    %10076 = vmatpush1.bf16.xpose.msra.mxu0 0
    %10077 = vmatprep.subr.bf16.mxu0 0
    %10078 = vmatpush1.bf16.xpose.msra.mxu0 0
    %10079 = vmatprep.subr.bf16.mxu0 0
    %10080 = vmatpush1.bf16.xpose.msra.mxu0 0
    %10081 = vmatprep.subr.bf16.mxu0 0
    %10082 = vmatpush1.bf16.xpose.msra.mxu0 0
    %10083 = vmatprep.subr.bf16.mxu0 0
    %10084 = vmatpush1.bf16.xpose.msra.mxu0 0
    %10085 = vmatprep.subr.bf16.mxu0 0
    %10086 = vmatpush1.bf16.xpose.msra.mxu0 0
    %10087 = vmatprep.subr.bf16.mxu0 0
    %10088 = vmatpush1.bf16.xpose.msra.mxu0 0
    %10089 = vmatprep.subr.bf16.mxu0 0
    %10090 = vmatpush1.bf16.xpose.msra.mxu0 0
    %10091 = vmatprep.subr.bf16.mxu0 0
    %10092 = vmatpush1.bf16.xpose.msra.mxu0 0
    %10093 = vmatprep.subr.bf16.mxu0 0
    %10094 = vmatpush1.bf16.xpose.msra.mxu0 0
    %10095 = vmatprep.subr.bf16.mxu0 0
    %10096 = vmatpush1.bf16.xpose.msra.mxu0 0
    %10097 = vmatprep.subr.bf16.mxu0 0
    %10098 = vmatpush1.bf16.xpose.msra.mxu0 0
    %10099 = vmatprep.mubr.bf16.mxu0 %v9615
    %10100 = vmatmul.mubr.bf16.gmra.mrb[0].mxu0 %v9614
    %v10101 = vpop.f32.mrb[0].mxu0
    %v10102 = vadd.f32 %v10061, %v10101
    %v10103 = vpop.f32.mrb[0].mxu0
    %v10104 = vpop.f32.mrb[0].mxu0
    %v10105 = vadd.f32 %v10064, %v10104
    %v10106 = vpop.f32.mrb[0].mxu0
    %10107 = vdwg.mxu0
    %v10108 = vadd.f32 %v8050, %v10102
    %v10109 = vadd.f32 %v8051, %v10105
    %v10110 = vsel %vm661, %v10108, 0.0
    %10111 = vadd.xlane.f32.xlu0 %v10110
    %v10112 = vpop.xlane.xlu0 %10111
    %v10113 = vsel %vm661, %v10109, 0.0
    %10114 = vadd.xlane.f32.xlu0 %v10113
    %v10115 = vpop.xlane.xlu0 %10114
    %v10116 = vmul.f32 %v10112, %v3273
    %v10117 = vmul.f32 %v10115, %v3273
    %v10118 = vsub.f32 %v10108, %v10116
    %v10119 = vsub.f32 %v10109, %v10117
    %v10120 = vmul.f32 %v10118, %v10118
    %v10121 = vmul.f32 %v10119, %v10119
    %v10122 = vsel %vm661, %v10120, 0.0
    %10123 = vadd.xlane.f32.xlu0 %v10122
    %v10124 = vpop.xlane.xlu0 %10123
    %v10125 = vsel %vm661, %v10121, 0.0
    %10126 = vadd.xlane.f32.xlu0 %v10125
    %v10127 = vpop.xlane.xlu0 %10126
    %v10128 = vmul.f32 %v10124, %v3273
    %v10129 = vmul.f32 %v10127, %v3273
    %v10130 = vadd.f32 %v10128, 1e-05
    %v10131 = vadd.f32 %v10129, 1e-05
    %v10132 = vrsqrt.pop %v10130
    %v10133 = vrsqrt.pop %v10131
    %v10134 = vmul.f32 %v10118, %v10132
    %v10135 = vmul.f32 %v10119, %v10133
    %v10136 = vlaneseq
    %v10137 = vshrl.u32 %v10136, 7
    %v10138 = vsub.s32 0, %v10137
    %v10139 = vrot.slane %v648, %v10138
    %v10140 = vmul.f32 %v10134, %v10139
    %v10141 = vmul.f32 %v10135, %v10139
    %v10142 = vlaneseq
    %v10143 = vshrl.u32 %v10142, 7
    %v10144 = vsub.s32 1, %v10143
    %v10145 = vrot.slane %v648, %v10144
    %v10146 = vadd.f32 %v10140, %v10145
    %v10147 = vadd.f32 %v10141, %v10145
    %v10148 = vsel %vm661, %v10146, 0.0
    %v10149 = vrot.slane %v10148, 4
    %v10150 = vadd.f32 %v10148, %v10149
    %v10151 = vrot.slane %v10150, 2
    %v10152 = vadd.f32 %v10150, %v10151
    %v10153 = vrot.slane %v10152, 1
    %v10154 = vadd.f32 %v10152, %v10153
    %v10155 = vsel %vm661, %v10147, 0.0
    %v10156 = vrot.slane %v10155, 4
    %v10157 = vadd.f32 %v10155, %v10156
    %v10158 = vrot.slane %v10157, 2
    %v10159 = vadd.f32 %v10157, %v10158
    %v10160 = vrot.slane %v10159, 1
    %v10161 = vadd.f32 %v10159, %v10160
    %v10162 = vrcp.pop 8.0
    %v10163 = vmul.f32 %v10154, %v10162
    %v10164 = vmul.f32 %v10161, %v10162
    %vm10167 = vcmask 1041409
    %v10168 = vsel %vm10167, %v10164, %v10163
    %v10169 = vsel %vm661, %v10168, 0
    %v10172 = vsel %vm661, %v649, 0
    %v10175 = vsel %vm661, %v650, 0
    %v10178 = vsel %vm661, %v651, 0
    %v10181 = vsel %vm661, %v652, 0
    %10183 = vmatprep.subr.mxu0 0.0
    %10184 = vmatpush1.xpose.msra.mxu0 %v10172
    %10185 = vmatprep.subr.mxu0 0.0
    %10186 = vmatpush1.xpose.msra.mxu0 %v10175
    %10187 = vmatprep.subr.mxu0 0.0
    %10188 = vmatpush1.xpose.msra.mxu0 %v10178
    %10189 = vmatprep.subr.mxu0 0.0
    %10190 = vmatpush1.xpose.msra.mxu0 %v10181
    %10191 = vmatprep.subr.mxu0 0.0
    %10192 = vmatpush1.xpose.msra.mxu0 0.0
    %10193 = vmatprep.subr.mxu0 0.0
    %10194 = vmatpush1.xpose.msra.mxu0 0.0
    %10195 = vmatprep.subr.mxu0 0.0
    %10196 = vmatpush1.xpose.msra.mxu0 0.0
    %10197 = vmatprep.subr.mxu0 0.0
    %10198 = vmatpush1.xpose.msra.mxu0 0.0
    %10199 = vmatprep.subr.mxu0 0.0
    %10200 = vmatpush1.xpose.msra.mxu0 0.0
    %10201 = vmatprep.subr.mxu0 0.0
    %10202 = vmatpush1.xpose.msra.mxu0 0.0
    %10203 = vmatprep.subr.mxu0 0.0
    %10204 = vmatpush1.xpose.msra.mxu0 0.0
    %10205 = vmatprep.subr.mxu0 0.0
    %10206 = vmatpush1.xpose.msra.mxu0 0.0
    %10207 = vmatprep.subr.mxu0 0.0
    %10208 = vmatpush1.xpose.msra.mxu0 0.0
    %10209 = vmatprep.subr.mxu0 0.0
    %10210 = vmatpush1.xpose.msra.mxu0 0.0
    %10211 = vmatprep.subr.mxu0 0.0
    %10212 = vmatpush1.xpose.msra.mxu0 0.0
    %10213 = vmatprep.subr.mxu0 0.0
    %10214 = vmatpush1.xpose.msra.mxu0 0.0
    %10215 = vmatprep.subr.mxu0 0.0
    %10216 = vmatpush1.xpose.msra.mxu0 0.0
    %10217 = vmatprep.subr.mxu0 0.0
    %10218 = vmatpush1.xpose.msra.mxu0 0.0
    %10219 = vmatprep.subr.mxu0 0.0
    %10220 = vmatpush1.xpose.msra.mxu0 0.0
    %10221 = vmatprep.subr.mxu0 0.0
    %10222 = vmatpush1.xpose.msra.mxu0 0.0
    %10223 = vmatprep.subr.mxu0 0.0
    %10224 = vmatpush1.xpose.msra.mxu0 0.0
    %10225 = vmatprep.subr.mxu0 0.0
    %10226 = vmatpush1.xpose.msra.mxu0 0.0
    %10227 = vmatprep.subr.mxu0 0.0
    %10228 = vmatpush1.xpose.msra.mxu0 0.0
    %10229 = vmatprep.subr.mxu0 0.0
    %10230 = vmatpush1.xpose.msra.mxu0 0.0
    %10231 = vmatprep.subr.mxu0 0.0
    %10232 = vmatpush1.xpose.msra.mxu0 0.0
    %10233 = vmatprep.subr.mxu0 0.0
    %10234 = vmatpush1.xpose.msra.mxu0 0.0
    %10235 = vmatprep.subr.mxu0 0.0
    %10236 = vmatpush1.xpose.msra.mxu0 0.0
    %10237 = vmatprep.subr.mxu0 0.0
    %10238 = vmatpush1.xpose.msra.mxu0 0.0
    %10239 = vmatprep.subr.mxu0 0.0
    %10240 = vmatpush1.xpose.msra.mxu0 0.0
    %10241 = vmatprep.subr.mxu0 0.0
    %10242 = vmatpush1.xpose.msra.mxu0 0.0
    %10243 = vmatprep.subr.mxu0 0.0
    %10244 = vmatpush1.xpose.msra.mxu0 0.0
    %10245 = vmatprep.subr.mxu0 0.0
    %10246 = vmatpush1.xpose.msra.mxu0 0.0
    %10247 = vmatprep.mubr.f32.mxu0 0.0
    %10248 = vmatmul.mubr.f32.gmra.mrb[0].mxu0 %v10169
    %v10249 = vpop.f32.mrb[0].mxu0
    %v10250 = vadd.f32 0.0, %v10249
    %v10251 = vpop.f32.mrb[0].mxu0
    %10252 = vdwg.mxu0
    %v10254 = vsel %vm661, %v10146, 0
    %v10257 = vsel %vm661, %v10147, 0
    %v10260 = vsel %vm661, %v653, 0
    %v10263 = vsel %vm661, %v654, 0
    %v10266 = vsel %vm661, %v655, 0
    %v10269 = vsel %vm661, %v656, 0
    %10271 = vmatprep.subr.mxu0 0.0
    %10272 = vmatpush1.xpose.msra.mxu0 %v10260
    %10273 = vmatprep.subr.mxu0 0.0
    %10274 = vmatpush1.xpose.msra.mxu0 %v10263
    %10275 = vmatprep.subr.mxu0 0.0
    %10276 = vmatpush1.xpose.msra.mxu0 %v10266
    %10277 = vmatprep.subr.mxu0 0.0
    %10278 = vmatpush1.xpose.msra.mxu0 %v10269
    %10279 = vmatprep.subr.mxu0 0.0
    %10280 = vmatpush1.xpose.msra.mxu0 0.0
    %10281 = vmatprep.subr.mxu0 0.0
    %10282 = vmatpush1.xpose.msra.mxu0 0.0
    %10283 = vmatprep.subr.mxu0 0.0
    %10284 = vmatpush1.xpose.msra.mxu0 0.0
    %10285 = vmatprep.subr.mxu0 0.0
    %10286 = vmatpush1.xpose.msra.mxu0 0.0
    %10287 = vmatprep.subr.mxu0 0.0
    %10288 = vmatpush1.xpose.msra.mxu0 0.0
    %10289 = vmatprep.subr.mxu0 0.0
    %10290 = vmatpush1.xpose.msra.mxu0 0.0
    %10291 = vmatprep.subr.mxu0 0.0
    %10292 = vmatpush1.xpose.msra.mxu0 0.0
    %10293 = vmatprep.subr.mxu0 0.0
    %10294 = vmatpush1.xpose.msra.mxu0 0.0
    %10295 = vmatprep.subr.mxu0 0.0
    %10296 = vmatpush1.xpose.msra.mxu0 0.0
    %10297 = vmatprep.subr.mxu0 0.0
    %10298 = vmatpush1.xpose.msra.mxu0 0.0
    %10299 = vmatprep.subr.mxu0 0.0
    %10300 = vmatpush1.xpose.msra.mxu0 0.0
    %10301 = vmatprep.subr.mxu0 0.0
    %10302 = vmatpush1.xpose.msra.mxu0 0.0
    %10303 = vmatprep.subr.mxu0 0.0
    %10304 = vmatpush1.xpose.msra.mxu0 0.0
    %10305 = vmatprep.subr.mxu0 0.0
    %10306 = vmatpush1.xpose.msra.mxu0 0.0
    %10307 = vmatprep.subr.mxu0 0.0
    %10308 = vmatpush1.xpose.msra.mxu0 0.0
    %10309 = vmatprep.subr.mxu0 0.0
    %10310 = vmatpush1.xpose.msra.mxu0 0.0
    %10311 = vmatprep.subr.mxu0 0.0
    %10312 = vmatpush1.xpose.msra.mxu0 0.0
    %10313 = vmatprep.subr.mxu0 0.0
    %10314 = vmatpush1.xpose.msra.mxu0 0.0
    %10315 = vmatprep.subr.mxu0 0.0
    %10316 = vmatpush1.xpose.msra.mxu0 0.0
    %10317 = vmatprep.subr.mxu0 0.0
    %10318 = vmatpush1.xpose.msra.mxu0 0.0
    %10319 = vmatprep.subr.mxu0 0.0
    %10320 = vmatpush1.xpose.msra.mxu0 0.0
    %10321 = vmatprep.subr.mxu0 0.0
    %10322 = vmatpush1.xpose.msra.mxu0 0.0
    %10323 = vmatprep.subr.mxu0 0.0
    %10324 = vmatpush1.xpose.msra.mxu0 0.0
    %10325 = vmatprep.subr.mxu0 0.0
    %10326 = vmatpush1.xpose.msra.mxu0 0.0
    %10327 = vmatprep.subr.mxu0 0.0
    %10328 = vmatpush1.xpose.msra.mxu0 0.0
    %10329 = vmatprep.subr.mxu0 0.0
    %10330 = vmatpush1.xpose.msra.mxu0 0.0
    %10331 = vmatprep.subr.mxu0 0.0
    %10332 = vmatpush1.xpose.msra.mxu0 0.0
    %10333 = vmatprep.subr.mxu0 0.0
    %10334 = vmatpush1.xpose.msra.mxu0 0.0
    %10335 = vmatprep.mubr.f32.mxu0 0.0
    %10336 = vmatmul.mubr.f32.gmra.mrb[0].mxu0 %v10254
    %v10337 = vpop.f32.mrb[0].mxu0
    %v10338 = vadd.f32 0.0, %v10337
    %v10339 = vpop.f32.mrb[0].mxu0
    %10340 = vmatprep.mubr.f32.mxu0 0.0
    %10341 = vmatmul.mubr.f32.gmra.mrb[0].mxu0 %v10257
    %v10342 = vpop.f32.mrb[0].mxu0
    %v10343 = vadd.f32 0.0, %v10342
    %v10344 = vpop.f32.mrb[0].mxu0
    %10345 = vdwg.mxu0
    %v10348 = vunpack.c.l.s4 1966171168
    %v10349 = vunpack.c.0.s8 %v10348
    %v10350 = vlaneseq
    %v10351 = vshrl.u32 %v10350, 7
    %v10352 = vsub.s32 %v10349, %v10351
    %v10353 = vrot.slane %v10250, %v10352
    %v10354 = vcombine.high %v10353, %v10353
    %v10356 = vunpack.c.l.s4 1966171168
    %v10357 = vunpack.c.0.s8 %v10356
    %v10358 = vlaneseq
    %v10359 = vshrl.u32 %v10358, 7
    %v10360 = vsub.s32 %v10357, %v10359
    %v10361 = vrot.slane %v10353, %v10360
    %v10363 = vunpack.c.l.s4 1966171168
    %v10364 = vunpack.c.0.s8 %v10363
    %v10365 = vlaneseq
    %v10366 = vshrl.u32 %v10365, 7
    %v10367 = vsub.s32 %v10364, %v10366
    %v10368 = vrot.slane %v10354, %v10367
    %v10369 = vlaneseq
    %v10370 = vshrl.u32 %v10369, 7
    %v10371 = vsub.s32 0, %v10370
    %v10372 = vrot.slane %v10361, %v10371
    %v10373 = vlaneseq
    %v10374 = vshrl.u32 %v10373, 7
    %v10375 = vsub.s32 0, %v10374
    %v10376 = vrot.slane %v10368, %v10375
    %v10379 = vadd.f32 %v10372, %v10338
    %v10380 = vadd.f32 %v10376, %v10343
    %v10381 = vtanh.pop %v10379
    %v10382 = vtanh.pop %v10380
    %v10383 = vlaneseq
    %v10384 = vshrl.u32 %v10383, 7
    %v10385 = vsub.s32 2, %v10384
    %v10386 = vrot.slane %v648, %v10385
    %v10387 = vmul.f32 %v10386, %v10381
    %v10388 = vmul.f32 %v10386, %v10382
    %v10389 = vsel %vm661, %v10387, 0.0
    %10390 = vadd.xlane.f32.xlu0 %v10389
    %v10391 = vpop.xlane.xlu0 %10390
    %v10392 = vsel %vm661, %v10388, 0.0
    %10393 = vadd.xlane.f32.xlu0 %v10392
    %v10394 = vpop.xlane.xlu0 %10393
    %vm10395 = vcmp.ne.s32.totalorder %v33, 0
    %v10398 = vlaneseq
    %v10399 = vand.u32 %v10398, 127
    %v10400 = vlaneseq
    %v10401 = vshrl.u32 %v10400, 7
    %v10402 = vsub.s32 %v10399, %v10401
    %v10403 = vrot.slane %v10391, %v10402
    %v10404 = vlaneseq
    %v10405 = vshrl.u32 %v10404, 7
    %v10406 = vsub.s32 %v10399, %v10405
    %v10407 = vrot.slane %v10394, %v10406
    %v10408 = vsel %vm10167, %v10407, %v10403
    %v10410 = vsel %vm10395, -inf, %v10408
    %vm10411 = vcmask 58368
    %10412 = vst.msk [vmem:[#allocation2] sm:$0x3] %vm10411, %v10410
    // Predicated region
    $region34: #{tpu_custom_call.1} parent=1 // pred_check
      _
    $region35: #{tpu_custom_call.1} parent=1 // pred_check_branch
      %10414 = sbr.rel (0) target = $region37
    $region36: #{tpu_custom_call.1} parent=1 // pred_region
      %s10416 = ssub.s32 32, 32
      %10417 = vsyncadd [#allocation3], %s10416
      %s10419 = sshll.u32 [#allocation2], 4
      %s10420 = int_to_ptr.vmem [resolvable:$true] %s10419
      %10422 = dma.vmem_to_hbm [thread:$0]  %s10420, 32, %s8, [#allocation3]
    $region37: #{tpu_custom_call.1} parent=1 // pred_fallthru
      _
    // Predicated region
    $region38: #{tpu_custom_call.1} parent=1 // pred_check
      _
    $region39: #{tpu_custom_call.1} parent=1 // pred_check_branch
      %10424 = sbr.rel (0) target = $region41
    $region40: #{tpu_custom_call.1} parent=1 // pred_region
      %10425 = dma.done [#allocation3], 32
    $region41: #{tpu_custom_call.1} parent=1 // pred_fallthru
      _
    %10426 = vsyncpa [#allocation3], 1

</llo_original>
